<compile_context>
chip_gen: v7x
topology: tpu7x:2x2x1
jax: 0.10.0
libtpu: 0.0.40
codegen_flags: <defaults>
</compile_context>

<pallas_src>
import jax
import jax.numpy as jnp
from jax.experimental import pallas as pl
from jax.experimental.pallas import tpu as pltpu

K1, C_IN, C1 = 9, 4, 16      # conv1: kernel 9, 4 -> 16 channels, pad 4
K2, C2 = 3, 32               # conv2: kernel 3, 16 -> 32 channels, pad 1
POOL1, POOL2 = 5, 2
H_FC, ZH1, ZH2 = 64, 32, 64


def _shift_rows(a, d):
    """Return s with s[r] = a[(r + d) % rows].

    The caller masks the rows whose shifted index crosses a batch-element
    boundary, so the wraparound never leaks into the result.
    """
    rows = a.shape[0]
    dm = d % rows
    if dm == 0:
        return a
    if rows % 8 == 0:
        # single XLU sublane rotate (the XLU slot is otherwise idle here)
        return pltpu.roll(a, shift=(-d) % rows, axis=0)
    # unaligned fallback: two static slices + one sublane concat
    return jnp.concatenate([a[dm:, :], a[:dm, :]], axis=0)


def cnn_cond_kernel(x_ref, z_ref,
                    w1_ref, b1_ref, w2_ref, b2_ref,
                    w1c_ref, b1c_ref, w2c_ref, b2c_ref,
                    wxfc1_ref, wzfc1_ref, bfc1_ref,
                    wfc2_ref, bfc2_ref,
                    out_ref):
    rows = x_ref.shape[0]               # TB * L
    TB = z_ref.shape[0]
    L = rows // TB
    L1 = L // POOL1
    L2 = L1 // POOL2
    r1 = TB * L1
    r2 = TB * L2
    f32 = jnp.float32
    cdt = w1_ref.dtype                  # MXU operand dtype (bf16 or f32)

    x = x_ref[...].astype(f32)                                     # (TB*L, 4)
    t = jax.lax.broadcasted_iota(jnp.int32, (rows, 1), 0) % L      # pos in seq

    # ---- conv1: in-VMEM im2col (9 shifted copies, halo-masked per batch) ---
    cols = []
    for k in range(K1):
        d = k - K1 // 2                 # -4 .. +4
        xs = _shift_rows(x, d)
        if d < 0:
            xs = jnp.where(t < -d, 0.0, xs)
        elif d > 0:
            xs = jnp.where(t >= L - d, 0.0, xs)
        cols.append(xs)
    xcol = jnp.concatenate(cols, axis=1)                           # (TB*L, 36)
    y1 = jnp.dot(xcol.astype(cdt), w1_ref[...], preferred_element_type=f32)
    y1 = jnp.maximum(y1 + b1_ref[...], 0.0)                        # (TB*L, 16)

    # ---- max_pool1d(5): L % 5 == 0, so windows never straddle batch rows ---
    # TODO(synk): reshape-based pool may emit an XLU relayout (5 !% 8); cheap
    # at these sizes — revisit with shift-and-max if the Mosaic dump shows it.
    h1 = jnp.max(y1.reshape(r1, POOL1, C1), axis=1)                # (TB*L1, 16)
    # (conv_dropout: identity at inference)

    # ---- conv2 (k=3, 'same'): single K=48 matmul over [prev | h1 | nxt] ----
    t1 = jax.lax.broadcasted_iota(jnp.int32, (r1, 1), 0) % L1
    prev = jnp.where(t1 == 0, 0.0, _shift_rows(h1, -1))
    nxt = jnp.where(t1 == L1 - 1, 0.0, _shift_rows(h1, 1))
    cat2 = jnp.concatenate([prev, h1, nxt], axis=1)                # (TB*L1, 48)
    y2 = jnp.dot(cat2.astype(cdt), w2_ref[...], preferred_element_type=f32)
    y2 = jnp.maximum(y2 + b2_ref[...], 0.0)                        # (TB*L1, 32)

    # ---- max_pool1d(2) -----------------------------------------------------
    h2 = jnp.max(y2.reshape(r2, POOL2, C2), axis=1)                # (TB*L2, 32)

    # ---- flatten to (TB, L2*32) in l-outer / c-inner order (fc1 weight was
    #      pre-rearranged from PyTorch's channel-major flatten to match) ------
    h2_3d = h2.reshape(TB, L2, C2)
    h2_flat = jnp.concatenate([h2_3d[:, l, :] for l in range(L2)], axis=1)

    # ---- conditioning branch: fc1c -> ReLU -> fc2c -> ReLU ------------------
    z1 = jnp.maximum(z_ref[...] * w1c_ref[...] + b1c_ref[...], 0.0)    # (TB,32)
    z2 = jnp.maximum(jnp.dot(z1.astype(cdt), w2c_ref[...],
                             preferred_element_type=f32) + b2c_ref[...], 0.0)

    # ---- fc1 over concat([flatten(conv feats), z2]) + ReLU; then fc2 --------
    h3 = (jnp.dot(h2_flat.astype(cdt), wxfc1_ref[...],
                  preferred_element_type=f32)
          + jnp.dot(z2.astype(cdt), wzfc1_ref[...],
                    preferred_element_type=f32)
          + bfc1_ref[...])
    h3 = jnp.maximum(h3, 0.0)                                          # (TB,64)
    out_ref[...] = (jnp.dot(h3.astype(cdt), wfc2_ref[...],
                            preferred_element_type=f32) + bfc2_ref[...])


def _num_batch_splits(batch, seq_length):
    """Deterministic, shape-only grid heuristic (no device sniffing at trace).

    Keeps each grid step's live activations to ~1-2 MiB so the double-buffered
    input blocks + intermediates fit every generation's scoped-VMEM default
    (16 MiB v5e / 32 MiB v6e / 32-of-64 MiB v7x), and uses >= 2 (even) steps
    once the batch is large enough so BlockSpec pipelining hides the input DMA
    and both v7x TensorCores get work.
    """
    per_elem_bytes = 4 * seq_length * 96          # ~live f32 values / element
    cap = max(1, (2 << 20) // per_elem_bytes)     # batch elements per step
    min_g = 2 if (batch % 2 == 0 and (batch > cap or batch >= 16)) else 1
    for g in range(min_g, batch + 1):
        if batch % g == 0 and batch // g <= cap:
            return g
    return batch


def prepare_params(params, seq_length=100, compute_dtype=jnp.bfloat16):
    """One-time re-layout of PyTorch-layout weights into kernel layout.

    Hoisted out of the per-call wrapper so no transpose/reshape ops are
    launched around the pallas_call at inference time.
    """
    (c1w, c1b, c2w, c2b, fc1w, fc1b, fc2w, fc2b,
     fc1cw, fc1cb, fc2cw, fc2cb) = params
    L1 = seq_length // POOL1
    L2 = L1 // POOL2
    assert fc1w.shape == (H_FC, C2 * L2 + ZH2), (
        f"fc1 weight {fc1w.shape} does not match seq_length={seq_length}")
    f32, cdt = jnp.float32, compute_dtype

    w1 = jnp.transpose(c1w, (2, 1, 0)).reshape(K1 * C_IN, C1).astype(cdt)
    b1 = c1b.reshape(1, C1).astype(f32)
    w2 = jnp.transpose(c2w, (2, 1, 0)).reshape(K2 * C1, C2).astype(cdt)
    b2 = c2b.reshape(1, C2).astype(f32)
    w1c = fc1cw.T.astype(f32)                    # (1, 32): used on the VPU
    b1c = fc1cb.reshape(1, ZH1).astype(f32)
    w2c = fc2cw.T.astype(cdt)                    # (32, 64)
    b2c = fc2cb.reshape(1, ZH2).astype(f32)
    # fc1: first 32*L2 input features follow PyTorch's channel-major flatten
    # (feature = c*L2 + l); rearrange rows to l-outer/c-inner to match the
    # kernel's lane-concat flatten, and split off the z-part.
    wx = fc1w[:, :C2 * L2]                                         # (64, 320)
    wz = fc1w[:, C2 * L2:]                                         # (64, 64)
    wx_fc1 = (wx.T.reshape(C2, L2, H_FC).transpose(1, 0, 2)
              .reshape(L2 * C2, H_FC).astype(cdt))                 # (L2*32, 64)
    wz_fc1 = wz.T.astype(cdt)                                      # (64, 64)
    bfc1 = fc1b.reshape(1, H_FC).astype(f32)
    wfc2 = fc2w.T.astype(cdt)                                      # (64, 1)
    bfc2 = fc2b.reshape(1, 1).astype(f32)
    return (w1, b1, w2, b2, w1c, b1c, w2c, b2c,
            wx_fc1, wz_fc1, bfc1, wfc2, bfc2)


def modified_simple_cnn_cond(x, z, prepared, seq_length=100,
                             num_batch_splits=None):
    """x: (B, seq_length, 4); z: (B,). Returns (B, 1) float32 (eval mode)."""
    B, L, cin = x.shape
    assert L == seq_length and cin == C_IN
    assert seq_length % POOL1 == 0 and (seq_length // POOL1) % POOL2 == 0
    L1 = seq_length // POOL1
    L2 = L1 // POOL2

    G = (_num_batch_splits(B, seq_length) if num_batch_splits is None
         else num_batch_splits)
    assert B % G == 0
    TB = B // G

    xr = x.astype(jnp.float32).reshape(G, TB * L, C_IN)
    zr = z.astype(jnp.float32).reshape(G, TB, 1)

    in_specs = [
        pl.BlockSpec((None, TB * L, C_IN), lambda i: (i, 0, 0)),
        pl.BlockSpec((None, TB, 1), lambda i: (i, 0, 0)),
    ] + [pl.BlockSpec(w.shape, (lambda i, nd=w.ndim: (0,) * nd))
         for w in prepared]
    out_spec = pl.BlockSpec((None, TB, 1), lambda i: (i, 0, 0))

    flops = 2 * B * (L * K1 * C_IN * C1 + L1 * K2 * C1 * C2 + ZH1 * ZH2
                     + L2 * C2 * H_FC + ZH2 * H_FC + H_FC)
    bytes_accessed = (xr.size * xr.dtype.itemsize + zr.size * 4 + B * 4
                      + sum(int(w.size) * w.dtype.itemsize for w in prepared))

    out = pl.pallas_call(
        cnn_cond_kernel,
        out_shape=jax.ShapeDtypeStruct((G, TB, 1), jnp.float32),
        grid=(G,),
        in_specs=in_specs,
        out_specs=out_spec,
        compiler_params=pltpu.CompilerParams(
            dimension_semantics=("parallel",)),
        cost_estimate=pl.CostEstimate(flops=int(flops), transcendentals=0,
                                      bytes_accessed=int(bytes_accessed)),
    )(xr, zr, *prepared)
    return out.reshape(B, 1)


def init_params(key):
    ks = jax.random.split(key, 12)

    def u(k, shape, scale):
        return jax.random.uniform(k, shape, jnp.float32, -scale, scale)

    c1w = u(ks[0], (16, 4, 9), 0.1);    c1b = u(ks[1], (16,), 0.1)
    c2w = u(ks[2], (32, 16, 3), 0.1);   c2b = u(ks[3], (32,), 0.1)
    fc1w = u(ks[4], (64, 384), 0.05);   fc1b = u(ks[5], (64,), 0.05)
    fc2w = u(ks[6], (1, 64), 0.1);      fc2b = u(ks[7], (1,), 0.1)
    fc1cw = u(ks[8], (32, 1), 0.5);     fc1cb = u(ks[9], (32,), 0.5)
    fc2cw = u(ks[10], (64, 32), 0.1);   fc2cb = u(ks[11], (64,), 0.1)
    return (c1w, c1b, c2w, c2b, fc1w, fc1b, fc2w, fc2b,
            fc1cw, fc1cb, fc2cw, fc2cb)


def reference_forward(x, z, params, seq_length=100):
    """Pure-JAX reference mirroring the PyTorch forward (eval mode)."""
    (c1w, c1b, c2w, c2b, fc1w, fc1b, fc2w, fc2b,
     fc1cw, fc1cb, fc2cw, fc2cb) = params
    B = x.shape[0]
    L1 = seq_length // 5
    L2 = L1 // 2
    xc = jnp.transpose(x, (0, 2, 1))                     # (B, 4, L) like PyTorch
    y1 = jax.lax.conv_general_dilated(
        xc, c1w, window_strides=(1,), padding=[(4, 4)],
        dimension_numbers=('NCH', 'OIH', 'NCH')) + c1b[None, :, None]
    h1 = jnp.max(jax.nn.relu(y1).reshape(B, 16, L1, 5), axis=3)
    y2 = jax.lax.conv_general_dilated(
        h1, c2w, window_strides=(1,), padding=[(1, 1)],
        dimension_numbers=('NCH', 'OIH', 'NCH')) + c2b[None, :, None]
    h2 = jnp.max(jax.nn.relu(y2).reshape(B, 32, L2, 2), axis=3)
    xflat = h2.reshape(B, 32 * L2)                       # channel-major flatten
    zz = z.reshape(B, 1)
    z1 = jax.nn.relu(zz @ fc1cw.T + fc1cb)
    z2 = jax.nn.relu(z1 @ fc2cw.T + fc2cb)
    feat = jnp.concatenate([xflat, z2], axis=1)          # (B, 384)
    h3 = jax.nn.relu(feat @ fc1w.T + fc1b)
    return h3 @ fc2w.T + fc2b


if __name__ == "__main__":
    key = jax.random.PRNGKey(0)
    kp, kx, kz = jax.random.split(key, 3)
    B, SEQ = 2, 100
    params = init_params(kp)
    x = jax.random.normal(kx, (B, SEQ, 4), jnp.float32)
    z = jax.random.normal(kz, (B,), jnp.float32)

    ref = reference_forward(x, z, params, seq_length=SEQ)

    fwd = jax.jit(modified_simple_cnn_cond,
                  static_argnames=("seq_length", "num_batch_splits"))

    # f32 MXU operands: tight algorithmic check against the JAX reference.
    prep_f32 = prepare_params(params, seq_length=SEQ,
                              compute_dtype=jnp.float32)
    out_f32 = jax.block_until_ready(fwd(x, z, prep_f32, seq_length=SEQ))
    assert out_f32.shape == (B, 1)
    if not jnp.allclose(out_f32, ref, atol=1e-3, rtol=1e-3):
        raise AssertionError(
            f"f32 Pallas/reference mismatch:\n{out_f32}\nvs\n{ref}")

    # bf16 MXU operands (default fast path): looser tolerance for rounding.
    prep_bf16 = prepare_params(params, seq_length=SEQ,
                               compute_dtype=jnp.bfloat16)
    out_bf16 = jax.block_until_ready(fwd(x, z, prep_bf16, seq_length=SEQ))
    if not jnp.allclose(out_bf16, ref, atol=5e-2, rtol=5e-2):
        raise AssertionError(
            f"bf16 Pallas/reference mismatch:\n{out_bf16}\nvs\n{ref}")

    print("KERNEL_OK")
</pallas_src>

<mosaic_0001>
module attributes {stable_mosaic.version = 11 : i64} {
  func.func @cnn_cond_kernel(%arg0: i32, %arg1: memref<1x200x4xf32, #tpu.memory_space<vmem>>, %arg2: memref<1x2x1xf32, #tpu.memory_space<vmem>>, %arg3: memref<36x16xf32, #tpu.memory_space<vmem>>, %arg4: memref<1x16xf32, #tpu.memory_space<vmem>>, %arg5: memref<48x32xf32, #tpu.memory_space<vmem>>, %arg6: memref<1x32xf32, #tpu.memory_space<vmem>>, %arg7: memref<1x32xf32, #tpu.memory_space<vmem>>, %arg8: memref<1x32xf32, #tpu.memory_space<vmem>>, %arg9: memref<32x64xf32, #tpu.memory_space<vmem>>, %arg10: memref<1x64xf32, #tpu.memory_space<vmem>>, %arg11: memref<320x64xf32, #tpu.memory_space<vmem>>, %arg12: memref<64x64xf32, #tpu.memory_space<vmem>>, %arg13: memref<1x64xf32, #tpu.memory_space<vmem>>, %arg14: memref<64x1xf32, #tpu.memory_space<vmem>>, %arg15: memref<1x1xf32, #tpu.memory_space<vmem>>, %arg16: memref<1x2x1xf32, #tpu.memory_space<vmem>>) attributes {dimension_semantics = [#tpu.dimension_semantics<parallel>], iteration_bounds = array<i64: 1>, scalar_prefetch = 0 : i64, scratch_operands = 0 : i64, tpu.core_type = #tpu.core_type<tc>, window_params = [{transform_indices = @transform_0, window_bounds = array<i64: 1, 200, 4>}, {transform_indices = @transform_1, window_bounds = array<i64: 1, 2, 1>}, {pipeline_mode = #tpu.pipeline_mode<synchronous>, transform_indices = @transform_2, window_bounds = array<i64: 36, 16>}, {pipeline_mode = #tpu.pipeline_mode<synchronous>, transform_indices = @transform_3, window_bounds = array<i64: 1, 16>}, {pipeline_mode = #tpu.pipeline_mode<synchronous>, transform_indices = @transform_4, window_bounds = array<i64: 48, 32>}, {pipeline_mode = #tpu.pipeline_mode<synchronous>, transform_indices = @transform_5, window_bounds = array<i64: 1, 32>}, {pipeline_mode = #tpu.pipeline_mode<synchronous>, transform_indices = @transform_6, window_bounds = array<i64: 1, 32>}, {pipeline_mode = #tpu.pipeline_mode<synchronous>, transform_indices = @transform_7, window_bounds = array<i64: 1, 32>}, {pipeline_mode = #tpu.pipeline_mode<synchronous>, transform_indices = @transform_8, window_bounds = array<i64: 32, 64>}, {pipeline_mode = #tpu.pipeline_mode<synchronous>, transform_indices = @transform_9, window_bounds = array<i64: 1, 64>}, {pipeline_mode = #tpu.pipeline_mode<synchronous>, transform_indices = @transform_10, window_bounds = array<i64: 320, 64>}, {pipeline_mode = #tpu.pipeline_mode<synchronous>, transform_indices = @transform_11, window_bounds = array<i64: 64, 64>}, {pipeline_mode = #tpu.pipeline_mode<synchronous>, transform_indices = @transform_12, window_bounds = array<i64: 1, 64>}, {pipeline_mode = #tpu.pipeline_mode<synchronous>, transform_indices = @transform_13, window_bounds = array<i64: 64, 1>}, {pipeline_mode = #tpu.pipeline_mode<synchronous>, transform_indices = @transform_14, window_bounds = array<i64: 1, 1>}, {transform_indices = @transform_15, window_bounds = array<i64: 1, 2, 1>}]} {
    %c0 = arith.constant 0 : index
    %c0_0 = arith.constant 0 : index
    %c0_1 = arith.constant 0 : index
    %0 = vector.load %arg1[%c0, %c0_0, %c0_1] : memref<1x200x4xf32, #tpu.memory_space<vmem>>, vector<1x200x4xf32>
    %1 = vector.shape_cast %0 : vector<1x200x4xf32> to vector<200x4xf32>
    %2 = tpu.iota {dimensions = array<i32: 0>} : vector<200x1xi32>
    %c100_i32 = arith.constant 100 : i32
    %c0_i32 = arith.constant 0 : i32
    %3 = arith.cmpi eq, %c100_i32, %c0_i32 : i32
    %c1_i32 = arith.constant 1 : i32
    %4 = arith.select %3, %c1_i32, %c100_i32 : i32
    %5 = vector.broadcast %4 : i32 to vector<200x1xi32>
    %6 = arith.remsi %2, %5 : vector<200x1xi32>
    %c0_i32_2 = arith.constant 0 : i32
    %7 = vector.broadcast %c0_i32_2 : i32 to vector<200x1xi32>
    %8 = arith.cmpi ne, %6, %7 : vector<200x1xi32>
    %c0_i32_3 = arith.constant 0 : i32
    %9 = vector.broadcast %c0_i32_3 : i32 to vector<200x1xi32>
    %10 = arith.cmpi slt, %6, %9 : vector<200x1xi32>
    %c0_i32_4 = arith.constant 0 : i32
    %11 = arith.cmpi slt, %4, %c0_i32_4 : i32
    %12 = vector.broadcast %11 : i1 to vector<200x1xi1>
    %13 = vector.broadcast %12 : vector<200x1xi1> to vector<200x1xi1>
    %14 = arith.xori %10, %13 : vector<200x1xi1>
    %15 = arith.andi %14, %8 : vector<200x1xi1>
    %16 = vector.broadcast %4 : i32 to vector<200x1xi32>
    %17 = arith.addi %6, %16 : vector<200x1xi32>
    %18 = arith.select %15, %17, %6 : vector<200x1xi1>, vector<200x1xi32>
    %c4_i32 = arith.constant 4 : i32
    %19 = tpu.dynamic_rotate %1 by %c4_i32 dim 0 : vector<200x4xf32>, i32 -> vector<200x4xf32>
    %c4_i32_5 = arith.constant 4 : i32
    %20 = vector.broadcast %c4_i32_5 : i32 to vector<200x1xi32>
    %21 = arith.cmpi slt, %18, %20 : vector<200x1xi32>
    %cst = arith.constant 0.000000e+00 : f32
    %22 = vector.shape_cast %21 : vector<200x1xi1> to vector<200x1xi1>
    %23 = vector.broadcast %22 : vector<200x1xi1> to vector<200x4xi1>
    %24 = vector.broadcast %cst : f32 to vector<200x4xf32>
    %25 = arith.select %23, %24, %19 : vector<200x4xi1>, vector<200x4xf32>
    %c3_i32 = arith.constant 3 : i32
    %26 = tpu.dynamic_rotate %1 by %c3_i32 dim 0 : vector<200x4xf32>, i32 -> vector<200x4xf32>
    %c3_i32_6 = arith.constant 3 : i32
    %27 = vector.broadcast %c3_i32_6 : i32 to vector<200x1xi32>
    %28 = arith.cmpi slt, %18, %27 : vector<200x1xi32>
    %cst_7 = arith.constant 0.000000e+00 : f32
    %29 = vector.shape_cast %28 : vector<200x1xi1> to vector<200x1xi1>
    %30 = vector.broadcast %29 : vector<200x1xi1> to vector<200x4xi1>
    %31 = vector.broadcast %cst_7 : f32 to vector<200x4xf32>
    %32 = arith.select %30, %31, %26 : vector<200x4xi1>, vector<200x4xf32>
    %c2_i32 = arith.constant 2 : i32
    %33 = tpu.dynamic_rotate %1 by %c2_i32 dim 0 : vector<200x4xf32>, i32 -> vector<200x4xf32>
    %c2_i32_8 = arith.constant 2 : i32
    %34 = vector.broadcast %c2_i32_8 : i32 to vector<200x1xi32>
    %35 = arith.cmpi slt, %18, %34 : vector<200x1xi32>
    %cst_9 = arith.constant 0.000000e+00 : f32
    %36 = vector.shape_cast %35 : vector<200x1xi1> to vector<200x1xi1>
    %37 = vector.broadcast %36 : vector<200x1xi1> to vector<200x4xi1>
    %38 = vector.broadcast %cst_9 : f32 to vector<200x4xf32>
    %39 = arith.select %37, %38, %33 : vector<200x4xi1>, vector<200x4xf32>
    %c1_i32_10 = arith.constant 1 : i32
    %40 = tpu.dynamic_rotate %1 by %c1_i32_10 dim 0 : vector<200x4xf32>, i32 -> vector<200x4xf32>
    %c1_i32_11 = arith.constant 1 : i32
    %41 = vector.broadcast %c1_i32_11 : i32 to vector<200x1xi32>
    %42 = arith.cmpi slt, %18, %41 : vector<200x1xi32>
    %cst_12 = arith.constant 0.000000e+00 : f32
    %43 = vector.shape_cast %42 : vector<200x1xi1> to vector<200x1xi1>
    %44 = vector.broadcast %43 : vector<200x1xi1> to vector<200x4xi1>
    %45 = vector.broadcast %cst_12 : f32 to vector<200x4xf32>
    %46 = arith.select %44, %45, %40 : vector<200x4xi1>, vector<200x4xf32>
    %c199_i32 = arith.constant 199 : i32
    %47 = tpu.dynamic_rotate %1 by %c199_i32 dim 0 : vector<200x4xf32>, i32 -> vector<200x4xf32>
    %c99_i32 = arith.constant 99 : i32
    %48 = vector.broadcast %c99_i32 : i32 to vector<200x1xi32>
    %49 = arith.cmpi sge, %18, %48 : vector<200x1xi32>
    %cst_13 = arith.constant 0.000000e+00 : f32
    %50 = vector.shape_cast %49 : vector<200x1xi1> to vector<200x1xi1>
    %51 = vector.broadcast %50 : vector<200x1xi1> to vector<200x4xi1>
    %52 = vector.broadcast %cst_13 : f32 to vector<200x4xf32>
    %53 = arith.select %51, %52, %47 : vector<200x4xi1>, vector<200x4xf32>
    %c198_i32 = arith.constant 198 : i32
    %54 = tpu.dynamic_rotate %1 by %c198_i32 dim 0 : vector<200x4xf32>, i32 -> vector<200x4xf32>
    %c98_i32 = arith.constant 98 : i32
    %55 = vector.broadcast %c98_i32 : i32 to vector<200x1xi32>
    %56 = arith.cmpi sge, %18, %55 : vector<200x1xi32>
    %cst_14 = arith.constant 0.000000e+00 : f32
    %57 = vector.shape_cast %56 : vector<200x1xi1> to vector<200x1xi1>
    %58 = vector.broadcast %57 : vector<200x1xi1> to vector<200x4xi1>
    %59 = vector.broadcast %cst_14 : f32 to vector<200x4xf32>
    %60 = arith.select %58, %59, %54 : vector<200x4xi1>, vector<200x4xf32>
    %c197_i32 = arith.constant 197 : i32
    %61 = tpu.dynamic_rotate %1 by %c197_i32 dim 0 : vector<200x4xf32>, i32 -> vector<200x4xf32>
    %c97_i32 = arith.constant 97 : i32
    %62 = vector.broadcast %c97_i32 : i32 to vector<200x1xi32>
    %63 = arith.cmpi sge, %18, %62 : vector<200x1xi32>
    %cst_15 = arith.constant 0.000000e+00 : f32
    %64 = vector.shape_cast %63 : vector<200x1xi1> to vector<200x1xi1>
    %65 = vector.broadcast %64 : vector<200x1xi1> to vector<200x4xi1>
    %66 = vector.broadcast %cst_15 : f32 to vector<200x4xf32>
    %67 = arith.select %65, %66, %61 : vector<200x4xi1>, vector<200x4xf32>
    %c196_i32 = arith.constant 196 : i32
    %68 = tpu.dynamic_rotate %1 by %c196_i32 dim 0 : vector<200x4xf32>, i32 -> vector<200x4xf32>
    %c96_i32 = arith.constant 96 : i32
    %69 = vector.broadcast %c96_i32 : i32 to vector<200x1xi32>
    %70 = arith.cmpi sge, %18, %69 : vector<200x1xi32>
    %cst_16 = arith.constant 0.000000e+00 : f32
    %71 = vector.shape_cast %70 : vector<200x1xi1> to vector<200x1xi1>
    %72 = vector.broadcast %71 : vector<200x1xi1> to vector<200x4xi1>
    %73 = vector.broadcast %cst_16 : f32 to vector<200x4xf32>
    %74 = arith.select %72, %73, %68 : vector<200x4xi1>, vector<200x4xf32>
    %75 = tpu.concatenate %25, %32, %39, %46, %1, %53, %60, %67, %74 in 1 : vector<200x4xf32>, vector<200x4xf32>, vector<200x4xf32>, vector<200x4xf32>, vector<200x4xf32>, vector<200x4xf32>, vector<200x4xf32>, vector<200x4xf32>, vector<200x4xf32> -> vector<200x36xf32>
    %c0_17 = arith.constant 0 : index
    %c0_18 = arith.constant 0 : index
    %76 = vector.load %arg3[%c0_17, %c0_18] : memref<36x16xf32, #tpu.memory_space<vmem>>, vector<36x16xf32>
    %cst_19 = arith.constant dense<0.000000e+00> : vector<200x16xf32>
    %77 = tpu.matmul %75, %76, %cst_19 {dimension_numbers = #tpu.dot_dimension_numbers<[1], [0], [0], [1], [0, 0, 1, 1], [], []>} : vector<200x36xf32>, vector<36x16xf32>, vector<200x16xf32> -> vector<200x16xf32>
    %c0_20 = arith.constant 0 : index
    %c0_21 = arith.constant 0 : index
    %78 = vector.load %arg4[%c0_20, %c0_21] : memref<1x16xf32, #tpu.memory_space<vmem>>, vector<1x16xf32>
    %79 = vector.broadcast %78 : vector<1x16xf32> to vector<200x16xf32>
    %80 = arith.addf %77, %79 : vector<200x16xf32>
    %cst_22 = arith.constant 0.000000e+00 : f32
    %81 = vector.broadcast %cst_22 : f32 to vector<200x16xf32>
    %82 = arith.maximumf %80, %81 : vector<200x16xf32>
    %83 = vector.shape_cast %82 : vector<200x16xf32> to vector<40x5x16xf32>
    %cst_23 = arith.constant dense<0xFF800000> : vector<40x16xf32>
    %84 = vector.multi_reduction <maximumf>, %83, %cst_23 [1] : vector<40x5x16xf32> to vector<40x16xf32>
    %85 = tpu.iota {dimensions = array<i32: 0>} : vector<40x1xi32>
    %c20_i32 = arith.constant 20 : i32
    %c0_i32_24 = arith.constant 0 : i32
    %86 = arith.cmpi eq, %c20_i32, %c0_i32_24 : i32
    %c1_i32_25 = arith.constant 1 : i32
    %87 = arith.select %86, %c1_i32_25, %c20_i32 : i32
    %88 = vector.broadcast %87 : i32 to vector<40x1xi32>
    %89 = arith.remsi %85, %88 : vector<40x1xi32>
    %c0_i32_26 = arith.constant 0 : i32
    %90 = vector.broadcast %c0_i32_26 : i32 to vector<40x1xi32>
    %91 = arith.cmpi ne, %89, %90 : vector<40x1xi32>
    %c0_i32_27 = arith.constant 0 : i32
    %92 = vector.broadcast %c0_i32_27 : i32 to vector<40x1xi32>
    %93 = arith.cmpi slt, %89, %92 : vector<40x1xi32>
    %c0_i32_28 = arith.constant 0 : i32
    %94 = arith.cmpi slt, %87, %c0_i32_28 : i32
    %95 = vector.broadcast %94 : i1 to vector<40x1xi1>
    %96 = vector.broadcast %95 : vector<40x1xi1> to vector<40x1xi1>
    %97 = arith.xori %93, %96 : vector<40x1xi1>
    %98 = arith.andi %97, %91 : vector<40x1xi1>
    %99 = vector.broadcast %87 : i32 to vector<40x1xi32>
    %100 = arith.addi %89, %99 : vector<40x1xi32>
    %101 = arith.select %98, %100, %89 : vector<40x1xi1>, vector<40x1xi32>
    %c0_i32_29 = arith.constant 0 : i32
    %102 = vector.broadcast %c0_i32_29 : i32 to vector<40x1xi32>
    %103 = arith.cmpi eq, %101, %102 : vector<40x1xi32>
    %c1_i32_30 = arith.constant 1 : i32
    %104 = tpu.dynamic_rotate %84 by %c1_i32_30 dim 0 : vector<40x16xf32>, i32 -> vector<40x16xf32>
    %cst_31 = arith.constant 0.000000e+00 : f32
    %105 = vector.shape_cast %103 : vector<40x1xi1> to vector<40x1xi1>
    %106 = vector.broadcast %105 : vector<40x1xi1> to vector<40x16xi1>
    %107 = vector.broadcast %cst_31 : f32 to vector<40x16xf32>
    %108 = arith.select %106, %107, %104 : vector<40x16xi1>, vector<40x16xf32>
    %c19_i32 = arith.constant 19 : i32
    %109 = vector.broadcast %c19_i32 : i32 to vector<40x1xi32>
    %110 = arith.cmpi eq, %101, %109 : vector<40x1xi32>
    %c39_i32 = arith.constant 39 : i32
    %111 = tpu.dynamic_rotate %84 by %c39_i32 dim 0 : vector<40x16xf32>, i32 -> vector<40x16xf32>
    %cst_32 = arith.constant 0.000000e+00 : f32
    %112 = vector.shape_cast %110 : vector<40x1xi1> to vector<40x1xi1>
    %113 = vector.broadcast %112 : vector<40x1xi1> to vector<40x16xi1>
    %114 = vector.broadcast %cst_32 : f32 to vector<40x16xf32>
    %115 = arith.select %113, %114, %111 : vector<40x16xi1>, vector<40x16xf32>
    %116 = tpu.concatenate %108, %84, %115 in 1 : vector<40x16xf32>, vector<40x16xf32>, vector<40x16xf32> -> vector<40x48xf32>
    %c0_33 = arith.constant 0 : index
    %c0_34 = arith.constant 0 : index
    %117 = vector.load %arg5[%c0_33, %c0_34] : memref<48x32xf32, #tpu.memory_space<vmem>>, vector<48x32xf32>
    %cst_35 = arith.constant dense<0.000000e+00> : vector<40x32xf32>
    %118 = tpu.matmul %116, %117, %cst_35 {dimension_numbers = #tpu.dot_dimension_numbers<[1], [0], [0], [1], [0, 0, 1, 1], [], []>} : vector<40x48xf32>, vector<48x32xf32>, vector<40x32xf32> -> vector<40x32xf32>
    %c0_36 = arith.constant 0 : index
    %c0_37 = arith.constant 0 : index
    %119 = vector.load %arg6[%c0_36, %c0_37] : memref<1x32xf32, #tpu.memory_space<vmem>>, vector<1x32xf32>
    %120 = vector.broadcast %119 : vector<1x32xf32> to vector<40x32xf32>
    %121 = arith.addf %118, %120 : vector<40x32xf32>
    %cst_38 = arith.constant 0.000000e+00 : f32
    %122 = vector.broadcast %cst_38 : f32 to vector<40x32xf32>
    %123 = arith.maximumf %121, %122 : vector<40x32xf32>
    %124 = vector.shape_cast %123 : vector<40x32xf32> to vector<20x2x32xf32>
    %cst_39 = arith.constant dense<0xFF800000> : vector<20x32xf32>
    %125 = vector.multi_reduction <maximumf>, %124, %cst_39 [1] : vector<20x2x32xf32> to vector<20x32xf32>
    %126 = vector.shape_cast %125 : vector<20x32xf32> to vector<2x10x32xf32>
    %127 = vector.extract_strided_slice %126 {offsets = [0, 0, 0], sizes = [2, 1, 32], strides = [1, 1, 1]} : vector<2x10x32xf32> to vector<2x1x32xf32>
    %128 = vector.shape_cast %127 : vector<2x1x32xf32> to vector<2x32xf32>
    %129 = vector.extract_strided_slice %126 {offsets = [0, 1, 0], sizes = [2, 1, 32], strides = [1, 1, 1]} : vector<2x10x32xf32> to vector<2x1x32xf32>
    %130 = vector.shape_cast %129 : vector<2x1x32xf32> to vector<2x32xf32>
    %131 = vector.extract_strided_slice %126 {offsets = [0, 2, 0], sizes = [2, 1, 32], strides = [1, 1, 1]} : vector<2x10x32xf32> to vector<2x1x32xf32>
    %132 = vector.shape_cast %131 : vector<2x1x32xf32> to vector<2x32xf32>
    %133 = vector.extract_strided_slice %126 {offsets = [0, 3, 0], sizes = [2, 1, 32], strides = [1, 1, 1]} : vector<2x10x32xf32> to vector<2x1x32xf32>
    %134 = vector.shape_cast %133 : vector<2x1x32xf32> to vector<2x32xf32>
    %135 = vector.extract_strided_slice %126 {offsets = [0, 4, 0], sizes = [2, 1, 32], strides = [1, 1, 1]} : vector<2x10x32xf32> to vector<2x1x32xf32>
    %136 = vector.shape_cast %135 : vector<2x1x32xf32> to vector<2x32xf32>
    %137 = vector.extract_strided_slice %126 {offsets = [0, 5, 0], sizes = [2, 1, 32], strides = [1, 1, 1]} : vector<2x10x32xf32> to vector<2x1x32xf32>
    %138 = vector.shape_cast %137 : vector<2x1x32xf32> to vector<2x32xf32>
    %139 = vector.extract_strided_slice %126 {offsets = [0, 6, 0], sizes = [2, 1, 32], strides = [1, 1, 1]} : vector<2x10x32xf32> to vector<2x1x32xf32>
    %140 = vector.shape_cast %139 : vector<2x1x32xf32> to vector<2x32xf32>
    %141 = vector.extract_strided_slice %126 {offsets = [0, 7, 0], sizes = [2, 1, 32], strides = [1, 1, 1]} : vector<2x10x32xf32> to vector<2x1x32xf32>
    %142 = vector.shape_cast %141 : vector<2x1x32xf32> to vector<2x32xf32>
    %143 = vector.extract_strided_slice %126 {offsets = [0, 8, 0], sizes = [2, 1, 32], strides = [1, 1, 1]} : vector<2x10x32xf32> to vector<2x1x32xf32>
    %144 = vector.shape_cast %143 : vector<2x1x32xf32> to vector<2x32xf32>
    %145 = vector.extract_strided_slice %126 {offsets = [0, 9, 0], sizes = [2, 1, 32], strides = [1, 1, 1]} : vector<2x10x32xf32> to vector<2x1x32xf32>
    %146 = vector.shape_cast %145 : vector<2x1x32xf32> to vector<2x32xf32>
    %147 = tpu.concatenate %128, %130, %132, %134, %136, %138, %140, %142, %144, %146 in 1 : vector<2x32xf32>, vector<2x32xf32>, vector<2x32xf32>, vector<2x32xf32>, vector<2x32xf32>, vector<2x32xf32>, vector<2x32xf32>, vector<2x32xf32>, vector<2x32xf32>, vector<2x32xf32> -> vector<2x320xf32>
    %c0_40 = arith.constant 0 : index
    %c0_41 = arith.constant 0 : index
    %c0_42 = arith.constant 0 : index
    %148 = vector.load %arg2[%c0_40, %c0_41, %c0_42] : memref<1x2x1xf32, #tpu.memory_space<vmem>>, vector<1x2x1xf32>
    %149 = vector.shape_cast %148 : vector<1x2x1xf32> to vector<2x1xf32>
    %c0_43 = arith.constant 0 : index
    %c0_44 = arith.constant 0 : index
    %150 = vector.load %arg7[%c0_43, %c0_44] : memref<1x32xf32, #tpu.memory_space<vmem>>, vector<1x32xf32>
    %151 = vector.broadcast %149 : vector<2x1xf32> to vector<2x32xf32>
    %152 = vector.broadcast %150 : vector<1x32xf32> to vector<2x32xf32>
    %153 = arith.mulf %151, %152 : vector<2x32xf32>
    %c0_45 = arith.constant 0 : index
    %c0_46 = arith.constant 0 : index
    %154 = vector.load %arg8[%c0_45, %c0_46] : memref<1x32xf32, #tpu.memory_space<vmem>>, vector<1x32xf32>
    %155 = vector.broadcast %154 : vector<1x32xf32> to vector<2x32xf32>
    %156 = arith.addf %153, %155 : vector<2x32xf32>
    %cst_47 = arith.constant 0.000000e+00 : f32
    %157 = vector.broadcast %cst_47 : f32 to vector<2x32xf32>
    %158 = arith.maximumf %156, %157 : vector<2x32xf32>
    %c0_48 = arith.constant 0 : index
    %c0_49 = arith.constant 0 : index
    %159 = vector.load %arg9[%c0_48, %c0_49] : memref<32x64xf32, #tpu.memory_space<vmem>>, vector<32x64xf32>
    %cst_50 = arith.constant dense<0.000000e+00> : vector<2x64xf32>
    %160 = tpu.matmul %158, %159, %cst_50 {dimension_numbers = #tpu.dot_dimension_numbers<[1], [0], [0], [1], [0, 0, 1, 1], [], []>} : vector<2x32xf32>, vector<32x64xf32>, vector<2x64xf32> -> vector<2x64xf32>
    %c0_51 = arith.constant 0 : index
    %c0_52 = arith.constant 0 : index
    %161 = vector.load %arg10[%c0_51, %c0_52] : memref<1x64xf32, #tpu.memory_space<vmem>>, vector<1x64xf32>
    %162 = vector.broadcast %161 : vector<1x64xf32> to vector<2x64xf32>
    %163 = arith.addf %160, %162 : vector<2x64xf32>
    %cst_53 = arith.constant 0.000000e+00 : f32
    %164 = vector.broadcast %cst_53 : f32 to vector<2x64xf32>
    %165 = arith.maximumf %163, %164 : vector<2x64xf32>
    %c0_54 = arith.constant 0 : index
    %c0_55 = arith.constant 0 : index
    %166 = vector.load %arg11[%c0_54, %c0_55] : memref<320x64xf32, #tpu.memory_space<vmem>>, vector<320x64xf32>
    %cst_56 = arith.constant dense<0.000000e+00> : vector<2x64xf32>
    %167 = tpu.matmul %147, %166, %cst_56 {dimension_numbers = #tpu.dot_dimension_numbers<[1], [0], [0], [1], [0, 0, 1, 1], [], []>} : vector<2x320xf32>, vector<320x64xf32>, vector<2x64xf32> -> vector<2x64xf32>
    %c0_57 = arith.constant 0 : index
    %c0_58 = arith.constant 0 : index
    %168 = vector.load %arg12[%c0_57, %c0_58] : memref<64x64xf32, #tpu.memory_space<vmem>>, vector<64x64xf32>
    %cst_59 = arith.constant dense<0.000000e+00> : vector<2x64xf32>
    %169 = tpu.matmul %165, %168, %cst_59 {dimension_numbers = #tpu.dot_dimension_numbers<[1], [0], [0], [1], [0, 0, 1, 1], [], []>} : vector<2x64xf32>, vector<64x64xf32>, vector<2x64xf32> -> vector<2x64xf32>
    %170 = arith.addf %167, %169 : vector<2x64xf32>
    %c0_60 = arith.constant 0 : index
    %c0_61 = arith.constant 0 : index
    %171 = vector.load %arg13[%c0_60, %c0_61] : memref<1x64xf32, #tpu.memory_space<vmem>>, vector<1x64xf32>
    %172 = vector.broadcast %171 : vector<1x64xf32> to vector<2x64xf32>
    %173 = arith.addf %170, %172 : vector<2x64xf32>
    %cst_62 = arith.constant 0.000000e+00 : f32
    %174 = vector.broadcast %cst_62 : f32 to vector<2x64xf32>
    %175 = arith.maximumf %173, %174 : vector<2x64xf32>
    %c0_63 = arith.constant 0 : index
    %c0_64 = arith.constant 0 : index
    %176 = vector.load %arg14[%c0_63, %c0_64] : memref<64x1xf32, #tpu.memory_space<vmem>>, vector<64x1xf32>
    %cst_65 = arith.constant dense<0.000000e+00> : vector<2x1xf32>
    %177 = tpu.matmul %175, %176, %cst_65 {dimension_numbers = #tpu.dot_dimension_numbers<[1], [0], [0], [1], [0, 0, 1, 1], [], []>} : vector<2x64xf32>, vector<64x1xf32>, vector<2x1xf32> -> vector<2x1xf32>
    %c0_66 = arith.constant 0 : index
    %c0_67 = arith.constant 0 : index
    %178 = vector.load %arg15[%c0_66, %c0_67] : memref<1x1xf32, #tpu.memory_space<vmem>>, vector<1x1xf32>
    %179 = vector.broadcast %178 : vector<1x1xf32> to vector<2x1xf32>
    %180 = arith.addf %177, %179 : vector<2x1xf32>
    %c0_68 = arith.constant 0 : index
    %c0_69 = arith.constant 0 : index
    %c0_70 = arith.constant 0 : index
    %181 = vector.load %arg16[%c0_68, %c0_69, %c0_70] : memref<1x2x1xf32, #tpu.memory_space<vmem>>, vector<1x2x1xf32>
    %182 = vector.shape_cast %181 : vector<1x2x1xf32> to vector<2x1xf32>
    %183 = vector.shape_cast %180 : vector<2x1xf32> to vector<1x2x1xf32>
    tpu.vector_store %arg16[%c0_68, %c0_69, %c0_70], %183 {strides = array<i32>} : memref<1x2x1xf32, #tpu.memory_space<vmem>>, vector<1x2x1xf32>,
    return
  }
  func.func @transform_0(%arg0: i32) -> (i32, i32, i32) {
    %c0_i32 = arith.constant 0 : i32
    %c0_i32_0 = arith.constant 0 : i32
    %c0_i32_1 = arith.constant 0 : i32
    return %arg0, %c0_i32, %c0_i32_0 : i32, i32, i32
  }
  func.func @transform_1(%arg0: i32) -> (i32, i32, i32) {
    %c0_i32 = arith.constant 0 : i32
    %c0_i32_0 = arith.constant 0 : i32
    %c0_i32_1 = arith.constant 0 : i32
    return %arg0, %c0_i32, %c0_i32_0 : i32, i32, i32
  }
  func.func @transform_2(%arg0: i32) -> (i32, i32) {
    %c0_i32 = arith.constant 0 : i32
    %c0_i32_0 = arith.constant 0 : i32
    %c0_i32_1 = arith.constant 0 : i32
    return %c0_i32, %c0_i32_0 : i32, i32
  }
  func.func @transform_3(%arg0: i32) -> (i32, i32) {
    %c0_i32 = arith.constant 0 : i32
    %c0_i32_0 = arith.constant 0 : i32
    %c0_i32_1 = arith.constant 0 : i32
    return %c0_i32, %c0_i32_0 : i32, i32
  }
  func.func @transform_4(%arg0: i32) -> (i32, i32) {
    %c0_i32 = arith.constant 0 : i32
    %c0_i32_0 = arith.constant 0 : i32
    %c0_i32_1 = arith.constant 0 : i32
    return %c0_i32, %c0_i32_0 : i32, i32
  }
  func.func @transform_5(%arg0: i32) -> (i32, i32) {
    %c0_i32 = arith.constant 0 : i32
    %c0_i32_0 = arith.constant 0 : i32
    %c0_i32_1 = arith.constant 0 : i32
    return %c0_i32, %c0_i32_0 : i32, i32
  }
  func.func @transform_6(%arg0: i32) -> (i32, i32) {
    %c0_i32 = arith.constant 0 : i32
    %c0_i32_0 = arith.constant 0 : i32
    %c0_i32_1 = arith.constant 0 : i32
    return %c0_i32, %c0_i32_0 : i32, i32
  }
  func.func @transform_7(%arg0: i32) -> (i32, i32) {
    %c0_i32 = arith.constant 0 : i32
    %c0_i32_0 = arith.constant 0 : i32
    %c0_i32_1 = arith.constant 0 : i32
    return %c0_i32, %c0_i32_0 : i32, i32
  }
  func.func @transform_8(%arg0: i32) -> (i32, i32) {
    %c0_i32 = arith.constant 0 : i32
    %c0_i32_0 = arith.constant 0 : i32
    %c0_i32_1 = arith.constant 0 : i32
    return %c0_i32, %c0_i32_0 : i32, i32
  }
  func.func @transform_9(%arg0: i32) -> (i32, i32) {
    %c0_i32 = arith.constant 0 : i32
    %c0_i32_0 = arith.constant 0 : i32
    %c0_i32_1 = arith.constant 0 : i32
    return %c0_i32, %c0_i32_0 : i32, i32
  }
  func.func @transform_10(%arg0: i32) -> (i32, i32) {
    %c0_i32 = arith.constant 0 : i32
    %c0_i32_0 = arith.constant 0 : i32
    %c0_i32_1 = arith.constant 0 : i32
    return %c0_i32, %c0_i32_0 : i32, i32
  }
  func.func @transform_11(%arg0: i32) -> (i32, i32) {
    %c0_i32 = arith.constant 0 : i32
    %c0_i32_0 = arith.constant 0 : i32
    %c0_i32_1 = arith.constant 0 : i32
    return %c0_i32, %c0_i32_0 : i32, i32
  }
  func.func @transform_12(%arg0: i32) -> (i32, i32) {
    %c0_i32 = arith.constant 0 : i32
    %c0_i32_0 = arith.constant 0 : i32
    %c0_i32_1 = arith.constant 0 : i32
    return %c0_i32, %c0_i32_0 : i32, i32
  }
  func.func @transform_13(%arg0: i32) -> (i32, i32) {
    %c0_i32 = arith.constant 0 : i32
    %c0_i32_0 = arith.constant 0 : i32
    %c0_i32_1 = arith.constant 0 : i32
    return %c0_i32, %c0_i32_0 : i32, i32
  }
  func.func @transform_14(%arg0: i32) -> (i32, i32) {
    %c0_i32 = arith.constant 0 : i32
    %c0_i32_0 = arith.constant 0 : i32
    %c0_i32_1 = arith.constant 0 : i32
    return %c0_i32, %c0_i32_0 : i32, i32
  }
  func.func @transform_15(%arg0: i32) -> (i32, i32, i32) {
    %c0_i32 = arith.constant 0 : i32
    %c0_i32_0 = arith.constant 0 : i32
    %c0_i32_1 = arith.constant 0 : i32
    return %arg0, %c0_i32, %c0_i32_0 : i32, i32, i32
  }
}

</mosaic_0001>

<llo_original>
// kernel: modified_simple_cnn_cond.1
$region0: #{modified_simple_cnn_cond.1}
  #allocation0 [shape = 'u32[]', space=smem, size = 0x4, offset = 0x4, fixed_abs, tag = 'smem constant byte address 0x4 - core index']
  #allocation1 [shape = 'u32[144,128]{1,0:T(1,128)}', space=vmem, size = 0x12000, scoped, tag = 'internal scratch']
  #allocation2 [shape = 'f32[1,1]{1,0:T(1,128)S(1)}', space=vmem, size = 0x200, scoped, tag = 'scoped memory for modified_simple_cnn_cond.1']
  %s0 = inlined_call_operand.vmem [shape: f32[1,200,4], index: 0, kind: input, shape index: {}]
  %s1 = inlined_call_operand.vmem [shape: f32[1,2,1], index: 1, kind: input, shape index: {}]
  %s2 = inlined_call_operand.vmem [shape: f32[36,16], index: 2, kind: input, shape index: {}]
  %s3 = inlined_call_operand.vmem [shape: f32[1,16], index: 3, kind: input, shape index: {}]
  %s4 = inlined_call_operand.vmem [shape: f32[48,32], index: 4, kind: input, shape index: {}]
  %s5 = inlined_call_operand.vmem [shape: f32[1,32], index: 5, kind: input, shape index: {}]
  %s6 = inlined_call_operand.vmem [shape: f32[1,32], index: 6, kind: input, shape index: {}]
  %s7 = inlined_call_operand.vmem [shape: f32[1,32], index: 7, kind: input, shape index: {}]
  %s8 = inlined_call_operand.vmem [shape: f32[32,64], index: 8, kind: input, shape index: {}]
  %s9 = inlined_call_operand.vmem [shape: f32[1,64], index: 9, kind: input, shape index: {}]
  %s10 = inlined_call_operand.vmem [shape: f32[320,64], index: 10, kind: input, shape index: {}]
  %s11 = inlined_call_operand.vmem [shape: f32[64,64], index: 11, kind: input, shape index: {}]
  %s12 = inlined_call_operand.vmem [shape: f32[1,64], index: 12, kind: input, shape index: {}]
  %s13 = inlined_call_operand.vmem [shape: f32[64,1], index: 13, kind: input, shape index: {}]
  %s14 = inlined_call_operand.<no memory space> [shape: f32[1,1], index: 14, kind: input, shape index: {}]
  %s15 = inlined_call_operand.vmem [shape: f32[1,2,1], index: 15, kind: output, shape index: {}]
  %s16 = sld [smem:[#allocation0]]
  $region70: #{modified_simple_cnn_cond.1} parent=0
    _
  %s18 = ssub.s32 1, %s16
  %s19 = scalar_select 0, %s18, %s16
  %v20 = vstv %s14
  %21 = vst [vmem:[#allocation2] sm:$0x1] %v20
  // Predicated region
  $region2: #{modified_simple_cnn_cond.1} parent=0 // pred_check
    _
  $region3: #{modified_simple_cnn_cond.1} parent=0 // pred_check_branch
    %23 = sbr.rel (0) target = $region5
  $region4: #{modified_simple_cnn_cond.1} parent=0 // pred_region
    _
  $region5: #{modified_simple_cnn_cond.1} parent=0 // pred_fallthru
    _
  // Predicated region
  $region6: #{modified_simple_cnn_cond.1} parent=0 // pred_check
    _
  $region7: #{modified_simple_cnn_cond.1} parent=0 // pred_check_branch
    %25 = sbr.rel (0) target = $region9
  $region8: #{modified_simple_cnn_cond.1} parent=0 // pred_region
    _
  $region9: #{modified_simple_cnn_cond.1} parent=0 // pred_fallthru
    _
  // Predicated region
  $region10: #{modified_simple_cnn_cond.1} parent=0 // pred_check
    _
  $region11: #{modified_simple_cnn_cond.1} parent=0 // pred_check_branch
    %27 = sbr.rel (0) target = $region13
  $region12: #{modified_simple_cnn_cond.1} parent=0 // pred_region
    _
  $region13: #{modified_simple_cnn_cond.1} parent=0 // pred_fallthru
    _
  // Predicated region
  $region14: #{modified_simple_cnn_cond.1} parent=0 // pred_check
    _
  $region15: #{modified_simple_cnn_cond.1} parent=0 // pred_check_branch
    %29 = sbr.rel (0) target = $region17
  $region16: #{modified_simple_cnn_cond.1} parent=0 // pred_region
    _
  $region17: #{modified_simple_cnn_cond.1} parent=0 // pred_fallthru
    _
  // Predicated region
  $region18: #{modified_simple_cnn_cond.1} parent=0 // pred_check
    _
  $region19: #{modified_simple_cnn_cond.1} parent=0 // pred_check_branch
    %31 = sbr.rel (0) target = $region21
  $region20: #{modified_simple_cnn_cond.1} parent=0 // pred_region
    _
  $region21: #{modified_simple_cnn_cond.1} parent=0 // pred_fallthru
    _
  // Predicated region
  $region22: #{modified_simple_cnn_cond.1} parent=0 // pred_check
    _
  $region23: #{modified_simple_cnn_cond.1} parent=0 // pred_check_branch
    %33 = sbr.rel (0) target = $region25
  $region24: #{modified_simple_cnn_cond.1} parent=0 // pred_region
    _
  $region25: #{modified_simple_cnn_cond.1} parent=0 // pred_fallthru
    _
  // Predicated region
  $region26: #{modified_simple_cnn_cond.1} parent=0 // pred_check
    _
  $region27: #{modified_simple_cnn_cond.1} parent=0 // pred_check_branch
    %35 = sbr.rel (0) target = $region29
  $region28: #{modified_simple_cnn_cond.1} parent=0 // pred_region
    _
  $region29: #{modified_simple_cnn_cond.1} parent=0 // pred_fallthru
    _
  // Predicated region
  $region30: #{modified_simple_cnn_cond.1} parent=0 // pred_check
    _
  $region31: #{modified_simple_cnn_cond.1} parent=0 // pred_check_branch
    %37 = sbr.rel (0) target = $region33
  $region32: #{modified_simple_cnn_cond.1} parent=0 // pred_region
    _
  $region33: #{modified_simple_cnn_cond.1} parent=0 // pred_fallthru
    _
  // Predicated region
  $region34: #{modified_simple_cnn_cond.1} parent=0 // pred_check
    _
  $region35: #{modified_simple_cnn_cond.1} parent=0 // pred_check_branch
    %39 = sbr.rel (0) target = $region37
  $region36: #{modified_simple_cnn_cond.1} parent=0 // pred_region
    _
  $region37: #{modified_simple_cnn_cond.1} parent=0 // pred_fallthru
    _
  // Predicated region
  $region38: #{modified_simple_cnn_cond.1} parent=0 // pred_check
    _
  $region39: #{modified_simple_cnn_cond.1} parent=0 // pred_check_branch
    %41 = sbr.rel (0) target = $region41
  $region40: #{modified_simple_cnn_cond.1} parent=0 // pred_region
    _
  $region41: #{modified_simple_cnn_cond.1} parent=0 // pred_fallthru
    _
  // Predicated region
  $region42: #{modified_simple_cnn_cond.1} parent=0 // pred_check
    _
  $region43: #{modified_simple_cnn_cond.1} parent=0 // pred_check_branch
    %43 = sbr.rel (0) target = $region45
  $region44: #{modified_simple_cnn_cond.1} parent=0 // pred_region
    _
  $region45: #{modified_simple_cnn_cond.1} parent=0 // pred_fallthru
    _
  // Predicated region
  $region46: #{modified_simple_cnn_cond.1} parent=0 // pred_check
    _
  $region47: #{modified_simple_cnn_cond.1} parent=0 // pred_check_branch
    %45 = sbr.rel (0) target = $region49
  $region48: #{modified_simple_cnn_cond.1} parent=0 // pred_region
    _
  $region49: #{modified_simple_cnn_cond.1} parent=0 // pred_fallthru
    _
  // Predicated region
  $region50: #{modified_simple_cnn_cond.1} parent=0 // pred_check
    _
  $region51: #{modified_simple_cnn_cond.1} parent=0 // pred_check_branch
    %47 = sbr.rel (0) target = $region53
  $region52: #{modified_simple_cnn_cond.1} parent=0 // pred_region
    _
  $region53: #{modified_simple_cnn_cond.1} parent=0 // pred_fallthru
    _
  // Predicated region
  $region54: #{modified_simple_cnn_cond.1} parent=0 // pred_check
    _
  $region55: #{modified_simple_cnn_cond.1} parent=0 // pred_check_branch
    %49 = sbr.rel (0) target = $region57
  $region56: #{modified_simple_cnn_cond.1} parent=0 // pred_region
    _
  $region57: #{modified_simple_cnn_cond.1} parent=0 // pred_fallthru
    _
  // Predicated region
  $region58: #{modified_simple_cnn_cond.1} parent=0 // pred_check
    _
  $region59: #{modified_simple_cnn_cond.1} parent=0 // pred_check_branch
    %51 = sbr.rel (0) target = $region61
  $region60: #{modified_simple_cnn_cond.1} parent=0 // pred_region
    _
  $region61: #{modified_simple_cnn_cond.1} parent=0 // pred_fallthru
    _
  %v52 = vld [vmem:[%s0] sm:$0xff]
  %v53 = vld [vmem:[%s0 + $0x8] sm:$0xff]
  %v54 = vld [vmem:[%s0 + $0x10] sm:$0xff]
  %v55 = vld [vmem:[%s0 + $0x18] sm:$0xff]
  %v56 = vld [vmem:[%s0 + $0x20] sm:$0xff]
  %v57 = vld [vmem:[%s0 + $0x28] sm:$0xff]
  %v58 = vld [vmem:[%s0 + $0x30] sm:$0xff]
  %v59 = vld [vmem:[%s0 + $0x38] sm:$0xff]
  %v60 = vld [vmem:[%s0 + $0x40] sm:$0xff]
  %v61 = vld [vmem:[%s0 + $0x48] sm:$0xff]
  %v62 = vld [vmem:[%s0 + $0x50] sm:$0xff]
  %v63 = vld [vmem:[%s0 + $0x58] sm:$0xff]
  %v64 = vld [vmem:[%s0 + $0x60] sm:$0xff]
  %v65 = vld [vmem:[%s0 + $0x68] sm:$0xff]
  %v66 = vld [vmem:[%s0 + $0x70] sm:$0xff]
  %v67 = vld [vmem:[%s0 + $0x78] sm:$0xff]
  %v68 = vld [vmem:[%s0 + $0x80] sm:$0xff]
  %v69 = vld [vmem:[%s0 + $0x88] sm:$0xff]
  %v70 = vld [vmem:[%s0 + $0x90] sm:$0xff]
  %v71 = vld [vmem:[%s0 + $0x98] sm:$0xff]
  %v72 = vld [vmem:[%s0 + $0xa0] sm:$0xff]
  %v73 = vld [vmem:[%s0 + $0xa8] sm:$0xff]
  %v74 = vld [vmem:[%s0 + $0xb0] sm:$0xff]
  %v75 = vld [vmem:[%s0 + $0xb8] sm:$0xff]
  %v76 = vld [vmem:[%s0 + $0xc0] sm:$0xff]
  %v77 = vlaneseq
  %v78 = vshrl.u32 %v77, 7
  %v79 = vadd.s32 %v78, 8
  %v80 = vadd.s32 %v78, 16
  %v81 = vadd.s32 %v78, 24
  %v82 = vadd.s32 %v78, 32
  %v83 = vadd.s32 %v78, 40
  %v84 = vadd.s32 %v78, 48
  %v85 = vadd.s32 %v78, 56
  %v86 = vadd.s32 %v78, 64
  %v87 = vadd.s32 %v78, 72
  %v88 = vadd.s32 %v78, 80
  %v89 = vadd.s32 %v78, 88
  %v90 = vadd.s32 %v78, 96
  %v91 = vadd.s32 %v78, 104
  %v92 = vadd.s32 %v78, 112
  %v93 = vadd.s32 %v78, 120
  %v94 = vadd.s32 %v78, 128
  %v95 = vadd.s32 %v78, 136
  %v96 = vadd.s32 %v78, 144
  %v97 = vadd.s32 %v78, 152
  %v98 = vadd.s32 %v78, 160
  %v99 = vadd.s32 %v78, 168
  %v100 = vadd.s32 %v78, 176
  %v101 = vadd.s32 %v78, 184
  %v102 = vadd.s32 %v78, 192
  %vm103 = vcmp.lt.s32.totalorder %v78, 0
  %v104 = vsub.s32 0, %v78
  %v105 = vsel %vm103, %v104, %v78
  %v106 = vmul.u32.u64.compose %v105, 2748779070
  %v107 = vextract.low.u32 %v106
  %v108 = vextract.high.u32 %v106
  %v109 = vshrl.u32 %v108, 6
  %v110 = vmul.u32 %v109, 100
  %v111 = vsub.s32 %v105, %v110
  %v112 = vsub.s32 0, %v111
  %v113 = vsel %vm103, %v112, %v111
  %vm114 = vcmp.lt.s32.totalorder %v79, 0
  %v115 = vsub.s32 0, %v79
  %v116 = vsel %vm114, %v115, %v79
  %v117 = vmul.u32.u64.compose %v116, 2748779070
  %v118 = vextract.low.u32 %v117
  %v119 = vextract.high.u32 %v117
  %v120 = vshrl.u32 %v119, 6
  %v121 = vmul.u32 %v120, 100
  %v122 = vsub.s32 %v116, %v121
  %v123 = vsub.s32 0, %v122
  %v124 = vsel %vm114, %v123, %v122
  %vm125 = vcmp.lt.s32.totalorder %v80, 0
  %v126 = vsub.s32 0, %v80
  %v127 = vsel %vm125, %v126, %v80
  %v128 = vmul.u32.u64.compose %v127, 2748779070
  %v129 = vextract.low.u32 %v128
  %v130 = vextract.high.u32 %v128
  %v131 = vshrl.u32 %v130, 6
  %v132 = vmul.u32 %v131, 100
  %v133 = vsub.s32 %v127, %v132
  %v134 = vsub.s32 0, %v133
  %v135 = vsel %vm125, %v134, %v133
  %vm136 = vcmp.lt.s32.totalorder %v81, 0
  %v137 = vsub.s32 0, %v81
  %v138 = vsel %vm136, %v137, %v81
  %v139 = vmul.u32.u64.compose %v138, 2748779070
  %v140 = vextract.low.u32 %v139
  %v141 = vextract.high.u32 %v139
  %v142 = vshrl.u32 %v141, 6
  %v143 = vmul.u32 %v142, 100
  %v144 = vsub.s32 %v138, %v143
  %v145 = vsub.s32 0, %v144
  %v146 = vsel %vm136, %v145, %v144
  %vm147 = vcmp.lt.s32.totalorder %v82, 0
  %v148 = vsub.s32 0, %v82
  %v149 = vsel %vm147, %v148, %v82
  %v150 = vmul.u32.u64.compose %v149, 2748779070
  %v151 = vextract.low.u32 %v150
  %v152 = vextract.high.u32 %v150
  %v153 = vshrl.u32 %v152, 6
  %v154 = vmul.u32 %v153, 100
  %v155 = vsub.s32 %v149, %v154
  %v156 = vsub.s32 0, %v155
  %v157 = vsel %vm147, %v156, %v155
  %vm158 = vcmp.lt.s32.totalorder %v83, 0
  %v159 = vsub.s32 0, %v83
  %v160 = vsel %vm158, %v159, %v83
  %v161 = vmul.u32.u64.compose %v160, 2748779070
  %v162 = vextract.low.u32 %v161
  %v163 = vextract.high.u32 %v161
  %v164 = vshrl.u32 %v163, 6
  %v165 = vmul.u32 %v164, 100
  %v166 = vsub.s32 %v160, %v165
  %v167 = vsub.s32 0, %v166
  %v168 = vsel %vm158, %v167, %v166
  %vm169 = vcmp.lt.s32.totalorder %v84, 0
  %v170 = vsub.s32 0, %v84
  %v171 = vsel %vm169, %v170, %v84
  %v172 = vmul.u32.u64.compose %v171, 2748779070
  %v173 = vextract.low.u32 %v172
  %v174 = vextract.high.u32 %v172
  %v175 = vshrl.u32 %v174, 6
  %v176 = vmul.u32 %v175, 100
  %v177 = vsub.s32 %v171, %v176
  %v178 = vsub.s32 0, %v177
  %v179 = vsel %vm169, %v178, %v177
  %vm180 = vcmp.lt.s32.totalorder %v85, 0
  %v181 = vsub.s32 0, %v85
  %v182 = vsel %vm180, %v181, %v85
  %v183 = vmul.u32.u64.compose %v182, 2748779070
  %v184 = vextract.low.u32 %v183
  %v185 = vextract.high.u32 %v183
  %v186 = vshrl.u32 %v185, 6
  %v187 = vmul.u32 %v186, 100
  %v188 = vsub.s32 %v182, %v187
  %v189 = vsub.s32 0, %v188
  %v190 = vsel %vm180, %v189, %v188
  %vm191 = vcmp.lt.s32.totalorder %v86, 0
  %v192 = vsub.s32 0, %v86
  %v193 = vsel %vm191, %v192, %v86
  %v194 = vmul.u32.u64.compose %v193, 2748779070
  %v195 = vextract.low.u32 %v194
  %v196 = vextract.high.u32 %v194
  %v197 = vshrl.u32 %v196, 6
  %v198 = vmul.u32 %v197, 100
  %v199 = vsub.s32 %v193, %v198
  %v200 = vsub.s32 0, %v199
  %v201 = vsel %vm191, %v200, %v199
  %vm202 = vcmp.lt.s32.totalorder %v87, 0
  %v203 = vsub.s32 0, %v87
  %v204 = vsel %vm202, %v203, %v87
  %v205 = vmul.u32.u64.compose %v204, 2748779070
  %v206 = vextract.low.u32 %v205
  %v207 = vextract.high.u32 %v205
  %v208 = vshrl.u32 %v207, 6
  %v209 = vmul.u32 %v208, 100
  %v210 = vsub.s32 %v204, %v209
  %v211 = vsub.s32 0, %v210
  %v212 = vsel %vm202, %v211, %v210
  %vm213 = vcmp.lt.s32.totalorder %v88, 0
  %v214 = vsub.s32 0, %v88
  %v215 = vsel %vm213, %v214, %v88
  %v216 = vmul.u32.u64.compose %v215, 2748779070
  %v217 = vextract.low.u32 %v216
  %v218 = vextract.high.u32 %v216
  %v219 = vshrl.u32 %v218, 6
  %v220 = vmul.u32 %v219, 100
  %v221 = vsub.s32 %v215, %v220
  %v222 = vsub.s32 0, %v221
  %v223 = vsel %vm213, %v222, %v221
  %vm224 = vcmp.lt.s32.totalorder %v89, 0
  %v225 = vsub.s32 0, %v89
  %v226 = vsel %vm224, %v225, %v89
  %v227 = vmul.u32.u64.compose %v226, 2748779070
  %v228 = vextract.low.u32 %v227
  %v229 = vextract.high.u32 %v227
  %v230 = vshrl.u32 %v229, 6
  %v231 = vmul.u32 %v230, 100
  %v232 = vsub.s32 %v226, %v231
  %v233 = vsub.s32 0, %v232
  %v234 = vsel %vm224, %v233, %v232
  %vm235 = vcmp.lt.s32.totalorder %v90, 0
  %v236 = vsub.s32 0, %v90
  %v237 = vsel %vm235, %v236, %v90
  %v238 = vmul.u32.u64.compose %v237, 2748779070
  %v239 = vextract.low.u32 %v238
  %v240 = vextract.high.u32 %v238
  %v241 = vshrl.u32 %v240, 6
  %v242 = vmul.u32 %v241, 100
  %v243 = vsub.s32 %v237, %v242
  %v244 = vsub.s32 0, %v243
  %v245 = vsel %vm235, %v244, %v243
  %vm246 = vcmp.lt.s32.totalorder %v91, 0
  %v247 = vsub.s32 0, %v91
  %v248 = vsel %vm246, %v247, %v91
  %v249 = vmul.u32.u64.compose %v248, 2748779070
  %v250 = vextract.low.u32 %v249
  %v251 = vextract.high.u32 %v249
  %v252 = vshrl.u32 %v251, 6
  %v253 = vmul.u32 %v252, 100
  %v254 = vsub.s32 %v248, %v253
  %v255 = vsub.s32 0, %v254
  %v256 = vsel %vm246, %v255, %v254
  %vm257 = vcmp.lt.s32.totalorder %v92, 0
  %v258 = vsub.s32 0, %v92
  %v259 = vsel %vm257, %v258, %v92
  %v260 = vmul.u32.u64.compose %v259, 2748779070
  %v261 = vextract.low.u32 %v260
  %v262 = vextract.high.u32 %v260
  %v263 = vshrl.u32 %v262, 6
  %v264 = vmul.u32 %v263, 100
  %v265 = vsub.s32 %v259, %v264
  %v266 = vsub.s32 0, %v265
  %v267 = vsel %vm257, %v266, %v265
  %vm268 = vcmp.lt.s32.totalorder %v93, 0
  %v269 = vsub.s32 0, %v93
  %v270 = vsel %vm268, %v269, %v93
  %v271 = vmul.u32.u64.compose %v270, 2748779070
  %v272 = vextract.low.u32 %v271
  %v273 = vextract.high.u32 %v271
  %v274 = vshrl.u32 %v273, 6
  %v275 = vmul.u32 %v274, 100
  %v276 = vsub.s32 %v270, %v275
  %v277 = vsub.s32 0, %v276
  %v278 = vsel %vm268, %v277, %v276
  %vm279 = vcmp.lt.s32.totalorder %v94, 0
  %v280 = vsub.s32 0, %v94
  %v281 = vsel %vm279, %v280, %v94
  %v282 = vmul.u32.u64.compose %v281, 2748779070
  %v283 = vextract.low.u32 %v282
  %v284 = vextract.high.u32 %v282
  %v285 = vshrl.u32 %v284, 6
  %v286 = vmul.u32 %v285, 100
  %v287 = vsub.s32 %v281, %v286
  %v288 = vsub.s32 0, %v287
  %v289 = vsel %vm279, %v288, %v287
  %vm290 = vcmp.lt.s32.totalorder %v95, 0
  %v291 = vsub.s32 0, %v95
  %v292 = vsel %vm290, %v291, %v95
  %v293 = vmul.u32.u64.compose %v292, 2748779070
  %v294 = vextract.low.u32 %v293
  %v295 = vextract.high.u32 %v293
  %v296 = vshrl.u32 %v295, 6
  %v297 = vmul.u32 %v296, 100
  %v298 = vsub.s32 %v292, %v297
  %v299 = vsub.s32 0, %v298
  %v300 = vsel %vm290, %v299, %v298
  %vm301 = vcmp.lt.s32.totalorder %v96, 0
  %v302 = vsub.s32 0, %v96
  %v303 = vsel %vm301, %v302, %v96
  %v304 = vmul.u32.u64.compose %v303, 2748779070
  %v305 = vextract.low.u32 %v304
  %v306 = vextract.high.u32 %v304
  %v307 = vshrl.u32 %v306, 6
  %v308 = vmul.u32 %v307, 100
  %v309 = vsub.s32 %v303, %v308
  %v310 = vsub.s32 0, %v309
  %v311 = vsel %vm301, %v310, %v309
  %vm312 = vcmp.lt.s32.totalorder %v97, 0
  %v313 = vsub.s32 0, %v97
  %v314 = vsel %vm312, %v313, %v97
  %v315 = vmul.u32.u64.compose %v314, 2748779070
  %v316 = vextract.low.u32 %v315
  %v317 = vextract.high.u32 %v315
  %v318 = vshrl.u32 %v317, 6
  %v319 = vmul.u32 %v318, 100
  %v320 = vsub.s32 %v314, %v319
  %v321 = vsub.s32 0, %v320
  %v322 = vsel %vm312, %v321, %v320
  %vm323 = vcmp.lt.s32.totalorder %v98, 0
  %v324 = vsub.s32 0, %v98
  %v325 = vsel %vm323, %v324, %v98
  %v326 = vmul.u32.u64.compose %v325, 2748779070
  %v327 = vextract.low.u32 %v326
  %v328 = vextract.high.u32 %v326
  %v329 = vshrl.u32 %v328, 6
  %v330 = vmul.u32 %v329, 100
  %v331 = vsub.s32 %v325, %v330
  %v332 = vsub.s32 0, %v331
  %v333 = vsel %vm323, %v332, %v331
  %vm334 = vcmp.lt.s32.totalorder %v99, 0
  %v335 = vsub.s32 0, %v99
  %v336 = vsel %vm334, %v335, %v99
  %v337 = vmul.u32.u64.compose %v336, 2748779070
  %v338 = vextract.low.u32 %v337
  %v339 = vextract.high.u32 %v337
  %v340 = vshrl.u32 %v339, 6
  %v341 = vmul.u32 %v340, 100
  %v342 = vsub.s32 %v336, %v341
  %v343 = vsub.s32 0, %v342
  %v344 = vsel %vm334, %v343, %v342
  %vm345 = vcmp.lt.s32.totalorder %v100, 0
  %v346 = vsub.s32 0, %v100
  %v347 = vsel %vm345, %v346, %v100
  %v348 = vmul.u32.u64.compose %v347, 2748779070
  %v349 = vextract.low.u32 %v348
  %v350 = vextract.high.u32 %v348
  %v351 = vshrl.u32 %v350, 6
  %v352 = vmul.u32 %v351, 100
  %v353 = vsub.s32 %v347, %v352
  %v354 = vsub.s32 0, %v353
  %v355 = vsel %vm345, %v354, %v353
  %vm356 = vcmp.lt.s32.totalorder %v101, 0
  %v357 = vsub.s32 0, %v101
  %v358 = vsel %vm356, %v357, %v101
  %v359 = vmul.u32.u64.compose %v358, 2748779070
  %v360 = vextract.low.u32 %v359
  %v361 = vextract.high.u32 %v359
  %v362 = vshrl.u32 %v361, 6
  %v363 = vmul.u32 %v362, 100
  %v364 = vsub.s32 %v358, %v363
  %v365 = vsub.s32 0, %v364
  %v366 = vsel %vm356, %v365, %v364
  %vm367 = vcmp.lt.s32.totalorder %v102, 0
  %v368 = vsub.s32 0, %v102
  %v369 = vsel %vm367, %v368, %v102
  %v370 = vmul.u32.u64.compose %v369, 2748779070
  %v371 = vextract.low.u32 %v370
  %v372 = vextract.high.u32 %v370
  %v373 = vshrl.u32 %v372, 6
  %v374 = vmul.u32 %v373, 100
  %v375 = vsub.s32 %v369, %v374
  %v376 = vsub.s32 0, %v375
  %v377 = vsel %vm367, %v376, %v375
  %vm378 = vcmp.ne.s32.totalorder %v113, 0
  %vm379 = vcmp.ne.s32.totalorder %v124, 0
  %vm380 = vcmp.ne.s32.totalorder %v135, 0
  %vm381 = vcmp.ne.s32.totalorder %v146, 0
  %vm382 = vcmp.ne.s32.totalorder %v157, 0
  %vm383 = vcmp.ne.s32.totalorder %v168, 0
  %vm384 = vcmp.ne.s32.totalorder %v179, 0
  %vm385 = vcmp.ne.s32.totalorder %v190, 0
  %vm386 = vcmp.ne.s32.totalorder %v201, 0
  %vm387 = vcmp.ne.s32.totalorder %v212, 0
  %vm388 = vcmp.ne.s32.totalorder %v223, 0
  %vm389 = vcmp.ne.s32.totalorder %v234, 0
  %vm390 = vcmp.ne.s32.totalorder %v245, 0
  %vm391 = vcmp.ne.s32.totalorder %v256, 0
  %vm392 = vcmp.ne.s32.totalorder %v267, 0
  %vm393 = vcmp.ne.s32.totalorder %v278, 0
  %vm394 = vcmp.ne.s32.totalorder %v289, 0
  %vm395 = vcmp.ne.s32.totalorder %v300, 0
  %vm396 = vcmp.ne.s32.totalorder %v311, 0
  %vm397 = vcmp.ne.s32.totalorder %v322, 0
  %vm398 = vcmp.ne.s32.totalorder %v333, 0
  %vm399 = vcmp.ne.s32.totalorder %v344, 0
  %vm400 = vcmp.ne.s32.totalorder %v355, 0
  %vm401 = vcmp.ne.s32.totalorder %v366, 0
  %vm402 = vcmp.ne.s32.totalorder %v377, 0
  %vm403 = vcmp.lt.s32.totalorder %v113, 0
  %vm404 = vcmp.lt.s32.totalorder %v124, 0
  %vm405 = vcmp.lt.s32.totalorder %v135, 0
  %vm406 = vcmp.lt.s32.totalorder %v146, 0
  %vm407 = vcmp.lt.s32.totalorder %v157, 0
  %vm408 = vcmp.lt.s32.totalorder %v168, 0
  %vm409 = vcmp.lt.s32.totalorder %v179, 0
  %vm410 = vcmp.lt.s32.totalorder %v190, 0
  %vm411 = vcmp.lt.s32.totalorder %v201, 0
  %vm412 = vcmp.lt.s32.totalorder %v212, 0
  %vm413 = vcmp.lt.s32.totalorder %v223, 0
  %vm414 = vcmp.lt.s32.totalorder %v234, 0
  %vm415 = vcmp.lt.s32.totalorder %v245, 0
  %vm416 = vcmp.lt.s32.totalorder %v256, 0
  %vm417 = vcmp.lt.s32.totalorder %v267, 0
  %vm418 = vcmp.lt.s32.totalorder %v278, 0
  %vm419 = vcmp.lt.s32.totalorder %v289, 0
  %vm420 = vcmp.lt.s32.totalorder %v300, 0
  %vm421 = vcmp.lt.s32.totalorder %v311, 0
  %vm422 = vcmp.lt.s32.totalorder %v322, 0
  %vm423 = vcmp.lt.s32.totalorder %v333, 0
  %vm424 = vcmp.lt.s32.totalorder %v344, 0
  %vm425 = vcmp.lt.s32.totalorder %v355, 0
  %vm426 = vcmp.lt.s32.totalorder %v366, 0
  %vm427 = vcmp.lt.s32.totalorder %v377, 0
  %vm428 = vmand %vm403, %vm378
  %vm429 = vmand %vm404, %vm379
  %vm430 = vmand %vm405, %vm380
  %vm431 = vmand %vm406, %vm381
  %vm432 = vmand %vm407, %vm382
  %vm433 = vmand %vm408, %vm383
  %vm434 = vmand %vm409, %vm384
  %vm435 = vmand %vm410, %vm385
  %vm436 = vmand %vm411, %vm386
  %vm437 = vmand %vm412, %vm387
  %vm438 = vmand %vm413, %vm388
  %vm439 = vmand %vm414, %vm389
  %vm440 = vmand %vm415, %vm390
  %vm441 = vmand %vm416, %vm391
  %vm442 = vmand %vm417, %vm392
  %vm443 = vmand %vm418, %vm393
  %vm444 = vmand %vm419, %vm394
  %vm445 = vmand %vm420, %vm395
  %vm446 = vmand %vm421, %vm396
  %vm447 = vmand %vm422, %vm397
  %vm448 = vmand %vm423, %vm398
  %vm449 = vmand %vm424, %vm399
  %vm450 = vmand %vm425, %vm400
  %vm451 = vmand %vm426, %vm401
  %vm452 = vmand %vm427, %vm402
  %v453 = vadd.s32 %v113, 100
  %v454 = vadd.s32 %v124, 100
  %v455 = vadd.s32 %v135, 100
  %v456 = vadd.s32 %v146, 100
  %v457 = vadd.s32 %v157, 100
  %v458 = vadd.s32 %v168, 100
  %v459 = vadd.s32 %v179, 100
  %v460 = vadd.s32 %v190, 100
  %v461 = vadd.s32 %v201, 100
  %v462 = vadd.s32 %v212, 100
  %v463 = vadd.s32 %v223, 100
  %v464 = vadd.s32 %v234, 100
  %v465 = vadd.s32 %v245, 100
  %v466 = vadd.s32 %v256, 100
  %v467 = vadd.s32 %v267, 100
  %v468 = vadd.s32 %v278, 100
  %v469 = vadd.s32 %v289, 100
  %v470 = vadd.s32 %v300, 100
  %v471 = vadd.s32 %v311, 100
  %v472 = vadd.s32 %v322, 100
  %v473 = vadd.s32 %v333, 100
  %v474 = vadd.s32 %v344, 100
  %v475 = vadd.s32 %v355, 100
  %v476 = vadd.s32 %v366, 100
  %v477 = vadd.s32 %v377, 100
  %v478 = vsel %vm428, %v453, %v113
  %v479 = vsel %vm429, %v454, %v124
  %v480 = vsel %vm430, %v455, %v135
  %v481 = vsel %vm431, %v456, %v146
  %v482 = vsel %vm432, %v457, %v157
  %v483 = vsel %vm433, %v458, %v168
  %v484 = vsel %vm434, %v459, %v179
  %v485 = vsel %vm435, %v460, %v190
  %v486 = vsel %vm436, %v461, %v201
  %v487 = vsel %vm437, %v462, %v212
  %v488 = vsel %vm438, %v463, %v223
  %v489 = vsel %vm439, %v464, %v234
  %v490 = vsel %vm440, %v465, %v245
  %v491 = vsel %vm441, %v466, %v256
  %v492 = vsel %vm442, %v467, %v267
  %v493 = vsel %vm443, %v468, %v278
  %v494 = vsel %vm444, %v469, %v289
  %v495 = vsel %vm445, %v470, %v300
  %v496 = vsel %vm446, %v471, %v311
  %v497 = vsel %vm447, %v472, %v322
  %v498 = vsel %vm448, %v473, %v333
  %v499 = vsel %vm449, %v474, %v344
  %v500 = vsel %vm450, %v475, %v355
  %v501 = vsel %vm451, %v476, %v366
  %v502 = vsel %vm452, %v477, %v377
  %v503 = vrot.slane %v52, 4
  %v504 = vrot.slane %v53, 4
  %v505 = vrot.slane %v54, 4
  %v506 = vrot.slane %v55, 4
  %v507 = vrot.slane %v56, 4
  %v508 = vrot.slane %v57, 4
  %v509 = vrot.slane %v58, 4
  %v510 = vrot.slane %v59, 4
  %v511 = vrot.slane %v60, 4
  %v512 = vrot.slane %v61, 4
  %v513 = vrot.slane %v62, 4
  %v514 = vrot.slane %v63, 4
  %v515 = vrot.slane %v64, 4
  %v516 = vrot.slane %v65, 4
  %v517 = vrot.slane %v66, 4
  %v518 = vrot.slane %v67, 4
  %v519 = vrot.slane %v68, 4
  %v520 = vrot.slane %v69, 4
  %v521 = vrot.slane %v70, 4
  %v522 = vrot.slane %v71, 4
  %v523 = vrot.slane %v72, 4
  %v524 = vrot.slane %v73, 4
  %v525 = vrot.slane %v74, 4
  %v526 = vrot.slane %v75, 4
  %v527 = vrot.slane %v76, 4
  %vm528 = vcmp.lt.s32.totalorder %v78, 4
  %v529 = vsel %vm528, %v526, %v527
  %v530 = vsel %vm528, %v525, %v526
  %v531 = vsel %vm528, %v524, %v525
  %v532 = vsel %vm528, %v523, %v524
  %v533 = vsel %vm528, %v522, %v523
  %v534 = vsel %vm528, %v521, %v522
  %v535 = vsel %vm528, %v520, %v521
  %v536 = vsel %vm528, %v519, %v520
  %v537 = vsel %vm528, %v518, %v519
  %v538 = vsel %vm528, %v517, %v518
  %v539 = vsel %vm528, %v516, %v517
  %v540 = vsel %vm528, %v515, %v516
  %v541 = vsel %vm528, %v514, %v515
  %v542 = vsel %vm528, %v513, %v514
  %v543 = vsel %vm528, %v512, %v513
  %v544 = vsel %vm528, %v511, %v512
  %v545 = vsel %vm528, %v510, %v511
  %v546 = vsel %vm528, %v509, %v510
  %v547 = vsel %vm528, %v508, %v509
  %v548 = vsel %vm528, %v507, %v508
  %v549 = vsel %vm528, %v506, %v507
  %v550 = vsel %vm528, %v505, %v506
  %v551 = vsel %vm528, %v504, %v505
  %v552 = vsel %vm528, %v503, %v504
  %v553 = vsel %vm528, %v527, %v503
  %vm554 = vcmp.lt.s32.totalorder %v478, 4
  %vm555 = vcmp.lt.s32.totalorder %v479, 4
  %vm556 = vcmp.lt.s32.totalorder %v480, 4
  %vm557 = vcmp.lt.s32.totalorder %v481, 4
  %vm558 = vcmp.lt.s32.totalorder %v482, 4
  %vm559 = vcmp.lt.s32.totalorder %v483, 4
  %vm560 = vcmp.lt.s32.totalorder %v484, 4
  %vm561 = vcmp.lt.s32.totalorder %v485, 4
  %vm562 = vcmp.lt.s32.totalorder %v486, 4
  %vm563 = vcmp.lt.s32.totalorder %v487, 4
  %vm564 = vcmp.lt.s32.totalorder %v488, 4
  %vm565 = vcmp.lt.s32.totalorder %v489, 4
  %vm566 = vcmp.lt.s32.totalorder %v490, 4
  %vm567 = vcmp.lt.s32.totalorder %v491, 4
  %vm568 = vcmp.lt.s32.totalorder %v492, 4
  %vm569 = vcmp.lt.s32.totalorder %v493, 4
  %vm570 = vcmp.lt.s32.totalorder %v494, 4
  %vm571 = vcmp.lt.s32.totalorder %v495, 4
  %vm572 = vcmp.lt.s32.totalorder %v496, 4
  %vm573 = vcmp.lt.s32.totalorder %v497, 4
  %vm574 = vcmp.lt.s32.totalorder %v498, 4
  %vm575 = vcmp.lt.s32.totalorder %v499, 4
  %vm576 = vcmp.lt.s32.totalorder %v500, 4
  %vm577 = vcmp.lt.s32.totalorder %v501, 4
  %vm578 = vcmp.lt.s32.totalorder %v502, 4
  %v579 = vsel %vm554, 1, 0
  %v580 = vsel %vm555, 1, 0
  %v581 = vsel %vm556, 1, 0
  %v582 = vsel %vm557, 1, 0
  %v583 = vsel %vm558, 1, 0
  %v584 = vsel %vm559, 1, 0
  %v585 = vsel %vm560, 1, 0
  %v586 = vsel %vm561, 1, 0
  %v587 = vsel %vm562, 1, 0
  %v588 = vsel %vm563, 1, 0
  %v589 = vsel %vm564, 1, 0
  %v590 = vsel %vm565, 1, 0
  %v591 = vsel %vm566, 1, 0
  %v592 = vsel %vm567, 1, 0
  %v593 = vsel %vm568, 1, 0
  %v594 = vsel %vm569, 1, 0
  %v595 = vsel %vm570, 1, 0
  %v596 = vsel %vm571, 1, 0
  %v597 = vsel %vm572, 1, 0
  %v598 = vsel %vm573, 1, 0
  %v599 = vsel %vm574, 1, 0
  %v600 = vsel %vm575, 1, 0
  %v601 = vsel %vm576, 1, 0
  %v602 = vsel %vm577, 1, 0
  %v603 = vsel %vm578, 1, 0
  %vm604 = vcmp.eq.s32.totalorder %v579, 1
  %vm605 = vcmp.eq.s32.totalorder %v580, 1
  %vm606 = vcmp.eq.s32.totalorder %v581, 1
  %vm607 = vcmp.eq.s32.totalorder %v582, 1
  %vm608 = vcmp.eq.s32.totalorder %v583, 1
  %vm609 = vcmp.eq.s32.totalorder %v584, 1
  %vm610 = vcmp.eq.s32.totalorder %v585, 1
  %vm611 = vcmp.eq.s32.totalorder %v586, 1
  %vm612 = vcmp.eq.s32.totalorder %v587, 1
  %vm613 = vcmp.eq.s32.totalorder %v588, 1
  %vm614 = vcmp.eq.s32.totalorder %v589, 1
  %vm615 = vcmp.eq.s32.totalorder %v590, 1
  %vm616 = vcmp.eq.s32.totalorder %v591, 1
  %vm617 = vcmp.eq.s32.totalorder %v592, 1
  %vm618 = vcmp.eq.s32.totalorder %v593, 1
  %vm619 = vcmp.eq.s32.totalorder %v594, 1
  %vm620 = vcmp.eq.s32.totalorder %v595, 1
  %vm621 = vcmp.eq.s32.totalorder %v596, 1
  %vm622 = vcmp.eq.s32.totalorder %v597, 1
  %vm623 = vcmp.eq.s32.totalorder %v598, 1
  %vm624 = vcmp.eq.s32.totalorder %v599, 1
  %vm625 = vcmp.eq.s32.totalorder %v600, 1
  %vm626 = vcmp.eq.s32.totalorder %v601, 1
  %vm627 = vcmp.eq.s32.totalorder %v602, 1
  %vm628 = vcmp.eq.s32.totalorder %v603, 1
  %v629 = vsel %vm604, 0.0, %v553
  %v630 = vsel %vm605, 0.0, %v552
  %v631 = vsel %vm606, 0.0, %v551
  %v632 = vsel %vm607, 0.0, %v550
  %v633 = vsel %vm608, 0.0, %v549
  %v634 = vsel %vm609, 0.0, %v548
  %v635 = vsel %vm610, 0.0, %v547
  %v636 = vsel %vm611, 0.0, %v546
  %v637 = vsel %vm612, 0.0, %v545
  %v638 = vsel %vm613, 0.0, %v544
  %v639 = vsel %vm614, 0.0, %v543
  %v640 = vsel %vm615, 0.0, %v542
  %v641 = vsel %vm616, 0.0, %v541
  %v642 = vsel %vm617, 0.0, %v540
  %v643 = vsel %vm618, 0.0, %v539
  %v644 = vsel %vm619, 0.0, %v538
  %v645 = vsel %vm620, 0.0, %v537
  %v646 = vsel %vm621, 0.0, %v536
  %v647 = vsel %vm622, 0.0, %v535
  %v648 = vsel %vm623, 0.0, %v534
  %v649 = vsel %vm624, 0.0, %v533
  %v650 = vsel %vm625, 0.0, %v532
  %v651 = vsel %vm626, 0.0, %v531
  %v652 = vsel %vm627, 0.0, %v530
  %v653 = vsel %vm628, 0.0, %v529
  %v654 = vrot.slane %v52, 5
  %v655 = vrot.slane %v53, 5
  %v656 = vrot.slane %v54, 5
  %v657 = vrot.slane %v55, 5
  %v658 = vrot.slane %v56, 5
  %v659 = vrot.slane %v57, 5
  %v660 = vrot.slane %v58, 5
  %v661 = vrot.slane %v59, 5
  %v662 = vrot.slane %v60, 5
  %v663 = vrot.slane %v61, 5
  %v664 = vrot.slane %v62, 5
  %v665 = vrot.slane %v63, 5
  %v666 = vrot.slane %v64, 5
  %v667 = vrot.slane %v65, 5
  %v668 = vrot.slane %v66, 5
  %v669 = vrot.slane %v67, 5
  %v670 = vrot.slane %v68, 5
  %v671 = vrot.slane %v69, 5
  %v672 = vrot.slane %v70, 5
  %v673 = vrot.slane %v71, 5
  %v674 = vrot.slane %v72, 5
  %v675 = vrot.slane %v73, 5
  %v676 = vrot.slane %v74, 5
  %v677 = vrot.slane %v75, 5
  %v678 = vrot.slane %v76, 5
  %vm679 = vcmp.lt.s32.totalorder %v78, 3
  %v680 = vsel %vm679, %v677, %v678
  %v681 = vsel %vm679, %v676, %v677
  %v682 = vsel %vm679, %v675, %v676
  %v683 = vsel %vm679, %v674, %v675
  %v684 = vsel %vm679, %v673, %v674
  %v685 = vsel %vm679, %v672, %v673
  %v686 = vsel %vm679, %v671, %v672
  %v687 = vsel %vm679, %v670, %v671
  %v688 = vsel %vm679, %v669, %v670
  %v689 = vsel %vm679, %v668, %v669
  %v690 = vsel %vm679, %v667, %v668
  %v691 = vsel %vm679, %v666, %v667
  %v692 = vsel %vm679, %v665, %v666
  %v693 = vsel %vm679, %v664, %v665
  %v694 = vsel %vm679, %v663, %v664
  %v695 = vsel %vm679, %v662, %v663
  %v696 = vsel %vm679, %v661, %v662
  %v697 = vsel %vm679, %v660, %v661
  %v698 = vsel %vm679, %v659, %v660
  %v699 = vsel %vm679, %v658, %v659
  %v700 = vsel %vm679, %v657, %v658
  %v701 = vsel %vm679, %v656, %v657
  %v702 = vsel %vm679, %v655, %v656
  %v703 = vsel %vm679, %v654, %v655
  %v704 = vsel %vm679, %v678, %v654
  %vm705 = vcmp.lt.s32.totalorder %v478, 3
  %vm706 = vcmp.lt.s32.totalorder %v479, 3
  %vm707 = vcmp.lt.s32.totalorder %v480, 3
  %vm708 = vcmp.lt.s32.totalorder %v481, 3
  %vm709 = vcmp.lt.s32.totalorder %v482, 3
  %vm710 = vcmp.lt.s32.totalorder %v483, 3
  %vm711 = vcmp.lt.s32.totalorder %v484, 3
  %vm712 = vcmp.lt.s32.totalorder %v485, 3
  %vm713 = vcmp.lt.s32.totalorder %v486, 3
  %vm714 = vcmp.lt.s32.totalorder %v487, 3
  %vm715 = vcmp.lt.s32.totalorder %v488, 3
  %vm716 = vcmp.lt.s32.totalorder %v489, 3
  %vm717 = vcmp.lt.s32.totalorder %v490, 3
  %vm718 = vcmp.lt.s32.totalorder %v491, 3
  %vm719 = vcmp.lt.s32.totalorder %v492, 3
  %vm720 = vcmp.lt.s32.totalorder %v493, 3
  %vm721 = vcmp.lt.s32.totalorder %v494, 3
  %vm722 = vcmp.lt.s32.totalorder %v495, 3
  %vm723 = vcmp.lt.s32.totalorder %v496, 3
  %vm724 = vcmp.lt.s32.totalorder %v497, 3
  %vm725 = vcmp.lt.s32.totalorder %v498, 3
  %vm726 = vcmp.lt.s32.totalorder %v499, 3
  %vm727 = vcmp.lt.s32.totalorder %v500, 3
  %vm728 = vcmp.lt.s32.totalorder %v501, 3
  %vm729 = vcmp.lt.s32.totalorder %v502, 3
  %v730 = vsel %vm705, 1, 0
  %v731 = vsel %vm706, 1, 0
  %v732 = vsel %vm707, 1, 0
  %v733 = vsel %vm708, 1, 0
  %v734 = vsel %vm709, 1, 0
  %v735 = vsel %vm710, 1, 0
  %v736 = vsel %vm711, 1, 0
  %v737 = vsel %vm712, 1, 0
  %v738 = vsel %vm713, 1, 0
  %v739 = vsel %vm714, 1, 0
  %v740 = vsel %vm715, 1, 0
  %v741 = vsel %vm716, 1, 0
  %v742 = vsel %vm717, 1, 0
  %v743 = vsel %vm718, 1, 0
  %v744 = vsel %vm719, 1, 0
  %v745 = vsel %vm720, 1, 0
  %v746 = vsel %vm721, 1, 0
  %v747 = vsel %vm722, 1, 0
  %v748 = vsel %vm723, 1, 0
  %v749 = vsel %vm724, 1, 0
  %v750 = vsel %vm725, 1, 0
  %v751 = vsel %vm726, 1, 0
  %v752 = vsel %vm727, 1, 0
  %v753 = vsel %vm728, 1, 0
  %v754 = vsel %vm729, 1, 0
  %vm755 = vcmp.eq.s32.totalorder %v730, 1
  %vm756 = vcmp.eq.s32.totalorder %v731, 1
  %vm757 = vcmp.eq.s32.totalorder %v732, 1
  %vm758 = vcmp.eq.s32.totalorder %v733, 1
  %vm759 = vcmp.eq.s32.totalorder %v734, 1
  %vm760 = vcmp.eq.s32.totalorder %v735, 1
  %vm761 = vcmp.eq.s32.totalorder %v736, 1
  %vm762 = vcmp.eq.s32.totalorder %v737, 1
  %vm763 = vcmp.eq.s32.totalorder %v738, 1
  %vm764 = vcmp.eq.s32.totalorder %v739, 1
  %vm765 = vcmp.eq.s32.totalorder %v740, 1
  %vm766 = vcmp.eq.s32.totalorder %v741, 1
  %vm767 = vcmp.eq.s32.totalorder %v742, 1
  %vm768 = vcmp.eq.s32.totalorder %v743, 1
  %vm769 = vcmp.eq.s32.totalorder %v744, 1
  %vm770 = vcmp.eq.s32.totalorder %v745, 1
  %vm771 = vcmp.eq.s32.totalorder %v746, 1
  %vm772 = vcmp.eq.s32.totalorder %v747, 1
  %vm773 = vcmp.eq.s32.totalorder %v748, 1
  %vm774 = vcmp.eq.s32.totalorder %v749, 1
  %vm775 = vcmp.eq.s32.totalorder %v750, 1
  %vm776 = vcmp.eq.s32.totalorder %v751, 1
  %vm777 = vcmp.eq.s32.totalorder %v752, 1
  %vm778 = vcmp.eq.s32.totalorder %v753, 1
  %vm779 = vcmp.eq.s32.totalorder %v754, 1
  %v780 = vsel %vm755, 0.0, %v704
  %v781 = vsel %vm756, 0.0, %v703
  %v782 = vsel %vm757, 0.0, %v702
  %v783 = vsel %vm758, 0.0, %v701
  %v784 = vsel %vm759, 0.0, %v700
  %v785 = vsel %vm760, 0.0, %v699
  %v786 = vsel %vm761, 0.0, %v698
  %v787 = vsel %vm762, 0.0, %v697
  %v788 = vsel %vm763, 0.0, %v696
  %v789 = vsel %vm764, 0.0, %v695
  %v790 = vsel %vm765, 0.0, %v694
  %v791 = vsel %vm766, 0.0, %v693
  %v792 = vsel %vm767, 0.0, %v692
  %v793 = vsel %vm768, 0.0, %v691
  %v794 = vsel %vm769, 0.0, %v690
  %v795 = vsel %vm770, 0.0, %v689
  %v796 = vsel %vm771, 0.0, %v688
  %v797 = vsel %vm772, 0.0, %v687
  %v798 = vsel %vm773, 0.0, %v686
  %v799 = vsel %vm774, 0.0, %v685
  %v800 = vsel %vm775, 0.0, %v684
  %v801 = vsel %vm776, 0.0, %v683
  %v802 = vsel %vm777, 0.0, %v682
  %v803 = vsel %vm778, 0.0, %v681
  %v804 = vsel %vm779, 0.0, %v680
  %v805 = vrot.slane %v52, 6
  %v806 = vrot.slane %v53, 6
  %v807 = vrot.slane %v54, 6
  %v808 = vrot.slane %v55, 6
  %v809 = vrot.slane %v56, 6
  %v810 = vrot.slane %v57, 6
  %v811 = vrot.slane %v58, 6
  %v812 = vrot.slane %v59, 6
  %v813 = vrot.slane %v60, 6
  %v814 = vrot.slane %v61, 6
  %v815 = vrot.slane %v62, 6
  %v816 = vrot.slane %v63, 6
  %v817 = vrot.slane %v64, 6
  %v818 = vrot.slane %v65, 6
  %v819 = vrot.slane %v66, 6
  %v820 = vrot.slane %v67, 6
  %v821 = vrot.slane %v68, 6
  %v822 = vrot.slane %v69, 6
  %v823 = vrot.slane %v70, 6
  %v824 = vrot.slane %v71, 6
  %v825 = vrot.slane %v72, 6
  %v826 = vrot.slane %v73, 6
  %v827 = vrot.slane %v74, 6
  %v828 = vrot.slane %v75, 6
  %v829 = vrot.slane %v76, 6
  %vm830 = vcmp.lt.s32.totalorder %v78, 2
  %v831 = vsel %vm830, %v828, %v829
  %v832 = vsel %vm830, %v827, %v828
  %v833 = vsel %vm830, %v826, %v827
  %v834 = vsel %vm830, %v825, %v826
  %v835 = vsel %vm830, %v824, %v825
  %v836 = vsel %vm830, %v823, %v824
  %v837 = vsel %vm830, %v822, %v823
  %v838 = vsel %vm830, %v821, %v822
  %v839 = vsel %vm830, %v820, %v821
  %v840 = vsel %vm830, %v819, %v820
  %v841 = vsel %vm830, %v818, %v819
  %v842 = vsel %vm830, %v817, %v818
  %v843 = vsel %vm830, %v816, %v817
  %v844 = vsel %vm830, %v815, %v816
  %v845 = vsel %vm830, %v814, %v815
  %v846 = vsel %vm830, %v813, %v814
  %v847 = vsel %vm830, %v812, %v813
  %v848 = vsel %vm830, %v811, %v812
  %v849 = vsel %vm830, %v810, %v811
  %v850 = vsel %vm830, %v809, %v810
  %v851 = vsel %vm830, %v808, %v809
  %v852 = vsel %vm830, %v807, %v808
  %v853 = vsel %vm830, %v806, %v807
  %v854 = vsel %vm830, %v805, %v806
  %v855 = vsel %vm830, %v829, %v805
  %vm856 = vcmp.lt.s32.totalorder %v478, 2
  %vm857 = vcmp.lt.s32.totalorder %v479, 2
  %vm858 = vcmp.lt.s32.totalorder %v480, 2
  %vm859 = vcmp.lt.s32.totalorder %v481, 2
  %vm860 = vcmp.lt.s32.totalorder %v482, 2
  %vm861 = vcmp.lt.s32.totalorder %v483, 2
  %vm862 = vcmp.lt.s32.totalorder %v484, 2
  %vm863 = vcmp.lt.s32.totalorder %v485, 2
  %vm864 = vcmp.lt.s32.totalorder %v486, 2
  %vm865 = vcmp.lt.s32.totalorder %v487, 2
  %vm866 = vcmp.lt.s32.totalorder %v488, 2
  %vm867 = vcmp.lt.s32.totalorder %v489, 2
  %vm868 = vcmp.lt.s32.totalorder %v490, 2
  %vm869 = vcmp.lt.s32.totalorder %v491, 2
  %vm870 = vcmp.lt.s32.totalorder %v492, 2
  %vm871 = vcmp.lt.s32.totalorder %v493, 2
  %vm872 = vcmp.lt.s32.totalorder %v494, 2
  %vm873 = vcmp.lt.s32.totalorder %v495, 2
  %vm874 = vcmp.lt.s32.totalorder %v496, 2
  %vm875 = vcmp.lt.s32.totalorder %v497, 2
  %vm876 = vcmp.lt.s32.totalorder %v498, 2
  %vm877 = vcmp.lt.s32.totalorder %v499, 2
  %vm878 = vcmp.lt.s32.totalorder %v500, 2
  %vm879 = vcmp.lt.s32.totalorder %v501, 2
  %vm880 = vcmp.lt.s32.totalorder %v502, 2
  %v881 = vsel %vm856, 1, 0
  %v882 = vsel %vm857, 1, 0
  %v883 = vsel %vm858, 1, 0
  %v884 = vsel %vm859, 1, 0
  %v885 = vsel %vm860, 1, 0
  %v886 = vsel %vm861, 1, 0
  %v887 = vsel %vm862, 1, 0
  %v888 = vsel %vm863, 1, 0
  %v889 = vsel %vm864, 1, 0
  %v890 = vsel %vm865, 1, 0
  %v891 = vsel %vm866, 1, 0
  %v892 = vsel %vm867, 1, 0
  %v893 = vsel %vm868, 1, 0
  %v894 = vsel %vm869, 1, 0
  %v895 = vsel %vm870, 1, 0
  %v896 = vsel %vm871, 1, 0
  %v897 = vsel %vm872, 1, 0
  %v898 = vsel %vm873, 1, 0
  %v899 = vsel %vm874, 1, 0
  %v900 = vsel %vm875, 1, 0
  %v901 = vsel %vm876, 1, 0
  %v902 = vsel %vm877, 1, 0
  %v903 = vsel %vm878, 1, 0
  %v904 = vsel %vm879, 1, 0
  %v905 = vsel %vm880, 1, 0
  %vm906 = vcmp.eq.s32.totalorder %v881, 1
  %vm907 = vcmp.eq.s32.totalorder %v882, 1
  %vm908 = vcmp.eq.s32.totalorder %v883, 1
  %vm909 = vcmp.eq.s32.totalorder %v884, 1
  %vm910 = vcmp.eq.s32.totalorder %v885, 1
  %vm911 = vcmp.eq.s32.totalorder %v886, 1
  %vm912 = vcmp.eq.s32.totalorder %v887, 1
  %vm913 = vcmp.eq.s32.totalorder %v888, 1
  %vm914 = vcmp.eq.s32.totalorder %v889, 1
  %vm915 = vcmp.eq.s32.totalorder %v890, 1
  %vm916 = vcmp.eq.s32.totalorder %v891, 1
  %vm917 = vcmp.eq.s32.totalorder %v892, 1
  %vm918 = vcmp.eq.s32.totalorder %v893, 1
  %vm919 = vcmp.eq.s32.totalorder %v894, 1
  %vm920 = vcmp.eq.s32.totalorder %v895, 1
  %vm921 = vcmp.eq.s32.totalorder %v896, 1
  %vm922 = vcmp.eq.s32.totalorder %v897, 1
  %vm923 = vcmp.eq.s32.totalorder %v898, 1
  %vm924 = vcmp.eq.s32.totalorder %v899, 1
  %vm925 = vcmp.eq.s32.totalorder %v900, 1
  %vm926 = vcmp.eq.s32.totalorder %v901, 1
  %vm927 = vcmp.eq.s32.totalorder %v902, 1
  %vm928 = vcmp.eq.s32.totalorder %v903, 1
  %vm929 = vcmp.eq.s32.totalorder %v904, 1
  %vm930 = vcmp.eq.s32.totalorder %v905, 1
  %v931 = vsel %vm906, 0.0, %v855
  %v932 = vsel %vm907, 0.0, %v854
  %v933 = vsel %vm908, 0.0, %v853
  %v934 = vsel %vm909, 0.0, %v852
  %v935 = vsel %vm910, 0.0, %v851
  %v936 = vsel %vm911, 0.0, %v850
  %v937 = vsel %vm912, 0.0, %v849
  %v938 = vsel %vm913, 0.0, %v848
  %v939 = vsel %vm914, 0.0, %v847
  %v940 = vsel %vm915, 0.0, %v846
  %v941 = vsel %vm916, 0.0, %v845
  %v942 = vsel %vm917, 0.0, %v844
  %v943 = vsel %vm918, 0.0, %v843
  %v944 = vsel %vm919, 0.0, %v842
  %v945 = vsel %vm920, 0.0, %v841
  %v946 = vsel %vm921, 0.0, %v840
  %v947 = vsel %vm922, 0.0, %v839
  %v948 = vsel %vm923, 0.0, %v838
  %v949 = vsel %vm924, 0.0, %v837
  %v950 = vsel %vm925, 0.0, %v836
  %v951 = vsel %vm926, 0.0, %v835
  %v952 = vsel %vm927, 0.0, %v834
  %v953 = vsel %vm928, 0.0, %v833
  %v954 = vsel %vm929, 0.0, %v832
  %v955 = vsel %vm930, 0.0, %v831
  %v956 = vrot.slane %v52, 7
  %v957 = vrot.slane %v53, 7
  %v958 = vrot.slane %v54, 7
  %v959 = vrot.slane %v55, 7
  %v960 = vrot.slane %v56, 7
  %v961 = vrot.slane %v57, 7
  %v962 = vrot.slane %v58, 7
  %v963 = vrot.slane %v59, 7
  %v964 = vrot.slane %v60, 7
  %v965 = vrot.slane %v61, 7
  %v966 = vrot.slane %v62, 7
  %v967 = vrot.slane %v63, 7
  %v968 = vrot.slane %v64, 7
  %v969 = vrot.slane %v65, 7
  %v970 = vrot.slane %v66, 7
  %v971 = vrot.slane %v67, 7
  %v972 = vrot.slane %v68, 7
  %v973 = vrot.slane %v69, 7
  %v974 = vrot.slane %v70, 7
  %v975 = vrot.slane %v71, 7
  %v976 = vrot.slane %v72, 7
  %v977 = vrot.slane %v73, 7
  %v978 = vrot.slane %v74, 7
  %v979 = vrot.slane %v75, 7
  %v980 = vrot.slane %v76, 7
  %vm981 = vcmp.lt.s32.totalorder %v78, 1
  %v982 = vsel %vm981, %v979, %v980
  %v983 = vsel %vm981, %v978, %v979
  %v984 = vsel %vm981, %v977, %v978
  %v985 = vsel %vm981, %v976, %v977
  %v986 = vsel %vm981, %v975, %v976
  %v987 = vsel %vm981, %v974, %v975
  %v988 = vsel %vm981, %v973, %v974
  %v989 = vsel %vm981, %v972, %v973
  %v990 = vsel %vm981, %v971, %v972
  %v991 = vsel %vm981, %v970, %v971
  %v992 = vsel %vm981, %v969, %v970
  %v993 = vsel %vm981, %v968, %v969
  %v994 = vsel %vm981, %v967, %v968
  %v995 = vsel %vm981, %v966, %v967
  %v996 = vsel %vm981, %v965, %v966
  %v997 = vsel %vm981, %v964, %v965
  %v998 = vsel %vm981, %v963, %v964
  %v999 = vsel %vm981, %v962, %v963
  %v1000 = vsel %vm981, %v961, %v962
  %v1001 = vsel %vm981, %v960, %v961
  %v1002 = vsel %vm981, %v959, %v960
  %v1003 = vsel %vm981, %v958, %v959
  %v1004 = vsel %vm981, %v957, %v958
  %v1005 = vsel %vm981, %v956, %v957
  %v1006 = vsel %vm981, %v980, %v956
  %vm1007 = vcmp.lt.s32.totalorder %v478, 1
  %vm1008 = vcmp.lt.s32.totalorder %v479, 1
  %vm1009 = vcmp.lt.s32.totalorder %v480, 1
  %vm1010 = vcmp.lt.s32.totalorder %v481, 1
  %vm1011 = vcmp.lt.s32.totalorder %v482, 1
  %vm1012 = vcmp.lt.s32.totalorder %v483, 1
  %vm1013 = vcmp.lt.s32.totalorder %v484, 1
  %vm1014 = vcmp.lt.s32.totalorder %v485, 1
  %vm1015 = vcmp.lt.s32.totalorder %v486, 1
  %vm1016 = vcmp.lt.s32.totalorder %v487, 1
  %vm1017 = vcmp.lt.s32.totalorder %v488, 1
  %vm1018 = vcmp.lt.s32.totalorder %v489, 1
  %vm1019 = vcmp.lt.s32.totalorder %v490, 1
  %vm1020 = vcmp.lt.s32.totalorder %v491, 1
  %vm1021 = vcmp.lt.s32.totalorder %v492, 1
  %vm1022 = vcmp.lt.s32.totalorder %v493, 1
  %vm1023 = vcmp.lt.s32.totalorder %v494, 1
  %vm1024 = vcmp.lt.s32.totalorder %v495, 1
  %vm1025 = vcmp.lt.s32.totalorder %v496, 1
  %vm1026 = vcmp.lt.s32.totalorder %v497, 1
  %vm1027 = vcmp.lt.s32.totalorder %v498, 1
  %vm1028 = vcmp.lt.s32.totalorder %v499, 1
  %vm1029 = vcmp.lt.s32.totalorder %v500, 1
  %vm1030 = vcmp.lt.s32.totalorder %v501, 1
  %vm1031 = vcmp.lt.s32.totalorder %v502, 1
  %v1032 = vsel %vm1007, 1, 0
  %v1033 = vsel %vm1008, 1, 0
  %v1034 = vsel %vm1009, 1, 0
  %v1035 = vsel %vm1010, 1, 0
  %v1036 = vsel %vm1011, 1, 0
  %v1037 = vsel %vm1012, 1, 0
  %v1038 = vsel %vm1013, 1, 0
  %v1039 = vsel %vm1014, 1, 0
  %v1040 = vsel %vm1015, 1, 0
  %v1041 = vsel %vm1016, 1, 0
  %v1042 = vsel %vm1017, 1, 0
  %v1043 = vsel %vm1018, 1, 0
  %v1044 = vsel %vm1019, 1, 0
  %v1045 = vsel %vm1020, 1, 0
  %v1046 = vsel %vm1021, 1, 0
  %v1047 = vsel %vm1022, 1, 0
  %v1048 = vsel %vm1023, 1, 0
  %v1049 = vsel %vm1024, 1, 0
  %v1050 = vsel %vm1025, 1, 0
  %v1051 = vsel %vm1026, 1, 0
  %v1052 = vsel %vm1027, 1, 0
  %v1053 = vsel %vm1028, 1, 0
  %v1054 = vsel %vm1029, 1, 0
  %v1055 = vsel %vm1030, 1, 0
  %v1056 = vsel %vm1031, 1, 0
  %vm1057 = vcmp.eq.s32.totalorder %v1032, 1
  %vm1058 = vcmp.eq.s32.totalorder %v1033, 1
  %vm1059 = vcmp.eq.s32.totalorder %v1034, 1
  %vm1060 = vcmp.eq.s32.totalorder %v1035, 1
  %vm1061 = vcmp.eq.s32.totalorder %v1036, 1
  %vm1062 = vcmp.eq.s32.totalorder %v1037, 1
  %vm1063 = vcmp.eq.s32.totalorder %v1038, 1
  %vm1064 = vcmp.eq.s32.totalorder %v1039, 1
  %vm1065 = vcmp.eq.s32.totalorder %v1040, 1
  %vm1066 = vcmp.eq.s32.totalorder %v1041, 1
  %vm1067 = vcmp.eq.s32.totalorder %v1042, 1
  %vm1068 = vcmp.eq.s32.totalorder %v1043, 1
  %vm1069 = vcmp.eq.s32.totalorder %v1044, 1
  %vm1070 = vcmp.eq.s32.totalorder %v1045, 1
  %vm1071 = vcmp.eq.s32.totalorder %v1046, 1
  %vm1072 = vcmp.eq.s32.totalorder %v1047, 1
  %vm1073 = vcmp.eq.s32.totalorder %v1048, 1
  %vm1074 = vcmp.eq.s32.totalorder %v1049, 1
  %vm1075 = vcmp.eq.s32.totalorder %v1050, 1
  %vm1076 = vcmp.eq.s32.totalorder %v1051, 1
  %vm1077 = vcmp.eq.s32.totalorder %v1052, 1
  %vm1078 = vcmp.eq.s32.totalorder %v1053, 1
  %vm1079 = vcmp.eq.s32.totalorder %v1054, 1
  %vm1080 = vcmp.eq.s32.totalorder %v1055, 1
  %vm1081 = vcmp.eq.s32.totalorder %v1056, 1
  %v1082 = vsel %vm1057, 0.0, %v1006
  %v1083 = vsel %vm1058, 0.0, %v1005
  %v1084 = vsel %vm1059, 0.0, %v1004
  %v1085 = vsel %vm1060, 0.0, %v1003
  %v1086 = vsel %vm1061, 0.0, %v1002
  %v1087 = vsel %vm1062, 0.0, %v1001
  %v1088 = vsel %vm1063, 0.0, %v1000
  %v1089 = vsel %vm1064, 0.0, %v999
  %v1090 = vsel %vm1065, 0.0, %v998
  %v1091 = vsel %vm1066, 0.0, %v997
  %v1092 = vsel %vm1067, 0.0, %v996
  %v1093 = vsel %vm1068, 0.0, %v995
  %v1094 = vsel %vm1069, 0.0, %v994
  %v1095 = vsel %vm1070, 0.0, %v993
  %v1096 = vsel %vm1071, 0.0, %v992
  %v1097 = vsel %vm1072, 0.0, %v991
  %v1098 = vsel %vm1073, 0.0, %v990
  %v1099 = vsel %vm1074, 0.0, %v989
  %v1100 = vsel %vm1075, 0.0, %v988
  %v1101 = vsel %vm1076, 0.0, %v987
  %v1102 = vsel %vm1077, 0.0, %v986
  %v1103 = vsel %vm1078, 0.0, %v985
  %v1104 = vsel %vm1079, 0.0, %v984
  %v1105 = vsel %vm1080, 0.0, %v983
  %v1106 = vsel %vm1081, 0.0, %v982
  %v1107 = vrot.slane %v52, 1
  %v1108 = vrot.slane %v53, 1
  %v1109 = vrot.slane %v54, 1
  %v1110 = vrot.slane %v55, 1
  %v1111 = vrot.slane %v56, 1
  %v1112 = vrot.slane %v57, 1
  %v1113 = vrot.slane %v58, 1
  %v1114 = vrot.slane %v59, 1
  %v1115 = vrot.slane %v60, 1
  %v1116 = vrot.slane %v61, 1
  %v1117 = vrot.slane %v62, 1
  %v1118 = vrot.slane %v63, 1
  %v1119 = vrot.slane %v64, 1
  %v1120 = vrot.slane %v65, 1
  %v1121 = vrot.slane %v66, 1
  %v1122 = vrot.slane %v67, 1
  %v1123 = vrot.slane %v68, 1
  %v1124 = vrot.slane %v69, 1
  %v1125 = vrot.slane %v70, 1
  %v1126 = vrot.slane %v71, 1
  %v1127 = vrot.slane %v72, 1
  %v1128 = vrot.slane %v73, 1
  %v1129 = vrot.slane %v74, 1
  %v1130 = vrot.slane %v75, 1
  %v1131 = vrot.slane %v76, 1
  %vm1132 = vcmp.lt.s32.totalorder %v78, 7
  %v1133 = vsel %vm1132, %v1130, %v1131
  %v1134 = vsel %vm1132, %v1129, %v1130
  %v1135 = vsel %vm1132, %v1128, %v1129
  %v1136 = vsel %vm1132, %v1127, %v1128
  %v1137 = vsel %vm1132, %v1126, %v1127
  %v1138 = vsel %vm1132, %v1125, %v1126
  %v1139 = vsel %vm1132, %v1124, %v1125
  %v1140 = vsel %vm1132, %v1123, %v1124
  %v1141 = vsel %vm1132, %v1122, %v1123
  %v1142 = vsel %vm1132, %v1121, %v1122
  %v1143 = vsel %vm1132, %v1120, %v1121
  %v1144 = vsel %vm1132, %v1119, %v1120
  %v1145 = vsel %vm1132, %v1118, %v1119
  %v1146 = vsel %vm1132, %v1117, %v1118
  %v1147 = vsel %vm1132, %v1116, %v1117
  %v1148 = vsel %vm1132, %v1115, %v1116
  %v1149 = vsel %vm1132, %v1114, %v1115
  %v1150 = vsel %vm1132, %v1113, %v1114
  %v1151 = vsel %vm1132, %v1112, %v1113
  %v1152 = vsel %vm1132, %v1111, %v1112
  %v1153 = vsel %vm1132, %v1110, %v1111
  %v1154 = vsel %vm1132, %v1109, %v1110
  %v1155 = vsel %vm1132, %v1108, %v1109
  %v1156 = vsel %vm1132, %v1107, %v1108
  %v1157 = vsel %vm1132, %v1131, %v1107
  %vm1158 = vcmp.ge.s32.totalorder %v478, 99
  %vm1159 = vcmp.ge.s32.totalorder %v479, 99
  %vm1160 = vcmp.ge.s32.totalorder %v480, 99
  %vm1161 = vcmp.ge.s32.totalorder %v481, 99
  %vm1162 = vcmp.ge.s32.totalorder %v482, 99
  %vm1163 = vcmp.ge.s32.totalorder %v483, 99
  %vm1164 = vcmp.ge.s32.totalorder %v484, 99
  %vm1165 = vcmp.ge.s32.totalorder %v485, 99
  %vm1166 = vcmp.ge.s32.totalorder %v486, 99
  %vm1167 = vcmp.ge.s32.totalorder %v487, 99
  %vm1168 = vcmp.ge.s32.totalorder %v488, 99
  %vm1169 = vcmp.ge.s32.totalorder %v489, 99
  %vm1170 = vcmp.ge.s32.totalorder %v490, 99
  %vm1171 = vcmp.ge.s32.totalorder %v491, 99
  %vm1172 = vcmp.ge.s32.totalorder %v492, 99
  %vm1173 = vcmp.ge.s32.totalorder %v493, 99
  %vm1174 = vcmp.ge.s32.totalorder %v494, 99
  %vm1175 = vcmp.ge.s32.totalorder %v495, 99
  %vm1176 = vcmp.ge.s32.totalorder %v496, 99
  %vm1177 = vcmp.ge.s32.totalorder %v497, 99
  %vm1178 = vcmp.ge.s32.totalorder %v498, 99
  %vm1179 = vcmp.ge.s32.totalorder %v499, 99
  %vm1180 = vcmp.ge.s32.totalorder %v500, 99
  %vm1181 = vcmp.ge.s32.totalorder %v501, 99
  %vm1182 = vcmp.ge.s32.totalorder %v502, 99
  %v1183 = vsel %vm1158, 1, 0
  %v1184 = vsel %vm1159, 1, 0
  %v1185 = vsel %vm1160, 1, 0
  %v1186 = vsel %vm1161, 1, 0
  %v1187 = vsel %vm1162, 1, 0
  %v1188 = vsel %vm1163, 1, 0
  %v1189 = vsel %vm1164, 1, 0
  %v1190 = vsel %vm1165, 1, 0
  %v1191 = vsel %vm1166, 1, 0
  %v1192 = vsel %vm1167, 1, 0
  %v1193 = vsel %vm1168, 1, 0
  %v1194 = vsel %vm1169, 1, 0
  %v1195 = vsel %vm1170, 1, 0
  %v1196 = vsel %vm1171, 1, 0
  %v1197 = vsel %vm1172, 1, 0
  %v1198 = vsel %vm1173, 1, 0
  %v1199 = vsel %vm1174, 1, 0
  %v1200 = vsel %vm1175, 1, 0
  %v1201 = vsel %vm1176, 1, 0
  %v1202 = vsel %vm1177, 1, 0
  %v1203 = vsel %vm1178, 1, 0
  %v1204 = vsel %vm1179, 1, 0
  %v1205 = vsel %vm1180, 1, 0
  %v1206 = vsel %vm1181, 1, 0
  %v1207 = vsel %vm1182, 1, 0
  %vm1208 = vcmp.eq.s32.totalorder %v1183, 1
  %vm1209 = vcmp.eq.s32.totalorder %v1184, 1
  %vm1210 = vcmp.eq.s32.totalorder %v1185, 1
  %vm1211 = vcmp.eq.s32.totalorder %v1186, 1
  %vm1212 = vcmp.eq.s32.totalorder %v1187, 1
  %vm1213 = vcmp.eq.s32.totalorder %v1188, 1
  %vm1214 = vcmp.eq.s32.totalorder %v1189, 1
  %vm1215 = vcmp.eq.s32.totalorder %v1190, 1
  %vm1216 = vcmp.eq.s32.totalorder %v1191, 1
  %vm1217 = vcmp.eq.s32.totalorder %v1192, 1
  %vm1218 = vcmp.eq.s32.totalorder %v1193, 1
  %vm1219 = vcmp.eq.s32.totalorder %v1194, 1
  %vm1220 = vcmp.eq.s32.totalorder %v1195, 1
  %vm1221 = vcmp.eq.s32.totalorder %v1196, 1
  %vm1222 = vcmp.eq.s32.totalorder %v1197, 1
  %vm1223 = vcmp.eq.s32.totalorder %v1198, 1
  %vm1224 = vcmp.eq.s32.totalorder %v1199, 1
  %vm1225 = vcmp.eq.s32.totalorder %v1200, 1
  %vm1226 = vcmp.eq.s32.totalorder %v1201, 1
  %vm1227 = vcmp.eq.s32.totalorder %v1202, 1
  %vm1228 = vcmp.eq.s32.totalorder %v1203, 1
  %vm1229 = vcmp.eq.s32.totalorder %v1204, 1
  %vm1230 = vcmp.eq.s32.totalorder %v1205, 1
  %vm1231 = vcmp.eq.s32.totalorder %v1206, 1
  %vm1232 = vcmp.eq.s32.totalorder %v1207, 1
  %v1233 = vsel %vm1208, 0.0, %v1156
  %v1234 = vsel %vm1209, 0.0, %v1155
  %v1235 = vsel %vm1210, 0.0, %v1154
  %v1236 = vsel %vm1211, 0.0, %v1153
  %v1237 = vsel %vm1212, 0.0, %v1152
  %v1238 = vsel %vm1213, 0.0, %v1151
  %v1239 = vsel %vm1214, 0.0, %v1150
  %v1240 = vsel %vm1215, 0.0, %v1149
  %v1241 = vsel %vm1216, 0.0, %v1148
  %v1242 = vsel %vm1217, 0.0, %v1147
  %v1243 = vsel %vm1218, 0.0, %v1146
  %v1244 = vsel %vm1219, 0.0, %v1145
  %v1245 = vsel %vm1220, 0.0, %v1144
  %v1246 = vsel %vm1221, 0.0, %v1143
  %v1247 = vsel %vm1222, 0.0, %v1142
  %v1248 = vsel %vm1223, 0.0, %v1141
  %v1249 = vsel %vm1224, 0.0, %v1140
  %v1250 = vsel %vm1225, 0.0, %v1139
  %v1251 = vsel %vm1226, 0.0, %v1138
  %v1252 = vsel %vm1227, 0.0, %v1137
  %v1253 = vsel %vm1228, 0.0, %v1136
  %v1254 = vsel %vm1229, 0.0, %v1135
  %v1255 = vsel %vm1230, 0.0, %v1134
  %v1256 = vsel %vm1231, 0.0, %v1133
  %v1257 = vsel %vm1232, 0.0, %v1157
  %v1258 = vrot.slane %v52, 2
  %v1259 = vrot.slane %v53, 2
  %v1260 = vrot.slane %v54, 2
  %v1261 = vrot.slane %v55, 2
  %v1262 = vrot.slane %v56, 2
  %v1263 = vrot.slane %v57, 2
  %v1264 = vrot.slane %v58, 2
  %v1265 = vrot.slane %v59, 2
  %v1266 = vrot.slane %v60, 2
  %v1267 = vrot.slane %v61, 2
  %v1268 = vrot.slane %v62, 2
  %v1269 = vrot.slane %v63, 2
  %v1270 = vrot.slane %v64, 2
  %v1271 = vrot.slane %v65, 2
  %v1272 = vrot.slane %v66, 2
  %v1273 = vrot.slane %v67, 2
  %v1274 = vrot.slane %v68, 2
  %v1275 = vrot.slane %v69, 2
  %v1276 = vrot.slane %v70, 2
  %v1277 = vrot.slane %v71, 2
  %v1278 = vrot.slane %v72, 2
  %v1279 = vrot.slane %v73, 2
  %v1280 = vrot.slane %v74, 2
  %v1281 = vrot.slane %v75, 2
  %v1282 = vrot.slane %v76, 2
  %vm1283 = vcmp.lt.s32.totalorder %v78, 6
  %v1284 = vsel %vm1283, %v1281, %v1282
  %v1285 = vsel %vm1283, %v1280, %v1281
  %v1286 = vsel %vm1283, %v1279, %v1280
  %v1287 = vsel %vm1283, %v1278, %v1279
  %v1288 = vsel %vm1283, %v1277, %v1278
  %v1289 = vsel %vm1283, %v1276, %v1277
  %v1290 = vsel %vm1283, %v1275, %v1276
  %v1291 = vsel %vm1283, %v1274, %v1275
  %v1292 = vsel %vm1283, %v1273, %v1274
  %v1293 = vsel %vm1283, %v1272, %v1273
  %v1294 = vsel %vm1283, %v1271, %v1272
  %v1295 = vsel %vm1283, %v1270, %v1271
  %v1296 = vsel %vm1283, %v1269, %v1270
  %v1297 = vsel %vm1283, %v1268, %v1269
  %v1298 = vsel %vm1283, %v1267, %v1268
  %v1299 = vsel %vm1283, %v1266, %v1267
  %v1300 = vsel %vm1283, %v1265, %v1266
  %v1301 = vsel %vm1283, %v1264, %v1265
  %v1302 = vsel %vm1283, %v1263, %v1264
  %v1303 = vsel %vm1283, %v1262, %v1263
  %v1304 = vsel %vm1283, %v1261, %v1262
  %v1305 = vsel %vm1283, %v1260, %v1261
  %v1306 = vsel %vm1283, %v1259, %v1260
  %v1307 = vsel %vm1283, %v1258, %v1259
  %v1308 = vsel %vm1283, %v1282, %v1258
  %vm1309 = vcmp.ge.s32.totalorder %v478, 98
  %vm1310 = vcmp.ge.s32.totalorder %v479, 98
  %vm1311 = vcmp.ge.s32.totalorder %v480, 98
  %vm1312 = vcmp.ge.s32.totalorder %v481, 98
  %vm1313 = vcmp.ge.s32.totalorder %v482, 98
  %vm1314 = vcmp.ge.s32.totalorder %v483, 98
  %vm1315 = vcmp.ge.s32.totalorder %v484, 98
  %vm1316 = vcmp.ge.s32.totalorder %v485, 98
  %vm1317 = vcmp.ge.s32.totalorder %v486, 98
  %vm1318 = vcmp.ge.s32.totalorder %v487, 98
  %vm1319 = vcmp.ge.s32.totalorder %v488, 98
  %vm1320 = vcmp.ge.s32.totalorder %v489, 98
  %vm1321 = vcmp.ge.s32.totalorder %v490, 98
  %vm1322 = vcmp.ge.s32.totalorder %v491, 98
  %vm1323 = vcmp.ge.s32.totalorder %v492, 98
  %vm1324 = vcmp.ge.s32.totalorder %v493, 98
  %vm1325 = vcmp.ge.s32.totalorder %v494, 98
  %vm1326 = vcmp.ge.s32.totalorder %v495, 98
  %vm1327 = vcmp.ge.s32.totalorder %v496, 98
  %vm1328 = vcmp.ge.s32.totalorder %v497, 98
  %vm1329 = vcmp.ge.s32.totalorder %v498, 98
  %vm1330 = vcmp.ge.s32.totalorder %v499, 98
  %vm1331 = vcmp.ge.s32.totalorder %v500, 98
  %vm1332 = vcmp.ge.s32.totalorder %v501, 98
  %vm1333 = vcmp.ge.s32.totalorder %v502, 98
  %v1334 = vsel %vm1309, 1, 0
  %v1335 = vsel %vm1310, 1, 0
  %v1336 = vsel %vm1311, 1, 0
  %v1337 = vsel %vm1312, 1, 0
  %v1338 = vsel %vm1313, 1, 0
  %v1339 = vsel %vm1314, 1, 0
  %v1340 = vsel %vm1315, 1, 0
  %v1341 = vsel %vm1316, 1, 0
  %v1342 = vsel %vm1317, 1, 0
  %v1343 = vsel %vm1318, 1, 0
  %v1344 = vsel %vm1319, 1, 0
  %v1345 = vsel %vm1320, 1, 0
  %v1346 = vsel %vm1321, 1, 0
  %v1347 = vsel %vm1322, 1, 0
  %v1348 = vsel %vm1323, 1, 0
  %v1349 = vsel %vm1324, 1, 0
  %v1350 = vsel %vm1325, 1, 0
  %v1351 = vsel %vm1326, 1, 0
  %v1352 = vsel %vm1327, 1, 0
  %v1353 = vsel %vm1328, 1, 0
  %v1354 = vsel %vm1329, 1, 0
  %v1355 = vsel %vm1330, 1, 0
  %v1356 = vsel %vm1331, 1, 0
  %v1357 = vsel %vm1332, 1, 0
  %v1358 = vsel %vm1333, 1, 0
  %vm1359 = vcmp.eq.s32.totalorder %v1334, 1
  %vm1360 = vcmp.eq.s32.totalorder %v1335, 1
  %vm1361 = vcmp.eq.s32.totalorder %v1336, 1
  %vm1362 = vcmp.eq.s32.totalorder %v1337, 1
  %vm1363 = vcmp.eq.s32.totalorder %v1338, 1
  %vm1364 = vcmp.eq.s32.totalorder %v1339, 1
  %vm1365 = vcmp.eq.s32.totalorder %v1340, 1
  %vm1366 = vcmp.eq.s32.totalorder %v1341, 1
  %vm1367 = vcmp.eq.s32.totalorder %v1342, 1
  %vm1368 = vcmp.eq.s32.totalorder %v1343, 1
  %vm1369 = vcmp.eq.s32.totalorder %v1344, 1
  %vm1370 = vcmp.eq.s32.totalorder %v1345, 1
  %vm1371 = vcmp.eq.s32.totalorder %v1346, 1
  %vm1372 = vcmp.eq.s32.totalorder %v1347, 1
  %vm1373 = vcmp.eq.s32.totalorder %v1348, 1
  %vm1374 = vcmp.eq.s32.totalorder %v1349, 1
  %vm1375 = vcmp.eq.s32.totalorder %v1350, 1
  %vm1376 = vcmp.eq.s32.totalorder %v1351, 1
  %vm1377 = vcmp.eq.s32.totalorder %v1352, 1
  %vm1378 = vcmp.eq.s32.totalorder %v1353, 1
  %vm1379 = vcmp.eq.s32.totalorder %v1354, 1
  %vm1380 = vcmp.eq.s32.totalorder %v1355, 1
  %vm1381 = vcmp.eq.s32.totalorder %v1356, 1
  %vm1382 = vcmp.eq.s32.totalorder %v1357, 1
  %vm1383 = vcmp.eq.s32.totalorder %v1358, 1
  %v1384 = vsel %vm1359, 0.0, %v1307
  %v1385 = vsel %vm1360, 0.0, %v1306
  %v1386 = vsel %vm1361, 0.0, %v1305
  %v1387 = vsel %vm1362, 0.0, %v1304
  %v1388 = vsel %vm1363, 0.0, %v1303
  %v1389 = vsel %vm1364, 0.0, %v1302
  %v1390 = vsel %vm1365, 0.0, %v1301
  %v1391 = vsel %vm1366, 0.0, %v1300
  %v1392 = vsel %vm1367, 0.0, %v1299
  %v1393 = vsel %vm1368, 0.0, %v1298
  %v1394 = vsel %vm1369, 0.0, %v1297
  %v1395 = vsel %vm1370, 0.0, %v1296
  %v1396 = vsel %vm1371, 0.0, %v1295
  %v1397 = vsel %vm1372, 0.0, %v1294
  %v1398 = vsel %vm1373, 0.0, %v1293
  %v1399 = vsel %vm1374, 0.0, %v1292
  %v1400 = vsel %vm1375, 0.0, %v1291
  %v1401 = vsel %vm1376, 0.0, %v1290
  %v1402 = vsel %vm1377, 0.0, %v1289
  %v1403 = vsel %vm1378, 0.0, %v1288
  %v1404 = vsel %vm1379, 0.0, %v1287
  %v1405 = vsel %vm1380, 0.0, %v1286
  %v1406 = vsel %vm1381, 0.0, %v1285
  %v1407 = vsel %vm1382, 0.0, %v1284
  %v1408 = vsel %vm1383, 0.0, %v1308
  %v1409 = vrot.slane %v52, 3
  %v1410 = vrot.slane %v53, 3
  %v1411 = vrot.slane %v54, 3
  %v1412 = vrot.slane %v55, 3
  %v1413 = vrot.slane %v56, 3
  %v1414 = vrot.slane %v57, 3
  %v1415 = vrot.slane %v58, 3
  %v1416 = vrot.slane %v59, 3
  %v1417 = vrot.slane %v60, 3
  %v1418 = vrot.slane %v61, 3
  %v1419 = vrot.slane %v62, 3
  %v1420 = vrot.slane %v63, 3
  %v1421 = vrot.slane %v64, 3
  %v1422 = vrot.slane %v65, 3
  %v1423 = vrot.slane %v66, 3
  %v1424 = vrot.slane %v67, 3
  %v1425 = vrot.slane %v68, 3
  %v1426 = vrot.slane %v69, 3
  %v1427 = vrot.slane %v70, 3
  %v1428 = vrot.slane %v71, 3
  %v1429 = vrot.slane %v72, 3
  %v1430 = vrot.slane %v73, 3
  %v1431 = vrot.slane %v74, 3
  %v1432 = vrot.slane %v75, 3
  %v1433 = vrot.slane %v76, 3
  %vm1434 = vcmp.lt.s32.totalorder %v78, 5
  %v1435 = vsel %vm1434, %v1432, %v1433
  %v1436 = vsel %vm1434, %v1431, %v1432
  %v1437 = vsel %vm1434, %v1430, %v1431
  %v1438 = vsel %vm1434, %v1429, %v1430
  %v1439 = vsel %vm1434, %v1428, %v1429
  %v1440 = vsel %vm1434, %v1427, %v1428
  %v1441 = vsel %vm1434, %v1426, %v1427
  %v1442 = vsel %vm1434, %v1425, %v1426
  %v1443 = vsel %vm1434, %v1424, %v1425
  %v1444 = vsel %vm1434, %v1423, %v1424
  %v1445 = vsel %vm1434, %v1422, %v1423
  %v1446 = vsel %vm1434, %v1421, %v1422
  %v1447 = vsel %vm1434, %v1420, %v1421
  %v1448 = vsel %vm1434, %v1419, %v1420
  %v1449 = vsel %vm1434, %v1418, %v1419
  %v1450 = vsel %vm1434, %v1417, %v1418
  %v1451 = vsel %vm1434, %v1416, %v1417
  %v1452 = vsel %vm1434, %v1415, %v1416
  %v1453 = vsel %vm1434, %v1414, %v1415
  %v1454 = vsel %vm1434, %v1413, %v1414
  %v1455 = vsel %vm1434, %v1412, %v1413
  %v1456 = vsel %vm1434, %v1411, %v1412
  %v1457 = vsel %vm1434, %v1410, %v1411
  %v1458 = vsel %vm1434, %v1409, %v1410
  %v1459 = vsel %vm1434, %v1433, %v1409
  %vm1460 = vcmp.ge.s32.totalorder %v478, 97
  %vm1461 = vcmp.ge.s32.totalorder %v479, 97
  %vm1462 = vcmp.ge.s32.totalorder %v480, 97
  %vm1463 = vcmp.ge.s32.totalorder %v481, 97
  %vm1464 = vcmp.ge.s32.totalorder %v482, 97
  %vm1465 = vcmp.ge.s32.totalorder %v483, 97
  %vm1466 = vcmp.ge.s32.totalorder %v484, 97
  %vm1467 = vcmp.ge.s32.totalorder %v485, 97
  %vm1468 = vcmp.ge.s32.totalorder %v486, 97
  %vm1469 = vcmp.ge.s32.totalorder %v487, 97
  %vm1470 = vcmp.ge.s32.totalorder %v488, 97
  %vm1471 = vcmp.ge.s32.totalorder %v489, 97
  %vm1472 = vcmp.ge.s32.totalorder %v490, 97
  %vm1473 = vcmp.ge.s32.totalorder %v491, 97
  %vm1474 = vcmp.ge.s32.totalorder %v492, 97
  %vm1475 = vcmp.ge.s32.totalorder %v493, 97
  %vm1476 = vcmp.ge.s32.totalorder %v494, 97
  %vm1477 = vcmp.ge.s32.totalorder %v495, 97
  %vm1478 = vcmp.ge.s32.totalorder %v496, 97
  %vm1479 = vcmp.ge.s32.totalorder %v497, 97
  %vm1480 = vcmp.ge.s32.totalorder %v498, 97
  %vm1481 = vcmp.ge.s32.totalorder %v499, 97
  %vm1482 = vcmp.ge.s32.totalorder %v500, 97
  %vm1483 = vcmp.ge.s32.totalorder %v501, 97
  %vm1484 = vcmp.ge.s32.totalorder %v502, 97
  %v1485 = vsel %vm1460, 1, 0
  %v1486 = vsel %vm1461, 1, 0
  %v1487 = vsel %vm1462, 1, 0
  %v1488 = vsel %vm1463, 1, 0
  %v1489 = vsel %vm1464, 1, 0
  %v1490 = vsel %vm1465, 1, 0
  %v1491 = vsel %vm1466, 1, 0
  %v1492 = vsel %vm1467, 1, 0
  %v1493 = vsel %vm1468, 1, 0
  %v1494 = vsel %vm1469, 1, 0
  %v1495 = vsel %vm1470, 1, 0
  %v1496 = vsel %vm1471, 1, 0
  %v1497 = vsel %vm1472, 1, 0
  %v1498 = vsel %vm1473, 1, 0
  %v1499 = vsel %vm1474, 1, 0
  %v1500 = vsel %vm1475, 1, 0
  %v1501 = vsel %vm1476, 1, 0
  %v1502 = vsel %vm1477, 1, 0
  %v1503 = vsel %vm1478, 1, 0
  %v1504 = vsel %vm1479, 1, 0
  %v1505 = vsel %vm1480, 1, 0
  %v1506 = vsel %vm1481, 1, 0
  %v1507 = vsel %vm1482, 1, 0
  %v1508 = vsel %vm1483, 1, 0
  %v1509 = vsel %vm1484, 1, 0
  %vm1510 = vcmp.eq.s32.totalorder %v1485, 1
  %vm1511 = vcmp.eq.s32.totalorder %v1486, 1
  %vm1512 = vcmp.eq.s32.totalorder %v1487, 1
  %vm1513 = vcmp.eq.s32.totalorder %v1488, 1
  %vm1514 = vcmp.eq.s32.totalorder %v1489, 1
  %vm1515 = vcmp.eq.s32.totalorder %v1490, 1
  %vm1516 = vcmp.eq.s32.totalorder %v1491, 1
  %vm1517 = vcmp.eq.s32.totalorder %v1492, 1
  %vm1518 = vcmp.eq.s32.totalorder %v1493, 1
  %vm1519 = vcmp.eq.s32.totalorder %v1494, 1
  %vm1520 = vcmp.eq.s32.totalorder %v1495, 1
  %vm1521 = vcmp.eq.s32.totalorder %v1496, 1
  %vm1522 = vcmp.eq.s32.totalorder %v1497, 1
  %vm1523 = vcmp.eq.s32.totalorder %v1498, 1
  %vm1524 = vcmp.eq.s32.totalorder %v1499, 1
  %vm1525 = vcmp.eq.s32.totalorder %v1500, 1
  %vm1526 = vcmp.eq.s32.totalorder %v1501, 1
  %vm1527 = vcmp.eq.s32.totalorder %v1502, 1
  %vm1528 = vcmp.eq.s32.totalorder %v1503, 1
  %vm1529 = vcmp.eq.s32.totalorder %v1504, 1
  %vm1530 = vcmp.eq.s32.totalorder %v1505, 1
  %vm1531 = vcmp.eq.s32.totalorder %v1506, 1
  %vm1532 = vcmp.eq.s32.totalorder %v1507, 1
  %vm1533 = vcmp.eq.s32.totalorder %v1508, 1
  %vm1534 = vcmp.eq.s32.totalorder %v1509, 1
  %v1535 = vsel %vm1510, 0.0, %v1458
  %v1536 = vsel %vm1511, 0.0, %v1457
  %v1537 = vsel %vm1512, 0.0, %v1456
  %v1538 = vsel %vm1513, 0.0, %v1455
  %v1539 = vsel %vm1514, 0.0, %v1454
  %v1540 = vsel %vm1515, 0.0, %v1453
  %v1541 = vsel %vm1516, 0.0, %v1452
  %v1542 = vsel %vm1517, 0.0, %v1451
  %v1543 = vsel %vm1518, 0.0, %v1450
  %v1544 = vsel %vm1519, 0.0, %v1449
  %v1545 = vsel %vm1520, 0.0, %v1448
  %v1546 = vsel %vm1521, 0.0, %v1447
  %v1547 = vsel %vm1522, 0.0, %v1446
  %v1548 = vsel %vm1523, 0.0, %v1445
  %v1549 = vsel %vm1524, 0.0, %v1444
  %v1550 = vsel %vm1525, 0.0, %v1443
  %v1551 = vsel %vm1526, 0.0, %v1442
  %v1552 = vsel %vm1527, 0.0, %v1441
  %v1553 = vsel %vm1528, 0.0, %v1440
  %v1554 = vsel %vm1529, 0.0, %v1439
  %v1555 = vsel %vm1530, 0.0, %v1438
  %v1556 = vsel %vm1531, 0.0, %v1437
  %v1557 = vsel %vm1532, 0.0, %v1436
  %v1558 = vsel %vm1533, 0.0, %v1435
  %v1559 = vsel %vm1534, 0.0, %v1459
  %vm1560 = vcmp.ge.s32.totalorder %v478, 96
  %vm1561 = vcmp.ge.s32.totalorder %v479, 96
  %vm1562 = vcmp.ge.s32.totalorder %v480, 96
  %vm1563 = vcmp.ge.s32.totalorder %v481, 96
  %vm1564 = vcmp.ge.s32.totalorder %v482, 96
  %vm1565 = vcmp.ge.s32.totalorder %v483, 96
  %vm1566 = vcmp.ge.s32.totalorder %v484, 96
  %vm1567 = vcmp.ge.s32.totalorder %v485, 96
  %vm1568 = vcmp.ge.s32.totalorder %v486, 96
  %vm1569 = vcmp.ge.s32.totalorder %v487, 96
  %vm1570 = vcmp.ge.s32.totalorder %v488, 96
  %vm1571 = vcmp.ge.s32.totalorder %v489, 96
  %vm1572 = vcmp.ge.s32.totalorder %v490, 96
  %vm1573 = vcmp.ge.s32.totalorder %v491, 96
  %vm1574 = vcmp.ge.s32.totalorder %v492, 96
  %vm1575 = vcmp.ge.s32.totalorder %v493, 96
  %vm1576 = vcmp.ge.s32.totalorder %v494, 96
  %vm1577 = vcmp.ge.s32.totalorder %v495, 96
  %vm1578 = vcmp.ge.s32.totalorder %v496, 96
  %vm1579 = vcmp.ge.s32.totalorder %v497, 96
  %vm1580 = vcmp.ge.s32.totalorder %v498, 96
  %vm1581 = vcmp.ge.s32.totalorder %v499, 96
  %vm1582 = vcmp.ge.s32.totalorder %v500, 96
  %vm1583 = vcmp.ge.s32.totalorder %v501, 96
  %vm1584 = vcmp.ge.s32.totalorder %v502, 96
  %v1585 = vsel %vm1560, 1, 0
  %v1586 = vsel %vm1561, 1, 0
  %v1587 = vsel %vm1562, 1, 0
  %v1588 = vsel %vm1563, 1, 0
  %v1589 = vsel %vm1564, 1, 0
  %v1590 = vsel %vm1565, 1, 0
  %v1591 = vsel %vm1566, 1, 0
  %v1592 = vsel %vm1567, 1, 0
  %v1593 = vsel %vm1568, 1, 0
  %v1594 = vsel %vm1569, 1, 0
  %v1595 = vsel %vm1570, 1, 0
  %v1596 = vsel %vm1571, 1, 0
  %v1597 = vsel %vm1572, 1, 0
  %v1598 = vsel %vm1573, 1, 0
  %v1599 = vsel %vm1574, 1, 0
  %v1600 = vsel %vm1575, 1, 0
  %v1601 = vsel %vm1576, 1, 0
  %v1602 = vsel %vm1577, 1, 0
  %v1603 = vsel %vm1578, 1, 0
  %v1604 = vsel %vm1579, 1, 0
  %v1605 = vsel %vm1580, 1, 0
  %v1606 = vsel %vm1581, 1, 0
  %v1607 = vsel %vm1582, 1, 0
  %v1608 = vsel %vm1583, 1, 0
  %v1609 = vsel %vm1584, 1, 0
  %vm1610 = vcmp.eq.s32.totalorder %v1585, 1
  %vm1611 = vcmp.eq.s32.totalorder %v1586, 1
  %vm1612 = vcmp.eq.s32.totalorder %v1587, 1
  %vm1613 = vcmp.eq.s32.totalorder %v1588, 1
  %vm1614 = vcmp.eq.s32.totalorder %v1589, 1
  %vm1615 = vcmp.eq.s32.totalorder %v1590, 1
  %vm1616 = vcmp.eq.s32.totalorder %v1591, 1
  %vm1617 = vcmp.eq.s32.totalorder %v1592, 1
  %vm1618 = vcmp.eq.s32.totalorder %v1593, 1
  %vm1619 = vcmp.eq.s32.totalorder %v1594, 1
  %vm1620 = vcmp.eq.s32.totalorder %v1595, 1
  %vm1621 = vcmp.eq.s32.totalorder %v1596, 1
  %vm1622 = vcmp.eq.s32.totalorder %v1597, 1
  %vm1623 = vcmp.eq.s32.totalorder %v1598, 1
  %vm1624 = vcmp.eq.s32.totalorder %v1599, 1
  %vm1625 = vcmp.eq.s32.totalorder %v1600, 1
  %vm1626 = vcmp.eq.s32.totalorder %v1601, 1
  %vm1627 = vcmp.eq.s32.totalorder %v1602, 1
  %vm1628 = vcmp.eq.s32.totalorder %v1603, 1
  %vm1629 = vcmp.eq.s32.totalorder %v1604, 1
  %vm1630 = vcmp.eq.s32.totalorder %v1605, 1
  %vm1631 = vcmp.eq.s32.totalorder %v1606, 1
  %vm1632 = vcmp.eq.s32.totalorder %v1607, 1
  %vm1633 = vcmp.eq.s32.totalorder %v1608, 1
  %vm1634 = vcmp.eq.s32.totalorder %v1609, 1
  %v1635 = vsel %vm1610, 0.0, %v552
  %v1636 = vsel %vm1611, 0.0, %v551
  %v1637 = vsel %vm1612, 0.0, %v550
  %v1638 = vsel %vm1613, 0.0, %v549
  %v1639 = vsel %vm1614, 0.0, %v548
  %v1640 = vsel %vm1615, 0.0, %v547
  %v1641 = vsel %vm1616, 0.0, %v546
  %v1642 = vsel %vm1617, 0.0, %v545
  %v1643 = vsel %vm1618, 0.0, %v544
  %v1644 = vsel %vm1619, 0.0, %v543
  %v1645 = vsel %vm1620, 0.0, %v542
  %v1646 = vsel %vm1621, 0.0, %v541
  %v1647 = vsel %vm1622, 0.0, %v540
  %v1648 = vsel %vm1623, 0.0, %v539
  %v1649 = vsel %vm1624, 0.0, %v538
  %v1650 = vsel %vm1625, 0.0, %v537
  %v1651 = vsel %vm1626, 0.0, %v536
  %v1652 = vsel %vm1627, 0.0, %v535
  %v1653 = vsel %vm1628, 0.0, %v534
  %v1654 = vsel %vm1629, 0.0, %v533
  %v1655 = vsel %vm1630, 0.0, %v532
  %v1656 = vsel %vm1631, 0.0, %v531
  %v1657 = vsel %vm1632, 0.0, %v530
  %v1658 = vsel %vm1633, 0.0, %v529
  %v1659 = vsel %vm1634, 0.0, %v553
  %1685 = vrot.lane.b32.xlu0 %v780, 4
  %v1686 = vpop.permute.xlu0 %1685
  %1687 = vrot.lane.b32.xlu0 %v781, 4
  %v1688 = vpop.permute.xlu0 %1687
  %1689 = vrot.lane.b32.xlu0 %v782, 4
  %v1690 = vpop.permute.xlu0 %1689
  %1691 = vrot.lane.b32.xlu0 %v783, 4
  %v1692 = vpop.permute.xlu0 %1691
  %1693 = vrot.lane.b32.xlu0 %v784, 4
  %v1694 = vpop.permute.xlu0 %1693
  %1695 = vrot.lane.b32.xlu0 %v785, 4
  %v1696 = vpop.permute.xlu0 %1695
  %1697 = vrot.lane.b32.xlu0 %v786, 4
  %v1698 = vpop.permute.xlu0 %1697
  %1699 = vrot.lane.b32.xlu0 %v787, 4
  %v1700 = vpop.permute.xlu0 %1699
  %1701 = vrot.lane.b32.xlu0 %v788, 4
  %v1702 = vpop.permute.xlu0 %1701
  %1703 = vrot.lane.b32.xlu0 %v789, 4
  %v1704 = vpop.permute.xlu0 %1703
  %1705 = vrot.lane.b32.xlu0 %v790, 4
  %v1706 = vpop.permute.xlu0 %1705
  %1707 = vrot.lane.b32.xlu0 %v791, 4
  %v1708 = vpop.permute.xlu0 %1707
  %1709 = vrot.lane.b32.xlu0 %v792, 4
  %v1710 = vpop.permute.xlu0 %1709
  %1711 = vrot.lane.b32.xlu0 %v793, 4
  %v1712 = vpop.permute.xlu0 %1711
  %1713 = vrot.lane.b32.xlu0 %v794, 4
  %v1714 = vpop.permute.xlu0 %1713
  %1715 = vrot.lane.b32.xlu0 %v795, 4
  %v1716 = vpop.permute.xlu0 %1715
  %1717 = vrot.lane.b32.xlu0 %v796, 4
  %v1718 = vpop.permute.xlu0 %1717
  %1719 = vrot.lane.b32.xlu0 %v797, 4
  %v1720 = vpop.permute.xlu0 %1719
  %1721 = vrot.lane.b32.xlu0 %v798, 4
  %v1722 = vpop.permute.xlu0 %1721
  %1723 = vrot.lane.b32.xlu0 %v799, 4
  %v1724 = vpop.permute.xlu0 %1723
  %1725 = vrot.lane.b32.xlu0 %v800, 4
  %v1726 = vpop.permute.xlu0 %1725
  %1727 = vrot.lane.b32.xlu0 %v801, 4
  %v1728 = vpop.permute.xlu0 %1727
  %1729 = vrot.lane.b32.xlu0 %v802, 4
  %v1730 = vpop.permute.xlu0 %1729
  %1731 = vrot.lane.b32.xlu0 %v803, 4
  %v1732 = vpop.permute.xlu0 %1731
  %1733 = vrot.lane.b32.xlu0 %v804, 4
  %v1734 = vpop.permute.xlu0 %1733
  %1785 = vrot.lane.b32.xlu0 %v931, 8
  %v1786 = vpop.permute.xlu0 %1785
  %1787 = vrot.lane.b32.xlu0 %v932, 8
  %v1788 = vpop.permute.xlu0 %1787
  %1789 = vrot.lane.b32.xlu0 %v933, 8
  %v1790 = vpop.permute.xlu0 %1789
  %1791 = vrot.lane.b32.xlu0 %v934, 8
  %v1792 = vpop.permute.xlu0 %1791
  %1793 = vrot.lane.b32.xlu0 %v935, 8
  %v1794 = vpop.permute.xlu0 %1793
  %1795 = vrot.lane.b32.xlu0 %v936, 8
  %v1796 = vpop.permute.xlu0 %1795
  %1797 = vrot.lane.b32.xlu0 %v937, 8
  %v1798 = vpop.permute.xlu0 %1797
  %1799 = vrot.lane.b32.xlu0 %v938, 8
  %v1800 = vpop.permute.xlu0 %1799
  %1801 = vrot.lane.b32.xlu0 %v939, 8
  %v1802 = vpop.permute.xlu0 %1801
  %1803 = vrot.lane.b32.xlu0 %v940, 8
  %v1804 = vpop.permute.xlu0 %1803
  %1805 = vrot.lane.b32.xlu0 %v941, 8
  %v1806 = vpop.permute.xlu0 %1805
  %1807 = vrot.lane.b32.xlu0 %v942, 8
  %v1808 = vpop.permute.xlu0 %1807
  %1809 = vrot.lane.b32.xlu0 %v943, 8
  %v1810 = vpop.permute.xlu0 %1809
  %1811 = vrot.lane.b32.xlu0 %v944, 8
  %v1812 = vpop.permute.xlu0 %1811
  %1813 = vrot.lane.b32.xlu0 %v945, 8
  %v1814 = vpop.permute.xlu0 %1813
  %1815 = vrot.lane.b32.xlu0 %v946, 8
  %v1816 = vpop.permute.xlu0 %1815
  %1817 = vrot.lane.b32.xlu0 %v947, 8
  %v1818 = vpop.permute.xlu0 %1817
  %1819 = vrot.lane.b32.xlu0 %v948, 8
  %v1820 = vpop.permute.xlu0 %1819
  %1821 = vrot.lane.b32.xlu0 %v949, 8
  %v1822 = vpop.permute.xlu0 %1821
  %1823 = vrot.lane.b32.xlu0 %v950, 8
  %v1824 = vpop.permute.xlu0 %1823
  %1825 = vrot.lane.b32.xlu0 %v951, 8
  %v1826 = vpop.permute.xlu0 %1825
  %1827 = vrot.lane.b32.xlu0 %v952, 8
  %v1828 = vpop.permute.xlu0 %1827
  %1829 = vrot.lane.b32.xlu0 %v953, 8
  %v1830 = vpop.permute.xlu0 %1829
  %1831 = vrot.lane.b32.xlu0 %v954, 8
  %v1832 = vpop.permute.xlu0 %1831
  %1833 = vrot.lane.b32.xlu0 %v955, 8
  %v1834 = vpop.permute.xlu0 %1833
  %1885 = vrot.lane.b32.xlu0 %v1082, 12
  %v1886 = vpop.permute.xlu0 %1885
  %1887 = vrot.lane.b32.xlu0 %v1083, 12
  %v1888 = vpop.permute.xlu0 %1887
  %1889 = vrot.lane.b32.xlu0 %v1084, 12
  %v1890 = vpop.permute.xlu0 %1889
  %1891 = vrot.lane.b32.xlu0 %v1085, 12
  %v1892 = vpop.permute.xlu0 %1891
  %1893 = vrot.lane.b32.xlu0 %v1086, 12
  %v1894 = vpop.permute.xlu0 %1893
  %1895 = vrot.lane.b32.xlu0 %v1087, 12
  %v1896 = vpop.permute.xlu0 %1895
  %1897 = vrot.lane.b32.xlu0 %v1088, 12
  %v1898 = vpop.permute.xlu0 %1897
  %1899 = vrot.lane.b32.xlu0 %v1089, 12
  %v1900 = vpop.permute.xlu0 %1899
  %1901 = vrot.lane.b32.xlu0 %v1090, 12
  %v1902 = vpop.permute.xlu0 %1901
  %1903 = vrot.lane.b32.xlu0 %v1091, 12
  %v1904 = vpop.permute.xlu0 %1903
  %1905 = vrot.lane.b32.xlu0 %v1092, 12
  %v1906 = vpop.permute.xlu0 %1905
  %1907 = vrot.lane.b32.xlu0 %v1093, 12
  %v1908 = vpop.permute.xlu0 %1907
  %1909 = vrot.lane.b32.xlu0 %v1094, 12
  %v1910 = vpop.permute.xlu0 %1909
  %1911 = vrot.lane.b32.xlu0 %v1095, 12
  %v1912 = vpop.permute.xlu0 %1911
  %1913 = vrot.lane.b32.xlu0 %v1096, 12
  %v1914 = vpop.permute.xlu0 %1913
  %1915 = vrot.lane.b32.xlu0 %v1097, 12
  %v1916 = vpop.permute.xlu0 %1915
  %1917 = vrot.lane.b32.xlu0 %v1098, 12
  %v1918 = vpop.permute.xlu0 %1917
  %1919 = vrot.lane.b32.xlu0 %v1099, 12
  %v1920 = vpop.permute.xlu0 %1919
  %1921 = vrot.lane.b32.xlu0 %v1100, 12
  %v1922 = vpop.permute.xlu0 %1921
  %1923 = vrot.lane.b32.xlu0 %v1101, 12
  %v1924 = vpop.permute.xlu0 %1923
  %1925 = vrot.lane.b32.xlu0 %v1102, 12
  %v1926 = vpop.permute.xlu0 %1925
  %1927 = vrot.lane.b32.xlu0 %v1103, 12
  %v1928 = vpop.permute.xlu0 %1927
  %1929 = vrot.lane.b32.xlu0 %v1104, 12
  %v1930 = vpop.permute.xlu0 %1929
  %1931 = vrot.lane.b32.xlu0 %v1105, 12
  %v1932 = vpop.permute.xlu0 %1931
  %1933 = vrot.lane.b32.xlu0 %v1106, 12
  %v1934 = vpop.permute.xlu0 %1933
  %1985 = vrot.lane.b32.xlu0 %v52, 16
  %v1986 = vpop.permute.xlu0 %1985
  %1987 = vrot.lane.b32.xlu0 %v53, 16
  %v1988 = vpop.permute.xlu0 %1987
  %1989 = vrot.lane.b32.xlu0 %v54, 16
  %v1990 = vpop.permute.xlu0 %1989
  %1991 = vrot.lane.b32.xlu0 %v55, 16
  %v1992 = vpop.permute.xlu0 %1991
  %1993 = vrot.lane.b32.xlu0 %v56, 16
  %v1994 = vpop.permute.xlu0 %1993
  %1995 = vrot.lane.b32.xlu0 %v57, 16
  %v1996 = vpop.permute.xlu0 %1995
  %1997 = vrot.lane.b32.xlu0 %v58, 16
  %v1998 = vpop.permute.xlu0 %1997
  %1999 = vrot.lane.b32.xlu0 %v59, 16
  %v2000 = vpop.permute.xlu0 %1999
  %2001 = vrot.lane.b32.xlu0 %v60, 16
  %v2002 = vpop.permute.xlu0 %2001
  %2003 = vrot.lane.b32.xlu0 %v61, 16
  %v2004 = vpop.permute.xlu0 %2003
  %2005 = vrot.lane.b32.xlu0 %v62, 16
  %v2006 = vpop.permute.xlu0 %2005
  %2007 = vrot.lane.b32.xlu0 %v63, 16
  %v2008 = vpop.permute.xlu0 %2007
  %2009 = vrot.lane.b32.xlu0 %v64, 16
  %v2010 = vpop.permute.xlu0 %2009
  %2011 = vrot.lane.b32.xlu0 %v65, 16
  %v2012 = vpop.permute.xlu0 %2011
  %2013 = vrot.lane.b32.xlu0 %v66, 16
  %v2014 = vpop.permute.xlu0 %2013
  %2015 = vrot.lane.b32.xlu0 %v67, 16
  %v2016 = vpop.permute.xlu0 %2015
  %2017 = vrot.lane.b32.xlu0 %v68, 16
  %v2018 = vpop.permute.xlu0 %2017
  %2019 = vrot.lane.b32.xlu0 %v69, 16
  %v2020 = vpop.permute.xlu0 %2019
  %2021 = vrot.lane.b32.xlu0 %v70, 16
  %v2022 = vpop.permute.xlu0 %2021
  %2023 = vrot.lane.b32.xlu0 %v71, 16
  %v2024 = vpop.permute.xlu0 %2023
  %2025 = vrot.lane.b32.xlu0 %v72, 16
  %v2026 = vpop.permute.xlu0 %2025
  %2027 = vrot.lane.b32.xlu0 %v73, 16
  %v2028 = vpop.permute.xlu0 %2027
  %2029 = vrot.lane.b32.xlu0 %v74, 16
  %v2030 = vpop.permute.xlu0 %2029
  %2031 = vrot.lane.b32.xlu0 %v75, 16
  %v2032 = vpop.permute.xlu0 %2031
  %2033 = vrot.lane.b32.xlu0 %v76, 16
  %v2034 = vpop.permute.xlu0 %2033
  %2085 = vrot.lane.b32.xlu0 %v1233, 20
  %v2086 = vpop.permute.xlu0 %2085
  %2087 = vrot.lane.b32.xlu0 %v1234, 20
  %v2088 = vpop.permute.xlu0 %2087
  %2089 = vrot.lane.b32.xlu0 %v1235, 20
  %v2090 = vpop.permute.xlu0 %2089
  %2091 = vrot.lane.b32.xlu0 %v1236, 20
  %v2092 = vpop.permute.xlu0 %2091
  %2093 = vrot.lane.b32.xlu0 %v1237, 20
  %v2094 = vpop.permute.xlu0 %2093
  %2095 = vrot.lane.b32.xlu0 %v1238, 20
  %v2096 = vpop.permute.xlu0 %2095
  %2097 = vrot.lane.b32.xlu0 %v1239, 20
  %v2098 = vpop.permute.xlu0 %2097
  %2099 = vrot.lane.b32.xlu0 %v1240, 20
  %v2100 = vpop.permute.xlu0 %2099
  %2101 = vrot.lane.b32.xlu0 %v1241, 20
  %v2102 = vpop.permute.xlu0 %2101
  %2103 = vrot.lane.b32.xlu0 %v1242, 20
  %v2104 = vpop.permute.xlu0 %2103
  %2105 = vrot.lane.b32.xlu0 %v1243, 20
  %v2106 = vpop.permute.xlu0 %2105
  %2107 = vrot.lane.b32.xlu0 %v1244, 20
  %v2108 = vpop.permute.xlu0 %2107
  %2109 = vrot.lane.b32.xlu0 %v1245, 20
  %v2110 = vpop.permute.xlu0 %2109
  %2111 = vrot.lane.b32.xlu0 %v1246, 20
  %v2112 = vpop.permute.xlu0 %2111
  %2113 = vrot.lane.b32.xlu0 %v1247, 20
  %v2114 = vpop.permute.xlu0 %2113
  %2115 = vrot.lane.b32.xlu0 %v1248, 20
  %v2116 = vpop.permute.xlu0 %2115
  %2117 = vrot.lane.b32.xlu0 %v1249, 20
  %v2118 = vpop.permute.xlu0 %2117
  %2119 = vrot.lane.b32.xlu0 %v1250, 20
  %v2120 = vpop.permute.xlu0 %2119
  %2121 = vrot.lane.b32.xlu0 %v1251, 20
  %v2122 = vpop.permute.xlu0 %2121
  %2123 = vrot.lane.b32.xlu0 %v1252, 20
  %v2124 = vpop.permute.xlu0 %2123
  %2125 = vrot.lane.b32.xlu0 %v1253, 20
  %v2126 = vpop.permute.xlu0 %2125
  %2127 = vrot.lane.b32.xlu0 %v1254, 20
  %v2128 = vpop.permute.xlu0 %2127
  %2129 = vrot.lane.b32.xlu0 %v1255, 20
  %v2130 = vpop.permute.xlu0 %2129
  %2131 = vrot.lane.b32.xlu0 %v1256, 20
  %v2132 = vpop.permute.xlu0 %2131
  %2133 = vrot.lane.b32.xlu0 %v1257, 20
  %v2134 = vpop.permute.xlu0 %2133
  %2185 = vrot.lane.b32.xlu0 %v1384, 24
  %v2186 = vpop.permute.xlu0 %2185
  %2187 = vrot.lane.b32.xlu0 %v1385, 24
  %v2188 = vpop.permute.xlu0 %2187
  %2189 = vrot.lane.b32.xlu0 %v1386, 24
  %v2190 = vpop.permute.xlu0 %2189
  %2191 = vrot.lane.b32.xlu0 %v1387, 24
  %v2192 = vpop.permute.xlu0 %2191
  %2193 = vrot.lane.b32.xlu0 %v1388, 24
  %v2194 = vpop.permute.xlu0 %2193
  %2195 = vrot.lane.b32.xlu0 %v1389, 24
  %v2196 = vpop.permute.xlu0 %2195
  %2197 = vrot.lane.b32.xlu0 %v1390, 24
  %v2198 = vpop.permute.xlu0 %2197
  %2199 = vrot.lane.b32.xlu0 %v1391, 24
  %v2200 = vpop.permute.xlu0 %2199
  %2201 = vrot.lane.b32.xlu0 %v1392, 24
  %v2202 = vpop.permute.xlu0 %2201
  %2203 = vrot.lane.b32.xlu0 %v1393, 24
  %v2204 = vpop.permute.xlu0 %2203
  %2205 = vrot.lane.b32.xlu0 %v1394, 24
  %v2206 = vpop.permute.xlu0 %2205
  %2207 = vrot.lane.b32.xlu0 %v1395, 24
  %v2208 = vpop.permute.xlu0 %2207
  %2209 = vrot.lane.b32.xlu0 %v1396, 24
  %v2210 = vpop.permute.xlu0 %2209
  %2211 = vrot.lane.b32.xlu0 %v1397, 24
  %v2212 = vpop.permute.xlu0 %2211
  %2213 = vrot.lane.b32.xlu0 %v1398, 24
  %v2214 = vpop.permute.xlu0 %2213
  %2215 = vrot.lane.b32.xlu0 %v1399, 24
  %v2216 = vpop.permute.xlu0 %2215
  %2217 = vrot.lane.b32.xlu0 %v1400, 24
  %v2218 = vpop.permute.xlu0 %2217
  %2219 = vrot.lane.b32.xlu0 %v1401, 24
  %v2220 = vpop.permute.xlu0 %2219
  %2221 = vrot.lane.b32.xlu0 %v1402, 24
  %v2222 = vpop.permute.xlu0 %2221
  %2223 = vrot.lane.b32.xlu0 %v1403, 24
  %v2224 = vpop.permute.xlu0 %2223
  %2225 = vrot.lane.b32.xlu0 %v1404, 24
  %v2226 = vpop.permute.xlu0 %2225
  %2227 = vrot.lane.b32.xlu0 %v1405, 24
  %v2228 = vpop.permute.xlu0 %2227
  %2229 = vrot.lane.b32.xlu0 %v1406, 24
  %v2230 = vpop.permute.xlu0 %2229
  %2231 = vrot.lane.b32.xlu0 %v1407, 24
  %v2232 = vpop.permute.xlu0 %2231
  %2233 = vrot.lane.b32.xlu0 %v1408, 24
  %v2234 = vpop.permute.xlu0 %2233
  %2285 = vrot.lane.b32.xlu0 %v1535, 28
  %v2286 = vpop.permute.xlu0 %2285
  %2287 = vrot.lane.b32.xlu0 %v1536, 28
  %v2288 = vpop.permute.xlu0 %2287
  %2289 = vrot.lane.b32.xlu0 %v1537, 28
  %v2290 = vpop.permute.xlu0 %2289
  %2291 = vrot.lane.b32.xlu0 %v1538, 28
  %v2292 = vpop.permute.xlu0 %2291
  %2293 = vrot.lane.b32.xlu0 %v1539, 28
  %v2294 = vpop.permute.xlu0 %2293
  %2295 = vrot.lane.b32.xlu0 %v1540, 28
  %v2296 = vpop.permute.xlu0 %2295
  %2297 = vrot.lane.b32.xlu0 %v1541, 28
  %v2298 = vpop.permute.xlu0 %2297
  %2299 = vrot.lane.b32.xlu0 %v1542, 28
  %v2300 = vpop.permute.xlu0 %2299
  %2301 = vrot.lane.b32.xlu0 %v1543, 28
  %v2302 = vpop.permute.xlu0 %2301
  %2303 = vrot.lane.b32.xlu0 %v1544, 28
  %v2304 = vpop.permute.xlu0 %2303
  %2305 = vrot.lane.b32.xlu0 %v1545, 28
  %v2306 = vpop.permute.xlu0 %2305
  %2307 = vrot.lane.b32.xlu0 %v1546, 28
  %v2308 = vpop.permute.xlu0 %2307
  %2309 = vrot.lane.b32.xlu0 %v1547, 28
  %v2310 = vpop.permute.xlu0 %2309
  %2311 = vrot.lane.b32.xlu0 %v1548, 28
  %v2312 = vpop.permute.xlu0 %2311
  %2313 = vrot.lane.b32.xlu0 %v1549, 28
  %v2314 = vpop.permute.xlu0 %2313
  %2315 = vrot.lane.b32.xlu0 %v1550, 28
  %v2316 = vpop.permute.xlu0 %2315
  %2317 = vrot.lane.b32.xlu0 %v1551, 28
  %v2318 = vpop.permute.xlu0 %2317
  %2319 = vrot.lane.b32.xlu0 %v1552, 28
  %v2320 = vpop.permute.xlu0 %2319
  %2321 = vrot.lane.b32.xlu0 %v1553, 28
  %v2322 = vpop.permute.xlu0 %2321
  %2323 = vrot.lane.b32.xlu0 %v1554, 28
  %v2324 = vpop.permute.xlu0 %2323
  %2325 = vrot.lane.b32.xlu0 %v1555, 28
  %v2326 = vpop.permute.xlu0 %2325
  %2327 = vrot.lane.b32.xlu0 %v1556, 28
  %v2328 = vpop.permute.xlu0 %2327
  %2329 = vrot.lane.b32.xlu0 %v1557, 28
  %v2330 = vpop.permute.xlu0 %2329
  %2331 = vrot.lane.b32.xlu0 %v1558, 28
  %v2332 = vpop.permute.xlu0 %2331
  %2333 = vrot.lane.b32.xlu0 %v1559, 28
  %v2334 = vpop.permute.xlu0 %2333
  %2385 = vrot.lane.b32.xlu0 %v1635, 32
  %v2386 = vpop.permute.xlu0 %2385
  %2387 = vrot.lane.b32.xlu0 %v1636, 32
  %v2388 = vpop.permute.xlu0 %2387
  %2389 = vrot.lane.b32.xlu0 %v1637, 32
  %v2390 = vpop.permute.xlu0 %2389
  %2391 = vrot.lane.b32.xlu0 %v1638, 32
  %v2392 = vpop.permute.xlu0 %2391
  %2393 = vrot.lane.b32.xlu0 %v1639, 32
  %v2394 = vpop.permute.xlu0 %2393
  %2395 = vrot.lane.b32.xlu0 %v1640, 32
  %v2396 = vpop.permute.xlu0 %2395
  %2397 = vrot.lane.b32.xlu0 %v1641, 32
  %v2398 = vpop.permute.xlu0 %2397
  %2399 = vrot.lane.b32.xlu0 %v1642, 32
  %v2400 = vpop.permute.xlu0 %2399
  %2401 = vrot.lane.b32.xlu0 %v1643, 32
  %v2402 = vpop.permute.xlu0 %2401
  %2403 = vrot.lane.b32.xlu0 %v1644, 32
  %v2404 = vpop.permute.xlu0 %2403
  %2405 = vrot.lane.b32.xlu0 %v1645, 32
  %v2406 = vpop.permute.xlu0 %2405
  %2407 = vrot.lane.b32.xlu0 %v1646, 32
  %v2408 = vpop.permute.xlu0 %2407
  %2409 = vrot.lane.b32.xlu0 %v1647, 32
  %v2410 = vpop.permute.xlu0 %2409
  %2411 = vrot.lane.b32.xlu0 %v1648, 32
  %v2412 = vpop.permute.xlu0 %2411
  %2413 = vrot.lane.b32.xlu0 %v1649, 32
  %v2414 = vpop.permute.xlu0 %2413
  %2415 = vrot.lane.b32.xlu0 %v1650, 32
  %v2416 = vpop.permute.xlu0 %2415
  %2417 = vrot.lane.b32.xlu0 %v1651, 32
  %v2418 = vpop.permute.xlu0 %2417
  %2419 = vrot.lane.b32.xlu0 %v1652, 32
  %v2420 = vpop.permute.xlu0 %2419
  %2421 = vrot.lane.b32.xlu0 %v1653, 32
  %v2422 = vpop.permute.xlu0 %2421
  %2423 = vrot.lane.b32.xlu0 %v1654, 32
  %v2424 = vpop.permute.xlu0 %2423
  %2425 = vrot.lane.b32.xlu0 %v1655, 32
  %v2426 = vpop.permute.xlu0 %2425
  %2427 = vrot.lane.b32.xlu0 %v1656, 32
  %v2428 = vpop.permute.xlu0 %2427
  %2429 = vrot.lane.b32.xlu0 %v1657, 32
  %v2430 = vpop.permute.xlu0 %2429
  %2431 = vrot.lane.b32.xlu0 %v1658, 32
  %v2432 = vpop.permute.xlu0 %2431
  %2433 = vrot.lane.b32.xlu0 %v1659, 32
  %v2434 = vpop.permute.xlu0 %2433
  %vm2460 = vcmask 31744
  %v2461 = vsel %vm2460, %v629, %v1686
  %v2462 = vsel %vm2460, %v630, %v1688
  %v2463 = vsel %vm2460, %v631, %v1690
  %v2464 = vsel %vm2460, %v632, %v1692
  %v2465 = vsel %vm2460, %v633, %v1694
  %v2466 = vsel %vm2460, %v634, %v1696
  %v2467 = vsel %vm2460, %v635, %v1698
  %v2468 = vsel %vm2460, %v636, %v1700
  %v2469 = vsel %vm2460, %v637, %v1702
  %v2470 = vsel %vm2460, %v638, %v1704
  %v2471 = vsel %vm2460, %v639, %v1706
  %v2472 = vsel %vm2460, %v640, %v1708
  %v2473 = vsel %vm2460, %v641, %v1710
  %v2474 = vsel %vm2460, %v642, %v1712
  %v2475 = vsel %vm2460, %v643, %v1714
  %v2476 = vsel %vm2460, %v644, %v1716
  %v2477 = vsel %vm2460, %v645, %v1718
  %v2478 = vsel %vm2460, %v646, %v1720
  %v2479 = vsel %vm2460, %v647, %v1722
  %v2480 = vsel %vm2460, %v648, %v1724
  %v2481 = vsel %vm2460, %v649, %v1726
  %v2482 = vsel %vm2460, %v650, %v1728
  %v2483 = vsel %vm2460, %v651, %v1730
  %v2484 = vsel %vm2460, %v652, %v1732
  %v2485 = vsel %vm2460, %v653, %v1734
  %vm2486 = vcmask 64512
  %v2487 = vsel %vm2486, %v2461, %v1786
  %v2488 = vsel %vm2486, %v2462, %v1788
  %v2489 = vsel %vm2486, %v2463, %v1790
  %v2490 = vsel %vm2486, %v2464, %v1792
  %v2491 = vsel %vm2486, %v2465, %v1794
  %v2492 = vsel %vm2486, %v2466, %v1796
  %v2493 = vsel %vm2486, %v2467, %v1798
  %v2494 = vsel %vm2486, %v2468, %v1800
  %v2495 = vsel %vm2486, %v2469, %v1802
  %v2496 = vsel %vm2486, %v2470, %v1804
  %v2497 = vsel %vm2486, %v2471, %v1806
  %v2498 = vsel %vm2486, %v2472, %v1808
  %v2499 = vsel %vm2486, %v2473, %v1810
  %v2500 = vsel %vm2486, %v2474, %v1812
  %v2501 = vsel %vm2486, %v2475, %v1814
  %v2502 = vsel %vm2486, %v2476, %v1816
  %v2503 = vsel %vm2486, %v2477, %v1818
  %v2504 = vsel %vm2486, %v2478, %v1820
  %v2505 = vsel %vm2486, %v2479, %v1822
  %v2506 = vsel %vm2486, %v2480, %v1824
  %v2507 = vsel %vm2486, %v2481, %v1826
  %v2508 = vsel %vm2486, %v2482, %v1828
  %v2509 = vsel %vm2486, %v2483, %v1830
  %v2510 = vsel %vm2486, %v2484, %v1832
  %v2511 = vsel %vm2486, %v2485, %v1834
  %vm2512 = vcmask 97280
  %v2513 = vsel %vm2512, %v2487, %v1886
  %v2514 = vsel %vm2512, %v2488, %v1888
  %v2515 = vsel %vm2512, %v2489, %v1890
  %v2516 = vsel %vm2512, %v2490, %v1892
  %v2517 = vsel %vm2512, %v2491, %v1894
  %v2518 = vsel %vm2512, %v2492, %v1896
  %v2519 = vsel %vm2512, %v2493, %v1898
  %v2520 = vsel %vm2512, %v2494, %v1900
  %v2521 = vsel %vm2512, %v2495, %v1902
  %v2522 = vsel %vm2512, %v2496, %v1904
  %v2523 = vsel %vm2512, %v2497, %v1906
  %v2524 = vsel %vm2512, %v2498, %v1908
  %v2525 = vsel %vm2512, %v2499, %v1910
  %v2526 = vsel %vm2512, %v2500, %v1912
  %v2527 = vsel %vm2512, %v2501, %v1914
  %v2528 = vsel %vm2512, %v2502, %v1916
  %v2529 = vsel %vm2512, %v2503, %v1918
  %v2530 = vsel %vm2512, %v2504, %v1920
  %v2531 = vsel %vm2512, %v2505, %v1922
  %v2532 = vsel %vm2512, %v2506, %v1924
  %v2533 = vsel %vm2512, %v2507, %v1926
  %v2534 = vsel %vm2512, %v2508, %v1928
  %v2535 = vsel %vm2512, %v2509, %v1930
  %v2536 = vsel %vm2512, %v2510, %v1932
  %v2537 = vsel %vm2512, %v2511, %v1934
  %vm2538 = vcmask 130048
  %v2539 = vsel %vm2538, %v2513, %v1986
  %v2540 = vsel %vm2538, %v2514, %v1988
  %v2541 = vsel %vm2538, %v2515, %v1990
  %v2542 = vsel %vm2538, %v2516, %v1992
  %v2543 = vsel %vm2538, %v2517, %v1994
  %v2544 = vsel %vm2538, %v2518, %v1996
  %v2545 = vsel %vm2538, %v2519, %v1998
  %v2546 = vsel %vm2538, %v2520, %v2000
  %v2547 = vsel %vm2538, %v2521, %v2002
  %v2548 = vsel %vm2538, %v2522, %v2004
  %v2549 = vsel %vm2538, %v2523, %v2006
  %v2550 = vsel %vm2538, %v2524, %v2008
  %v2551 = vsel %vm2538, %v2525, %v2010
  %v2552 = vsel %vm2538, %v2526, %v2012
  %v2553 = vsel %vm2538, %v2527, %v2014
  %v2554 = vsel %vm2538, %v2528, %v2016
  %v2555 = vsel %vm2538, %v2529, %v2018
  %v2556 = vsel %vm2538, %v2530, %v2020
  %v2557 = vsel %vm2538, %v2531, %v2022
  %v2558 = vsel %vm2538, %v2532, %v2024
  %v2559 = vsel %vm2538, %v2533, %v2026
  %v2560 = vsel %vm2538, %v2534, %v2028
  %v2561 = vsel %vm2538, %v2535, %v2030
  %v2562 = vsel %vm2538, %v2536, %v2032
  %v2563 = vsel %vm2538, %v2537, %v2034
  %vm2564 = vcmask 162816
  %v2565 = vsel %vm2564, %v2539, %v2086
  %v2566 = vsel %vm2564, %v2540, %v2088
  %v2567 = vsel %vm2564, %v2541, %v2090
  %v2568 = vsel %vm2564, %v2542, %v2092
  %v2569 = vsel %vm2564, %v2543, %v2094
  %v2570 = vsel %vm2564, %v2544, %v2096
  %v2571 = vsel %vm2564, %v2545, %v2098
  %v2572 = vsel %vm2564, %v2546, %v2100
  %v2573 = vsel %vm2564, %v2547, %v2102
  %v2574 = vsel %vm2564, %v2548, %v2104
  %v2575 = vsel %vm2564, %v2549, %v2106
  %v2576 = vsel %vm2564, %v2550, %v2108
  %v2577 = vsel %vm2564, %v2551, %v2110
  %v2578 = vsel %vm2564, %v2552, %v2112
  %v2579 = vsel %vm2564, %v2553, %v2114
  %v2580 = vsel %vm2564, %v2554, %v2116
  %v2581 = vsel %vm2564, %v2555, %v2118
  %v2582 = vsel %vm2564, %v2556, %v2120
  %v2583 = vsel %vm2564, %v2557, %v2122
  %v2584 = vsel %vm2564, %v2558, %v2124
  %v2585 = vsel %vm2564, %v2559, %v2126
  %v2586 = vsel %vm2564, %v2560, %v2128
  %v2587 = vsel %vm2564, %v2561, %v2130
  %v2588 = vsel %vm2564, %v2562, %v2132
  %v2589 = vsel %vm2564, %v2563, %v2134
  %vm2590 = vcmask 195584
  %v2591 = vsel %vm2590, %v2565, %v2186
  %v2592 = vsel %vm2590, %v2566, %v2188
  %v2593 = vsel %vm2590, %v2567, %v2190
  %v2594 = vsel %vm2590, %v2568, %v2192
  %v2595 = vsel %vm2590, %v2569, %v2194
  %v2596 = vsel %vm2590, %v2570, %v2196
  %v2597 = vsel %vm2590, %v2571, %v2198
  %v2598 = vsel %vm2590, %v2572, %v2200
  %v2599 = vsel %vm2590, %v2573, %v2202
  %v2600 = vsel %vm2590, %v2574, %v2204
  %v2601 = vsel %vm2590, %v2575, %v2206
  %v2602 = vsel %vm2590, %v2576, %v2208
  %v2603 = vsel %vm2590, %v2577, %v2210
  %v2604 = vsel %vm2590, %v2578, %v2212
  %v2605 = vsel %vm2590, %v2579, %v2214
  %v2606 = vsel %vm2590, %v2580, %v2216
  %v2607 = vsel %vm2590, %v2581, %v2218
  %v2608 = vsel %vm2590, %v2582, %v2220
  %v2609 = vsel %vm2590, %v2583, %v2222
  %v2610 = vsel %vm2590, %v2584, %v2224
  %v2611 = vsel %vm2590, %v2585, %v2226
  %v2612 = vsel %vm2590, %v2586, %v2228
  %v2613 = vsel %vm2590, %v2587, %v2230
  %v2614 = vsel %vm2590, %v2588, %v2232
  %v2615 = vsel %vm2590, %v2589, %v2234
  %vm2616 = vcmask 228352
  %v2617 = vsel %vm2616, %v2591, %v2286
  %v2618 = vsel %vm2616, %v2592, %v2288
  %v2619 = vsel %vm2616, %v2593, %v2290
  %v2620 = vsel %vm2616, %v2594, %v2292
  %v2621 = vsel %vm2616, %v2595, %v2294
  %v2622 = vsel %vm2616, %v2596, %v2296
  %v2623 = vsel %vm2616, %v2597, %v2298
  %v2624 = vsel %vm2616, %v2598, %v2300
  %v2625 = vsel %vm2616, %v2599, %v2302
  %v2626 = vsel %vm2616, %v2600, %v2304
  %v2627 = vsel %vm2616, %v2601, %v2306
  %v2628 = vsel %vm2616, %v2602, %v2308
  %v2629 = vsel %vm2616, %v2603, %v2310
  %v2630 = vsel %vm2616, %v2604, %v2312
  %v2631 = vsel %vm2616, %v2605, %v2314
  %v2632 = vsel %vm2616, %v2606, %v2316
  %v2633 = vsel %vm2616, %v2607, %v2318
  %v2634 = vsel %vm2616, %v2608, %v2320
  %v2635 = vsel %vm2616, %v2609, %v2322
  %v2636 = vsel %vm2616, %v2610, %v2324
  %v2637 = vsel %vm2616, %v2611, %v2326
  %v2638 = vsel %vm2616, %v2612, %v2328
  %v2639 = vsel %vm2616, %v2613, %v2330
  %v2640 = vsel %vm2616, %v2614, %v2332
  %v2641 = vsel %vm2616, %v2615, %v2334
  %vm2642 = vcmask 261120
  %v2643 = vsel %vm2642, %v2617, %v2386
  %v2644 = vsel %vm2642, %v2618, %v2388
  %v2645 = vsel %vm2642, %v2619, %v2390
  %v2646 = vsel %vm2642, %v2620, %v2392
  %v2647 = vsel %vm2642, %v2621, %v2394
  %v2648 = vsel %vm2642, %v2622, %v2396
  %v2649 = vsel %vm2642, %v2623, %v2398
  %v2650 = vsel %vm2642, %v2624, %v2400
  %v2651 = vsel %vm2642, %v2625, %v2402
  %v2652 = vsel %vm2642, %v2626, %v2404
  %v2653 = vsel %vm2642, %v2627, %v2406
  %v2654 = vsel %vm2642, %v2628, %v2408
  %v2655 = vsel %vm2642, %v2629, %v2410
  %v2656 = vsel %vm2642, %v2630, %v2412
  %v2657 = vsel %vm2642, %v2631, %v2414
  %v2658 = vsel %vm2642, %v2632, %v2416
  %v2659 = vsel %vm2642, %v2633, %v2418
  %v2660 = vsel %vm2642, %v2634, %v2420
  %v2661 = vsel %vm2642, %v2635, %v2422
  %v2662 = vsel %vm2642, %v2636, %v2424
  %v2663 = vsel %vm2642, %v2637, %v2426
  %v2664 = vsel %vm2642, %v2638, %v2428
  %v2665 = vsel %vm2642, %v2639, %v2430
  %v2666 = vsel %vm2642, %v2640, %v2432
  %v2667 = vsel %vm2642, %v2641, %v2434
  %v2668 = vld [vmem:[%s2] sm:$0xff]
  %v2669 = vld [vmem:[%s2 + $0x8] sm:$0xff]
  %v2670 = vld [vmem:[%s2 + $0x10] sm:$0xff]
  %v2671 = vld [vmem:[%s2 + $0x18] sm:$0xff]
  %v2672 = vld [vmem:[%s2 + $0x20] sm:$0xf]
  %v2673 = vld [vmem:[%s3] sm:$0x1]
  %v2675 = vlaneseq
  %v2676 = vshrl.u32 %v2675, 7
  %v2677 = vsub.s32 0, %v2676
  %v2678 = vrot.slane %v2673, %v2677
  %vm2680 = vcmask 293888
  %v2682 = vsel %vm2680, %v2643, 0
  %v2685 = vsel %vm2680, %v2644, 0
  %v2688 = vsel %vm2680, %v2645, 0
  %v2691 = vsel %vm2680, %v2646, 0
  %v2694 = vsel %vm2680, %v2647, 0
  %v2697 = vsel %vm2680, %v2648, 0
  %v2700 = vsel %vm2680, %v2649, 0
  %v2703 = vsel %vm2680, %v2650, 0
  %v2706 = vsel %vm2680, %v2651, 0
  %v2709 = vsel %vm2680, %v2652, 0
  %v2712 = vsel %vm2680, %v2653, 0
  %v2715 = vsel %vm2680, %v2654, 0
  %v2718 = vsel %vm2680, %v2655, 0
  %v2721 = vsel %vm2680, %v2656, 0
  %v2724 = vsel %vm2680, %v2657, 0
  %v2727 = vsel %vm2680, %v2658, 0
  %v2730 = vsel %vm2680, %v2659, 0
  %v2733 = vsel %vm2680, %v2660, 0
  %v2736 = vsel %vm2680, %v2661, 0
  %v2739 = vsel %vm2680, %v2662, 0
  %v2742 = vsel %vm2680, %v2663, 0
  %v2745 = vsel %vm2680, %v2664, 0
  %v2748 = vsel %vm2680, %v2665, 0
  %v2751 = vsel %vm2680, %v2666, 0
  %v2754 = vsel %vm2680, %v2667, 0
  %vm2756 = vcmask 1043456
  %v2758 = vsel %vm2756, %v2672, 0
  %2760 = vmatprep.subr.mxu0 0.0
  %2761 = vmatpush1.msra.mxu0 %v2668
  %2762 = vmatprep.subr.mxu0 0.0
  %2763 = vmatpush1.msra.mxu0 %v2669
  %2764 = vmatprep.subr.mxu0 0.0
  %2765 = vmatpush1.msra.mxu0 %v2670
  %2766 = vmatprep.subr.mxu0 0.0
  %2767 = vmatpush1.msra.mxu0 %v2671
  %2768 = vmatprep.subr.mxu0 0.0
  %2769 = vmatpush1.msra.mxu0 %v2758
  %2770 = vmatprep.subr.mxu0 0.0
  %2771 = vmatpush1.msra.mxu0 0.0
  %2772 = vmatprep.subr.mxu0 0.0
  %2773 = vmatpush1.msra.mxu0 0.0
  %2774 = vmatprep.subr.mxu0 0.0
  %2775 = vmatpush1.msra.mxu0 0.0
  %2776 = vmatprep.subr.mxu0 0.0
  %2777 = vmatpush1.msra.mxu0 0.0
  %2778 = vmatprep.subr.mxu0 0.0
  %2779 = vmatpush1.msra.mxu0 0.0
  %2780 = vmatprep.subr.mxu0 0.0
  %2781 = vmatpush1.msra.mxu0 0.0
  %2782 = vmatprep.subr.mxu0 0.0
  %2783 = vmatpush1.msra.mxu0 0.0
  %2784 = vmatprep.subr.mxu0 0.0
  %2785 = vmatpush1.msra.mxu0 0.0
  %2786 = vmatprep.subr.mxu0 0.0
  %2787 = vmatpush1.msra.mxu0 0.0
  %2788 = vmatprep.subr.mxu0 0.0
  %2789 = vmatpush1.msra.mxu0 0.0
  %2790 = vmatprep.subr.mxu0 0.0
  %2791 = vmatpush1.msra.mxu0 0.0
  %2792 = vmatprep.subr.mxu0 0.0
  %2793 = vmatpush1.msra.mxu0 0.0
  %2794 = vmatprep.subr.mxu0 0.0
  %2795 = vmatpush1.msra.mxu0 0.0
  %2796 = vmatprep.subr.mxu0 0.0
  %2797 = vmatpush1.msra.mxu0 0.0
  %2798 = vmatprep.subr.mxu0 0.0
  %2799 = vmatpush1.msra.mxu0 0.0
  %2800 = vmatprep.subr.mxu0 0.0
  %2801 = vmatpush1.msra.mxu0 0.0
  %2802 = vmatprep.subr.mxu0 0.0
  %2803 = vmatpush1.msra.mxu0 0.0
  %2804 = vmatprep.subr.mxu0 0.0
  %2805 = vmatpush1.msra.mxu0 0.0
  %2806 = vmatprep.subr.mxu0 0.0
  %2807 = vmatpush1.msra.mxu0 0.0
  %2808 = vmatprep.subr.mxu0 0.0
  %2809 = vmatpush1.msra.mxu0 0.0
  %2810 = vmatprep.subr.mxu0 0.0
  %2811 = vmatpush1.msra.mxu0 0.0
  %2812 = vmatprep.subr.mxu0 0.0
  %2813 = vmatpush1.msra.mxu0 0.0
  %2814 = vmatprep.subr.mxu0 0.0
  %2815 = vmatpush1.msra.mxu0 0.0
  %2816 = vmatprep.subr.mxu0 0.0
  %2817 = vmatpush1.msra.mxu0 0.0
  %2818 = vmatprep.subr.mxu0 0.0
  %2819 = vmatpush1.msra.mxu0 0.0
  %2820 = vmatprep.subr.mxu0 0.0
  %2821 = vmatpush1.msra.mxu0 0.0
  %2822 = vmatprep.subr.mxu0 0.0
  %2823 = vmatpush1.msra.mxu0 0.0
  %2824 = vmatprep.mubr.f32.mxu0 0.0
  %2825 = vmatmul.mubr.f32.gmra.mrb[0].mxu0 %v2682
  %v2826 = vpop.f32.mrb[0].mxu0
  %v2827 = vadd.f32 %v2678, %v2826
  %v2828 = vpop.f32.mrb[0].mxu0
  %2829 = vmatprep.mubr.f32.mxu0 0.0
  %2830 = vmatmul.mubr.f32.gmra.mrb[0].mxu0 %v2685
  %v2831 = vpop.f32.mrb[0].mxu0
  %v2832 = vadd.f32 %v2678, %v2831
  %v2833 = vpop.f32.mrb[0].mxu0
  %2834 = vmatprep.mubr.f32.mxu0 0.0
  %2835 = vmatmul.mubr.f32.gmra.mrb[0].mxu0 %v2688
  %v2836 = vpop.f32.mrb[0].mxu0
  %v2837 = vadd.f32 %v2678, %v2836
  %v2838 = vpop.f32.mrb[0].mxu0
  %2839 = vmatprep.mubr.f32.mxu0 0.0
  %2840 = vmatmul.mubr.f32.gmra.mrb[0].mxu0 %v2691
  %v2841 = vpop.f32.mrb[0].mxu0
  %v2842 = vadd.f32 %v2678, %v2841
  %v2843 = vpop.f32.mrb[0].mxu0
  %2844 = vmatprep.mubr.f32.mxu0 0.0
  %2845 = vmatmul.mubr.f32.gmra.mrb[0].mxu0 %v2694
  %v2846 = vpop.f32.mrb[0].mxu0
  %v2847 = vadd.f32 %v2678, %v2846
  %v2848 = vpop.f32.mrb[0].mxu0
  %2849 = vmatprep.mubr.f32.mxu0 0.0
  %2850 = vmatmul.mubr.f32.gmra.mrb[0].mxu0 %v2697
  %v2851 = vpop.f32.mrb[0].mxu0
  %v2852 = vadd.f32 %v2678, %v2851
  %v2853 = vpop.f32.mrb[0].mxu0
  %2854 = vmatprep.mubr.f32.mxu0 0.0
  %2855 = vmatmul.mubr.f32.gmra.mrb[0].mxu0 %v2700
  %v2856 = vpop.f32.mrb[0].mxu0
  %v2857 = vadd.f32 %v2678, %v2856
  %v2858 = vpop.f32.mrb[0].mxu0
  %2859 = vmatprep.mubr.f32.mxu0 0.0
  %2860 = vmatmul.mubr.f32.gmra.mrb[0].mxu0 %v2703
  %v2861 = vpop.f32.mrb[0].mxu0
  %v2862 = vadd.f32 %v2678, %v2861
  %v2863 = vpop.f32.mrb[0].mxu0
  %2864 = vmatprep.mubr.f32.mxu0 0.0
  %2865 = vmatmul.mubr.f32.gmra.mrb[0].mxu0 %v2706
  %v2866 = vpop.f32.mrb[0].mxu0
  %v2867 = vadd.f32 %v2678, %v2866
  %v2868 = vpop.f32.mrb[0].mxu0
  %2869 = vmatprep.mubr.f32.mxu0 0.0
  %2870 = vmatmul.mubr.f32.gmra.mrb[0].mxu0 %v2709
  %v2871 = vpop.f32.mrb[0].mxu0
  %v2872 = vadd.f32 %v2678, %v2871
  %v2873 = vpop.f32.mrb[0].mxu0
  %2874 = vmatprep.mubr.f32.mxu0 0.0
  %2875 = vmatmul.mubr.f32.gmra.mrb[0].mxu0 %v2712
  %v2876 = vpop.f32.mrb[0].mxu0
  %v2877 = vadd.f32 %v2678, %v2876
  %v2878 = vpop.f32.mrb[0].mxu0
  %2879 = vmatprep.mubr.f32.mxu0 0.0
  %2880 = vmatmul.mubr.f32.gmra.mrb[0].mxu0 %v2715
  %v2881 = vpop.f32.mrb[0].mxu0
  %v2882 = vadd.f32 %v2678, %v2881
  %v2883 = vpop.f32.mrb[0].mxu0
  %2884 = vmatprep.mubr.f32.mxu0 0.0
  %2885 = vmatmul.mubr.f32.gmra.mrb[0].mxu0 %v2718
  %v2886 = vpop.f32.mrb[0].mxu0
  %v2887 = vadd.f32 %v2678, %v2886
  %v2888 = vpop.f32.mrb[0].mxu0
  %2889 = vmatprep.mubr.f32.mxu0 0.0
  %2890 = vmatmul.mubr.f32.gmra.mrb[0].mxu0 %v2721
  %v2891 = vpop.f32.mrb[0].mxu0
  %v2892 = vadd.f32 %v2678, %v2891
  %v2893 = vpop.f32.mrb[0].mxu0
  %2894 = vmatprep.mubr.f32.mxu0 0.0
  %2895 = vmatmul.mubr.f32.gmra.mrb[0].mxu0 %v2724
  %v2896 = vpop.f32.mrb[0].mxu0
  %v2897 = vadd.f32 %v2678, %v2896
  %v2898 = vpop.f32.mrb[0].mxu0
  %2899 = vmatprep.mubr.f32.mxu0 0.0
  %2900 = vmatmul.mubr.f32.gmra.mrb[0].mxu0 %v2727
  %v2901 = vpop.f32.mrb[0].mxu0
  %v2902 = vadd.f32 %v2678, %v2901
  %v2903 = vpop.f32.mrb[0].mxu0
  %2904 = vmatprep.mubr.f32.mxu0 0.0
  %2905 = vmatmul.mubr.f32.gmra.mrb[0].mxu0 %v2730
  %v2906 = vpop.f32.mrb[0].mxu0
  %v2907 = vadd.f32 %v2678, %v2906
  %v2908 = vpop.f32.mrb[0].mxu0
  %2909 = vmatprep.mubr.f32.mxu0 0.0
  %2910 = vmatmul.mubr.f32.gmra.mrb[0].mxu0 %v2733
  %v2911 = vpop.f32.mrb[0].mxu0
  %v2912 = vadd.f32 %v2678, %v2911
  %v2913 = vpop.f32.mrb[0].mxu0
  %2914 = vmatprep.mubr.f32.mxu0 0.0
  %2915 = vmatmul.mubr.f32.gmra.mrb[0].mxu0 %v2736
  %v2916 = vpop.f32.mrb[0].mxu0
  %v2917 = vadd.f32 %v2678, %v2916
  %v2918 = vpop.f32.mrb[0].mxu0
  %2919 = vmatprep.mubr.f32.mxu0 0.0
  %2920 = vmatmul.mubr.f32.gmra.mrb[0].mxu0 %v2739
  %v2921 = vpop.f32.mrb[0].mxu0
  %v2922 = vadd.f32 %v2678, %v2921
  %v2923 = vpop.f32.mrb[0].mxu0
  %2924 = vmatprep.mubr.f32.mxu0 0.0
  %2925 = vmatmul.mubr.f32.gmra.mrb[0].mxu0 %v2742
  %v2926 = vpop.f32.mrb[0].mxu0
  %v2927 = vadd.f32 %v2678, %v2926
  %v2928 = vpop.f32.mrb[0].mxu0
  %2929 = vmatprep.mubr.f32.mxu0 0.0
  %2930 = vmatmul.mubr.f32.gmra.mrb[0].mxu0 %v2745
  %v2931 = vpop.f32.mrb[0].mxu0
  %v2932 = vadd.f32 %v2678, %v2931
  %v2933 = vpop.f32.mrb[0].mxu0
  %2934 = vmatprep.mubr.f32.mxu0 0.0
  %2935 = vmatmul.mubr.f32.gmra.mrb[0].mxu0 %v2748
  %v2936 = vpop.f32.mrb[0].mxu0
  %v2937 = vadd.f32 %v2678, %v2936
  %v2938 = vpop.f32.mrb[0].mxu0
  %2939 = vmatprep.mubr.f32.mxu0 0.0
  %2940 = vmatmul.mubr.f32.gmra.mrb[0].mxu0 %v2751
  %v2941 = vpop.f32.mrb[0].mxu0
  %v2942 = vadd.f32 %v2678, %v2941
  %v2943 = vpop.f32.mrb[0].mxu0
  %2944 = vmatprep.mubr.f32.mxu0 0.0
  %2945 = vmatmul.mubr.f32.gmra.mrb[0].mxu0 %v2754
  %v2946 = vpop.f32.mrb[0].mxu0
  %v2947 = vadd.f32 %v2678, %v2946
  %v2948 = vpop.f32.mrb[0].mxu0
  %2949 = vdwg.mxu0
  %v2950 = vmax.f32 %v2827, 0.0
  %v2951 = vmax.f32 %v2832, 0.0
  %v2952 = vmax.f32 %v2837, 0.0
  %v2953 = vmax.f32 %v2842, 0.0
  %v2954 = vmax.f32 %v2847, 0.0
  %v2955 = vmax.f32 %v2852, 0.0
  %v2956 = vmax.f32 %v2857, 0.0
  %v2957 = vmax.f32 %v2862, 0.0
  %v2958 = vmax.f32 %v2867, 0.0
  %v2959 = vmax.f32 %v2872, 0.0
  %v2960 = vmax.f32 %v2877, 0.0
  %v2961 = vmax.f32 %v2882, 0.0
  %v2962 = vmax.f32 %v2887, 0.0
  %v2963 = vmax.f32 %v2892, 0.0
  %v2964 = vmax.f32 %v2897, 0.0
  %v2965 = vmax.f32 %v2902, 0.0
  %v2966 = vmax.f32 %v2907, 0.0
  %v2967 = vmax.f32 %v2912, 0.0
  %v2968 = vmax.f32 %v2917, 0.0
  %v2969 = vmax.f32 %v2922, 0.0
  %v2970 = vmax.f32 %v2927, 0.0
  %v2971 = vmax.f32 %v2932, 0.0
  %v2972 = vmax.f32 %v2937, 0.0
  %v2973 = vmax.f32 %v2942, 0.0
  %v2974 = vmax.f32 %v2947, 0.0
  %v3000 = vcombine.high %v2950, %v2950
  %v3002 = vunpack.c.l.s4 1966171168
  %v3003 = vunpack.c.0.s8 %v3002
  %v3004 = vlaneseq
  %v3005 = vshrl.u32 %v3004, 7
  %v3006 = vsub.s32 %v3003, %v3005
  %v3007 = vrot.slane %v2950, %v3006
  %v3009 = vunpack.c.l.s4 1966171168
  %v3010 = vunpack.c.0.s8 %v3009
  %v3011 = vlaneseq
  %v3012 = vshrl.u32 %v3011, 7
  %v3013 = vsub.s32 %v3010, %v3012
  %v3014 = vrot.slane %v3000, %v3013
  %v3015 = vcombine.high %v3007, %v3007
  %v3016 = vcombine.high %v3014, %v3014
  %v3018 = vunpack.c.l.s4 1966171168
  %v3019 = vunpack.c.0.s8 %v3018
  %v3020 = vlaneseq
  %v3021 = vshrl.u32 %v3020, 7
  %v3022 = vsub.s32 %v3019, %v3021
  %v3023 = vrot.slane %v3007, %v3022
  %v3025 = vunpack.c.l.s4 1966171168
  %v3026 = vunpack.c.0.s8 %v3025
  %v3027 = vlaneseq
  %v3028 = vshrl.u32 %v3027, 7
  %v3029 = vsub.s32 %v3026, %v3028
  %v3030 = vrot.slane %v3014, %v3029
  %v3032 = vunpack.c.l.s4 1966171168
  %v3033 = vunpack.c.0.s8 %v3032
  %v3034 = vlaneseq
  %v3035 = vshrl.u32 %v3034, 7
  %v3036 = vsub.s32 %v3033, %v3035
  %v3037 = vrot.slane %v3015, %v3036
  %v3039 = vunpack.c.l.s4 1966171168
  %v3040 = vunpack.c.0.s8 %v3039
  %v3041 = vlaneseq
  %v3042 = vshrl.u32 %v3041, 7
  %v3043 = vsub.s32 %v3040, %v3042
  %v3044 = vrot.slane %v3016, %v3043
  %v3045 = vcombine.high %v3023, %v3023
  %v3046 = vcombine.high %v3030, %v3030
  %v3047 = vcombine.high %v3037, %v3037
  %v3048 = vcombine.high %v3044, %v3044
  %v3049 = vcombine.high %v2951, %v2951
  %v3051 = vunpack.c.l.s4 1966171168
  %v3052 = vunpack.c.0.s8 %v3051
  %v3053 = vlaneseq
  %v3054 = vshrl.u32 %v3053, 7
  %v3055 = vsub.s32 %v3052, %v3054
  %v3056 = vrot.slane %v2951, %v3055
  %v3058 = vunpack.c.l.s4 1966171168
  %v3059 = vunpack.c.0.s8 %v3058
  %v3060 = vlaneseq
  %v3061 = vshrl.u32 %v3060, 7
  %v3062 = vsub.s32 %v3059, %v3061
  %v3063 = vrot.slane %v3049, %v3062
  %v3064 = vcombine.high %v3056, %v3056
  %v3065 = vcombine.high %v3063, %v3063
  %v3067 = vunpack.c.l.s4 1966171168
  %v3068 = vunpack.c.0.s8 %v3067
  %v3069 = vlaneseq
  %v3070 = vshrl.u32 %v3069, 7
  %v3071 = vsub.s32 %v3068, %v3070
  %v3072 = vrot.slane %v3056, %v3071
  %v3074 = vunpack.c.l.s4 1966171168
  %v3075 = vunpack.c.0.s8 %v3074
  %v3076 = vlaneseq
  %v3077 = vshrl.u32 %v3076, 7
  %v3078 = vsub.s32 %v3075, %v3077
  %v3079 = vrot.slane %v3063, %v3078
  %v3081 = vunpack.c.l.s4 1966171168
  %v3082 = vunpack.c.0.s8 %v3081
  %v3083 = vlaneseq
  %v3084 = vshrl.u32 %v3083, 7
  %v3085 = vsub.s32 %v3082, %v3084
  %v3086 = vrot.slane %v3064, %v3085
  %v3088 = vunpack.c.l.s4 1966171168
  %v3089 = vunpack.c.0.s8 %v3088
  %v3090 = vlaneseq
  %v3091 = vshrl.u32 %v3090, 7
  %v3092 = vsub.s32 %v3089, %v3091
  %v3093 = vrot.slane %v3065, %v3092
  %v3094 = vcombine.high %v3072, %v3072
  %v3095 = vcombine.high %v3079, %v3079
  %v3096 = vcombine.high %v3086, %v3086
  %v3097 = vcombine.high %v3093, %v3093
  %v3098 = vcombine.high %v2952, %v2952
  %v3100 = vunpack.c.l.s4 1966171168
  %v3101 = vunpack.c.0.s8 %v3100
  %v3102 = vlaneseq
  %v3103 = vshrl.u32 %v3102, 7
  %v3104 = vsub.s32 %v3101, %v3103
  %v3105 = vrot.slane %v2952, %v3104
  %v3107 = vunpack.c.l.s4 1966171168
  %v3108 = vunpack.c.0.s8 %v3107
  %v3109 = vlaneseq
  %v3110 = vshrl.u32 %v3109, 7
  %v3111 = vsub.s32 %v3108, %v3110
  %v3112 = vrot.slane %v3098, %v3111
  %v3113 = vcombine.high %v3105, %v3105
  %v3114 = vcombine.high %v3112, %v3112
  %v3116 = vunpack.c.l.s4 1966171168
  %v3117 = vunpack.c.0.s8 %v3116
  %v3118 = vlaneseq
  %v3119 = vshrl.u32 %v3118, 7
  %v3120 = vsub.s32 %v3117, %v3119
  %v3121 = vrot.slane %v3105, %v3120
  %v3123 = vunpack.c.l.s4 1966171168
  %v3124 = vunpack.c.0.s8 %v3123
  %v3125 = vlaneseq
  %v3126 = vshrl.u32 %v3125, 7
  %v3127 = vsub.s32 %v3124, %v3126
  %v3128 = vrot.slane %v3112, %v3127
  %v3130 = vunpack.c.l.s4 1966171168
  %v3131 = vunpack.c.0.s8 %v3130
  %v3132 = vlaneseq
  %v3133 = vshrl.u32 %v3132, 7
  %v3134 = vsub.s32 %v3131, %v3133
  %v3135 = vrot.slane %v3113, %v3134
  %v3137 = vunpack.c.l.s4 1966171168
  %v3138 = vunpack.c.0.s8 %v3137
  %v3139 = vlaneseq
  %v3140 = vshrl.u32 %v3139, 7
  %v3141 = vsub.s32 %v3138, %v3140
  %v3142 = vrot.slane %v3114, %v3141
  %v3143 = vcombine.high %v3121, %v3121
  %v3144 = vcombine.high %v3128, %v3128
  %v3145 = vcombine.high %v3135, %v3135
  %v3146 = vcombine.high %v3142, %v3142
  %v3147 = vcombine.high %v2953, %v2953
  %v3149 = vunpack.c.l.s4 1966171168
  %v3150 = vunpack.c.0.s8 %v3149
  %v3151 = vlaneseq
  %v3152 = vshrl.u32 %v3151, 7
  %v3153 = vsub.s32 %v3150, %v3152
  %v3154 = vrot.slane %v2953, %v3153
  %v3156 = vunpack.c.l.s4 1966171168
  %v3157 = vunpack.c.0.s8 %v3156
  %v3158 = vlaneseq
  %v3159 = vshrl.u32 %v3158, 7
  %v3160 = vsub.s32 %v3157, %v3159
  %v3161 = vrot.slane %v3147, %v3160
  %v3162 = vcombine.high %v3154, %v3154
  %v3163 = vcombine.high %v3161, %v3161
  %v3165 = vunpack.c.l.s4 1966171168
  %v3166 = vunpack.c.0.s8 %v3165
  %v3167 = vlaneseq
  %v3168 = vshrl.u32 %v3167, 7
  %v3169 = vsub.s32 %v3166, %v3168
  %v3170 = vrot.slane %v3154, %v3169
  %v3172 = vunpack.c.l.s4 1966171168
  %v3173 = vunpack.c.0.s8 %v3172
  %v3174 = vlaneseq
  %v3175 = vshrl.u32 %v3174, 7
  %v3176 = vsub.s32 %v3173, %v3175
  %v3177 = vrot.slane %v3161, %v3176
  %v3179 = vunpack.c.l.s4 1966171168
  %v3180 = vunpack.c.0.s8 %v3179
  %v3181 = vlaneseq
  %v3182 = vshrl.u32 %v3181, 7
  %v3183 = vsub.s32 %v3180, %v3182
  %v3184 = vrot.slane %v3162, %v3183
  %v3186 = vunpack.c.l.s4 1966171168
  %v3187 = vunpack.c.0.s8 %v3186
  %v3188 = vlaneseq
  %v3189 = vshrl.u32 %v3188, 7
  %v3190 = vsub.s32 %v3187, %v3189
  %v3191 = vrot.slane %v3163, %v3190
  %v3192 = vcombine.high %v3170, %v3170
  %v3193 = vcombine.high %v3177, %v3177
  %v3194 = vcombine.high %v3184, %v3184
  %v3195 = vcombine.high %v3191, %v3191
  %v3196 = vcombine.high %v2954, %v2954
  %v3198 = vunpack.c.l.s4 1966171168
  %v3199 = vunpack.c.0.s8 %v3198
  %v3200 = vlaneseq
  %v3201 = vshrl.u32 %v3200, 7
  %v3202 = vsub.s32 %v3199, %v3201
  %v3203 = vrot.slane %v2954, %v3202
  %v3205 = vunpack.c.l.s4 1966171168
  %v3206 = vunpack.c.0.s8 %v3205
  %v3207 = vlaneseq
  %v3208 = vshrl.u32 %v3207, 7
  %v3209 = vsub.s32 %v3206, %v3208
  %v3210 = vrot.slane %v3196, %v3209
  %v3211 = vcombine.high %v3203, %v3203
  %v3212 = vcombine.high %v3210, %v3210
  %v3214 = vunpack.c.l.s4 1966171168
  %v3215 = vunpack.c.0.s8 %v3214
  %v3216 = vlaneseq
  %v3217 = vshrl.u32 %v3216, 7
  %v3218 = vsub.s32 %v3215, %v3217
  %v3219 = vrot.slane %v3203, %v3218
  %v3221 = vunpack.c.l.s4 1966171168
  %v3222 = vunpack.c.0.s8 %v3221
  %v3223 = vlaneseq
  %v3224 = vshrl.u32 %v3223, 7
  %v3225 = vsub.s32 %v3222, %v3224
  %v3226 = vrot.slane %v3210, %v3225
  %v3228 = vunpack.c.l.s4 1966171168
  %v3229 = vunpack.c.0.s8 %v3228
  %v3230 = vlaneseq
  %v3231 = vshrl.u32 %v3230, 7
  %v3232 = vsub.s32 %v3229, %v3231
  %v3233 = vrot.slane %v3211, %v3232
  %v3235 = vunpack.c.l.s4 1966171168
  %v3236 = vunpack.c.0.s8 %v3235
  %v3237 = vlaneseq
  %v3238 = vshrl.u32 %v3237, 7
  %v3239 = vsub.s32 %v3236, %v3238
  %v3240 = vrot.slane %v3212, %v3239
  %v3241 = vcombine.high %v3219, %v3219
  %v3242 = vcombine.high %v3226, %v3226
  %v3243 = vcombine.high %v3233, %v3233
  %v3244 = vcombine.high %v3240, %v3240
  %v3245 = vcombine.high %v2955, %v2955
  %v3247 = vunpack.c.l.s4 1966171168
  %v3248 = vunpack.c.0.s8 %v3247
  %v3249 = vlaneseq
  %v3250 = vshrl.u32 %v3249, 7
  %v3251 = vsub.s32 %v3248, %v3250
  %v3252 = vrot.slane %v2955, %v3251
  %v3254 = vunpack.c.l.s4 1966171168
  %v3255 = vunpack.c.0.s8 %v3254
  %v3256 = vlaneseq
  %v3257 = vshrl.u32 %v3256, 7
  %v3258 = vsub.s32 %v3255, %v3257
  %v3259 = vrot.slane %v3245, %v3258
  %v3260 = vcombine.high %v3252, %v3252
  %v3261 = vcombine.high %v3259, %v3259
  %v3263 = vunpack.c.l.s4 1966171168
  %v3264 = vunpack.c.0.s8 %v3263
  %v3265 = vlaneseq
  %v3266 = vshrl.u32 %v3265, 7
  %v3267 = vsub.s32 %v3264, %v3266
  %v3268 = vrot.slane %v3252, %v3267
  %v3270 = vunpack.c.l.s4 1966171168
  %v3271 = vunpack.c.0.s8 %v3270
  %v3272 = vlaneseq
  %v3273 = vshrl.u32 %v3272, 7
  %v3274 = vsub.s32 %v3271, %v3273
  %v3275 = vrot.slane %v3259, %v3274
  %v3277 = vunpack.c.l.s4 1966171168
  %v3278 = vunpack.c.0.s8 %v3277
  %v3279 = vlaneseq
  %v3280 = vshrl.u32 %v3279, 7
  %v3281 = vsub.s32 %v3278, %v3280
  %v3282 = vrot.slane %v3260, %v3281
  %v3284 = vunpack.c.l.s4 1966171168
  %v3285 = vunpack.c.0.s8 %v3284
  %v3286 = vlaneseq
  %v3287 = vshrl.u32 %v3286, 7
  %v3288 = vsub.s32 %v3285, %v3287
  %v3289 = vrot.slane %v3261, %v3288
  %v3290 = vcombine.high %v3268, %v3268
  %v3291 = vcombine.high %v3275, %v3275
  %v3292 = vcombine.high %v3282, %v3282
  %v3293 = vcombine.high %v3289, %v3289
  %v3294 = vcombine.high %v2956, %v2956
  %v3296 = vunpack.c.l.s4 1966171168
  %v3297 = vunpack.c.0.s8 %v3296
  %v3298 = vlaneseq
  %v3299 = vshrl.u32 %v3298, 7
  %v3300 = vsub.s32 %v3297, %v3299
  %v3301 = vrot.slane %v2956, %v3300
  %v3303 = vunpack.c.l.s4 1966171168
  %v3304 = vunpack.c.0.s8 %v3303
  %v3305 = vlaneseq
  %v3306 = vshrl.u32 %v3305, 7
  %v3307 = vsub.s32 %v3304, %v3306
  %v3308 = vrot.slane %v3294, %v3307
  %v3309 = vcombine.high %v3301, %v3301
  %v3310 = vcombine.high %v3308, %v3308
  %v3312 = vunpack.c.l.s4 1966171168
  %v3313 = vunpack.c.0.s8 %v3312
  %v3314 = vlaneseq
  %v3315 = vshrl.u32 %v3314, 7
  %v3316 = vsub.s32 %v3313, %v3315
  %v3317 = vrot.slane %v3301, %v3316
  %v3319 = vunpack.c.l.s4 1966171168
  %v3320 = vunpack.c.0.s8 %v3319
  %v3321 = vlaneseq
  %v3322 = vshrl.u32 %v3321, 7
  %v3323 = vsub.s32 %v3320, %v3322
  %v3324 = vrot.slane %v3308, %v3323
  %v3326 = vunpack.c.l.s4 1966171168
  %v3327 = vunpack.c.0.s8 %v3326
  %v3328 = vlaneseq
  %v3329 = vshrl.u32 %v3328, 7
  %v3330 = vsub.s32 %v3327, %v3329
  %v3331 = vrot.slane %v3309, %v3330
  %v3333 = vunpack.c.l.s4 1966171168
  %v3334 = vunpack.c.0.s8 %v3333
  %v3335 = vlaneseq
  %v3336 = vshrl.u32 %v3335, 7
  %v3337 = vsub.s32 %v3334, %v3336
  %v3338 = vrot.slane %v3310, %v3337
  %v3339 = vcombine.high %v3317, %v3317
  %v3340 = vcombine.high %v3324, %v3324
  %v3341 = vcombine.high %v3331, %v3331
  %v3342 = vcombine.high %v3338, %v3338
  %v3343 = vcombine.high %v2957, %v2957
  %v3345 = vunpack.c.l.s4 1966171168
  %v3346 = vunpack.c.0.s8 %v3345
  %v3347 = vlaneseq
  %v3348 = vshrl.u32 %v3347, 7
  %v3349 = vsub.s32 %v3346, %v3348
  %v3350 = vrot.slane %v2957, %v3349
  %v3352 = vunpack.c.l.s4 1966171168
  %v3353 = vunpack.c.0.s8 %v3352
  %v3354 = vlaneseq
  %v3355 = vshrl.u32 %v3354, 7
  %v3356 = vsub.s32 %v3353, %v3355
  %v3357 = vrot.slane %v3343, %v3356
  %v3358 = vcombine.high %v3350, %v3350
  %v3359 = vcombine.high %v3357, %v3357
  %v3361 = vunpack.c.l.s4 1966171168
  %v3362 = vunpack.c.0.s8 %v3361
  %v3363 = vlaneseq
  %v3364 = vshrl.u32 %v3363, 7
  %v3365 = vsub.s32 %v3362, %v3364
  %v3366 = vrot.slane %v3350, %v3365
  %v3368 = vunpack.c.l.s4 1966171168
  %v3369 = vunpack.c.0.s8 %v3368
  %v3370 = vlaneseq
  %v3371 = vshrl.u32 %v3370, 7
  %v3372 = vsub.s32 %v3369, %v3371
  %v3373 = vrot.slane %v3357, %v3372
  %v3375 = vunpack.c.l.s4 1966171168
  %v3376 = vunpack.c.0.s8 %v3375
  %v3377 = vlaneseq
  %v3378 = vshrl.u32 %v3377, 7
  %v3379 = vsub.s32 %v3376, %v3378
  %v3380 = vrot.slane %v3358, %v3379
  %v3382 = vunpack.c.l.s4 1966171168
  %v3383 = vunpack.c.0.s8 %v3382
  %v3384 = vlaneseq
  %v3385 = vshrl.u32 %v3384, 7
  %v3386 = vsub.s32 %v3383, %v3385
  %v3387 = vrot.slane %v3359, %v3386
  %v3388 = vcombine.high %v3366, %v3366
  %v3389 = vcombine.high %v3373, %v3373
  %v3390 = vcombine.high %v3380, %v3380
  %v3391 = vcombine.high %v3387, %v3387
  %v3392 = vcombine.high %v2958, %v2958
  %v3394 = vunpack.c.l.s4 1966171168
  %v3395 = vunpack.c.0.s8 %v3394
  %v3396 = vlaneseq
  %v3397 = vshrl.u32 %v3396, 7
  %v3398 = vsub.s32 %v3395, %v3397
  %v3399 = vrot.slane %v2958, %v3398
  %v3401 = vunpack.c.l.s4 1966171168
  %v3402 = vunpack.c.0.s8 %v3401
  %v3403 = vlaneseq
  %v3404 = vshrl.u32 %v3403, 7
  %v3405 = vsub.s32 %v3402, %v3404
  %v3406 = vrot.slane %v3392, %v3405
  %v3407 = vcombine.high %v3399, %v3399
  %v3408 = vcombine.high %v3406, %v3406
  %v3410 = vunpack.c.l.s4 1966171168
  %v3411 = vunpack.c.0.s8 %v3410
  %v3412 = vlaneseq
  %v3413 = vshrl.u32 %v3412, 7
  %v3414 = vsub.s32 %v3411, %v3413
  %v3415 = vrot.slane %v3399, %v3414
  %v3417 = vunpack.c.l.s4 1966171168
  %v3418 = vunpack.c.0.s8 %v3417
  %v3419 = vlaneseq
  %v3420 = vshrl.u32 %v3419, 7
  %v3421 = vsub.s32 %v3418, %v3420
  %v3422 = vrot.slane %v3406, %v3421
  %v3424 = vunpack.c.l.s4 1966171168
  %v3425 = vunpack.c.0.s8 %v3424
  %v3426 = vlaneseq
  %v3427 = vshrl.u32 %v3426, 7
  %v3428 = vsub.s32 %v3425, %v3427
  %v3429 = vrot.slane %v3407, %v3428
  %v3431 = vunpack.c.l.s4 1966171168
  %v3432 = vunpack.c.0.s8 %v3431
  %v3433 = vlaneseq
  %v3434 = vshrl.u32 %v3433, 7
  %v3435 = vsub.s32 %v3432, %v3434
  %v3436 = vrot.slane %v3408, %v3435
  %v3437 = vcombine.high %v3415, %v3415
  %v3438 = vcombine.high %v3422, %v3422
  %v3439 = vcombine.high %v3429, %v3429
  %v3440 = vcombine.high %v3436, %v3436
  %v3441 = vcombine.high %v2959, %v2959
  %v3443 = vunpack.c.l.s4 1966171168
  %v3444 = vunpack.c.0.s8 %v3443
  %v3445 = vlaneseq
  %v3446 = vshrl.u32 %v3445, 7
  %v3447 = vsub.s32 %v3444, %v3446
  %v3448 = vrot.slane %v2959, %v3447
  %v3450 = vunpack.c.l.s4 1966171168
  %v3451 = vunpack.c.0.s8 %v3450
  %v3452 = vlaneseq
  %v3453 = vshrl.u32 %v3452, 7
  %v3454 = vsub.s32 %v3451, %v3453
  %v3455 = vrot.slane %v3441, %v3454
  %v3456 = vcombine.high %v3448, %v3448
  %v3457 = vcombine.high %v3455, %v3455
  %v3459 = vunpack.c.l.s4 1966171168
  %v3460 = vunpack.c.0.s8 %v3459
  %v3461 = vlaneseq
  %v3462 = vshrl.u32 %v3461, 7
  %v3463 = vsub.s32 %v3460, %v3462
  %v3464 = vrot.slane %v3448, %v3463
  %v3466 = vunpack.c.l.s4 1966171168
  %v3467 = vunpack.c.0.s8 %v3466
  %v3468 = vlaneseq
  %v3469 = vshrl.u32 %v3468, 7
  %v3470 = vsub.s32 %v3467, %v3469
  %v3471 = vrot.slane %v3455, %v3470
  %v3473 = vunpack.c.l.s4 1966171168
  %v3474 = vunpack.c.0.s8 %v3473
  %v3475 = vlaneseq
  %v3476 = vshrl.u32 %v3475, 7
  %v3477 = vsub.s32 %v3474, %v3476
  %v3478 = vrot.slane %v3456, %v3477
  %v3480 = vunpack.c.l.s4 1966171168
  %v3481 = vunpack.c.0.s8 %v3480
  %v3482 = vlaneseq
  %v3483 = vshrl.u32 %v3482, 7
  %v3484 = vsub.s32 %v3481, %v3483
  %v3485 = vrot.slane %v3457, %v3484
  %v3486 = vcombine.high %v3464, %v3464
  %v3487 = vcombine.high %v3471, %v3471
  %v3488 = vcombine.high %v3478, %v3478
  %v3489 = vcombine.high %v3485, %v3485
  %v3490 = vcombine.high %v2960, %v2960
  %v3492 = vunpack.c.l.s4 1966171168
  %v3493 = vunpack.c.0.s8 %v3492
  %v3494 = vlaneseq
  %v3495 = vshrl.u32 %v3494, 7
  %v3496 = vsub.s32 %v3493, %v3495
  %v3497 = vrot.slane %v2960, %v3496
  %v3499 = vunpack.c.l.s4 1966171168
  %v3500 = vunpack.c.0.s8 %v3499
  %v3501 = vlaneseq
  %v3502 = vshrl.u32 %v3501, 7
  %v3503 = vsub.s32 %v3500, %v3502
  %v3504 = vrot.slane %v3490, %v3503
  %v3505 = vcombine.high %v3497, %v3497
  %v3506 = vcombine.high %v3504, %v3504
  %v3508 = vunpack.c.l.s4 1966171168
  %v3509 = vunpack.c.0.s8 %v3508
  %v3510 = vlaneseq
  %v3511 = vshrl.u32 %v3510, 7
  %v3512 = vsub.s32 %v3509, %v3511
  %v3513 = vrot.slane %v3497, %v3512
  %v3515 = vunpack.c.l.s4 1966171168
  %v3516 = vunpack.c.0.s8 %v3515
  %v3517 = vlaneseq
  %v3518 = vshrl.u32 %v3517, 7
  %v3519 = vsub.s32 %v3516, %v3518
  %v3520 = vrot.slane %v3504, %v3519
  %v3522 = vunpack.c.l.s4 1966171168
  %v3523 = vunpack.c.0.s8 %v3522
  %v3524 = vlaneseq
  %v3525 = vshrl.u32 %v3524, 7
  %v3526 = vsub.s32 %v3523, %v3525
  %v3527 = vrot.slane %v3505, %v3526
  %v3529 = vunpack.c.l.s4 1966171168
  %v3530 = vunpack.c.0.s8 %v3529
  %v3531 = vlaneseq
  %v3532 = vshrl.u32 %v3531, 7
  %v3533 = vsub.s32 %v3530, %v3532
  %v3534 = vrot.slane %v3506, %v3533
  %v3535 = vcombine.high %v3513, %v3513
  %v3536 = vcombine.high %v3520, %v3520
  %v3537 = vcombine.high %v3527, %v3527
  %v3538 = vcombine.high %v3534, %v3534
  %v3539 = vcombine.high %v2961, %v2961
  %v3541 = vunpack.c.l.s4 1966171168
  %v3542 = vunpack.c.0.s8 %v3541
  %v3543 = vlaneseq
  %v3544 = vshrl.u32 %v3543, 7
  %v3545 = vsub.s32 %v3542, %v3544
  %v3546 = vrot.slane %v2961, %v3545
  %v3548 = vunpack.c.l.s4 1966171168
  %v3549 = vunpack.c.0.s8 %v3548
  %v3550 = vlaneseq
  %v3551 = vshrl.u32 %v3550, 7
  %v3552 = vsub.s32 %v3549, %v3551
  %v3553 = vrot.slane %v3539, %v3552
  %v3554 = vcombine.high %v3546, %v3546
  %v3555 = vcombine.high %v3553, %v3553
  %v3557 = vunpack.c.l.s4 1966171168
  %v3558 = vunpack.c.0.s8 %v3557
  %v3559 = vlaneseq
  %v3560 = vshrl.u32 %v3559, 7
  %v3561 = vsub.s32 %v3558, %v3560
  %v3562 = vrot.slane %v3546, %v3561
  %v3564 = vunpack.c.l.s4 1966171168
  %v3565 = vunpack.c.0.s8 %v3564
  %v3566 = vlaneseq
  %v3567 = vshrl.u32 %v3566, 7
  %v3568 = vsub.s32 %v3565, %v3567
  %v3569 = vrot.slane %v3553, %v3568
  %v3571 = vunpack.c.l.s4 1966171168
  %v3572 = vunpack.c.0.s8 %v3571
  %v3573 = vlaneseq
  %v3574 = vshrl.u32 %v3573, 7
  %v3575 = vsub.s32 %v3572, %v3574
  %v3576 = vrot.slane %v3554, %v3575
  %v3578 = vunpack.c.l.s4 1966171168
  %v3579 = vunpack.c.0.s8 %v3578
  %v3580 = vlaneseq
  %v3581 = vshrl.u32 %v3580, 7
  %v3582 = vsub.s32 %v3579, %v3581
  %v3583 = vrot.slane %v3555, %v3582
  %v3584 = vcombine.high %v3562, %v3562
  %v3585 = vcombine.high %v3569, %v3569
  %v3586 = vcombine.high %v3576, %v3576
  %v3587 = vcombine.high %v3583, %v3583
  %v3588 = vcombine.high %v2962, %v2962
  %v3590 = vunpack.c.l.s4 1966171168
  %v3591 = vunpack.c.0.s8 %v3590
  %v3592 = vlaneseq
  %v3593 = vshrl.u32 %v3592, 7
  %v3594 = vsub.s32 %v3591, %v3593
  %v3595 = vrot.slane %v2962, %v3594
  %v3597 = vunpack.c.l.s4 1966171168
  %v3598 = vunpack.c.0.s8 %v3597
  %v3599 = vlaneseq
  %v3600 = vshrl.u32 %v3599, 7
  %v3601 = vsub.s32 %v3598, %v3600
  %v3602 = vrot.slane %v3588, %v3601
  %v3603 = vcombine.high %v3595, %v3595
  %v3604 = vcombine.high %v3602, %v3602
  %v3606 = vunpack.c.l.s4 1966171168
  %v3607 = vunpack.c.0.s8 %v3606
  %v3608 = vlaneseq
  %v3609 = vshrl.u32 %v3608, 7
  %v3610 = vsub.s32 %v3607, %v3609
  %v3611 = vrot.slane %v3595, %v3610
  %v3613 = vunpack.c.l.s4 1966171168
  %v3614 = vunpack.c.0.s8 %v3613
  %v3615 = vlaneseq
  %v3616 = vshrl.u32 %v3615, 7
  %v3617 = vsub.s32 %v3614, %v3616
  %v3618 = vrot.slane %v3602, %v3617
  %v3620 = vunpack.c.l.s4 1966171168
  %v3621 = vunpack.c.0.s8 %v3620
  %v3622 = vlaneseq
  %v3623 = vshrl.u32 %v3622, 7
  %v3624 = vsub.s32 %v3621, %v3623
  %v3625 = vrot.slane %v3603, %v3624
  %v3627 = vunpack.c.l.s4 1966171168
  %v3628 = vunpack.c.0.s8 %v3627
  %v3629 = vlaneseq
  %v3630 = vshrl.u32 %v3629, 7
  %v3631 = vsub.s32 %v3628, %v3630
  %v3632 = vrot.slane %v3604, %v3631
  %v3633 = vcombine.high %v3611, %v3611
  %v3634 = vcombine.high %v3618, %v3618
  %v3635 = vcombine.high %v3625, %v3625
  %v3636 = vcombine.high %v3632, %v3632
  %v3637 = vcombine.high %v2963, %v2963
  %v3639 = vunpack.c.l.s4 1966171168
  %v3640 = vunpack.c.0.s8 %v3639
  %v3641 = vlaneseq
  %v3642 = vshrl.u32 %v3641, 7
  %v3643 = vsub.s32 %v3640, %v3642
  %v3644 = vrot.slane %v2963, %v3643
  %v3646 = vunpack.c.l.s4 1966171168
  %v3647 = vunpack.c.0.s8 %v3646
  %v3648 = vlaneseq
  %v3649 = vshrl.u32 %v3648, 7
  %v3650 = vsub.s32 %v3647, %v3649
  %v3651 = vrot.slane %v3637, %v3650
  %v3652 = vcombine.high %v3644, %v3644
  %v3653 = vcombine.high %v3651, %v3651
  %v3655 = vunpack.c.l.s4 1966171168
  %v3656 = vunpack.c.0.s8 %v3655
  %v3657 = vlaneseq
  %v3658 = vshrl.u32 %v3657, 7
  %v3659 = vsub.s32 %v3656, %v3658
  %v3660 = vrot.slane %v3644, %v3659
  %v3662 = vunpack.c.l.s4 1966171168
  %v3663 = vunpack.c.0.s8 %v3662
  %v3664 = vlaneseq
  %v3665 = vshrl.u32 %v3664, 7
  %v3666 = vsub.s32 %v3663, %v3665
  %v3667 = vrot.slane %v3651, %v3666
  %v3669 = vunpack.c.l.s4 1966171168
  %v3670 = vunpack.c.0.s8 %v3669
  %v3671 = vlaneseq
  %v3672 = vshrl.u32 %v3671, 7
  %v3673 = vsub.s32 %v3670, %v3672
  %v3674 = vrot.slane %v3652, %v3673
  %v3676 = vunpack.c.l.s4 1966171168
  %v3677 = vunpack.c.0.s8 %v3676
  %v3678 = vlaneseq
  %v3679 = vshrl.u32 %v3678, 7
  %v3680 = vsub.s32 %v3677, %v3679
  %v3681 = vrot.slane %v3653, %v3680
  %v3682 = vcombine.high %v3660, %v3660
  %v3683 = vcombine.high %v3667, %v3667
  %v3684 = vcombine.high %v3674, %v3674
  %v3685 = vcombine.high %v3681, %v3681
  %v3686 = vcombine.high %v2964, %v2964
  %v3688 = vunpack.c.l.s4 1966171168
  %v3689 = vunpack.c.0.s8 %v3688
  %v3690 = vlaneseq
  %v3691 = vshrl.u32 %v3690, 7
  %v3692 = vsub.s32 %v3689, %v3691
  %v3693 = vrot.slane %v2964, %v3692
  %v3695 = vunpack.c.l.s4 1966171168
  %v3696 = vunpack.c.0.s8 %v3695
  %v3697 = vlaneseq
  %v3698 = vshrl.u32 %v3697, 7
  %v3699 = vsub.s32 %v3696, %v3698
  %v3700 = vrot.slane %v3686, %v3699
  %v3701 = vcombine.high %v3693, %v3693
  %v3702 = vcombine.high %v3700, %v3700
  %v3704 = vunpack.c.l.s4 1966171168
  %v3705 = vunpack.c.0.s8 %v3704
  %v3706 = vlaneseq
  %v3707 = vshrl.u32 %v3706, 7
  %v3708 = vsub.s32 %v3705, %v3707
  %v3709 = vrot.slane %v3693, %v3708
  %v3711 = vunpack.c.l.s4 1966171168
  %v3712 = vunpack.c.0.s8 %v3711
  %v3713 = vlaneseq
  %v3714 = vshrl.u32 %v3713, 7
  %v3715 = vsub.s32 %v3712, %v3714
  %v3716 = vrot.slane %v3700, %v3715
  %v3718 = vunpack.c.l.s4 1966171168
  %v3719 = vunpack.c.0.s8 %v3718
  %v3720 = vlaneseq
  %v3721 = vshrl.u32 %v3720, 7
  %v3722 = vsub.s32 %v3719, %v3721
  %v3723 = vrot.slane %v3701, %v3722
  %v3725 = vunpack.c.l.s4 1966171168
  %v3726 = vunpack.c.0.s8 %v3725
  %v3727 = vlaneseq
  %v3728 = vshrl.u32 %v3727, 7
  %v3729 = vsub.s32 %v3726, %v3728
  %v3730 = vrot.slane %v3702, %v3729
  %v3731 = vcombine.high %v3709, %v3709
  %v3732 = vcombine.high %v3716, %v3716
  %v3733 = vcombine.high %v3723, %v3723
  %v3734 = vcombine.high %v3730, %v3730
  %v3735 = vcombine.high %v2965, %v2965
  %v3737 = vunpack.c.l.s4 1966171168
  %v3738 = vunpack.c.0.s8 %v3737
  %v3739 = vlaneseq
  %v3740 = vshrl.u32 %v3739, 7
  %v3741 = vsub.s32 %v3738, %v3740
  %v3742 = vrot.slane %v2965, %v3741
  %v3744 = vunpack.c.l.s4 1966171168
  %v3745 = vunpack.c.0.s8 %v3744
  %v3746 = vlaneseq
  %v3747 = vshrl.u32 %v3746, 7
  %v3748 = vsub.s32 %v3745, %v3747
  %v3749 = vrot.slane %v3735, %v3748
  %v3750 = vcombine.high %v3742, %v3742
  %v3751 = vcombine.high %v3749, %v3749
  %v3753 = vunpack.c.l.s4 1966171168
  %v3754 = vunpack.c.0.s8 %v3753
  %v3755 = vlaneseq
  %v3756 = vshrl.u32 %v3755, 7
  %v3757 = vsub.s32 %v3754, %v3756
  %v3758 = vrot.slane %v3742, %v3757
  %v3760 = vunpack.c.l.s4 1966171168
  %v3761 = vunpack.c.0.s8 %v3760
  %v3762 = vlaneseq
  %v3763 = vshrl.u32 %v3762, 7
  %v3764 = vsub.s32 %v3761, %v3763
  %v3765 = vrot.slane %v3749, %v3764
  %v3767 = vunpack.c.l.s4 1966171168
  %v3768 = vunpack.c.0.s8 %v3767
  %v3769 = vlaneseq
  %v3770 = vshrl.u32 %v3769, 7
  %v3771 = vsub.s32 %v3768, %v3770
  %v3772 = vrot.slane %v3750, %v3771
  %v3774 = vunpack.c.l.s4 1966171168
  %v3775 = vunpack.c.0.s8 %v3774
  %v3776 = vlaneseq
  %v3777 = vshrl.u32 %v3776, 7
  %v3778 = vsub.s32 %v3775, %v3777
  %v3779 = vrot.slane %v3751, %v3778
  %v3780 = vcombine.high %v3758, %v3758
  %v3781 = vcombine.high %v3765, %v3765
  %v3782 = vcombine.high %v3772, %v3772
  %v3783 = vcombine.high %v3779, %v3779
  %v3784 = vcombine.high %v2966, %v2966
  %v3786 = vunpack.c.l.s4 1966171168
  %v3787 = vunpack.c.0.s8 %v3786
  %v3788 = vlaneseq
  %v3789 = vshrl.u32 %v3788, 7
  %v3790 = vsub.s32 %v3787, %v3789
  %v3791 = vrot.slane %v2966, %v3790
  %v3793 = vunpack.c.l.s4 1966171168
  %v3794 = vunpack.c.0.s8 %v3793
  %v3795 = vlaneseq
  %v3796 = vshrl.u32 %v3795, 7
  %v3797 = vsub.s32 %v3794, %v3796
  %v3798 = vrot.slane %v3784, %v3797
  %v3799 = vcombine.high %v3791, %v3791
  %v3800 = vcombine.high %v3798, %v3798
  %v3802 = vunpack.c.l.s4 1966171168
  %v3803 = vunpack.c.0.s8 %v3802
  %v3804 = vlaneseq
  %v3805 = vshrl.u32 %v3804, 7
  %v3806 = vsub.s32 %v3803, %v3805
  %v3807 = vrot.slane %v3791, %v3806
  %v3809 = vunpack.c.l.s4 1966171168
  %v3810 = vunpack.c.0.s8 %v3809
  %v3811 = vlaneseq
  %v3812 = vshrl.u32 %v3811, 7
  %v3813 = vsub.s32 %v3810, %v3812
  %v3814 = vrot.slane %v3798, %v3813
  %v3816 = vunpack.c.l.s4 1966171168
  %v3817 = vunpack.c.0.s8 %v3816
  %v3818 = vlaneseq
  %v3819 = vshrl.u32 %v3818, 7
  %v3820 = vsub.s32 %v3817, %v3819
  %v3821 = vrot.slane %v3799, %v3820
  %v3823 = vunpack.c.l.s4 1966171168
  %v3824 = vunpack.c.0.s8 %v3823
  %v3825 = vlaneseq
  %v3826 = vshrl.u32 %v3825, 7
  %v3827 = vsub.s32 %v3824, %v3826
  %v3828 = vrot.slane %v3800, %v3827
  %v3829 = vcombine.high %v3807, %v3807
  %v3830 = vcombine.high %v3814, %v3814
  %v3831 = vcombine.high %v3821, %v3821
  %v3832 = vcombine.high %v3828, %v3828
  %v3833 = vcombine.high %v2967, %v2967
  %v3835 = vunpack.c.l.s4 1966171168
  %v3836 = vunpack.c.0.s8 %v3835
  %v3837 = vlaneseq
  %v3838 = vshrl.u32 %v3837, 7
  %v3839 = vsub.s32 %v3836, %v3838
  %v3840 = vrot.slane %v2967, %v3839
  %v3842 = vunpack.c.l.s4 1966171168
  %v3843 = vunpack.c.0.s8 %v3842
  %v3844 = vlaneseq
  %v3845 = vshrl.u32 %v3844, 7
  %v3846 = vsub.s32 %v3843, %v3845
  %v3847 = vrot.slane %v3833, %v3846
  %v3848 = vcombine.high %v3840, %v3840
  %v3849 = vcombine.high %v3847, %v3847
  %v3851 = vunpack.c.l.s4 1966171168
  %v3852 = vunpack.c.0.s8 %v3851
  %v3853 = vlaneseq
  %v3854 = vshrl.u32 %v3853, 7
  %v3855 = vsub.s32 %v3852, %v3854
  %v3856 = vrot.slane %v3840, %v3855
  %v3858 = vunpack.c.l.s4 1966171168
  %v3859 = vunpack.c.0.s8 %v3858
  %v3860 = vlaneseq
  %v3861 = vshrl.u32 %v3860, 7
  %v3862 = vsub.s32 %v3859, %v3861
  %v3863 = vrot.slane %v3847, %v3862
  %v3865 = vunpack.c.l.s4 1966171168
  %v3866 = vunpack.c.0.s8 %v3865
  %v3867 = vlaneseq
  %v3868 = vshrl.u32 %v3867, 7
  %v3869 = vsub.s32 %v3866, %v3868
  %v3870 = vrot.slane %v3848, %v3869
  %v3872 = vunpack.c.l.s4 1966171168
  %v3873 = vunpack.c.0.s8 %v3872
  %v3874 = vlaneseq
  %v3875 = vshrl.u32 %v3874, 7
  %v3876 = vsub.s32 %v3873, %v3875
  %v3877 = vrot.slane %v3849, %v3876
  %v3878 = vcombine.high %v3856, %v3856
  %v3879 = vcombine.high %v3863, %v3863
  %v3880 = vcombine.high %v3870, %v3870
  %v3881 = vcombine.high %v3877, %v3877
  %v3882 = vcombine.high %v2968, %v2968
  %v3884 = vunpack.c.l.s4 1966171168
  %v3885 = vunpack.c.0.s8 %v3884
  %v3886 = vlaneseq
  %v3887 = vshrl.u32 %v3886, 7
  %v3888 = vsub.s32 %v3885, %v3887
  %v3889 = vrot.slane %v2968, %v3888
  %v3891 = vunpack.c.l.s4 1966171168
  %v3892 = vunpack.c.0.s8 %v3891
  %v3893 = vlaneseq
  %v3894 = vshrl.u32 %v3893, 7
  %v3895 = vsub.s32 %v3892, %v3894
  %v3896 = vrot.slane %v3882, %v3895
  %v3897 = vcombine.high %v3889, %v3889
  %v3898 = vcombine.high %v3896, %v3896
  %v3900 = vunpack.c.l.s4 1966171168
  %v3901 = vunpack.c.0.s8 %v3900
  %v3902 = vlaneseq
  %v3903 = vshrl.u32 %v3902, 7
  %v3904 = vsub.s32 %v3901, %v3903
  %v3905 = vrot.slane %v3889, %v3904
  %v3907 = vunpack.c.l.s4 1966171168
  %v3908 = vunpack.c.0.s8 %v3907
  %v3909 = vlaneseq
  %v3910 = vshrl.u32 %v3909, 7
  %v3911 = vsub.s32 %v3908, %v3910
  %v3912 = vrot.slane %v3896, %v3911
  %v3914 = vunpack.c.l.s4 1966171168
  %v3915 = vunpack.c.0.s8 %v3914
  %v3916 = vlaneseq
  %v3917 = vshrl.u32 %v3916, 7
  %v3918 = vsub.s32 %v3915, %v3917
  %v3919 = vrot.slane %v3897, %v3918
  %v3921 = vunpack.c.l.s4 1966171168
  %v3922 = vunpack.c.0.s8 %v3921
  %v3923 = vlaneseq
  %v3924 = vshrl.u32 %v3923, 7
  %v3925 = vsub.s32 %v3922, %v3924
  %v3926 = vrot.slane %v3898, %v3925
  %v3927 = vcombine.high %v3905, %v3905
  %v3928 = vcombine.high %v3912, %v3912
  %v3929 = vcombine.high %v3919, %v3919
  %v3930 = vcombine.high %v3926, %v3926
  %v3931 = vcombine.high %v2969, %v2969
  %v3933 = vunpack.c.l.s4 1966171168
  %v3934 = vunpack.c.0.s8 %v3933
  %v3935 = vlaneseq
  %v3936 = vshrl.u32 %v3935, 7
  %v3937 = vsub.s32 %v3934, %v3936
  %v3938 = vrot.slane %v2969, %v3937
  %v3940 = vunpack.c.l.s4 1966171168
  %v3941 = vunpack.c.0.s8 %v3940
  %v3942 = vlaneseq
  %v3943 = vshrl.u32 %v3942, 7
  %v3944 = vsub.s32 %v3941, %v3943
  %v3945 = vrot.slane %v3931, %v3944
  %v3946 = vcombine.high %v3938, %v3938
  %v3947 = vcombine.high %v3945, %v3945
  %v3949 = vunpack.c.l.s4 1966171168
  %v3950 = vunpack.c.0.s8 %v3949
  %v3951 = vlaneseq
  %v3952 = vshrl.u32 %v3951, 7
  %v3953 = vsub.s32 %v3950, %v3952
  %v3954 = vrot.slane %v3938, %v3953
  %v3956 = vunpack.c.l.s4 1966171168
  %v3957 = vunpack.c.0.s8 %v3956
  %v3958 = vlaneseq
  %v3959 = vshrl.u32 %v3958, 7
  %v3960 = vsub.s32 %v3957, %v3959
  %v3961 = vrot.slane %v3945, %v3960
  %v3963 = vunpack.c.l.s4 1966171168
  %v3964 = vunpack.c.0.s8 %v3963
  %v3965 = vlaneseq
  %v3966 = vshrl.u32 %v3965, 7
  %v3967 = vsub.s32 %v3964, %v3966
  %v3968 = vrot.slane %v3946, %v3967
  %v3970 = vunpack.c.l.s4 1966171168
  %v3971 = vunpack.c.0.s8 %v3970
  %v3972 = vlaneseq
  %v3973 = vshrl.u32 %v3972, 7
  %v3974 = vsub.s32 %v3971, %v3973
  %v3975 = vrot.slane %v3947, %v3974
  %v3976 = vcombine.high %v3954, %v3954
  %v3977 = vcombine.high %v3961, %v3961
  %v3978 = vcombine.high %v3968, %v3968
  %v3979 = vcombine.high %v3975, %v3975
  %v3980 = vcombine.high %v2970, %v2970
  %v3982 = vunpack.c.l.s4 1966171168
  %v3983 = vunpack.c.0.s8 %v3982
  %v3984 = vlaneseq
  %v3985 = vshrl.u32 %v3984, 7
  %v3986 = vsub.s32 %v3983, %v3985
  %v3987 = vrot.slane %v2970, %v3986
  %v3989 = vunpack.c.l.s4 1966171168
  %v3990 = vunpack.c.0.s8 %v3989
  %v3991 = vlaneseq
  %v3992 = vshrl.u32 %v3991, 7
  %v3993 = vsub.s32 %v3990, %v3992
  %v3994 = vrot.slane %v3980, %v3993
  %v3995 = vcombine.high %v3987, %v3987
  %v3996 = vcombine.high %v3994, %v3994
  %v3998 = vunpack.c.l.s4 1966171168
  %v3999 = vunpack.c.0.s8 %v3998
  %v4000 = vlaneseq
  %v4001 = vshrl.u32 %v4000, 7
  %v4002 = vsub.s32 %v3999, %v4001
  %v4003 = vrot.slane %v3987, %v4002
  %v4005 = vunpack.c.l.s4 1966171168
  %v4006 = vunpack.c.0.s8 %v4005
  %v4007 = vlaneseq
  %v4008 = vshrl.u32 %v4007, 7
  %v4009 = vsub.s32 %v4006, %v4008
  %v4010 = vrot.slane %v3994, %v4009
  %v4012 = vunpack.c.l.s4 1966171168
  %v4013 = vunpack.c.0.s8 %v4012
  %v4014 = vlaneseq
  %v4015 = vshrl.u32 %v4014, 7
  %v4016 = vsub.s32 %v4013, %v4015
  %v4017 = vrot.slane %v3995, %v4016
  %v4019 = vunpack.c.l.s4 1966171168
  %v4020 = vunpack.c.0.s8 %v4019
  %v4021 = vlaneseq
  %v4022 = vshrl.u32 %v4021, 7
  %v4023 = vsub.s32 %v4020, %v4022
  %v4024 = vrot.slane %v3996, %v4023
  %v4025 = vcombine.high %v4003, %v4003
  %v4026 = vcombine.high %v4010, %v4010
  %v4027 = vcombine.high %v4017, %v4017
  %v4028 = vcombine.high %v4024, %v4024
  %v4029 = vcombine.high %v2971, %v2971
  %v4031 = vunpack.c.l.s4 1966171168
  %v4032 = vunpack.c.0.s8 %v4031
  %v4033 = vlaneseq
  %v4034 = vshrl.u32 %v4033, 7
  %v4035 = vsub.s32 %v4032, %v4034
  %v4036 = vrot.slane %v2971, %v4035
  %v4038 = vunpack.c.l.s4 1966171168
  %v4039 = vunpack.c.0.s8 %v4038
  %v4040 = vlaneseq
  %v4041 = vshrl.u32 %v4040, 7
  %v4042 = vsub.s32 %v4039, %v4041
  %v4043 = vrot.slane %v4029, %v4042
  %v4044 = vcombine.high %v4036, %v4036
  %v4045 = vcombine.high %v4043, %v4043
  %v4047 = vunpack.c.l.s4 1966171168
  %v4048 = vunpack.c.0.s8 %v4047
  %v4049 = vlaneseq
  %v4050 = vshrl.u32 %v4049, 7
  %v4051 = vsub.s32 %v4048, %v4050
  %v4052 = vrot.slane %v4036, %v4051
  %v4054 = vunpack.c.l.s4 1966171168
  %v4055 = vunpack.c.0.s8 %v4054
  %v4056 = vlaneseq
  %v4057 = vshrl.u32 %v4056, 7
  %v4058 = vsub.s32 %v4055, %v4057
  %v4059 = vrot.slane %v4043, %v4058
  %v4061 = vunpack.c.l.s4 1966171168
  %v4062 = vunpack.c.0.s8 %v4061
  %v4063 = vlaneseq
  %v4064 = vshrl.u32 %v4063, 7
  %v4065 = vsub.s32 %v4062, %v4064
  %v4066 = vrot.slane %v4044, %v4065
  %v4068 = vunpack.c.l.s4 1966171168
  %v4069 = vunpack.c.0.s8 %v4068
  %v4070 = vlaneseq
  %v4071 = vshrl.u32 %v4070, 7
  %v4072 = vsub.s32 %v4069, %v4071
  %v4073 = vrot.slane %v4045, %v4072
  %v4074 = vcombine.high %v4052, %v4052
  %v4075 = vcombine.high %v4059, %v4059
  %v4076 = vcombine.high %v4066, %v4066
  %v4077 = vcombine.high %v4073, %v4073
  %v4078 = vcombine.high %v2972, %v2972
  %v4080 = vunpack.c.l.s4 1966171168
  %v4081 = vunpack.c.0.s8 %v4080
  %v4082 = vlaneseq
  %v4083 = vshrl.u32 %v4082, 7
  %v4084 = vsub.s32 %v4081, %v4083
  %v4085 = vrot.slane %v2972, %v4084
  %v4087 = vunpack.c.l.s4 1966171168
  %v4088 = vunpack.c.0.s8 %v4087
  %v4089 = vlaneseq
  %v4090 = vshrl.u32 %v4089, 7
  %v4091 = vsub.s32 %v4088, %v4090
  %v4092 = vrot.slane %v4078, %v4091
  %v4093 = vcombine.high %v4085, %v4085
  %v4094 = vcombine.high %v4092, %v4092
  %v4096 = vunpack.c.l.s4 1966171168
  %v4097 = vunpack.c.0.s8 %v4096
  %v4098 = vlaneseq
  %v4099 = vshrl.u32 %v4098, 7
  %v4100 = vsub.s32 %v4097, %v4099
  %v4101 = vrot.slane %v4085, %v4100
  %v4103 = vunpack.c.l.s4 1966171168
  %v4104 = vunpack.c.0.s8 %v4103
  %v4105 = vlaneseq
  %v4106 = vshrl.u32 %v4105, 7
  %v4107 = vsub.s32 %v4104, %v4106
  %v4108 = vrot.slane %v4092, %v4107
  %v4110 = vunpack.c.l.s4 1966171168
  %v4111 = vunpack.c.0.s8 %v4110
  %v4112 = vlaneseq
  %v4113 = vshrl.u32 %v4112, 7
  %v4114 = vsub.s32 %v4111, %v4113
  %v4115 = vrot.slane %v4093, %v4114
  %v4117 = vunpack.c.l.s4 1966171168
  %v4118 = vunpack.c.0.s8 %v4117
  %v4119 = vlaneseq
  %v4120 = vshrl.u32 %v4119, 7
  %v4121 = vsub.s32 %v4118, %v4120
  %v4122 = vrot.slane %v4094, %v4121
  %v4123 = vcombine.high %v4101, %v4101
  %v4124 = vcombine.high %v4108, %v4108
  %v4125 = vcombine.high %v4115, %v4115
  %v4126 = vcombine.high %v4122, %v4122
  %v4127 = vcombine.high %v2973, %v2973
  %v4129 = vunpack.c.l.s4 1966171168
  %v4130 = vunpack.c.0.s8 %v4129
  %v4131 = vlaneseq
  %v4132 = vshrl.u32 %v4131, 7
  %v4133 = vsub.s32 %v4130, %v4132
  %v4134 = vrot.slane %v2973, %v4133
  %v4136 = vunpack.c.l.s4 1966171168
  %v4137 = vunpack.c.0.s8 %v4136
  %v4138 = vlaneseq
  %v4139 = vshrl.u32 %v4138, 7
  %v4140 = vsub.s32 %v4137, %v4139
  %v4141 = vrot.slane %v4127, %v4140
  %v4142 = vcombine.high %v4134, %v4134
  %v4143 = vcombine.high %v4141, %v4141
  %v4145 = vunpack.c.l.s4 1966171168
  %v4146 = vunpack.c.0.s8 %v4145
  %v4147 = vlaneseq
  %v4148 = vshrl.u32 %v4147, 7
  %v4149 = vsub.s32 %v4146, %v4148
  %v4150 = vrot.slane %v4134, %v4149
  %v4152 = vunpack.c.l.s4 1966171168
  %v4153 = vunpack.c.0.s8 %v4152
  %v4154 = vlaneseq
  %v4155 = vshrl.u32 %v4154, 7
  %v4156 = vsub.s32 %v4153, %v4155
  %v4157 = vrot.slane %v4141, %v4156
  %v4159 = vunpack.c.l.s4 1966171168
  %v4160 = vunpack.c.0.s8 %v4159
  %v4161 = vlaneseq
  %v4162 = vshrl.u32 %v4161, 7
  %v4163 = vsub.s32 %v4160, %v4162
  %v4164 = vrot.slane %v4142, %v4163
  %v4166 = vunpack.c.l.s4 1966171168
  %v4167 = vunpack.c.0.s8 %v4166
  %v4168 = vlaneseq
  %v4169 = vshrl.u32 %v4168, 7
  %v4170 = vsub.s32 %v4167, %v4169
  %v4171 = vrot.slane %v4143, %v4170
  %v4172 = vcombine.high %v4150, %v4150
  %v4173 = vcombine.high %v4157, %v4157
  %v4174 = vcombine.high %v4164, %v4164
  %v4175 = vcombine.high %v4171, %v4171
  %v4176 = vcombine.high %v2974, %v2974
  %v4178 = vunpack.c.l.s4 1966171168
  %v4179 = vunpack.c.0.s8 %v4178
  %v4180 = vlaneseq
  %v4181 = vshrl.u32 %v4180, 7
  %v4182 = vsub.s32 %v4179, %v4181
  %v4183 = vrot.slane %v2974, %v4182
  %v4185 = vunpack.c.l.s4 1966171168
  %v4186 = vunpack.c.0.s8 %v4185
  %v4187 = vlaneseq
  %v4188 = vshrl.u32 %v4187, 7
  %v4189 = vsub.s32 %v4186, %v4188
  %v4190 = vrot.slane %v4176, %v4189
  %v4191 = vcombine.high %v4183, %v4183
  %v4192 = vcombine.high %v4190, %v4190
  %v4194 = vunpack.c.l.s4 1966171168
  %v4195 = vunpack.c.0.s8 %v4194
  %v4196 = vlaneseq
  %v4197 = vshrl.u32 %v4196, 7
  %v4198 = vsub.s32 %v4195, %v4197
  %v4199 = vrot.slane %v4183, %v4198
  %v4201 = vunpack.c.l.s4 1966171168
  %v4202 = vunpack.c.0.s8 %v4201
  %v4203 = vlaneseq
  %v4204 = vshrl.u32 %v4203, 7
  %v4205 = vsub.s32 %v4202, %v4204
  %v4206 = vrot.slane %v4190, %v4205
  %v4208 = vunpack.c.l.s4 1966171168
  %v4209 = vunpack.c.0.s8 %v4208
  %v4210 = vlaneseq
  %v4211 = vshrl.u32 %v4210, 7
  %v4212 = vsub.s32 %v4209, %v4211
  %v4213 = vrot.slane %v4191, %v4212
  %v4215 = vunpack.c.l.s4 1966171168
  %v4216 = vunpack.c.0.s8 %v4215
  %v4217 = vlaneseq
  %v4218 = vshrl.u32 %v4217, 7
  %v4219 = vsub.s32 %v4216, %v4218
  %v4220 = vrot.slane %v4192, %v4219
  %v4221 = vcombine.high %v4199, %v4199
  %v4222 = vcombine.high %v4206, %v4206
  %v4223 = vcombine.high %v4213, %v4213
  %v4224 = vcombine.high %v4220, %v4220
  %v4225 = vcombine.low %v3023, %v3037
  %v4226 = vcombine.low %v3045, %v3047
  %v4228 = vunpack.c.l.s4 1966171168
  %v4229 = vunpack.c.0.s8 %v4228
  %v4230 = vlaneseq
  %v4231 = vshrl.u32 %v4230, 7
  %v4232 = vsub.s32 %v4229, %v4231
  %v4233 = vrot.slane %v4225, %v4232
  %v4235 = vunpack.c.l.s4 1966171168
  %v4236 = vunpack.c.0.s8 %v4235
  %v4237 = vlaneseq
  %v4238 = vshrl.u32 %v4237, 7
  %v4239 = vsub.s32 %v4236, %v4238
  %v4240 = vrot.slane %v4226, %v4239
  %v4242 = vunpack.c.l.s4 1966171168
  %v4243 = vunpack.c.0.s8 %v4242
  %v4244 = vlaneseq
  %v4245 = vshrl.u32 %v4244, 7
  %v4246 = vsub.s32 %v4243, %v4245
  %v4247 = vrot.slane %v3030, %v4246
  %v4248 = vcombine.low %v4233, %v4240
  %v4250 = vunpack.c.l.s4 1966171168
  %v4251 = vunpack.c.0.s8 %v4250
  %v4252 = vlaneseq
  %v4253 = vshrl.u32 %v4252, 7
  %v4254 = vsub.s32 %v4251, %v4253
  %v4255 = vrot.slane %v4248, %v4254
  %v4257 = vunpack.c.l.s4 1966171168
  %v4258 = vunpack.c.0.s8 %v4257
  %v4259 = vlaneseq
  %v4260 = vshrl.u32 %v4259, 7
  %v4261 = vsub.s32 %v4258, %v4260
  %v4262 = vrot.slane %v4247, %v4261
  %v4263 = vcombine.low %v4255, %v4262
  %v4264 = vcombine.low %v3044, %v3046
  %v4265 = vcombine.low %v3048, %v3072
  %v4267 = vunpack.c.l.s4 1966171168
  %v4268 = vunpack.c.0.s8 %v4267
  %v4269 = vlaneseq
  %v4270 = vshrl.u32 %v4269, 7
  %v4271 = vsub.s32 %v4268, %v4270
  %v4272 = vrot.slane %v4264, %v4271
  %v4274 = vunpack.c.l.s4 1966171168
  %v4275 = vunpack.c.0.s8 %v4274
  %v4276 = vlaneseq
  %v4277 = vshrl.u32 %v4276, 7
  %v4278 = vsub.s32 %v4275, %v4277
  %v4279 = vrot.slane %v4265, %v4278
  %v4281 = vunpack.c.l.s4 1966171168
  %v4282 = vunpack.c.0.s8 %v4281
  %v4283 = vlaneseq
  %v4284 = vshrl.u32 %v4283, 7
  %v4285 = vsub.s32 %v4282, %v4284
  %v4286 = vrot.slane %v3086, %v4285
  %v4287 = vcombine.low %v4272, %v4279
  %v4289 = vunpack.c.l.s4 1966171168
  %v4290 = vunpack.c.0.s8 %v4289
  %v4291 = vlaneseq
  %v4292 = vshrl.u32 %v4291, 7
  %v4293 = vsub.s32 %v4290, %v4292
  %v4294 = vrot.slane %v4287, %v4293
  %v4296 = vunpack.c.l.s4 1966171168
  %v4297 = vunpack.c.0.s8 %v4296
  %v4298 = vlaneseq
  %v4299 = vshrl.u32 %v4298, 7
  %v4300 = vsub.s32 %v4297, %v4299
  %v4301 = vrot.slane %v4286, %v4300
  %v4302 = vcombine.low %v4294, %v4301
  %v4303 = vcombine.low %v3094, %v3096
  %v4304 = vcombine.low %v3079, %v3093
  %v4306 = vunpack.c.l.s4 1966171168
  %v4307 = vunpack.c.0.s8 %v4306
  %v4308 = vlaneseq
  %v4309 = vshrl.u32 %v4308, 7
  %v4310 = vsub.s32 %v4307, %v4309
  %v4311 = vrot.slane %v4303, %v4310
  %v4313 = vunpack.c.l.s4 1966171168
  %v4314 = vunpack.c.0.s8 %v4313
  %v4315 = vlaneseq
  %v4316 = vshrl.u32 %v4315, 7
  %v4317 = vsub.s32 %v4314, %v4316
  %v4318 = vrot.slane %v4304, %v4317
  %v4320 = vunpack.c.l.s4 1966171168
  %v4321 = vunpack.c.0.s8 %v4320
  %v4322 = vlaneseq
  %v4323 = vshrl.u32 %v4322, 7
  %v4324 = vsub.s32 %v4321, %v4323
  %v4325 = vrot.slane %v3095, %v4324
  %v4326 = vcombine.low %v4311, %v4318
  %v4328 = vunpack.c.l.s4 1966171168
  %v4329 = vunpack.c.0.s8 %v4328
  %v4330 = vlaneseq
  %v4331 = vshrl.u32 %v4330, 7
  %v4332 = vsub.s32 %v4329, %v4331
  %v4333 = vrot.slane %v4326, %v4332
  %v4335 = vunpack.c.l.s4 1966171168
  %v4336 = vunpack.c.0.s8 %v4335
  %v4337 = vlaneseq
  %v4338 = vshrl.u32 %v4337, 7
  %v4339 = vsub.s32 %v4336, %v4338
  %v4340 = vrot.slane %v4325, %v4339
  %v4341 = vcombine.low %v4333, %v4340
  %v4342 = vcombine.low %v3097, %v3121
  %v4343 = vcombine.low %v3135, %v3143
  %v4345 = vunpack.c.l.s4 1966171168
  %v4346 = vunpack.c.0.s8 %v4345
  %v4347 = vlaneseq
  %v4348 = vshrl.u32 %v4347, 7
  %v4349 = vsub.s32 %v4346, %v4348
  %v4350 = vrot.slane %v4342, %v4349
  %v4352 = vunpack.c.l.s4 1966171168
  %v4353 = vunpack.c.0.s8 %v4352
  %v4354 = vlaneseq
  %v4355 = vshrl.u32 %v4354, 7
  %v4356 = vsub.s32 %v4353, %v4355
  %v4357 = vrot.slane %v4343, %v4356
  %v4359 = vunpack.c.l.s4 1966171168
  %v4360 = vunpack.c.0.s8 %v4359
  %v4361 = vlaneseq
  %v4362 = vshrl.u32 %v4361, 7
  %v4363 = vsub.s32 %v4360, %v4362
  %v4364 = vrot.slane %v3145, %v4363
  %v4365 = vcombine.low %v4350, %v4357
  %v4367 = vunpack.c.l.s4 1966171168
  %v4368 = vunpack.c.0.s8 %v4367
  %v4369 = vlaneseq
  %v4370 = vshrl.u32 %v4369, 7
  %v4371 = vsub.s32 %v4368, %v4370
  %v4372 = vrot.slane %v4365, %v4371
  %v4374 = vunpack.c.l.s4 1966171168
  %v4375 = vunpack.c.0.s8 %v4374
  %v4376 = vlaneseq
  %v4377 = vshrl.u32 %v4376, 7
  %v4378 = vsub.s32 %v4375, %v4377
  %v4379 = vrot.slane %v4364, %v4378
  %v4380 = vcombine.low %v4372, %v4379
  %v4381 = vcombine.low %v3128, %v3142
  %v4382 = vcombine.low %v3144, %v3146
  %v4384 = vunpack.c.l.s4 1966171168
  %v4385 = vunpack.c.0.s8 %v4384
  %v4386 = vlaneseq
  %v4387 = vshrl.u32 %v4386, 7
  %v4388 = vsub.s32 %v4385, %v4387
  %v4389 = vrot.slane %v4381, %v4388
  %v4391 = vunpack.c.l.s4 1966171168
  %v4392 = vunpack.c.0.s8 %v4391
  %v4393 = vlaneseq
  %v4394 = vshrl.u32 %v4393, 7
  %v4395 = vsub.s32 %v4392, %v4394
  %v4396 = vrot.slane %v4382, %v4395
  %v4398 = vunpack.c.l.s4 1966171168
  %v4399 = vunpack.c.0.s8 %v4398
  %v4400 = vlaneseq
  %v4401 = vshrl.u32 %v4400, 7
  %v4402 = vsub.s32 %v4399, %v4401
  %v4403 = vrot.slane %v3170, %v4402
  %v4404 = vcombine.low %v4389, %v4396
  %v4406 = vunpack.c.l.s4 1966171168
  %v4407 = vunpack.c.0.s8 %v4406
  %v4408 = vlaneseq
  %v4409 = vshrl.u32 %v4408, 7
  %v4410 = vsub.s32 %v4407, %v4409
  %v4411 = vrot.slane %v4404, %v4410
  %v4413 = vunpack.c.l.s4 1966171168
  %v4414 = vunpack.c.0.s8 %v4413
  %v4415 = vlaneseq
  %v4416 = vshrl.u32 %v4415, 7
  %v4417 = vsub.s32 %v4414, %v4416
  %v4418 = vrot.slane %v4403, %v4417
  %v4419 = vcombine.low %v4411, %v4418
  %v4420 = vcombine.low %v3184, %v3192
  %v4421 = vcombine.low %v3194, %v3177
  %v4423 = vunpack.c.l.s4 1966171168
  %v4424 = vunpack.c.0.s8 %v4423
  %v4425 = vlaneseq
  %v4426 = vshrl.u32 %v4425, 7
  %v4427 = vsub.s32 %v4424, %v4426
  %v4428 = vrot.slane %v4420, %v4427
  %v4430 = vunpack.c.l.s4 1966171168
  %v4431 = vunpack.c.0.s8 %v4430
  %v4432 = vlaneseq
  %v4433 = vshrl.u32 %v4432, 7
  %v4434 = vsub.s32 %v4431, %v4433
  %v4435 = vrot.slane %v4421, %v4434
  %v4437 = vunpack.c.l.s4 1966171168
  %v4438 = vunpack.c.0.s8 %v4437
  %v4439 = vlaneseq
  %v4440 = vshrl.u32 %v4439, 7
  %v4441 = vsub.s32 %v4438, %v4440
  %v4442 = vrot.slane %v3191, %v4441
  %v4443 = vcombine.low %v4428, %v4435
  %v4445 = vunpack.c.l.s4 1966171168
  %v4446 = vunpack.c.0.s8 %v4445
  %v4447 = vlaneseq
  %v4448 = vshrl.u32 %v4447, 7
  %v4449 = vsub.s32 %v4446, %v4448
  %v4450 = vrot.slane %v4443, %v4449
  %v4452 = vunpack.c.l.s4 1966171168
  %v4453 = vunpack.c.0.s8 %v4452
  %v4454 = vlaneseq
  %v4455 = vshrl.u32 %v4454, 7
  %v4456 = vsub.s32 %v4453, %v4455
  %v4457 = vrot.slane %v4442, %v4456
  %v4458 = vcombine.low %v4450, %v4457
  %v4459 = vcombine.low %v3193, %v3195
  %v4460 = vcombine.low %v3219, %v3233
  %v4462 = vunpack.c.l.s4 1966171168
  %v4463 = vunpack.c.0.s8 %v4462
  %v4464 = vlaneseq
  %v4465 = vshrl.u32 %v4464, 7
  %v4466 = vsub.s32 %v4463, %v4465
  %v4467 = vrot.slane %v4459, %v4466
  %v4469 = vunpack.c.l.s4 1966171168
  %v4470 = vunpack.c.0.s8 %v4469
  %v4471 = vlaneseq
  %v4472 = vshrl.u32 %v4471, 7
  %v4473 = vsub.s32 %v4470, %v4472
  %v4474 = vrot.slane %v4460, %v4473
  %v4476 = vunpack.c.l.s4 1966171168
  %v4477 = vunpack.c.0.s8 %v4476
  %v4478 = vlaneseq
  %v4479 = vshrl.u32 %v4478, 7
  %v4480 = vsub.s32 %v4477, %v4479
  %v4481 = vrot.slane %v3241, %v4480
  %v4482 = vcombine.low %v4467, %v4474
  %v4484 = vunpack.c.l.s4 1966171168
  %v4485 = vunpack.c.0.s8 %v4484
  %v4486 = vlaneseq
  %v4487 = vshrl.u32 %v4486, 7
  %v4488 = vsub.s32 %v4485, %v4487
  %v4489 = vrot.slane %v4482, %v4488
  %v4491 = vunpack.c.l.s4 1966171168
  %v4492 = vunpack.c.0.s8 %v4491
  %v4493 = vlaneseq
  %v4494 = vshrl.u32 %v4493, 7
  %v4495 = vsub.s32 %v4492, %v4494
  %v4496 = vrot.slane %v4481, %v4495
  %v4497 = vcombine.low %v4489, %v4496
  %v4498 = vcombine.low %v3243, %v3226
  %v4499 = vcombine.low %v3240, %v3242
  %v4501 = vunpack.c.l.s4 1966171168
  %v4502 = vunpack.c.0.s8 %v4501
  %v4503 = vlaneseq
  %v4504 = vshrl.u32 %v4503, 7
  %v4505 = vsub.s32 %v4502, %v4504
  %v4506 = vrot.slane %v4498, %v4505
  %v4508 = vunpack.c.l.s4 1966171168
  %v4509 = vunpack.c.0.s8 %v4508
  %v4510 = vlaneseq
  %v4511 = vshrl.u32 %v4510, 7
  %v4512 = vsub.s32 %v4509, %v4511
  %v4513 = vrot.slane %v4499, %v4512
  %v4515 = vunpack.c.l.s4 1966171168
  %v4516 = vunpack.c.0.s8 %v4515
  %v4517 = vlaneseq
  %v4518 = vshrl.u32 %v4517, 7
  %v4519 = vsub.s32 %v4516, %v4518
  %v4520 = vrot.slane %v3244, %v4519
  %v4521 = vcombine.low %v4506, %v4513
  %v4523 = vunpack.c.l.s4 1966171168
  %v4524 = vunpack.c.0.s8 %v4523
  %v4525 = vlaneseq
  %v4526 = vshrl.u32 %v4525, 7
  %v4527 = vsub.s32 %v4524, %v4526
  %v4528 = vrot.slane %v4521, %v4527
  %v4530 = vunpack.c.l.s4 1966171168
  %v4531 = vunpack.c.0.s8 %v4530
  %v4532 = vlaneseq
  %v4533 = vshrl.u32 %v4532, 7
  %v4534 = vsub.s32 %v4531, %v4533
  %v4535 = vrot.slane %v4520, %v4534
  %v4536 = vcombine.low %v4528, %v4535
  %v4537 = vcombine.low %v3268, %v3282
  %v4538 = vcombine.low %v3290, %v3292
  %v4540 = vunpack.c.l.s4 1966171168
  %v4541 = vunpack.c.0.s8 %v4540
  %v4542 = vlaneseq
  %v4543 = vshrl.u32 %v4542, 7
  %v4544 = vsub.s32 %v4541, %v4543
  %v4545 = vrot.slane %v4537, %v4544
  %v4547 = vunpack.c.l.s4 1966171168
  %v4548 = vunpack.c.0.s8 %v4547
  %v4549 = vlaneseq
  %v4550 = vshrl.u32 %v4549, 7
  %v4551 = vsub.s32 %v4548, %v4550
  %v4552 = vrot.slane %v4538, %v4551
  %v4554 = vunpack.c.l.s4 1966171168
  %v4555 = vunpack.c.0.s8 %v4554
  %v4556 = vlaneseq
  %v4557 = vshrl.u32 %v4556, 7
  %v4558 = vsub.s32 %v4555, %v4557
  %v4559 = vrot.slane %v3275, %v4558
  %v4560 = vcombine.low %v4545, %v4552
  %v4562 = vunpack.c.l.s4 1966171168
  %v4563 = vunpack.c.0.s8 %v4562
  %v4564 = vlaneseq
  %v4565 = vshrl.u32 %v4564, 7
  %v4566 = vsub.s32 %v4563, %v4565
  %v4567 = vrot.slane %v4560, %v4566
  %v4569 = vunpack.c.l.s4 1966171168
  %v4570 = vunpack.c.0.s8 %v4569
  %v4571 = vlaneseq
  %v4572 = vshrl.u32 %v4571, 7
  %v4573 = vsub.s32 %v4570, %v4572
  %v4574 = vrot.slane %v4559, %v4573
  %v4575 = vcombine.low %v4567, %v4574
  %v4576 = vcombine.low %v3289, %v3291
  %v4577 = vcombine.low %v3293, %v3317
  %v4579 = vunpack.c.l.s4 1966171168
  %v4580 = vunpack.c.0.s8 %v4579
  %v4581 = vlaneseq
  %v4582 = vshrl.u32 %v4581, 7
  %v4583 = vsub.s32 %v4580, %v4582
  %v4584 = vrot.slane %v4576, %v4583
  %v4586 = vunpack.c.l.s4 1966171168
  %v4587 = vunpack.c.0.s8 %v4586
  %v4588 = vlaneseq
  %v4589 = vshrl.u32 %v4588, 7
  %v4590 = vsub.s32 %v4587, %v4589
  %v4591 = vrot.slane %v4577, %v4590
  %v4593 = vunpack.c.l.s4 1966171168
  %v4594 = vunpack.c.0.s8 %v4593
  %v4595 = vlaneseq
  %v4596 = vshrl.u32 %v4595, 7
  %v4597 = vsub.s32 %v4594, %v4596
  %v4598 = vrot.slane %v3331, %v4597
  %v4599 = vcombine.low %v4584, %v4591
  %v4601 = vunpack.c.l.s4 1966171168
  %v4602 = vunpack.c.0.s8 %v4601
  %v4603 = vlaneseq
  %v4604 = vshrl.u32 %v4603, 7
  %v4605 = vsub.s32 %v4602, %v4604
  %v4606 = vrot.slane %v4599, %v4605
  %v4608 = vunpack.c.l.s4 1966171168
  %v4609 = vunpack.c.0.s8 %v4608
  %v4610 = vlaneseq
  %v4611 = vshrl.u32 %v4610, 7
  %v4612 = vsub.s32 %v4609, %v4611
  %v4613 = vrot.slane %v4598, %v4612
  %v4614 = vcombine.low %v4606, %v4613
  %v4615 = vcombine.low %v3339, %v3341
  %v4616 = vcombine.low %v3324, %v3338
  %v4618 = vunpack.c.l.s4 1966171168
  %v4619 = vunpack.c.0.s8 %v4618
  %v4620 = vlaneseq
  %v4621 = vshrl.u32 %v4620, 7
  %v4622 = vsub.s32 %v4619, %v4621
  %v4623 = vrot.slane %v4615, %v4622
  %v4625 = vunpack.c.l.s4 1966171168
  %v4626 = vunpack.c.0.s8 %v4625
  %v4627 = vlaneseq
  %v4628 = vshrl.u32 %v4627, 7
  %v4629 = vsub.s32 %v4626, %v4628
  %v4630 = vrot.slane %v4616, %v4629
  %v4632 = vunpack.c.l.s4 1966171168
  %v4633 = vunpack.c.0.s8 %v4632
  %v4634 = vlaneseq
  %v4635 = vshrl.u32 %v4634, 7
  %v4636 = vsub.s32 %v4633, %v4635
  %v4637 = vrot.slane %v3340, %v4636
  %v4638 = vcombine.low %v4623, %v4630
  %v4640 = vunpack.c.l.s4 1966171168
  %v4641 = vunpack.c.0.s8 %v4640
  %v4642 = vlaneseq
  %v4643 = vshrl.u32 %v4642, 7
  %v4644 = vsub.s32 %v4641, %v4643
  %v4645 = vrot.slane %v4638, %v4644
  %v4647 = vunpack.c.l.s4 1966171168
  %v4648 = vunpack.c.0.s8 %v4647
  %v4649 = vlaneseq
  %v4650 = vshrl.u32 %v4649, 7
  %v4651 = vsub.s32 %v4648, %v4650
  %v4652 = vrot.slane %v4637, %v4651
  %v4653 = vcombine.low %v4645, %v4652
  %v4654 = vcombine.low %v3342, %v3366
  %v4655 = vcombine.low %v3380, %v3388
  %v4657 = vunpack.c.l.s4 1966171168
  %v4658 = vunpack.c.0.s8 %v4657
  %v4659 = vlaneseq
  %v4660 = vshrl.u32 %v4659, 7
  %v4661 = vsub.s32 %v4658, %v4660
  %v4662 = vrot.slane %v4654, %v4661
  %v4664 = vunpack.c.l.s4 1966171168
  %v4665 = vunpack.c.0.s8 %v4664
  %v4666 = vlaneseq
  %v4667 = vshrl.u32 %v4666, 7
  %v4668 = vsub.s32 %v4665, %v4667
  %v4669 = vrot.slane %v4655, %v4668
  %v4671 = vunpack.c.l.s4 1966171168
  %v4672 = vunpack.c.0.s8 %v4671
  %v4673 = vlaneseq
  %v4674 = vshrl.u32 %v4673, 7
  %v4675 = vsub.s32 %v4672, %v4674
  %v4676 = vrot.slane %v3390, %v4675
  %v4677 = vcombine.low %v4662, %v4669
  %v4679 = vunpack.c.l.s4 1966171168
  %v4680 = vunpack.c.0.s8 %v4679
  %v4681 = vlaneseq
  %v4682 = vshrl.u32 %v4681, 7
  %v4683 = vsub.s32 %v4680, %v4682
  %v4684 = vrot.slane %v4677, %v4683
  %v4686 = vunpack.c.l.s4 1966171168
  %v4687 = vunpack.c.0.s8 %v4686
  %v4688 = vlaneseq
  %v4689 = vshrl.u32 %v4688, 7
  %v4690 = vsub.s32 %v4687, %v4689
  %v4691 = vrot.slane %v4676, %v4690
  %v4692 = vcombine.low %v4684, %v4691
  %v4693 = vcombine.low %v3373, %v3387
  %v4694 = vcombine.low %v3389, %v3391
  %v4696 = vunpack.c.l.s4 1966171168
  %v4697 = vunpack.c.0.s8 %v4696
  %v4698 = vlaneseq
  %v4699 = vshrl.u32 %v4698, 7
  %v4700 = vsub.s32 %v4697, %v4699
  %v4701 = vrot.slane %v4693, %v4700
  %v4703 = vunpack.c.l.s4 1966171168
  %v4704 = vunpack.c.0.s8 %v4703
  %v4705 = vlaneseq
  %v4706 = vshrl.u32 %v4705, 7
  %v4707 = vsub.s32 %v4704, %v4706
  %v4708 = vrot.slane %v4694, %v4707
  %v4710 = vunpack.c.l.s4 1966171168
  %v4711 = vunpack.c.0.s8 %v4710
  %v4712 = vlaneseq
  %v4713 = vshrl.u32 %v4712, 7
  %v4714 = vsub.s32 %v4711, %v4713
  %v4715 = vrot.slane %v3415, %v4714
  %v4716 = vcombine.low %v4701, %v4708
  %v4718 = vunpack.c.l.s4 1966171168
  %v4719 = vunpack.c.0.s8 %v4718
  %v4720 = vlaneseq
  %v4721 = vshrl.u32 %v4720, 7
  %v4722 = vsub.s32 %v4719, %v4721
  %v4723 = vrot.slane %v4716, %v4722
  %v4725 = vunpack.c.l.s4 1966171168
  %v4726 = vunpack.c.0.s8 %v4725
  %v4727 = vlaneseq
  %v4728 = vshrl.u32 %v4727, 7
  %v4729 = vsub.s32 %v4726, %v4728
  %v4730 = vrot.slane %v4715, %v4729
  %v4731 = vcombine.low %v4723, %v4730
  %v4732 = vcombine.low %v3429, %v3437
  %v4733 = vcombine.low %v3439, %v3422
  %v4735 = vunpack.c.l.s4 1966171168
  %v4736 = vunpack.c.0.s8 %v4735
  %v4737 = vlaneseq
  %v4738 = vshrl.u32 %v4737, 7
  %v4739 = vsub.s32 %v4736, %v4738
  %v4740 = vrot.slane %v4732, %v4739
  %v4742 = vunpack.c.l.s4 1966171168
  %v4743 = vunpack.c.0.s8 %v4742
  %v4744 = vlaneseq
  %v4745 = vshrl.u32 %v4744, 7
  %v4746 = vsub.s32 %v4743, %v4745
  %v4747 = vrot.slane %v4733, %v4746
  %v4749 = vunpack.c.l.s4 1966171168
  %v4750 = vunpack.c.0.s8 %v4749
  %v4751 = vlaneseq
  %v4752 = vshrl.u32 %v4751, 7
  %v4753 = vsub.s32 %v4750, %v4752
  %v4754 = vrot.slane %v3436, %v4753
  %v4755 = vcombine.low %v4740, %v4747
  %v4757 = vunpack.c.l.s4 1966171168
  %v4758 = vunpack.c.0.s8 %v4757
  %v4759 = vlaneseq
  %v4760 = vshrl.u32 %v4759, 7
  %v4761 = vsub.s32 %v4758, %v4760
  %v4762 = vrot.slane %v4755, %v4761
  %v4764 = vunpack.c.l.s4 1966171168
  %v4765 = vunpack.c.0.s8 %v4764
  %v4766 = vlaneseq
  %v4767 = vshrl.u32 %v4766, 7
  %v4768 = vsub.s32 %v4765, %v4767
  %v4769 = vrot.slane %v4754, %v4768
  %v4770 = vcombine.low %v4762, %v4769
  %v4771 = vcombine.low %v3438, %v3440
  %v4772 = vcombine.low %v3464, %v3478
  %v4774 = vunpack.c.l.s4 1966171168
  %v4775 = vunpack.c.0.s8 %v4774
  %v4776 = vlaneseq
  %v4777 = vshrl.u32 %v4776, 7
  %v4778 = vsub.s32 %v4775, %v4777
  %v4779 = vrot.slane %v4771, %v4778
  %v4781 = vunpack.c.l.s4 1966171168
  %v4782 = vunpack.c.0.s8 %v4781
  %v4783 = vlaneseq
  %v4784 = vshrl.u32 %v4783, 7
  %v4785 = vsub.s32 %v4782, %v4784
  %v4786 = vrot.slane %v4772, %v4785
  %v4788 = vunpack.c.l.s4 1966171168
  %v4789 = vunpack.c.0.s8 %v4788
  %v4790 = vlaneseq
  %v4791 = vshrl.u32 %v4790, 7
  %v4792 = vsub.s32 %v4789, %v4791
  %v4793 = vrot.slane %v3486, %v4792
  %v4794 = vcombine.low %v4779, %v4786
  %v4796 = vunpack.c.l.s4 1966171168
  %v4797 = vunpack.c.0.s8 %v4796
  %v4798 = vlaneseq
  %v4799 = vshrl.u32 %v4798, 7
  %v4800 = vsub.s32 %v4797, %v4799
  %v4801 = vrot.slane %v4794, %v4800
  %v4803 = vunpack.c.l.s4 1966171168
  %v4804 = vunpack.c.0.s8 %v4803
  %v4805 = vlaneseq
  %v4806 = vshrl.u32 %v4805, 7
  %v4807 = vsub.s32 %v4804, %v4806
  %v4808 = vrot.slane %v4793, %v4807
  %v4809 = vcombine.low %v4801, %v4808
  %v4810 = vcombine.low %v3488, %v3471
  %v4811 = vcombine.low %v3485, %v3487
  %v4813 = vunpack.c.l.s4 1966171168
  %v4814 = vunpack.c.0.s8 %v4813
  %v4815 = vlaneseq
  %v4816 = vshrl.u32 %v4815, 7
  %v4817 = vsub.s32 %v4814, %v4816
  %v4818 = vrot.slane %v4810, %v4817
  %v4820 = vunpack.c.l.s4 1966171168
  %v4821 = vunpack.c.0.s8 %v4820
  %v4822 = vlaneseq
  %v4823 = vshrl.u32 %v4822, 7
  %v4824 = vsub.s32 %v4821, %v4823
  %v4825 = vrot.slane %v4811, %v4824
  %v4827 = vunpack.c.l.s4 1966171168
  %v4828 = vunpack.c.0.s8 %v4827
  %v4829 = vlaneseq
  %v4830 = vshrl.u32 %v4829, 7
  %v4831 = vsub.s32 %v4828, %v4830
  %v4832 = vrot.slane %v3489, %v4831
  %v4833 = vcombine.low %v4818, %v4825
  %v4835 = vunpack.c.l.s4 1966171168
  %v4836 = vunpack.c.0.s8 %v4835
  %v4837 = vlaneseq
  %v4838 = vshrl.u32 %v4837, 7
  %v4839 = vsub.s32 %v4836, %v4838
  %v4840 = vrot.slane %v4833, %v4839
  %v4842 = vunpack.c.l.s4 1966171168
  %v4843 = vunpack.c.0.s8 %v4842
  %v4844 = vlaneseq
  %v4845 = vshrl.u32 %v4844, 7
  %v4846 = vsub.s32 %v4843, %v4845
  %v4847 = vrot.slane %v4832, %v4846
  %v4848 = vcombine.low %v4840, %v4847
  %v4849 = vcombine.low %v3513, %v3527
  %v4850 = vcombine.low %v3535, %v3537
  %v4852 = vunpack.c.l.s4 1966171168
  %v4853 = vunpack.c.0.s8 %v4852
  %v4854 = vlaneseq
  %v4855 = vshrl.u32 %v4854, 7
  %v4856 = vsub.s32 %v4853, %v4855
  %v4857 = vrot.slane %v4849, %v4856
  %v4859 = vunpack.c.l.s4 1966171168
  %v4860 = vunpack.c.0.s8 %v4859
  %v4861 = vlaneseq
  %v4862 = vshrl.u32 %v4861, 7
  %v4863 = vsub.s32 %v4860, %v4862
  %v4864 = vrot.slane %v4850, %v4863
  %v4866 = vunpack.c.l.s4 1966171168
  %v4867 = vunpack.c.0.s8 %v4866
  %v4868 = vlaneseq
  %v4869 = vshrl.u32 %v4868, 7
  %v4870 = vsub.s32 %v4867, %v4869
  %v4871 = vrot.slane %v3520, %v4870
  %v4872 = vcombine.low %v4857, %v4864
  %v4874 = vunpack.c.l.s4 1966171168
  %v4875 = vunpack.c.0.s8 %v4874
  %v4876 = vlaneseq
  %v4877 = vshrl.u32 %v4876, 7
  %v4878 = vsub.s32 %v4875, %v4877
  %v4879 = vrot.slane %v4872, %v4878
  %v4881 = vunpack.c.l.s4 1966171168
  %v4882 = vunpack.c.0.s8 %v4881
  %v4883 = vlaneseq
  %v4884 = vshrl.u32 %v4883, 7
  %v4885 = vsub.s32 %v4882, %v4884
  %v4886 = vrot.slane %v4871, %v4885
  %v4887 = vcombine.low %v4879, %v4886
  %v4888 = vcombine.low %v3534, %v3536
  %v4889 = vcombine.low %v3538, %v3562
  %v4891 = vunpack.c.l.s4 1966171168
  %v4892 = vunpack.c.0.s8 %v4891
  %v4893 = vlaneseq
  %v4894 = vshrl.u32 %v4893, 7
  %v4895 = vsub.s32 %v4892, %v4894
  %v4896 = vrot.slane %v4888, %v4895
  %v4898 = vunpack.c.l.s4 1966171168
  %v4899 = vunpack.c.0.s8 %v4898
  %v4900 = vlaneseq
  %v4901 = vshrl.u32 %v4900, 7
  %v4902 = vsub.s32 %v4899, %v4901
  %v4903 = vrot.slane %v4889, %v4902
  %v4905 = vunpack.c.l.s4 1966171168
  %v4906 = vunpack.c.0.s8 %v4905
  %v4907 = vlaneseq
  %v4908 = vshrl.u32 %v4907, 7
  %v4909 = vsub.s32 %v4906, %v4908
  %v4910 = vrot.slane %v3576, %v4909
  %v4911 = vcombine.low %v4896, %v4903
  %v4913 = vunpack.c.l.s4 1966171168
  %v4914 = vunpack.c.0.s8 %v4913
  %v4915 = vlaneseq
  %v4916 = vshrl.u32 %v4915, 7
  %v4917 = vsub.s32 %v4914, %v4916
  %v4918 = vrot.slane %v4911, %v4917
  %v4920 = vunpack.c.l.s4 1966171168
  %v4921 = vunpack.c.0.s8 %v4920
  %v4922 = vlaneseq
  %v4923 = vshrl.u32 %v4922, 7
  %v4924 = vsub.s32 %v4921, %v4923
  %v4925 = vrot.slane %v4910, %v4924
  %v4926 = vcombine.low %v4918, %v4925
  %v4927 = vcombine.low %v3584, %v3586
  %v4928 = vcombine.low %v3569, %v3583
  %v4930 = vunpack.c.l.s4 1966171168
  %v4931 = vunpack.c.0.s8 %v4930
  %v4932 = vlaneseq
  %v4933 = vshrl.u32 %v4932, 7
  %v4934 = vsub.s32 %v4931, %v4933
  %v4935 = vrot.slane %v4927, %v4934
  %v4937 = vunpack.c.l.s4 1966171168
  %v4938 = vunpack.c.0.s8 %v4937
  %v4939 = vlaneseq
  %v4940 = vshrl.u32 %v4939, 7
  %v4941 = vsub.s32 %v4938, %v4940
  %v4942 = vrot.slane %v4928, %v4941
  %v4944 = vunpack.c.l.s4 1966171168
  %v4945 = vunpack.c.0.s8 %v4944
  %v4946 = vlaneseq
  %v4947 = vshrl.u32 %v4946, 7
  %v4948 = vsub.s32 %v4945, %v4947
  %v4949 = vrot.slane %v3585, %v4948
  %v4950 = vcombine.low %v4935, %v4942
  %v4952 = vunpack.c.l.s4 1966171168
  %v4953 = vunpack.c.0.s8 %v4952
  %v4954 = vlaneseq
  %v4955 = vshrl.u32 %v4954, 7
  %v4956 = vsub.s32 %v4953, %v4955
  %v4957 = vrot.slane %v4950, %v4956
  %v4959 = vunpack.c.l.s4 1966171168
  %v4960 = vunpack.c.0.s8 %v4959
  %v4961 = vlaneseq
  %v4962 = vshrl.u32 %v4961, 7
  %v4963 = vsub.s32 %v4960, %v4962
  %v4964 = vrot.slane %v4949, %v4963
  %v4965 = vcombine.low %v4957, %v4964
  %v4966 = vcombine.low %v3587, %v3611
  %v4967 = vcombine.low %v3625, %v3633
  %v4969 = vunpack.c.l.s4 1966171168
  %v4970 = vunpack.c.0.s8 %v4969
  %v4971 = vlaneseq
  %v4972 = vshrl.u32 %v4971, 7
  %v4973 = vsub.s32 %v4970, %v4972
  %v4974 = vrot.slane %v4966, %v4973
  %v4976 = vunpack.c.l.s4 1966171168
  %v4977 = vunpack.c.0.s8 %v4976
  %v4978 = vlaneseq
  %v4979 = vshrl.u32 %v4978, 7
  %v4980 = vsub.s32 %v4977, %v4979
  %v4981 = vrot.slane %v4967, %v4980
  %v4983 = vunpack.c.l.s4 1966171168
  %v4984 = vunpack.c.0.s8 %v4983
  %v4985 = vlaneseq
  %v4986 = vshrl.u32 %v4985, 7
  %v4987 = vsub.s32 %v4984, %v4986
  %v4988 = vrot.slane %v3635, %v4987
  %v4989 = vcombine.low %v4974, %v4981
  %v4991 = vunpack.c.l.s4 1966171168
  %v4992 = vunpack.c.0.s8 %v4991
  %v4993 = vlaneseq
  %v4994 = vshrl.u32 %v4993, 7
  %v4995 = vsub.s32 %v4992, %v4994
  %v4996 = vrot.slane %v4989, %v4995
  %v4998 = vunpack.c.l.s4 1966171168
  %v4999 = vunpack.c.0.s8 %v4998
  %v5000 = vlaneseq
  %v5001 = vshrl.u32 %v5000, 7
  %v5002 = vsub.s32 %v4999, %v5001
  %v5003 = vrot.slane %v4988, %v5002
  %v5004 = vcombine.low %v4996, %v5003
  %v5005 = vcombine.low %v3618, %v3632
  %v5006 = vcombine.low %v3634, %v3636
  %v5008 = vunpack.c.l.s4 1966171168
  %v5009 = vunpack.c.0.s8 %v5008
  %v5010 = vlaneseq
  %v5011 = vshrl.u32 %v5010, 7
  %v5012 = vsub.s32 %v5009, %v5011
  %v5013 = vrot.slane %v5005, %v5012
  %v5015 = vunpack.c.l.s4 1966171168
  %v5016 = vunpack.c.0.s8 %v5015
  %v5017 = vlaneseq
  %v5018 = vshrl.u32 %v5017, 7
  %v5019 = vsub.s32 %v5016, %v5018
  %v5020 = vrot.slane %v5006, %v5019
  %v5022 = vunpack.c.l.s4 1966171168
  %v5023 = vunpack.c.0.s8 %v5022
  %v5024 = vlaneseq
  %v5025 = vshrl.u32 %v5024, 7
  %v5026 = vsub.s32 %v5023, %v5025
  %v5027 = vrot.slane %v3660, %v5026
  %v5028 = vcombine.low %v5013, %v5020
  %v5030 = vunpack.c.l.s4 1966171168
  %v5031 = vunpack.c.0.s8 %v5030
  %v5032 = vlaneseq
  %v5033 = vshrl.u32 %v5032, 7
  %v5034 = vsub.s32 %v5031, %v5033
  %v5035 = vrot.slane %v5028, %v5034
  %v5037 = vunpack.c.l.s4 1966171168
  %v5038 = vunpack.c.0.s8 %v5037
  %v5039 = vlaneseq
  %v5040 = vshrl.u32 %v5039, 7
  %v5041 = vsub.s32 %v5038, %v5040
  %v5042 = vrot.slane %v5027, %v5041
  %v5043 = vcombine.low %v5035, %v5042
  %v5044 = vcombine.low %v3674, %v3682
  %v5045 = vcombine.low %v3684, %v3667
  %v5047 = vunpack.c.l.s4 1966171168
  %v5048 = vunpack.c.0.s8 %v5047
  %v5049 = vlaneseq
  %v5050 = vshrl.u32 %v5049, 7
  %v5051 = vsub.s32 %v5048, %v5050
  %v5052 = vrot.slane %v5044, %v5051
  %v5054 = vunpack.c.l.s4 1966171168
  %v5055 = vunpack.c.0.s8 %v5054
  %v5056 = vlaneseq
  %v5057 = vshrl.u32 %v5056, 7
  %v5058 = vsub.s32 %v5055, %v5057
  %v5059 = vrot.slane %v5045, %v5058
  %v5061 = vunpack.c.l.s4 1966171168
  %v5062 = vunpack.c.0.s8 %v5061
  %v5063 = vlaneseq
  %v5064 = vshrl.u32 %v5063, 7
  %v5065 = vsub.s32 %v5062, %v5064
  %v5066 = vrot.slane %v3681, %v5065
  %v5067 = vcombine.low %v5052, %v5059
  %v5069 = vunpack.c.l.s4 1966171168
  %v5070 = vunpack.c.0.s8 %v5069
  %v5071 = vlaneseq
  %v5072 = vshrl.u32 %v5071, 7
  %v5073 = vsub.s32 %v5070, %v5072
  %v5074 = vrot.slane %v5067, %v5073
  %v5076 = vunpack.c.l.s4 1966171168
  %v5077 = vunpack.c.0.s8 %v5076
  %v5078 = vlaneseq
  %v5079 = vshrl.u32 %v5078, 7
  %v5080 = vsub.s32 %v5077, %v5079
  %v5081 = vrot.slane %v5066, %v5080
  %v5082 = vcombine.low %v5074, %v5081
  %v5083 = vcombine.low %v3683, %v3685
  %v5084 = vcombine.low %v3709, %v3723
  %v5086 = vunpack.c.l.s4 1966171168
  %v5087 = vunpack.c.0.s8 %v5086
  %v5088 = vlaneseq
  %v5089 = vshrl.u32 %v5088, 7
  %v5090 = vsub.s32 %v5087, %v5089
  %v5091 = vrot.slane %v5083, %v5090
  %v5093 = vunpack.c.l.s4 1966171168
  %v5094 = vunpack.c.0.s8 %v5093
  %v5095 = vlaneseq
  %v5096 = vshrl.u32 %v5095, 7
  %v5097 = vsub.s32 %v5094, %v5096
  %v5098 = vrot.slane %v5084, %v5097
  %v5100 = vunpack.c.l.s4 1966171168
  %v5101 = vunpack.c.0.s8 %v5100
  %v5102 = vlaneseq
  %v5103 = vshrl.u32 %v5102, 7
  %v5104 = vsub.s32 %v5101, %v5103
  %v5105 = vrot.slane %v3731, %v5104
  %v5106 = vcombine.low %v5091, %v5098
  %v5108 = vunpack.c.l.s4 1966171168
  %v5109 = vunpack.c.0.s8 %v5108
  %v5110 = vlaneseq
  %v5111 = vshrl.u32 %v5110, 7
  %v5112 = vsub.s32 %v5109, %v5111
  %v5113 = vrot.slane %v5106, %v5112
  %v5115 = vunpack.c.l.s4 1966171168
  %v5116 = vunpack.c.0.s8 %v5115
  %v5117 = vlaneseq
  %v5118 = vshrl.u32 %v5117, 7
  %v5119 = vsub.s32 %v5116, %v5118
  %v5120 = vrot.slane %v5105, %v5119
  %v5121 = vcombine.low %v5113, %v5120
  %v5122 = vcombine.low %v3733, %v3716
  %v5123 = vcombine.low %v3730, %v3732
  %v5125 = vunpack.c.l.s4 1966171168
  %v5126 = vunpack.c.0.s8 %v5125
  %v5127 = vlaneseq
  %v5128 = vshrl.u32 %v5127, 7
  %v5129 = vsub.s32 %v5126, %v5128
  %v5130 = vrot.slane %v5122, %v5129
  %v5132 = vunpack.c.l.s4 1966171168
  %v5133 = vunpack.c.0.s8 %v5132
  %v5134 = vlaneseq
  %v5135 = vshrl.u32 %v5134, 7
  %v5136 = vsub.s32 %v5133, %v5135
  %v5137 = vrot.slane %v5123, %v5136
  %v5139 = vunpack.c.l.s4 1966171168
  %v5140 = vunpack.c.0.s8 %v5139
  %v5141 = vlaneseq
  %v5142 = vshrl.u32 %v5141, 7
  %v5143 = vsub.s32 %v5140, %v5142
  %v5144 = vrot.slane %v3734, %v5143
  %v5145 = vcombine.low %v5130, %v5137
  %v5147 = vunpack.c.l.s4 1966171168
  %v5148 = vunpack.c.0.s8 %v5147
  %v5149 = vlaneseq
  %v5150 = vshrl.u32 %v5149, 7
  %v5151 = vsub.s32 %v5148, %v5150
  %v5152 = vrot.slane %v5145, %v5151
  %v5154 = vunpack.c.l.s4 1966171168
  %v5155 = vunpack.c.0.s8 %v5154
  %v5156 = vlaneseq
  %v5157 = vshrl.u32 %v5156, 7
  %v5158 = vsub.s32 %v5155, %v5157
  %v5159 = vrot.slane %v5144, %v5158
  %v5160 = vcombine.low %v5152, %v5159
  %v5161 = vcombine.low %v3758, %v3772
  %v5162 = vcombine.low %v3780, %v3782
  %v5164 = vunpack.c.l.s4 1966171168
  %v5165 = vunpack.c.0.s8 %v5164
  %v5166 = vlaneseq
  %v5167 = vshrl.u32 %v5166, 7
  %v5168 = vsub.s32 %v5165, %v5167
  %v5169 = vrot.slane %v5161, %v5168
  %v5171 = vunpack.c.l.s4 1966171168
  %v5172 = vunpack.c.0.s8 %v5171
  %v5173 = vlaneseq
  %v5174 = vshrl.u32 %v5173, 7
  %v5175 = vsub.s32 %v5172, %v5174
  %v5176 = vrot.slane %v5162, %v5175
  %v5178 = vunpack.c.l.s4 1966171168
  %v5179 = vunpack.c.0.s8 %v5178
  %v5180 = vlaneseq
  %v5181 = vshrl.u32 %v5180, 7
  %v5182 = vsub.s32 %v5179, %v5181
  %v5183 = vrot.slane %v3765, %v5182
  %v5184 = vcombine.low %v5169, %v5176
  %v5186 = vunpack.c.l.s4 1966171168
  %v5187 = vunpack.c.0.s8 %v5186
  %v5188 = vlaneseq
  %v5189 = vshrl.u32 %v5188, 7
  %v5190 = vsub.s32 %v5187, %v5189
  %v5191 = vrot.slane %v5184, %v5190
  %v5193 = vunpack.c.l.s4 1966171168
  %v5194 = vunpack.c.0.s8 %v5193
  %v5195 = vlaneseq
  %v5196 = vshrl.u32 %v5195, 7
  %v5197 = vsub.s32 %v5194, %v5196
  %v5198 = vrot.slane %v5183, %v5197
  %v5199 = vcombine.low %v5191, %v5198
  %v5200 = vcombine.low %v3779, %v3781
  %v5201 = vcombine.low %v3783, %v3807
  %v5203 = vunpack.c.l.s4 1966171168
  %v5204 = vunpack.c.0.s8 %v5203
  %v5205 = vlaneseq
  %v5206 = vshrl.u32 %v5205, 7
  %v5207 = vsub.s32 %v5204, %v5206
  %v5208 = vrot.slane %v5200, %v5207
  %v5210 = vunpack.c.l.s4 1966171168
  %v5211 = vunpack.c.0.s8 %v5210
  %v5212 = vlaneseq
  %v5213 = vshrl.u32 %v5212, 7
  %v5214 = vsub.s32 %v5211, %v5213
  %v5215 = vrot.slane %v5201, %v5214
  %v5217 = vunpack.c.l.s4 1966171168
  %v5218 = vunpack.c.0.s8 %v5217
  %v5219 = vlaneseq
  %v5220 = vshrl.u32 %v5219, 7
  %v5221 = vsub.s32 %v5218, %v5220
  %v5222 = vrot.slane %v3821, %v5221
  %v5223 = vcombine.low %v5208, %v5215
  %v5225 = vunpack.c.l.s4 1966171168
  %v5226 = vunpack.c.0.s8 %v5225
  %v5227 = vlaneseq
  %v5228 = vshrl.u32 %v5227, 7
  %v5229 = vsub.s32 %v5226, %v5228
  %v5230 = vrot.slane %v5223, %v5229
  %v5232 = vunpack.c.l.s4 1966171168
  %v5233 = vunpack.c.0.s8 %v5232
  %v5234 = vlaneseq
  %v5235 = vshrl.u32 %v5234, 7
  %v5236 = vsub.s32 %v5233, %v5235
  %v5237 = vrot.slane %v5222, %v5236
  %v5238 = vcombine.low %v5230, %v5237
  %v5239 = vcombine.low %v3829, %v3831
  %v5240 = vcombine.low %v3814, %v3828
  %v5242 = vunpack.c.l.s4 1966171168
  %v5243 = vunpack.c.0.s8 %v5242
  %v5244 = vlaneseq
  %v5245 = vshrl.u32 %v5244, 7
  %v5246 = vsub.s32 %v5243, %v5245
  %v5247 = vrot.slane %v5239, %v5246
  %v5249 = vunpack.c.l.s4 1966171168
  %v5250 = vunpack.c.0.s8 %v5249
  %v5251 = vlaneseq
  %v5252 = vshrl.u32 %v5251, 7
  %v5253 = vsub.s32 %v5250, %v5252
  %v5254 = vrot.slane %v5240, %v5253
  %v5256 = vunpack.c.l.s4 1966171168
  %v5257 = vunpack.c.0.s8 %v5256
  %v5258 = vlaneseq
  %v5259 = vshrl.u32 %v5258, 7
  %v5260 = vsub.s32 %v5257, %v5259
  %v5261 = vrot.slane %v3830, %v5260
  %v5262 = vcombine.low %v5247, %v5254
  %v5264 = vunpack.c.l.s4 1966171168
  %v5265 = vunpack.c.0.s8 %v5264
  %v5266 = vlaneseq
  %v5267 = vshrl.u32 %v5266, 7
  %v5268 = vsub.s32 %v5265, %v5267
  %v5269 = vrot.slane %v5262, %v5268
  %v5271 = vunpack.c.l.s4 1966171168
  %v5272 = vunpack.c.0.s8 %v5271
  %v5273 = vlaneseq
  %v5274 = vshrl.u32 %v5273, 7
  %v5275 = vsub.s32 %v5272, %v5274
  %v5276 = vrot.slane %v5261, %v5275
  %v5277 = vcombine.low %v5269, %v5276
  %v5278 = vcombine.low %v3832, %v3856
  %v5279 = vcombine.low %v3870, %v3878
  %v5281 = vunpack.c.l.s4 1966171168
  %v5282 = vunpack.c.0.s8 %v5281
  %v5283 = vlaneseq
  %v5284 = vshrl.u32 %v5283, 7
  %v5285 = vsub.s32 %v5282, %v5284
  %v5286 = vrot.slane %v5278, %v5285
  %v5288 = vunpack.c.l.s4 1966171168
  %v5289 = vunpack.c.0.s8 %v5288
  %v5290 = vlaneseq
  %v5291 = vshrl.u32 %v5290, 7
  %v5292 = vsub.s32 %v5289, %v5291
  %v5293 = vrot.slane %v5279, %v5292
  %v5295 = vunpack.c.l.s4 1966171168
  %v5296 = vunpack.c.0.s8 %v5295
  %v5297 = vlaneseq
  %v5298 = vshrl.u32 %v5297, 7
  %v5299 = vsub.s32 %v5296, %v5298
  %v5300 = vrot.slane %v3880, %v5299
  %v5301 = vcombine.low %v5286, %v5293
  %v5303 = vunpack.c.l.s4 1966171168
  %v5304 = vunpack.c.0.s8 %v5303
  %v5305 = vlaneseq
  %v5306 = vshrl.u32 %v5305, 7
  %v5307 = vsub.s32 %v5304, %v5306
  %v5308 = vrot.slane %v5301, %v5307
  %v5310 = vunpack.c.l.s4 1966171168
  %v5311 = vunpack.c.0.s8 %v5310
  %v5312 = vlaneseq
  %v5313 = vshrl.u32 %v5312, 7
  %v5314 = vsub.s32 %v5311, %v5313
  %v5315 = vrot.slane %v5300, %v5314
  %v5316 = vcombine.low %v5308, %v5315
  %v5317 = vcombine.low %v3863, %v3877
  %v5318 = vcombine.low %v3879, %v3881
  %v5320 = vunpack.c.l.s4 1966171168
  %v5321 = vunpack.c.0.s8 %v5320
  %v5322 = vlaneseq
  %v5323 = vshrl.u32 %v5322, 7
  %v5324 = vsub.s32 %v5321, %v5323
  %v5325 = vrot.slane %v5317, %v5324
  %v5327 = vunpack.c.l.s4 1966171168
  %v5328 = vunpack.c.0.s8 %v5327
  %v5329 = vlaneseq
  %v5330 = vshrl.u32 %v5329, 7
  %v5331 = vsub.s32 %v5328, %v5330
  %v5332 = vrot.slane %v5318, %v5331
  %v5334 = vunpack.c.l.s4 1966171168
  %v5335 = vunpack.c.0.s8 %v5334
  %v5336 = vlaneseq
  %v5337 = vshrl.u32 %v5336, 7
  %v5338 = vsub.s32 %v5335, %v5337
  %v5339 = vrot.slane %v3905, %v5338
  %v5340 = vcombine.low %v5325, %v5332
  %v5342 = vunpack.c.l.s4 1966171168
  %v5343 = vunpack.c.0.s8 %v5342
  %v5344 = vlaneseq
  %v5345 = vshrl.u32 %v5344, 7
  %v5346 = vsub.s32 %v5343, %v5345
  %v5347 = vrot.slane %v5340, %v5346
  %v5349 = vunpack.c.l.s4 1966171168
  %v5350 = vunpack.c.0.s8 %v5349
  %v5351 = vlaneseq
  %v5352 = vshrl.u32 %v5351, 7
  %v5353 = vsub.s32 %v5350, %v5352
  %v5354 = vrot.slane %v5339, %v5353
  %v5355 = vcombine.low %v5347, %v5354
  %v5356 = vcombine.low %v3919, %v3927
  %v5357 = vcombine.low %v3929, %v3912
  %v5359 = vunpack.c.l.s4 1966171168
  %v5360 = vunpack.c.0.s8 %v5359
  %v5361 = vlaneseq
  %v5362 = vshrl.u32 %v5361, 7
  %v5363 = vsub.s32 %v5360, %v5362
  %v5364 = vrot.slane %v5356, %v5363
  %v5366 = vunpack.c.l.s4 1966171168
  %v5367 = vunpack.c.0.s8 %v5366
  %v5368 = vlaneseq
  %v5369 = vshrl.u32 %v5368, 7
  %v5370 = vsub.s32 %v5367, %v5369
  %v5371 = vrot.slane %v5357, %v5370
  %v5373 = vunpack.c.l.s4 1966171168
  %v5374 = vunpack.c.0.s8 %v5373
  %v5375 = vlaneseq
  %v5376 = vshrl.u32 %v5375, 7
  %v5377 = vsub.s32 %v5374, %v5376
  %v5378 = vrot.slane %v3926, %v5377
  %v5379 = vcombine.low %v5364, %v5371
  %v5381 = vunpack.c.l.s4 1966171168
  %v5382 = vunpack.c.0.s8 %v5381
  %v5383 = vlaneseq
  %v5384 = vshrl.u32 %v5383, 7
  %v5385 = vsub.s32 %v5382, %v5384
  %v5386 = vrot.slane %v5379, %v5385
  %v5388 = vunpack.c.l.s4 1966171168
  %v5389 = vunpack.c.0.s8 %v5388
  %v5390 = vlaneseq
  %v5391 = vshrl.u32 %v5390, 7
  %v5392 = vsub.s32 %v5389, %v5391
  %v5393 = vrot.slane %v5378, %v5392
  %v5394 = vcombine.low %v5386, %v5393
  %v5395 = vcombine.low %v3928, %v3930
  %v5396 = vcombine.low %v3954, %v3968
  %v5398 = vunpack.c.l.s4 1966171168
  %v5399 = vunpack.c.0.s8 %v5398
  %v5400 = vlaneseq
  %v5401 = vshrl.u32 %v5400, 7
  %v5402 = vsub.s32 %v5399, %v5401
  %v5403 = vrot.slane %v5395, %v5402
  %v5405 = vunpack.c.l.s4 1966171168
  %v5406 = vunpack.c.0.s8 %v5405
  %v5407 = vlaneseq
  %v5408 = vshrl.u32 %v5407, 7
  %v5409 = vsub.s32 %v5406, %v5408
  %v5410 = vrot.slane %v5396, %v5409
  %v5412 = vunpack.c.l.s4 1966171168
  %v5413 = vunpack.c.0.s8 %v5412
  %v5414 = vlaneseq
  %v5415 = vshrl.u32 %v5414, 7
  %v5416 = vsub.s32 %v5413, %v5415
  %v5417 = vrot.slane %v3976, %v5416
  %v5418 = vcombine.low %v5403, %v5410
  %v5420 = vunpack.c.l.s4 1966171168
  %v5421 = vunpack.c.0.s8 %v5420
  %v5422 = vlaneseq
  %v5423 = vshrl.u32 %v5422, 7
  %v5424 = vsub.s32 %v5421, %v5423
  %v5425 = vrot.slane %v5418, %v5424
  %v5427 = vunpack.c.l.s4 1966171168
  %v5428 = vunpack.c.0.s8 %v5427
  %v5429 = vlaneseq
  %v5430 = vshrl.u32 %v5429, 7
  %v5431 = vsub.s32 %v5428, %v5430
  %v5432 = vrot.slane %v5417, %v5431
  %v5433 = vcombine.low %v5425, %v5432
  %v5434 = vcombine.low %v3978, %v3961
  %v5435 = vcombine.low %v3975, %v3977
  %v5437 = vunpack.c.l.s4 1966171168
  %v5438 = vunpack.c.0.s8 %v5437
  %v5439 = vlaneseq
  %v5440 = vshrl.u32 %v5439, 7
  %v5441 = vsub.s32 %v5438, %v5440
  %v5442 = vrot.slane %v5434, %v5441
  %v5444 = vunpack.c.l.s4 1966171168
  %v5445 = vunpack.c.0.s8 %v5444
  %v5446 = vlaneseq
  %v5447 = vshrl.u32 %v5446, 7
  %v5448 = vsub.s32 %v5445, %v5447
  %v5449 = vrot.slane %v5435, %v5448
  %v5451 = vunpack.c.l.s4 1966171168
  %v5452 = vunpack.c.0.s8 %v5451
  %v5453 = vlaneseq
  %v5454 = vshrl.u32 %v5453, 7
  %v5455 = vsub.s32 %v5452, %v5454
  %v5456 = vrot.slane %v3979, %v5455
  %v5457 = vcombine.low %v5442, %v5449
  %v5459 = vunpack.c.l.s4 1966171168
  %v5460 = vunpack.c.0.s8 %v5459
  %v5461 = vlaneseq
  %v5462 = vshrl.u32 %v5461, 7
  %v5463 = vsub.s32 %v5460, %v5462
  %v5464 = vrot.slane %v5457, %v5463
  %v5466 = vunpack.c.l.s4 1966171168
  %v5467 = vunpack.c.0.s8 %v5466
  %v5468 = vlaneseq
  %v5469 = vshrl.u32 %v5468, 7
  %v5470 = vsub.s32 %v5467, %v5469
  %v5471 = vrot.slane %v5456, %v5470
  %v5472 = vcombine.low %v5464, %v5471
  %v5473 = vcombine.low %v4003, %v4017
  %v5474 = vcombine.low %v4025, %v4027
  %v5476 = vunpack.c.l.s4 1966171168
  %v5477 = vunpack.c.0.s8 %v5476
  %v5478 = vlaneseq
  %v5479 = vshrl.u32 %v5478, 7
  %v5480 = vsub.s32 %v5477, %v5479
  %v5481 = vrot.slane %v5473, %v5480
  %v5483 = vunpack.c.l.s4 1966171168
  %v5484 = vunpack.c.0.s8 %v5483
  %v5485 = vlaneseq
  %v5486 = vshrl.u32 %v5485, 7
  %v5487 = vsub.s32 %v5484, %v5486
  %v5488 = vrot.slane %v5474, %v5487
  %v5490 = vunpack.c.l.s4 1966171168
  %v5491 = vunpack.c.0.s8 %v5490
  %v5492 = vlaneseq
  %v5493 = vshrl.u32 %v5492, 7
  %v5494 = vsub.s32 %v5491, %v5493
  %v5495 = vrot.slane %v4010, %v5494
  %v5496 = vcombine.low %v5481, %v5488
  %v5498 = vunpack.c.l.s4 1966171168
  %v5499 = vunpack.c.0.s8 %v5498
  %v5500 = vlaneseq
  %v5501 = vshrl.u32 %v5500, 7
  %v5502 = vsub.s32 %v5499, %v5501
  %v5503 = vrot.slane %v5496, %v5502
  %v5505 = vunpack.c.l.s4 1966171168
  %v5506 = vunpack.c.0.s8 %v5505
  %v5507 = vlaneseq
  %v5508 = vshrl.u32 %v5507, 7
  %v5509 = vsub.s32 %v5506, %v5508
  %v5510 = vrot.slane %v5495, %v5509
  %v5511 = vcombine.low %v5503, %v5510
  %v5512 = vcombine.low %v4024, %v4026
  %v5513 = vcombine.low %v4028, %v4052
  %v5515 = vunpack.c.l.s4 1966171168
  %v5516 = vunpack.c.0.s8 %v5515
  %v5517 = vlaneseq
  %v5518 = vshrl.u32 %v5517, 7
  %v5519 = vsub.s32 %v5516, %v5518
  %v5520 = vrot.slane %v5512, %v5519
  %v5522 = vunpack.c.l.s4 1966171168
  %v5523 = vunpack.c.0.s8 %v5522
  %v5524 = vlaneseq
  %v5525 = vshrl.u32 %v5524, 7
  %v5526 = vsub.s32 %v5523, %v5525
  %v5527 = vrot.slane %v5513, %v5526
  %v5529 = vunpack.c.l.s4 1966171168
  %v5530 = vunpack.c.0.s8 %v5529
  %v5531 = vlaneseq
  %v5532 = vshrl.u32 %v5531, 7
  %v5533 = vsub.s32 %v5530, %v5532
  %v5534 = vrot.slane %v4066, %v5533
  %v5535 = vcombine.low %v5520, %v5527
  %v5537 = vunpack.c.l.s4 1966171168
  %v5538 = vunpack.c.0.s8 %v5537
  %v5539 = vlaneseq
  %v5540 = vshrl.u32 %v5539, 7
  %v5541 = vsub.s32 %v5538, %v5540
  %v5542 = vrot.slane %v5535, %v5541
  %v5544 = vunpack.c.l.s4 1966171168
  %v5545 = vunpack.c.0.s8 %v5544
  %v5546 = vlaneseq
  %v5547 = vshrl.u32 %v5546, 7
  %v5548 = vsub.s32 %v5545, %v5547
  %v5549 = vrot.slane %v5534, %v5548
  %v5550 = vcombine.low %v5542, %v5549
  %v5551 = vcombine.low %v4074, %v4076
  %v5552 = vcombine.low %v4059, %v4073
  %v5554 = vunpack.c.l.s4 1966171168
  %v5555 = vunpack.c.0.s8 %v5554
  %v5556 = vlaneseq
  %v5557 = vshrl.u32 %v5556, 7
  %v5558 = vsub.s32 %v5555, %v5557
  %v5559 = vrot.slane %v5551, %v5558
  %v5561 = vunpack.c.l.s4 1966171168
  %v5562 = vunpack.c.0.s8 %v5561
  %v5563 = vlaneseq
  %v5564 = vshrl.u32 %v5563, 7
  %v5565 = vsub.s32 %v5562, %v5564
  %v5566 = vrot.slane %v5552, %v5565
  %v5568 = vunpack.c.l.s4 1966171168
  %v5569 = vunpack.c.0.s8 %v5568
  %v5570 = vlaneseq
  %v5571 = vshrl.u32 %v5570, 7
  %v5572 = vsub.s32 %v5569, %v5571
  %v5573 = vrot.slane %v4075, %v5572
  %v5574 = vcombine.low %v5559, %v5566
  %v5576 = vunpack.c.l.s4 1966171168
  %v5577 = vunpack.c.0.s8 %v5576
  %v5578 = vlaneseq
  %v5579 = vshrl.u32 %v5578, 7
  %v5580 = vsub.s32 %v5577, %v5579
  %v5581 = vrot.slane %v5574, %v5580
  %v5583 = vunpack.c.l.s4 1966171168
  %v5584 = vunpack.c.0.s8 %v5583
  %v5585 = vlaneseq
  %v5586 = vshrl.u32 %v5585, 7
  %v5587 = vsub.s32 %v5584, %v5586
  %v5588 = vrot.slane %v5573, %v5587
  %v5589 = vcombine.low %v5581, %v5588
  %v5590 = vcombine.low %v4077, %v4101
  %v5591 = vcombine.low %v4115, %v4123
  %v5593 = vunpack.c.l.s4 1966171168
  %v5594 = vunpack.c.0.s8 %v5593
  %v5595 = vlaneseq
  %v5596 = vshrl.u32 %v5595, 7
  %v5597 = vsub.s32 %v5594, %v5596
  %v5598 = vrot.slane %v5590, %v5597
  %v5600 = vunpack.c.l.s4 1966171168
  %v5601 = vunpack.c.0.s8 %v5600
  %v5602 = vlaneseq
  %v5603 = vshrl.u32 %v5602, 7
  %v5604 = vsub.s32 %v5601, %v5603
  %v5605 = vrot.slane %v5591, %v5604
  %v5607 = vunpack.c.l.s4 1966171168
  %v5608 = vunpack.c.0.s8 %v5607
  %v5609 = vlaneseq
  %v5610 = vshrl.u32 %v5609, 7
  %v5611 = vsub.s32 %v5608, %v5610
  %v5612 = vrot.slane %v4125, %v5611
  %v5613 = vcombine.low %v5598, %v5605
  %v5615 = vunpack.c.l.s4 1966171168
  %v5616 = vunpack.c.0.s8 %v5615
  %v5617 = vlaneseq
  %v5618 = vshrl.u32 %v5617, 7
  %v5619 = vsub.s32 %v5616, %v5618
  %v5620 = vrot.slane %v5613, %v5619
  %v5622 = vunpack.c.l.s4 1966171168
  %v5623 = vunpack.c.0.s8 %v5622
  %v5624 = vlaneseq
  %v5625 = vshrl.u32 %v5624, 7
  %v5626 = vsub.s32 %v5623, %v5625
  %v5627 = vrot.slane %v5612, %v5626
  %v5628 = vcombine.low %v5620, %v5627
  %v5629 = vcombine.low %v4108, %v4122
  %v5630 = vcombine.low %v4124, %v4126
  %v5632 = vunpack.c.l.s4 1966171168
  %v5633 = vunpack.c.0.s8 %v5632
  %v5634 = vlaneseq
  %v5635 = vshrl.u32 %v5634, 7
  %v5636 = vsub.s32 %v5633, %v5635
  %v5637 = vrot.slane %v5629, %v5636
  %v5639 = vunpack.c.l.s4 1966171168
  %v5640 = vunpack.c.0.s8 %v5639
  %v5641 = vlaneseq
  %v5642 = vshrl.u32 %v5641, 7
  %v5643 = vsub.s32 %v5640, %v5642
  %v5644 = vrot.slane %v5630, %v5643
  %v5646 = vunpack.c.l.s4 1966171168
  %v5647 = vunpack.c.0.s8 %v5646
  %v5648 = vlaneseq
  %v5649 = vshrl.u32 %v5648, 7
  %v5650 = vsub.s32 %v5647, %v5649
  %v5651 = vrot.slane %v4150, %v5650
  %v5652 = vcombine.low %v5637, %v5644
  %v5654 = vunpack.c.l.s4 1966171168
  %v5655 = vunpack.c.0.s8 %v5654
  %v5656 = vlaneseq
  %v5657 = vshrl.u32 %v5656, 7
  %v5658 = vsub.s32 %v5655, %v5657
  %v5659 = vrot.slane %v5652, %v5658
  %v5661 = vunpack.c.l.s4 1966171168
  %v5662 = vunpack.c.0.s8 %v5661
  %v5663 = vlaneseq
  %v5664 = vshrl.u32 %v5663, 7
  %v5665 = vsub.s32 %v5662, %v5664
  %v5666 = vrot.slane %v5651, %v5665
  %v5667 = vcombine.low %v5659, %v5666
  %v5668 = vcombine.low %v4164, %v4172
  %v5669 = vcombine.low %v4174, %v4157
  %v5671 = vunpack.c.l.s4 1966171168
  %v5672 = vunpack.c.0.s8 %v5671
  %v5673 = vlaneseq
  %v5674 = vshrl.u32 %v5673, 7
  %v5675 = vsub.s32 %v5672, %v5674
  %v5676 = vrot.slane %v5668, %v5675
  %v5678 = vunpack.c.l.s4 1966171168
  %v5679 = vunpack.c.0.s8 %v5678
  %v5680 = vlaneseq
  %v5681 = vshrl.u32 %v5680, 7
  %v5682 = vsub.s32 %v5679, %v5681
  %v5683 = vrot.slane %v5669, %v5682
  %v5685 = vunpack.c.l.s4 1966171168
  %v5686 = vunpack.c.0.s8 %v5685
  %v5687 = vlaneseq
  %v5688 = vshrl.u32 %v5687, 7
  %v5689 = vsub.s32 %v5686, %v5688
  %v5690 = vrot.slane %v4171, %v5689
  %v5691 = vcombine.low %v5676, %v5683
  %v5693 = vunpack.c.l.s4 1966171168
  %v5694 = vunpack.c.0.s8 %v5693
  %v5695 = vlaneseq
  %v5696 = vshrl.u32 %v5695, 7
  %v5697 = vsub.s32 %v5694, %v5696
  %v5698 = vrot.slane %v5691, %v5697
  %v5700 = vunpack.c.l.s4 1966171168
  %v5701 = vunpack.c.0.s8 %v5700
  %v5702 = vlaneseq
  %v5703 = vshrl.u32 %v5702, 7
  %v5704 = vsub.s32 %v5701, %v5703
  %v5705 = vrot.slane %v5690, %v5704
  %v5706 = vcombine.low %v5698, %v5705
  %v5707 = vcombine.low %v4173, %v4175
  %v5708 = vcombine.low %v4199, %v4213
  %v5710 = vunpack.c.l.s4 1966171168
  %v5711 = vunpack.c.0.s8 %v5710
  %v5712 = vlaneseq
  %v5713 = vshrl.u32 %v5712, 7
  %v5714 = vsub.s32 %v5711, %v5713
  %v5715 = vrot.slane %v5707, %v5714
  %v5717 = vunpack.c.l.s4 1966171168
  %v5718 = vunpack.c.0.s8 %v5717
  %v5719 = vlaneseq
  %v5720 = vshrl.u32 %v5719, 7
  %v5721 = vsub.s32 %v5718, %v5720
  %v5722 = vrot.slane %v5708, %v5721
  %v5724 = vunpack.c.l.s4 1966171168
  %v5725 = vunpack.c.0.s8 %v5724
  %v5726 = vlaneseq
  %v5727 = vshrl.u32 %v5726, 7
  %v5728 = vsub.s32 %v5725, %v5727
  %v5729 = vrot.slane %v4221, %v5728
  %v5730 = vcombine.low %v5715, %v5722
  %v5732 = vunpack.c.l.s4 1966171168
  %v5733 = vunpack.c.0.s8 %v5732
  %v5734 = vlaneseq
  %v5735 = vshrl.u32 %v5734, 7
  %v5736 = vsub.s32 %v5733, %v5735
  %v5737 = vrot.slane %v5730, %v5736
  %v5739 = vunpack.c.l.s4 1966171168
  %v5740 = vunpack.c.0.s8 %v5739
  %v5741 = vlaneseq
  %v5742 = vshrl.u32 %v5741, 7
  %v5743 = vsub.s32 %v5740, %v5742
  %v5744 = vrot.slane %v5729, %v5743
  %v5745 = vcombine.low %v5737, %v5744
  %v5746 = vcombine.low %v4223, %v4206
  %v5747 = vcombine.low %v4220, %v4222
  %v5749 = vunpack.c.l.s4 1966171168
  %v5750 = vunpack.c.0.s8 %v5749
  %v5751 = vlaneseq
  %v5752 = vshrl.u32 %v5751, 7
  %v5753 = vsub.s32 %v5750, %v5752
  %v5754 = vrot.slane %v5746, %v5753
  %v5756 = vunpack.c.l.s4 1966171168
  %v5757 = vunpack.c.0.s8 %v5756
  %v5758 = vlaneseq
  %v5759 = vshrl.u32 %v5758, 7
  %v5760 = vsub.s32 %v5757, %v5759
  %v5761 = vrot.slane %v5747, %v5760
  %v5763 = vunpack.c.l.s4 1966171168
  %v5764 = vunpack.c.0.s8 %v5763
  %v5765 = vlaneseq
  %v5766 = vshrl.u32 %v5765, 7
  %v5767 = vsub.s32 %v5764, %v5766
  %v5768 = vrot.slane %v4224, %v5767
  %v5769 = vcombine.low %v5754, %v5761
  %v5771 = vunpack.c.l.s4 1966171168
  %v5772 = vunpack.c.0.s8 %v5771
  %v5773 = vlaneseq
  %v5774 = vshrl.u32 %v5773, 7
  %v5775 = vsub.s32 %v5772, %v5774
  %v5776 = vrot.slane %v5769, %v5775
  %v5778 = vunpack.c.l.s4 1966171168
  %v5779 = vunpack.c.0.s8 %v5778
  %v5780 = vlaneseq
  %v5781 = vshrl.u32 %v5780, 7
  %v5782 = vsub.s32 %v5779, %v5781
  %v5783 = vrot.slane %v5768, %v5782
  %v5784 = vcombine.low %v5776, %v5783
  %vm5825 = vcmask 126976
  %v5826 = vsel %vm5825, %v4263, -inf
  %v5827 = vrot.slane %v5826, 4
  %v5828 = vmax.f32 %v5826, %v5827
  %v5829 = vrot.slane %v5828, 2
  %v5830 = vmax.f32 %v5828, %v5829
  %v5831 = vrot.slane %v5830, 1
  %v5832 = vmax.f32 %v5830, %v5831
  %v5833 = vsel %vm5825, %v4302, -inf
  %v5834 = vrot.slane %v5833, 4
  %v5835 = vmax.f32 %v5833, %v5834
  %v5836 = vrot.slane %v5835, 2
  %v5837 = vmax.f32 %v5835, %v5836
  %v5838 = vrot.slane %v5837, 1
  %v5839 = vmax.f32 %v5837, %v5838
  %v5840 = vsel %vm5825, %v4341, -inf
  %v5841 = vrot.slane %v5840, 4
  %v5842 = vmax.f32 %v5840, %v5841
  %v5843 = vrot.slane %v5842, 2
  %v5844 = vmax.f32 %v5842, %v5843
  %v5845 = vrot.slane %v5844, 1
  %v5846 = vmax.f32 %v5844, %v5845
  %v5847 = vsel %vm5825, %v4380, -inf
  %v5848 = vrot.slane %v5847, 4
  %v5849 = vmax.f32 %v5847, %v5848
  %v5850 = vrot.slane %v5849, 2
  %v5851 = vmax.f32 %v5849, %v5850
  %v5852 = vrot.slane %v5851, 1
  %v5853 = vmax.f32 %v5851, %v5852
  %v5854 = vsel %vm5825, %v4419, -inf
  %v5855 = vrot.slane %v5854, 4
  %v5856 = vmax.f32 %v5854, %v5855
  %v5857 = vrot.slane %v5856, 2
  %v5858 = vmax.f32 %v5856, %v5857
  %v5859 = vrot.slane %v5858, 1
  %v5860 = vmax.f32 %v5858, %v5859
  %v5861 = vsel %vm5825, %v4458, -inf
  %v5862 = vrot.slane %v5861, 4
  %v5863 = vmax.f32 %v5861, %v5862
  %v5864 = vrot.slane %v5863, 2
  %v5865 = vmax.f32 %v5863, %v5864
  %v5866 = vrot.slane %v5865, 1
  %v5867 = vmax.f32 %v5865, %v5866
  %v5868 = vsel %vm5825, %v4497, -inf
  %v5869 = vrot.slane %v5868, 4
  %v5870 = vmax.f32 %v5868, %v5869
  %v5871 = vrot.slane %v5870, 2
  %v5872 = vmax.f32 %v5870, %v5871
  %v5873 = vrot.slane %v5872, 1
  %v5874 = vmax.f32 %v5872, %v5873
  %v5875 = vsel %vm5825, %v4536, -inf
  %v5876 = vrot.slane %v5875, 4
  %v5877 = vmax.f32 %v5875, %v5876
  %v5878 = vrot.slane %v5877, 2
  %v5879 = vmax.f32 %v5877, %v5878
  %v5880 = vrot.slane %v5879, 1
  %v5881 = vmax.f32 %v5879, %v5880
  %v5882 = vsel %vm5825, %v4575, -inf
  %v5883 = vrot.slane %v5882, 4
  %v5884 = vmax.f32 %v5882, %v5883
  %v5885 = vrot.slane %v5884, 2
  %v5886 = vmax.f32 %v5884, %v5885
  %v5887 = vrot.slane %v5886, 1
  %v5888 = vmax.f32 %v5886, %v5887
  %v5889 = vsel %vm5825, %v4614, -inf
  %v5890 = vrot.slane %v5889, 4
  %v5891 = vmax.f32 %v5889, %v5890
  %v5892 = vrot.slane %v5891, 2
  %v5893 = vmax.f32 %v5891, %v5892
  %v5894 = vrot.slane %v5893, 1
  %v5895 = vmax.f32 %v5893, %v5894
  %v5896 = vsel %vm5825, %v4653, -inf
  %v5897 = vrot.slane %v5896, 4
  %v5898 = vmax.f32 %v5896, %v5897
  %v5899 = vrot.slane %v5898, 2
  %v5900 = vmax.f32 %v5898, %v5899
  %v5901 = vrot.slane %v5900, 1
  %v5902 = vmax.f32 %v5900, %v5901
  %v5903 = vsel %vm5825, %v4692, -inf
  %v5904 = vrot.slane %v5903, 4
  %v5905 = vmax.f32 %v5903, %v5904
  %v5906 = vrot.slane %v5905, 2
  %v5907 = vmax.f32 %v5905, %v5906
  %v5908 = vrot.slane %v5907, 1
  %v5909 = vmax.f32 %v5907, %v5908
  %v5910 = vsel %vm5825, %v4731, -inf
  %v5911 = vrot.slane %v5910, 4
  %v5912 = vmax.f32 %v5910, %v5911
  %v5913 = vrot.slane %v5912, 2
  %v5914 = vmax.f32 %v5912, %v5913
  %v5915 = vrot.slane %v5914, 1
  %v5916 = vmax.f32 %v5914, %v5915
  %v5917 = vsel %vm5825, %v4770, -inf
  %v5918 = vrot.slane %v5917, 4
  %v5919 = vmax.f32 %v5917, %v5918
  %v5920 = vrot.slane %v5919, 2
  %v5921 = vmax.f32 %v5919, %v5920
  %v5922 = vrot.slane %v5921, 1
  %v5923 = vmax.f32 %v5921, %v5922
  %v5924 = vsel %vm5825, %v4809, -inf
  %v5925 = vrot.slane %v5924, 4
  %v5926 = vmax.f32 %v5924, %v5925
  %v5927 = vrot.slane %v5926, 2
  %v5928 = vmax.f32 %v5926, %v5927
  %v5929 = vrot.slane %v5928, 1
  %v5930 = vmax.f32 %v5928, %v5929
  %v5931 = vsel %vm5825, %v4848, -inf
  %v5932 = vrot.slane %v5931, 4
  %v5933 = vmax.f32 %v5931, %v5932
  %v5934 = vrot.slane %v5933, 2
  %v5935 = vmax.f32 %v5933, %v5934
  %v5936 = vrot.slane %v5935, 1
  %v5937 = vmax.f32 %v5935, %v5936
  %v5938 = vsel %vm5825, %v4887, -inf
  %v5939 = vrot.slane %v5938, 4
  %v5940 = vmax.f32 %v5938, %v5939
  %v5941 = vrot.slane %v5940, 2
  %v5942 = vmax.f32 %v5940, %v5941
  %v5943 = vrot.slane %v5942, 1
  %v5944 = vmax.f32 %v5942, %v5943
  %v5945 = vsel %vm5825, %v4926, -inf
  %v5946 = vrot.slane %v5945, 4
  %v5947 = vmax.f32 %v5945, %v5946
  %v5948 = vrot.slane %v5947, 2
  %v5949 = vmax.f32 %v5947, %v5948
  %v5950 = vrot.slane %v5949, 1
  %v5951 = vmax.f32 %v5949, %v5950
  %v5952 = vsel %vm5825, %v4965, -inf
  %v5953 = vrot.slane %v5952, 4
  %v5954 = vmax.f32 %v5952, %v5953
  %v5955 = vrot.slane %v5954, 2
  %v5956 = vmax.f32 %v5954, %v5955
  %v5957 = vrot.slane %v5956, 1
  %v5958 = vmax.f32 %v5956, %v5957
  %v5959 = vsel %vm5825, %v5004, -inf
  %v5960 = vrot.slane %v5959, 4
  %v5961 = vmax.f32 %v5959, %v5960
  %v5962 = vrot.slane %v5961, 2
  %v5963 = vmax.f32 %v5961, %v5962
  %v5964 = vrot.slane %v5963, 1
  %v5965 = vmax.f32 %v5963, %v5964
  %v5966 = vsel %vm5825, %v5043, -inf
  %v5967 = vrot.slane %v5966, 4
  %v5968 = vmax.f32 %v5966, %v5967
  %v5969 = vrot.slane %v5968, 2
  %v5970 = vmax.f32 %v5968, %v5969
  %v5971 = vrot.slane %v5970, 1
  %v5972 = vmax.f32 %v5970, %v5971
  %v5973 = vsel %vm5825, %v5082, -inf
  %v5974 = vrot.slane %v5973, 4
  %v5975 = vmax.f32 %v5973, %v5974
  %v5976 = vrot.slane %v5975, 2
  %v5977 = vmax.f32 %v5975, %v5976
  %v5978 = vrot.slane %v5977, 1
  %v5979 = vmax.f32 %v5977, %v5978
  %v5980 = vsel %vm5825, %v5121, -inf
  %v5981 = vrot.slane %v5980, 4
  %v5982 = vmax.f32 %v5980, %v5981
  %v5983 = vrot.slane %v5982, 2
  %v5984 = vmax.f32 %v5982, %v5983
  %v5985 = vrot.slane %v5984, 1
  %v5986 = vmax.f32 %v5984, %v5985
  %v5987 = vsel %vm5825, %v5160, -inf
  %v5988 = vrot.slane %v5987, 4
  %v5989 = vmax.f32 %v5987, %v5988
  %v5990 = vrot.slane %v5989, 2
  %v5991 = vmax.f32 %v5989, %v5990
  %v5992 = vrot.slane %v5991, 1
  %v5993 = vmax.f32 %v5991, %v5992
  %v5994 = vsel %vm5825, %v5199, -inf
  %v5995 = vrot.slane %v5994, 4
  %v5996 = vmax.f32 %v5994, %v5995
  %v5997 = vrot.slane %v5996, 2
  %v5998 = vmax.f32 %v5996, %v5997
  %v5999 = vrot.slane %v5998, 1
  %v6000 = vmax.f32 %v5998, %v5999
  %v6001 = vsel %vm5825, %v5238, -inf
  %v6002 = vrot.slane %v6001, 4
  %v6003 = vmax.f32 %v6001, %v6002
  %v6004 = vrot.slane %v6003, 2
  %v6005 = vmax.f32 %v6003, %v6004
  %v6006 = vrot.slane %v6005, 1
  %v6007 = vmax.f32 %v6005, %v6006
  %v6008 = vsel %vm5825, %v5277, -inf
  %v6009 = vrot.slane %v6008, 4
  %v6010 = vmax.f32 %v6008, %v6009
  %v6011 = vrot.slane %v6010, 2
  %v6012 = vmax.f32 %v6010, %v6011
  %v6013 = vrot.slane %v6012, 1
  %v6014 = vmax.f32 %v6012, %v6013
  %v6015 = vsel %vm5825, %v5316, -inf
  %v6016 = vrot.slane %v6015, 4
  %v6017 = vmax.f32 %v6015, %v6016
  %v6018 = vrot.slane %v6017, 2
  %v6019 = vmax.f32 %v6017, %v6018
  %v6020 = vrot.slane %v6019, 1
  %v6021 = vmax.f32 %v6019, %v6020
  %v6022 = vsel %vm5825, %v5355, -inf
  %v6023 = vrot.slane %v6022, 4
  %v6024 = vmax.f32 %v6022, %v6023
  %v6025 = vrot.slane %v6024, 2
  %v6026 = vmax.f32 %v6024, %v6025
  %v6027 = vrot.slane %v6026, 1
  %v6028 = vmax.f32 %v6026, %v6027
  %v6029 = vsel %vm5825, %v5394, -inf
  %v6030 = vrot.slane %v6029, 4
  %v6031 = vmax.f32 %v6029, %v6030
  %v6032 = vrot.slane %v6031, 2
  %v6033 = vmax.f32 %v6031, %v6032
  %v6034 = vrot.slane %v6033, 1
  %v6035 = vmax.f32 %v6033, %v6034
  %v6036 = vsel %vm5825, %v5433, -inf
  %v6037 = vrot.slane %v6036, 4
  %v6038 = vmax.f32 %v6036, %v6037
  %v6039 = vrot.slane %v6038, 2
  %v6040 = vmax.f32 %v6038, %v6039
  %v6041 = vrot.slane %v6040, 1
  %v6042 = vmax.f32 %v6040, %v6041
  %v6043 = vsel %vm5825, %v5472, -inf
  %v6044 = vrot.slane %v6043, 4
  %v6045 = vmax.f32 %v6043, %v6044
  %v6046 = vrot.slane %v6045, 2
  %v6047 = vmax.f32 %v6045, %v6046
  %v6048 = vrot.slane %v6047, 1
  %v6049 = vmax.f32 %v6047, %v6048
  %v6050 = vsel %vm5825, %v5511, -inf
  %v6051 = vrot.slane %v6050, 4
  %v6052 = vmax.f32 %v6050, %v6051
  %v6053 = vrot.slane %v6052, 2
  %v6054 = vmax.f32 %v6052, %v6053
  %v6055 = vrot.slane %v6054, 1
  %v6056 = vmax.f32 %v6054, %v6055
  %v6057 = vsel %vm5825, %v5550, -inf
  %v6058 = vrot.slane %v6057, 4
  %v6059 = vmax.f32 %v6057, %v6058
  %v6060 = vrot.slane %v6059, 2
  %v6061 = vmax.f32 %v6059, %v6060
  %v6062 = vrot.slane %v6061, 1
  %v6063 = vmax.f32 %v6061, %v6062
  %v6064 = vsel %vm5825, %v5589, -inf
  %v6065 = vrot.slane %v6064, 4
  %v6066 = vmax.f32 %v6064, %v6065
  %v6067 = vrot.slane %v6066, 2
  %v6068 = vmax.f32 %v6066, %v6067
  %v6069 = vrot.slane %v6068, 1
  %v6070 = vmax.f32 %v6068, %v6069
  %v6071 = vsel %vm5825, %v5628, -inf
  %v6072 = vrot.slane %v6071, 4
  %v6073 = vmax.f32 %v6071, %v6072
  %v6074 = vrot.slane %v6073, 2
  %v6075 = vmax.f32 %v6073, %v6074
  %v6076 = vrot.slane %v6075, 1
  %v6077 = vmax.f32 %v6075, %v6076
  %v6078 = vsel %vm5825, %v5667, -inf
  %v6079 = vrot.slane %v6078, 4
  %v6080 = vmax.f32 %v6078, %v6079
  %v6081 = vrot.slane %v6080, 2
  %v6082 = vmax.f32 %v6080, %v6081
  %v6083 = vrot.slane %v6082, 1
  %v6084 = vmax.f32 %v6082, %v6083
  %v6085 = vsel %vm5825, %v5706, -inf
  %v6086 = vrot.slane %v6085, 4
  %v6087 = vmax.f32 %v6085, %v6086
  %v6088 = vrot.slane %v6087, 2
  %v6089 = vmax.f32 %v6087, %v6088
  %v6090 = vrot.slane %v6089, 1
  %v6091 = vmax.f32 %v6089, %v6090
  %v6092 = vsel %vm5825, %v5745, -inf
  %v6093 = vrot.slane %v6092, 4
  %v6094 = vmax.f32 %v6092, %v6093
  %v6095 = vrot.slane %v6094, 2
  %v6096 = vmax.f32 %v6094, %v6095
  %v6097 = vrot.slane %v6096, 1
  %v6098 = vmax.f32 %v6096, %v6097
  %v6099 = vsel %vm5825, %v5784, -inf
  %v6100 = vrot.slane %v6099, 4
  %v6101 = vmax.f32 %v6099, %v6100
  %v6102 = vrot.slane %v6101, 2
  %v6103 = vmax.f32 %v6101, %v6102
  %v6104 = vrot.slane %v6103, 1
  %v6105 = vmax.f32 %v6103, %v6104
  %vm6106 = vcmp.lt.s32.totalorder %v78, 0
  %v6107 = vsub.s32 0, %v78
  %v6108 = vsel %vm6106, %v6107, %v78
  %v6109 = vmul.u32.u64.compose %v6108, 3435973837
  %v6110 = vextract.low.u32 %v6109
  %v6111 = vextract.high.u32 %v6109
  %v6112 = vshrl.u32 %v6111, 4
  %v6113 = vmul.u32 %v6112, 20
  %v6114 = vsub.s32 %v6108, %v6113
  %v6115 = vsub.s32 0, %v6114
  %v6116 = vsel %vm6106, %v6115, %v6114
  %vm6117 = vcmp.lt.s32.totalorder %v79, 0
  %v6118 = vsub.s32 0, %v79
  %v6119 = vsel %vm6117, %v6118, %v79
  %v6120 = vmul.u32.u64.compose %v6119, 3435973837
  %v6121 = vextract.low.u32 %v6120
  %v6122 = vextract.high.u32 %v6120
  %v6123 = vshrl.u32 %v6122, 4
  %v6124 = vmul.u32 %v6123, 20
  %v6125 = vsub.s32 %v6119, %v6124
  %v6126 = vsub.s32 0, %v6125
  %v6127 = vsel %vm6117, %v6126, %v6125
  %vm6128 = vcmp.lt.s32.totalorder %v80, 0
  %v6129 = vsub.s32 0, %v80
  %v6130 = vsel %vm6128, %v6129, %v80
  %v6131 = vmul.u32.u64.compose %v6130, 3435973837
  %v6132 = vextract.low.u32 %v6131
  %v6133 = vextract.high.u32 %v6131
  %v6134 = vshrl.u32 %v6133, 4
  %v6135 = vmul.u32 %v6134, 20
  %v6136 = vsub.s32 %v6130, %v6135
  %v6137 = vsub.s32 0, %v6136
  %v6138 = vsel %vm6128, %v6137, %v6136
  %vm6139 = vcmp.lt.s32.totalorder %v81, 0
  %v6140 = vsub.s32 0, %v81
  %v6141 = vsel %vm6139, %v6140, %v81
  %v6142 = vmul.u32.u64.compose %v6141, 3435973837
  %v6143 = vextract.low.u32 %v6142
  %v6144 = vextract.high.u32 %v6142
  %v6145 = vshrl.u32 %v6144, 4
  %v6146 = vmul.u32 %v6145, 20
  %v6147 = vsub.s32 %v6141, %v6146
  %v6148 = vsub.s32 0, %v6147
  %v6149 = vsel %vm6139, %v6148, %v6147
  %vm6150 = vcmp.lt.s32.totalorder %v82, 0
  %v6151 = vsub.s32 0, %v82
  %v6152 = vsel %vm6150, %v6151, %v82
  %v6153 = vmul.u32.u64.compose %v6152, 3435973837
  %v6154 = vextract.low.u32 %v6153
  %v6155 = vextract.high.u32 %v6153
  %v6156 = vshrl.u32 %v6155, 4
  %v6157 = vmul.u32 %v6156, 20
  %v6158 = vsub.s32 %v6152, %v6157
  %v6159 = vsub.s32 0, %v6158
  %v6160 = vsel %vm6150, %v6159, %v6158
  %vm6161 = vcmp.ne.s32.totalorder %v6116, 0
  %vm6162 = vcmp.ne.s32.totalorder %v6127, 0
  %vm6163 = vcmp.ne.s32.totalorder %v6138, 0
  %vm6164 = vcmp.ne.s32.totalorder %v6149, 0
  %vm6165 = vcmp.ne.s32.totalorder %v6160, 0
  %vm6166 = vcmp.lt.s32.totalorder %v6116, 0
  %vm6167 = vcmp.lt.s32.totalorder %v6127, 0
  %vm6168 = vcmp.lt.s32.totalorder %v6138, 0
  %vm6169 = vcmp.lt.s32.totalorder %v6149, 0
  %vm6170 = vcmp.lt.s32.totalorder %v6160, 0
  %vm6171 = vmand %vm6166, %vm6161
  %vm6172 = vmand %vm6167, %vm6162
  %vm6173 = vmand %vm6168, %vm6163
  %vm6174 = vmand %vm6169, %vm6164
  %vm6175 = vmand %vm6170, %vm6165
  %v6176 = vadd.s32 %v6116, 20
  %v6177 = vadd.s32 %v6127, 20
  %v6178 = vadd.s32 %v6138, 20
  %v6179 = vadd.s32 %v6149, 20
  %v6180 = vadd.s32 %v6160, 20
  %v6181 = vsel %vm6171, %v6176, %v6116
  %v6182 = vsel %vm6172, %v6177, %v6127
  %v6183 = vsel %vm6173, %v6178, %v6138
  %v6184 = vsel %vm6174, %v6179, %v6149
  %v6185 = vsel %vm6175, %v6180, %v6160
  %vm6186 = vcmp.eq.s32.totalorder %v6181, 0
  %vm6187 = vcmp.eq.s32.totalorder %v6182, 0
  %vm6188 = vcmp.eq.s32.totalorder %v6183, 0
  %vm6189 = vcmp.eq.s32.totalorder %v6184, 0
  %vm6190 = vcmp.eq.s32.totalorder %v6185, 0
  %vm6231 = vcmask 1041409
  %v6232 = vsel %vm6231, %v5839, %v5832
  %vm6233 = vcmask 1042434
  %v6234 = vsel %vm6233, %v5846, %v6232
  %vm6235 = vcmask 1043459
  %v6236 = vsel %vm6235, %v5853, %v6234
  %vm6237 = vcmask 1044484
  %v6238 = vsel %vm6237, %v5860, %v6236
  %vm6239 = vcmask 1045509
  %v6240 = vsel %vm6239, %v5867, %v6238
  %vm6241 = vcmask 1046534
  %v6242 = vsel %vm6241, %v5874, %v6240
  %vm6243 = vcmask 1047559
  %v6244 = vsel %vm6243, %v5881, %v6242
  %v6245 = vsel %vm6231, %v5895, %v5888
  %v6246 = vsel %vm6233, %v5902, %v6245
  %v6247 = vsel %vm6235, %v5909, %v6246
  %v6248 = vsel %vm6237, %v5916, %v6247
  %v6249 = vsel %vm6239, %v5923, %v6248
  %v6250 = vsel %vm6241, %v5930, %v6249
  %v6251 = vsel %vm6243, %v5937, %v6250
  %v6252 = vsel %vm6231, %v5951, %v5944
  %v6253 = vsel %vm6233, %v5958, %v6252
  %v6254 = vsel %vm6235, %v5965, %v6253
  %v6255 = vsel %vm6237, %v5972, %v6254
  %v6256 = vsel %vm6239, %v5979, %v6255
  %v6257 = vsel %vm6241, %v5986, %v6256
  %v6258 = vsel %vm6243, %v5993, %v6257
  %v6259 = vsel %vm6231, %v6007, %v6000
  %v6260 = vsel %vm6233, %v6014, %v6259
  %v6261 = vsel %vm6235, %v6021, %v6260
  %v6262 = vsel %vm6237, %v6028, %v6261
  %v6263 = vsel %vm6239, %v6035, %v6262
  %v6264 = vsel %vm6241, %v6042, %v6263
  %v6265 = vsel %vm6243, %v6049, %v6264
  %v6266 = vsel %vm6231, %v6063, %v6056
  %v6267 = vsel %vm6233, %v6070, %v6266
  %v6268 = vsel %vm6235, %v6077, %v6267
  %v6269 = vsel %vm6237, %v6084, %v6268
  %v6270 = vsel %vm6239, %v6091, %v6269
  %v6271 = vsel %vm6241, %v6098, %v6270
  %v6272 = vsel %vm6243, %v6105, %v6271
  %v6278 = vrot.slane %v6244, 7
  %v6279 = vrot.slane %v6251, 7
  %v6280 = vrot.slane %v6258, 7
  %v6281 = vrot.slane %v6265, 7
  %v6282 = vrot.slane %v6272, 7
  %v6283 = vsel %vm981, %v6281, %v6282
  %v6284 = vsel %vm981, %v6280, %v6281
  %v6285 = vsel %vm981, %v6279, %v6280
  %v6286 = vsel %vm981, %v6278, %v6279
  %v6287 = vsel %vm981, %v6282, %v6278
  %v6288 = vsel %vm6186, 1, 0
  %v6289 = vsel %vm6187, 1, 0
  %v6290 = vsel %vm6188, 1, 0
  %v6291 = vsel %vm6189, 1, 0
  %v6292 = vsel %vm6190, 1, 0
  %vm6293 = vcmp.eq.s32.totalorder %v6288, 1
  %vm6294 = vcmp.eq.s32.totalorder %v6289, 1
  %vm6295 = vcmp.eq.s32.totalorder %v6290, 1
  %vm6296 = vcmp.eq.s32.totalorder %v6291, 1
  %vm6297 = vcmp.eq.s32.totalorder %v6292, 1
  %v6298 = vsel %vm6293, 0.0, %v6287
  %v6299 = vsel %vm6294, 0.0, %v6286
  %v6300 = vsel %vm6295, 0.0, %v6285
  %v6301 = vsel %vm6296, 0.0, %v6284
  %v6302 = vsel %vm6297, 0.0, %v6283
  %vm6303 = vcmp.eq.s32.totalorder %v6181, 19
  %vm6304 = vcmp.eq.s32.totalorder %v6182, 19
  %vm6305 = vcmp.eq.s32.totalorder %v6183, 19
  %vm6306 = vcmp.eq.s32.totalorder %v6184, 19
  %vm6307 = vcmp.eq.s32.totalorder %v6185, 19
  %v6308 = vrot.slane %v6244, 1
  %v6309 = vrot.slane %v6251, 1
  %v6310 = vrot.slane %v6258, 1
  %v6311 = vrot.slane %v6265, 1
  %v6312 = vrot.slane %v6272, 1
  %v6313 = vsel %vm1132, %v6311, %v6312
  %v6314 = vsel %vm1132, %v6310, %v6311
  %v6315 = vsel %vm1132, %v6309, %v6310
  %v6316 = vsel %vm1132, %v6308, %v6309
  %v6317 = vsel %vm1132, %v6312, %v6308
  %v6318 = vsel %vm6303, 1, 0
  %v6319 = vsel %vm6304, 1, 0
  %v6320 = vsel %vm6305, 1, 0
  %v6321 = vsel %vm6306, 1, 0
  %v6322 = vsel %vm6307, 1, 0
  %vm6323 = vcmp.eq.s32.totalorder %v6318, 1
  %vm6324 = vcmp.eq.s32.totalorder %v6319, 1
  %vm6325 = vcmp.eq.s32.totalorder %v6320, 1
  %vm6326 = vcmp.eq.s32.totalorder %v6321, 1
  %vm6327 = vcmp.eq.s32.totalorder %v6322, 1
  %v6328 = vsel %vm6323, 0.0, %v6316
  %v6329 = vsel %vm6324, 0.0, %v6315
  %v6330 = vsel %vm6325, 0.0, %v6314
  %v6331 = vsel %vm6326, 0.0, %v6313
  %v6332 = vsel %vm6327, 0.0, %v6317
  %6333 = vrot.lane.b32.xlu0 %v6244, 16
  %v6334 = vpop.permute.xlu0 %6333
  %6335 = vrot.lane.b32.xlu0 %v6251, 16
  %v6336 = vpop.permute.xlu0 %6335
  %6337 = vrot.lane.b32.xlu0 %v6258, 16
  %v6338 = vpop.permute.xlu0 %6337
  %6339 = vrot.lane.b32.xlu0 %v6265, 16
  %v6340 = vpop.permute.xlu0 %6339
  %6341 = vrot.lane.b32.xlu0 %v6272, 16
  %v6342 = vpop.permute.xlu0 %6341
  %6353 = vrot.lane.b32.xlu0 %v6328, 32
  %v6354 = vpop.permute.xlu0 %6353
  %6355 = vrot.lane.b32.xlu0 %v6329, 32
  %v6356 = vpop.permute.xlu0 %6355
  %6357 = vrot.lane.b32.xlu0 %v6330, 32
  %v6358 = vpop.permute.xlu0 %6357
  %6359 = vrot.lane.b32.xlu0 %v6331, 32
  %v6360 = vpop.permute.xlu0 %6359
  %6361 = vrot.lane.b32.xlu0 %v6332, 32
  %v6362 = vpop.permute.xlu0 %6361
  %v6368 = vsel %vm2538, %v6298, %v6334
  %v6369 = vsel %vm2538, %v6299, %v6336
  %v6370 = vsel %vm2538, %v6300, %v6338
  %v6371 = vsel %vm2538, %v6301, %v6340
  %v6372 = vsel %vm2538, %v6302, %v6342
  %v6373 = vsel %vm2642, %v6368, %v6354
  %v6374 = vsel %vm2642, %v6369, %v6356
  %v6375 = vsel %vm2642, %v6370, %v6358
  %v6376 = vsel %vm2642, %v6371, %v6360
  %v6377 = vsel %vm2642, %v6372, %v6362
  %v6378 = vld [vmem:[%s4] sm:$0xff]
  %v6379 = vld [vmem:[%s4 + $0x8] sm:$0xff]
  %v6380 = vld [vmem:[%s4 + $0x10] sm:$0xff]
  %v6381 = vld [vmem:[%s4 + $0x18] sm:$0xff]
  %v6382 = vld [vmem:[%s4 + $0x20] sm:$0xff]
  %v6383 = vld [vmem:[%s4 + $0x28] sm:$0xff]
  %v6384 = vld [vmem:[%s5] sm:$0x1]
  %v6386 = vlaneseq
  %v6387 = vshrl.u32 %v6386, 7
  %v6388 = vsub.s32 0, %v6387
  %v6389 = vrot.slane %v6384, %v6388
  %vm6391 = vcmask 392192
  %v6393 = vsel %vm6391, %v6373, 0
  %v6396 = vsel %vm6391, %v6374, 0
  %v6399 = vsel %vm6391, %v6375, 0
  %v6402 = vsel %vm6391, %v6376, 0
  %v6405 = vsel %vm6391, %v6377, 0
  %6407 = vmatprep.subr.mxu0 0.0
  %6408 = vmatpush1.msra.mxu0 %v6378
  %6409 = vmatprep.subr.mxu0 0.0
  %6410 = vmatpush1.msra.mxu0 %v6379
  %6411 = vmatprep.subr.mxu0 0.0
  %6412 = vmatpush1.msra.mxu0 %v6380
  %6413 = vmatprep.subr.mxu0 0.0
  %6414 = vmatpush1.msra.mxu0 %v6381
  %6415 = vmatprep.subr.mxu0 0.0
  %6416 = vmatpush1.msra.mxu0 %v6382
  %6417 = vmatprep.subr.mxu0 0.0
  %6418 = vmatpush1.msra.mxu0 %v6383
  %6419 = vmatprep.subr.mxu0 0.0
  %6420 = vmatpush1.msra.mxu0 0.0
  %6421 = vmatprep.subr.mxu0 0.0
  %6422 = vmatpush1.msra.mxu0 0.0
  %6423 = vmatprep.subr.mxu0 0.0
  %6424 = vmatpush1.msra.mxu0 0.0
  %6425 = vmatprep.subr.mxu0 0.0
  %6426 = vmatpush1.msra.mxu0 0.0
  %6427 = vmatprep.subr.mxu0 0.0
  %6428 = vmatpush1.msra.mxu0 0.0
  %6429 = vmatprep.subr.mxu0 0.0
  %6430 = vmatpush1.msra.mxu0 0.0
  %6431 = vmatprep.subr.mxu0 0.0
  %6432 = vmatpush1.msra.mxu0 0.0
  %6433 = vmatprep.subr.mxu0 0.0
  %6434 = vmatpush1.msra.mxu0 0.0
  %6435 = vmatprep.subr.mxu0 0.0
  %6436 = vmatpush1.msra.mxu0 0.0
  %6437 = vmatprep.subr.mxu0 0.0
  %6438 = vmatpush1.msra.mxu0 0.0
  %6439 = vmatprep.subr.mxu0 0.0
  %6440 = vmatpush1.msra.mxu0 0.0
  %6441 = vmatprep.subr.mxu0 0.0
  %6442 = vmatpush1.msra.mxu0 0.0
  %6443 = vmatprep.subr.mxu0 0.0
  %6444 = vmatpush1.msra.mxu0 0.0
  %6445 = vmatprep.subr.mxu0 0.0
  %6446 = vmatpush1.msra.mxu0 0.0
  %6447 = vmatprep.subr.mxu0 0.0
  %6448 = vmatpush1.msra.mxu0 0.0
  %6449 = vmatprep.subr.mxu0 0.0
  %6450 = vmatpush1.msra.mxu0 0.0
  %6451 = vmatprep.subr.mxu0 0.0
  %6452 = vmatpush1.msra.mxu0 0.0
  %6453 = vmatprep.subr.mxu0 0.0
  %6454 = vmatpush1.msra.mxu0 0.0
  %6455 = vmatprep.subr.mxu0 0.0
  %6456 = vmatpush1.msra.mxu0 0.0
  %6457 = vmatprep.subr.mxu0 0.0
  %6458 = vmatpush1.msra.mxu0 0.0
  %6459 = vmatprep.subr.mxu0 0.0
  %6460 = vmatpush1.msra.mxu0 0.0
  %6461 = vmatprep.subr.mxu0 0.0
  %6462 = vmatpush1.msra.mxu0 0.0
  %6463 = vmatprep.subr.mxu0 0.0
  %6464 = vmatpush1.msra.mxu0 0.0
  %6465 = vmatprep.subr.mxu0 0.0
  %6466 = vmatpush1.msra.mxu0 0.0
  %6467 = vmatprep.subr.mxu0 0.0
  %6468 = vmatpush1.msra.mxu0 0.0
  %6469 = vmatprep.subr.mxu0 0.0
  %6470 = vmatpush1.msra.mxu0 0.0
  %6471 = vmatprep.mubr.f32.mxu0 0.0
  %6472 = vmatmul.mubr.f32.gmra.mrb[0].mxu0 %v6393
  %v6473 = vpop.f32.mrb[0].mxu0
  %v6474 = vadd.f32 %v6389, %v6473
  %v6475 = vpop.f32.mrb[0].mxu0
  %6476 = vmatprep.mubr.f32.mxu0 0.0
  %6477 = vmatmul.mubr.f32.gmra.mrb[0].mxu0 %v6396
  %v6478 = vpop.f32.mrb[0].mxu0
  %v6479 = vadd.f32 %v6389, %v6478
  %v6480 = vpop.f32.mrb[0].mxu0
  %6481 = vmatprep.mubr.f32.mxu0 0.0
  %6482 = vmatmul.mubr.f32.gmra.mrb[0].mxu0 %v6399
  %v6483 = vpop.f32.mrb[0].mxu0
  %v6484 = vadd.f32 %v6389, %v6483
  %v6485 = vpop.f32.mrb[0].mxu0
  %6486 = vmatprep.mubr.f32.mxu0 0.0
  %6487 = vmatmul.mubr.f32.gmra.mrb[0].mxu0 %v6402
  %v6488 = vpop.f32.mrb[0].mxu0
  %v6489 = vadd.f32 %v6389, %v6488
  %v6490 = vpop.f32.mrb[0].mxu0
  %6491 = vmatprep.mubr.f32.mxu0 0.0
  %6492 = vmatmul.mubr.f32.gmra.mrb[0].mxu0 %v6405
  %v6493 = vpop.f32.mrb[0].mxu0
  %v6494 = vadd.f32 %v6389, %v6493
  %v6495 = vpop.f32.mrb[0].mxu0
  %6496 = vdwg.mxu0
  %v6497 = vmax.f32 %v6474, 0.0
  %v6498 = vmax.f32 %v6479, 0.0
  %v6499 = vmax.f32 %v6484, 0.0
  %v6500 = vmax.f32 %v6489, 0.0
  %v6501 = vmax.f32 %v6494, 0.0
  %v6507 = vcombine.high %v6497, %v6497
  %v6509 = vunpack.c.l.s4 1983009808
  %v6510 = vunpack.c.0.s8 %v6509
  %v6511 = vlaneseq
  %v6512 = vshrl.u32 %v6511, 7
  %v6513 = vsub.s32 %v6510, %v6512
  %v6514 = vrot.slane %v6497, %v6513
  %v6516 = vunpack.c.l.s4 1983009808
  %v6517 = vunpack.c.0.s8 %v6516
  %v6518 = vlaneseq
  %v6519 = vshrl.u32 %v6518, 7
  %v6520 = vsub.s32 %v6517, %v6519
  %v6521 = vrot.slane %v6507, %v6520
  %v6522 = vcombine.high %v6514, %v6514
  %v6523 = vcombine.high %v6521, %v6521
  %v6524 = vcombine.high %v6498, %v6498
  %v6526 = vunpack.c.l.s4 1983009808
  %v6527 = vunpack.c.0.s8 %v6526
  %v6528 = vlaneseq
  %v6529 = vshrl.u32 %v6528, 7
  %v6530 = vsub.s32 %v6527, %v6529
  %v6531 = vrot.slane %v6498, %v6530
  %v6533 = vunpack.c.l.s4 1983009808
  %v6534 = vunpack.c.0.s8 %v6533
  %v6535 = vlaneseq
  %v6536 = vshrl.u32 %v6535, 7
  %v6537 = vsub.s32 %v6534, %v6536
  %v6538 = vrot.slane %v6524, %v6537
  %v6539 = vcombine.high %v6531, %v6531
  %v6540 = vcombine.high %v6538, %v6538
  %v6541 = vcombine.high %v6499, %v6499
  %v6543 = vunpack.c.l.s4 1983009808
  %v6544 = vunpack.c.0.s8 %v6543
  %v6545 = vlaneseq
  %v6546 = vshrl.u32 %v6545, 7
  %v6547 = vsub.s32 %v6544, %v6546
  %v6548 = vrot.slane %v6499, %v6547
  %v6550 = vunpack.c.l.s4 1983009808
  %v6551 = vunpack.c.0.s8 %v6550
  %v6552 = vlaneseq
  %v6553 = vshrl.u32 %v6552, 7
  %v6554 = vsub.s32 %v6551, %v6553
  %v6555 = vrot.slane %v6541, %v6554
  %v6556 = vcombine.high %v6548, %v6548
  %v6557 = vcombine.high %v6555, %v6555
  %v6558 = vcombine.high %v6500, %v6500
  %v6560 = vunpack.c.l.s4 1983009808
  %v6561 = vunpack.c.0.s8 %v6560
  %v6562 = vlaneseq
  %v6563 = vshrl.u32 %v6562, 7
  %v6564 = vsub.s32 %v6561, %v6563
  %v6565 = vrot.slane %v6500, %v6564
  %v6567 = vunpack.c.l.s4 1983009808
  %v6568 = vunpack.c.0.s8 %v6567
  %v6569 = vlaneseq
  %v6570 = vshrl.u32 %v6569, 7
  %v6571 = vsub.s32 %v6568, %v6570
  %v6572 = vrot.slane %v6558, %v6571
  %v6573 = vcombine.high %v6565, %v6565
  %v6574 = vcombine.high %v6572, %v6572
  %v6575 = vcombine.high %v6501, %v6501
  %v6577 = vunpack.c.l.s4 1983009808
  %v6578 = vunpack.c.0.s8 %v6577
  %v6579 = vlaneseq
  %v6580 = vshrl.u32 %v6579, 7
  %v6581 = vsub.s32 %v6578, %v6580
  %v6582 = vrot.slane %v6501, %v6581
  %v6584 = vunpack.c.l.s4 1983009808
  %v6585 = vunpack.c.0.s8 %v6584
  %v6586 = vlaneseq
  %v6587 = vshrl.u32 %v6586, 7
  %v6588 = vsub.s32 %v6585, %v6587
  %v6589 = vrot.slane %v6575, %v6588
  %v6590 = vcombine.high %v6582, %v6582
  %v6591 = vcombine.high %v6589, %v6589
  %vm6612 = vcmask 254976
  %v6613 = vsel %vm6612, %v6514, -inf
  %v6614 = vrot.slane %v6613, 4
  %v6615 = vmax.f32 %v6613, %v6614
  %v6616 = vrot.slane %v6615, 2
  %v6617 = vmax.f32 %v6615, %v6616
  %v6618 = vrot.slane %v6617, 1
  %v6619 = vmax.f32 %v6617, %v6618
  %v6620 = vsel %vm6612, %v6522, -inf
  %v6621 = vrot.slane %v6620, 4
  %v6622 = vmax.f32 %v6620, %v6621
  %v6623 = vrot.slane %v6622, 2
  %v6624 = vmax.f32 %v6622, %v6623
  %v6625 = vrot.slane %v6624, 1
  %v6626 = vmax.f32 %v6624, %v6625
  %v6627 = vsel %vm6612, %v6521, -inf
  %v6628 = vrot.slane %v6627, 4
  %v6629 = vmax.f32 %v6627, %v6628
  %v6630 = vrot.slane %v6629, 2
  %v6631 = vmax.f32 %v6629, %v6630
  %v6632 = vrot.slane %v6631, 1
  %v6633 = vmax.f32 %v6631, %v6632
  %v6634 = vsel %vm6612, %v6523, -inf
  %v6635 = vrot.slane %v6634, 4
  %v6636 = vmax.f32 %v6634, %v6635
  %v6637 = vrot.slane %v6636, 2
  %v6638 = vmax.f32 %v6636, %v6637
  %v6639 = vrot.slane %v6638, 1
  %v6640 = vmax.f32 %v6638, %v6639
  %v6641 = vsel %vm6612, %v6531, -inf
  %v6642 = vrot.slane %v6641, 4
  %v6643 = vmax.f32 %v6641, %v6642
  %v6644 = vrot.slane %v6643, 2
  %v6645 = vmax.f32 %v6643, %v6644
  %v6646 = vrot.slane %v6645, 1
  %v6647 = vmax.f32 %v6645, %v6646
  %v6648 = vsel %vm6612, %v6539, -inf
  %v6649 = vrot.slane %v6648, 4
  %v6650 = vmax.f32 %v6648, %v6649
  %v6651 = vrot.slane %v6650, 2
  %v6652 = vmax.f32 %v6650, %v6651
  %v6653 = vrot.slane %v6652, 1
  %v6654 = vmax.f32 %v6652, %v6653
  %v6655 = vsel %vm6612, %v6538, -inf
  %v6656 = vrot.slane %v6655, 4
  %v6657 = vmax.f32 %v6655, %v6656
  %v6658 = vrot.slane %v6657, 2
  %v6659 = vmax.f32 %v6657, %v6658
  %v6660 = vrot.slane %v6659, 1
  %v6661 = vmax.f32 %v6659, %v6660
  %v6662 = vsel %vm6612, %v6540, -inf
  %v6663 = vrot.slane %v6662, 4
  %v6664 = vmax.f32 %v6662, %v6663
  %v6665 = vrot.slane %v6664, 2
  %v6666 = vmax.f32 %v6664, %v6665
  %v6667 = vrot.slane %v6666, 1
  %v6668 = vmax.f32 %v6666, %v6667
  %v6669 = vsel %vm6612, %v6548, -inf
  %v6670 = vrot.slane %v6669, 4
  %v6671 = vmax.f32 %v6669, %v6670
  %v6672 = vrot.slane %v6671, 2
  %v6673 = vmax.f32 %v6671, %v6672
  %v6674 = vrot.slane %v6673, 1
  %v6675 = vmax.f32 %v6673, %v6674
  %v6676 = vsel %vm6612, %v6556, -inf
  %v6677 = vrot.slane %v6676, 4
  %v6678 = vmax.f32 %v6676, %v6677
  %v6679 = vrot.slane %v6678, 2
  %v6680 = vmax.f32 %v6678, %v6679
  %v6681 = vrot.slane %v6680, 1
  %v6682 = vmax.f32 %v6680, %v6681
  %v6683 = vsel %vm6612, %v6555, -inf
  %v6684 = vrot.slane %v6683, 4
  %v6685 = vmax.f32 %v6683, %v6684
  %v6686 = vrot.slane %v6685, 2
  %v6687 = vmax.f32 %v6685, %v6686
  %v6688 = vrot.slane %v6687, 1
  %v6689 = vmax.f32 %v6687, %v6688
  %v6690 = vsel %vm6612, %v6557, -inf
  %v6691 = vrot.slane %v6690, 4
  %v6692 = vmax.f32 %v6690, %v6691
  %v6693 = vrot.slane %v6692, 2
  %v6694 = vmax.f32 %v6692, %v6693
  %v6695 = vrot.slane %v6694, 1
  %v6696 = vmax.f32 %v6694, %v6695
  %v6697 = vsel %vm6612, %v6565, -inf
  %v6698 = vrot.slane %v6697, 4
  %v6699 = vmax.f32 %v6697, %v6698
  %v6700 = vrot.slane %v6699, 2
  %v6701 = vmax.f32 %v6699, %v6700
  %v6702 = vrot.slane %v6701, 1
  %v6703 = vmax.f32 %v6701, %v6702
  %v6704 = vsel %vm6612, %v6573, -inf
  %v6705 = vrot.slane %v6704, 4
  %v6706 = vmax.f32 %v6704, %v6705
  %v6707 = vrot.slane %v6706, 2
  %v6708 = vmax.f32 %v6706, %v6707
  %v6709 = vrot.slane %v6708, 1
  %v6710 = vmax.f32 %v6708, %v6709
  %v6711 = vsel %vm6612, %v6572, -inf
  %v6712 = vrot.slane %v6711, 4
  %v6713 = vmax.f32 %v6711, %v6712
  %v6714 = vrot.slane %v6713, 2
  %v6715 = vmax.f32 %v6713, %v6714
  %v6716 = vrot.slane %v6715, 1
  %v6717 = vmax.f32 %v6715, %v6716
  %v6718 = vsel %vm6612, %v6574, -inf
  %v6719 = vrot.slane %v6718, 4
  %v6720 = vmax.f32 %v6718, %v6719
  %v6721 = vrot.slane %v6720, 2
  %v6722 = vmax.f32 %v6720, %v6721
  %v6723 = vrot.slane %v6722, 1
  %v6724 = vmax.f32 %v6722, %v6723
  %v6725 = vsel %vm6612, %v6582, -inf
  %v6726 = vrot.slane %v6725, 4
  %v6727 = vmax.f32 %v6725, %v6726
  %v6728 = vrot.slane %v6727, 2
  %v6729 = vmax.f32 %v6727, %v6728
  %v6730 = vrot.slane %v6729, 1
  %v6731 = vmax.f32 %v6729, %v6730
  %v6732 = vsel %vm6612, %v6590, -inf
  %v6733 = vrot.slane %v6732, 4
  %v6734 = vmax.f32 %v6732, %v6733
  %v6735 = vrot.slane %v6734, 2
  %v6736 = vmax.f32 %v6734, %v6735
  %v6737 = vrot.slane %v6736, 1
  %v6738 = vmax.f32 %v6736, %v6737
  %v6739 = vsel %vm6612, %v6589, -inf
  %v6740 = vrot.slane %v6739, 4
  %v6741 = vmax.f32 %v6739, %v6740
  %v6742 = vrot.slane %v6741, 2
  %v6743 = vmax.f32 %v6741, %v6742
  %v6744 = vrot.slane %v6743, 1
  %v6745 = vmax.f32 %v6743, %v6744
  %v6746 = vsel %vm6612, %v6591, -inf
  %v6747 = vrot.slane %v6746, 4
  %v6748 = vmax.f32 %v6746, %v6747
  %v6749 = vrot.slane %v6748, 2
  %v6750 = vmax.f32 %v6748, %v6749
  %v6751 = vrot.slane %v6750, 1
  %v6752 = vmax.f32 %v6750, %v6751
  %v6755 = vsel %vm6231, %v6689, %v6619
  %v6759 = vsel %vm6231, %v6696, %v6626
  %6760 = vrot.lane.b32.xlu0 %v6759, 32
  %v6761 = vpop.permute.xlu0 %6760
  %v6765 = vsel %vm6231, %v6703, %v6633
  %6766 = vrot.lane.b32.xlu0 %v6765, 64
  %v6767 = vpop.permute.xlu0 %6766
  %v6771 = vsel %vm6231, %v6710, %v6640
  %6772 = vrot.lane.b32.xlu0 %v6771, 96
  %v6773 = vpop.permute.xlu0 %6772
  %v6777 = vsel %vm6231, %v6717, %v6647
  %v6781 = vsel %vm6231, %v6724, %v6654
  %6782 = vrot.lane.b32.xlu0 %v6781, 32
  %v6783 = vpop.permute.xlu0 %6782
  %v6787 = vsel %vm6231, %v6731, %v6661
  %6788 = vrot.lane.b32.xlu0 %v6787, 64
  %v6789 = vpop.permute.xlu0 %6788
  %v6793 = vsel %vm6231, %v6738, %v6668
  %6794 = vrot.lane.b32.xlu0 %v6793, 96
  %v6795 = vpop.permute.xlu0 %6794
  %v6799 = vsel %vm6231, %v6745, %v6675
  %v6803 = vsel %vm6231, %v6752, %v6682
  %6804 = vrot.lane.b32.xlu0 %v6803, 32
  %v6805 = vpop.permute.xlu0 %6804
  %v6807 = vsel %vm2642, %v6755, %v6761
  %vm6808 = vcmask 523264
  %v6809 = vsel %vm6808, %v6807, %v6767
  %vm6810 = vcmask 785408
  %v6811 = vsel %vm6810, %v6809, %v6773
  %v6812 = vsel %vm2642, %v6777, %v6783
  %v6813 = vsel %vm6808, %v6812, %v6789
  %v6814 = vsel %vm6810, %v6813, %v6795
  %v6815 = vsel %vm2642, %v6799, %v6805
  %v6816 = vld [vmem:[%s1] sm:$0x3]
  %v6817 = vld [vmem:[%s6] sm:$0x1]
  %6819 = vset.pattern.permute.xlu0 0
  %6820 = vperm.xlu0 %6819, %v6816
  %v6821 = vpop.permute.xlu0 %6820
  %v6824 = vlaneseq
  %v6825 = vshrl.u32 %v6824, 7
  %v6826 = vsub.s32 0, %v6825
  %v6827 = vrot.slane %v6817, %v6826
  %v6829 = vmul.f32 %v6821, %v6827
  %v6830 = vld [vmem:[%s7] sm:$0x1]
  %v6832 = vlaneseq
  %v6833 = vshrl.u32 %v6832, 7
  %v6834 = vsub.s32 0, %v6833
  %v6835 = vrot.slane %v6830, %v6834
  %v6837 = vadd.f32 %v6829, %v6835
  %v6838 = vmax.f32 %v6837, 0.0
  %v6839 = vld [vmem:[%s8] sm:$0xff]
  %v6840 = vld [vmem:[%s8 + $0x8] sm:$0xff]
  %v6841 = vld [vmem:[%s8 + $0x10] sm:$0xff]
  %v6842 = vld [vmem:[%s8 + $0x18] sm:$0xff]
  %v6843 = vld [vmem:[%s9] sm:$0x1]
  %v6845 = vlaneseq
  %v6846 = vshrl.u32 %v6845, 7
  %v6847 = vsub.s32 0, %v6846
  %v6848 = vrot.slane %v6843, %v6847
  %v6851 = vsel %vm2642, %v6838, 0
  %6853 = vmatprep.subr.mxu0 0.0
  %6854 = vmatpush1.msra.mxu0 %v6839
  %6855 = vmatprep.subr.mxu0 0.0
  %6856 = vmatpush1.msra.mxu0 %v6840
  %6857 = vmatprep.subr.mxu0 0.0
  %6858 = vmatpush1.msra.mxu0 %v6841
  %6859 = vmatprep.subr.mxu0 0.0
  %6860 = vmatpush1.msra.mxu0 %v6842
  %6861 = vmatprep.subr.mxu0 0.0
  %6862 = vmatpush1.msra.mxu0 0.0
  %6863 = vmatprep.subr.mxu0 0.0
  %6864 = vmatpush1.msra.mxu0 0.0
  %6865 = vmatprep.subr.mxu0 0.0
  %6866 = vmatpush1.msra.mxu0 0.0
  %6867 = vmatprep.subr.mxu0 0.0
  %6868 = vmatpush1.msra.mxu0 0.0
  %6869 = vmatprep.subr.mxu0 0.0
  %6870 = vmatpush1.msra.mxu0 0.0
  %6871 = vmatprep.subr.mxu0 0.0
  %6872 = vmatpush1.msra.mxu0 0.0
  %6873 = vmatprep.subr.mxu0 0.0
  %6874 = vmatpush1.msra.mxu0 0.0
  %6875 = vmatprep.subr.mxu0 0.0
  %6876 = vmatpush1.msra.mxu0 0.0
  %6877 = vmatprep.subr.mxu0 0.0
  %6878 = vmatpush1.msra.mxu0 0.0
  %6879 = vmatprep.subr.mxu0 0.0
  %6880 = vmatpush1.msra.mxu0 0.0
  %6881 = vmatprep.subr.mxu0 0.0
  %6882 = vmatpush1.msra.mxu0 0.0
  %6883 = vmatprep.subr.mxu0 0.0
  %6884 = vmatpush1.msra.mxu0 0.0
  %6885 = vmatprep.subr.mxu0 0.0
  %6886 = vmatpush1.msra.mxu0 0.0
  %6887 = vmatprep.subr.mxu0 0.0
  %6888 = vmatpush1.msra.mxu0 0.0
  %6889 = vmatprep.subr.mxu0 0.0
  %6890 = vmatpush1.msra.mxu0 0.0
  %6891 = vmatprep.subr.mxu0 0.0
  %6892 = vmatpush1.msra.mxu0 0.0
  %6893 = vmatprep.subr.mxu0 0.0
  %6894 = vmatpush1.msra.mxu0 0.0
  %6895 = vmatprep.subr.mxu0 0.0
  %6896 = vmatpush1.msra.mxu0 0.0
  %6897 = vmatprep.subr.mxu0 0.0
  %6898 = vmatpush1.msra.mxu0 0.0
  %6899 = vmatprep.subr.mxu0 0.0
  %6900 = vmatpush1.msra.mxu0 0.0
  %6901 = vmatprep.subr.mxu0 0.0
  %6902 = vmatpush1.msra.mxu0 0.0
  %6903 = vmatprep.subr.mxu0 0.0
  %6904 = vmatpush1.msra.mxu0 0.0
  %6905 = vmatprep.subr.mxu0 0.0
  %6906 = vmatpush1.msra.mxu0 0.0
  %6907 = vmatprep.subr.mxu0 0.0
  %6908 = vmatpush1.msra.mxu0 0.0
  %6909 = vmatprep.subr.mxu0 0.0
  %6910 = vmatpush1.msra.mxu0 0.0
  %6911 = vmatprep.subr.mxu0 0.0
  %6912 = vmatpush1.msra.mxu0 0.0
  %6913 = vmatprep.subr.mxu0 0.0
  %6914 = vmatpush1.msra.mxu0 0.0
  %6915 = vmatprep.subr.mxu0 0.0
  %6916 = vmatpush1.msra.mxu0 0.0
  %6917 = vmatprep.mubr.f32.mxu0 0.0
  %6918 = vmatmul.mubr.f32.gmra.mrb[0].mxu0 %v6851
  %v6919 = vpop.f32.mrb[0].mxu0
  %v6920 = vadd.f32 %v6848, %v6919
  %v6921 = vpop.f32.mrb[0].mxu0
  %6922 = vdwg.mxu0
  %v6923 = vmax.f32 %v6920, 0.0
  %v6924 = vld [vmem:[%s10] sm:$0xff]
  %v6925 = vld [vmem:[%s10 + $0x8] sm:$0xff]
  %v6926 = vld [vmem:[%s10 + $0x10] sm:$0xff]
  %v6927 = vld [vmem:[%s10 + $0x18] sm:$0xff]
  %v6928 = vld [vmem:[%s10 + $0x20] sm:$0xff]
  %v6929 = vld [vmem:[%s10 + $0x28] sm:$0xff]
  %v6930 = vld [vmem:[%s10 + $0x30] sm:$0xff]
  %v6931 = vld [vmem:[%s10 + $0x38] sm:$0xff]
  %v6932 = vld [vmem:[%s10 + $0x40] sm:$0xff]
  %v6933 = vld [vmem:[%s10 + $0x48] sm:$0xff]
  %v6934 = vld [vmem:[%s10 + $0x50] sm:$0xff]
  %v6935 = vld [vmem:[%s10 + $0x58] sm:$0xff]
  %v6936 = vld [vmem:[%s10 + $0x60] sm:$0xff]
  %v6937 = vld [vmem:[%s10 + $0x68] sm:$0xff]
  %v6938 = vld [vmem:[%s10 + $0x70] sm:$0xff]
  %v6939 = vld [vmem:[%s10 + $0x78] sm:$0xff]
  %v6940 = vld [vmem:[%s10 + $0x80] sm:$0xff]
  %v6941 = vld [vmem:[%s10 + $0x88] sm:$0xff]
  %v6942 = vld [vmem:[%s10 + $0x90] sm:$0xff]
  %v6943 = vld [vmem:[%s10 + $0x98] sm:$0xff]
  %v6944 = vld [vmem:[%s10 + $0xa0] sm:$0xff]
  %v6945 = vld [vmem:[%s10 + $0xa8] sm:$0xff]
  %v6946 = vld [vmem:[%s10 + $0xb0] sm:$0xff]
  %v6947 = vld [vmem:[%s10 + $0xb8] sm:$0xff]
  %v6948 = vld [vmem:[%s10 + $0xc0] sm:$0xff]
  %v6949 = vld [vmem:[%s10 + $0xc8] sm:$0xff]
  %v6950 = vld [vmem:[%s10 + $0xd0] sm:$0xff]
  %v6951 = vld [vmem:[%s10 + $0xd8] sm:$0xff]
  %v6952 = vld [vmem:[%s10 + $0xe0] sm:$0xff]
  %v6953 = vld [vmem:[%s10 + $0xe8] sm:$0xff]
  %v6954 = vld [vmem:[%s10 + $0xf0] sm:$0xff]
  %v6955 = vld [vmem:[%s10 + $0xf8] sm:$0xff]
  %v6956 = vld [vmem:[%s10 + $0x100] sm:$0xff]
  %v6957 = vld [vmem:[%s10 + $0x108] sm:$0xff]
  %v6958 = vld [vmem:[%s10 + $0x110] sm:$0xff]
  %v6959 = vld [vmem:[%s10 + $0x118] sm:$0xff]
  %v6960 = vld [vmem:[%s10 + $0x120] sm:$0xff]
  %v6961 = vld [vmem:[%s10 + $0x128] sm:$0xff]
  %v6962 = vld [vmem:[%s10 + $0x130] sm:$0xff]
  %v6963 = vld [vmem:[%s10 + $0x138] sm:$0xff]
  %v6964 = vld [vmem:[%s11] sm:$0xff]
  %v6965 = vld [vmem:[%s11 + $0x8] sm:$0xff]
  %v6966 = vld [vmem:[%s11 + $0x10] sm:$0xff]
  %v6967 = vld [vmem:[%s11 + $0x18] sm:$0xff]
  %v6968 = vld [vmem:[%s11 + $0x20] sm:$0xff]
  %v6969 = vld [vmem:[%s11 + $0x28] sm:$0xff]
  %v6970 = vld [vmem:[%s11 + $0x30] sm:$0xff]
  %v6971 = vld [vmem:[%s11 + $0x38] sm:$0xff]
  %v6973 = vsel %vm6808, %v6923, 0
  %6975 = vmatprep.subr.mxu0 0.0
  %6976 = vmatpush1.msra.mxu0 %v6964
  %6977 = vmatprep.subr.mxu0 0.0
  %6978 = vmatpush1.msra.mxu0 %v6965
  %6979 = vmatprep.subr.mxu0 0.0
  %6980 = vmatpush1.msra.mxu0 %v6966
  %6981 = vmatprep.subr.mxu0 0.0
  %6982 = vmatpush1.msra.mxu0 %v6967
  %6983 = vmatprep.subr.mxu0 0.0
  %6984 = vmatpush1.msra.mxu0 %v6968
  %6985 = vmatprep.subr.mxu0 0.0
  %6986 = vmatpush1.msra.mxu0 %v6969
  %6987 = vmatprep.subr.mxu0 0.0
  %6988 = vmatpush1.msra.mxu0 %v6970
  %6989 = vmatprep.subr.mxu0 0.0
  %6990 = vmatpush1.msra.mxu0 %v6971
  %6991 = vmatprep.subr.mxu0 0.0
  %6992 = vmatpush1.msra.mxu0 0.0
  %6993 = vmatprep.subr.mxu0 0.0
  %6994 = vmatpush1.msra.mxu0 0.0
  %6995 = vmatprep.subr.mxu0 0.0
  %6996 = vmatpush1.msra.mxu0 0.0
  %6997 = vmatprep.subr.mxu0 0.0
  %6998 = vmatpush1.msra.mxu0 0.0
  %6999 = vmatprep.subr.mxu0 0.0
  %7000 = vmatpush1.msra.mxu0 0.0
  %7001 = vmatprep.subr.mxu0 0.0
  %7002 = vmatpush1.msra.mxu0 0.0
  %7003 = vmatprep.subr.mxu0 0.0
  %7004 = vmatpush1.msra.mxu0 0.0
  %7005 = vmatprep.subr.mxu0 0.0
  %7006 = vmatpush1.msra.mxu0 0.0
  %7007 = vmatprep.subr.mxu0 0.0
  %7008 = vmatpush1.msra.mxu0 0.0
  %7009 = vmatprep.subr.mxu0 0.0
  %7010 = vmatpush1.msra.mxu0 0.0
  %7011 = vmatprep.subr.mxu0 0.0
  %7012 = vmatpush1.msra.mxu0 0.0
  %7013 = vmatprep.subr.mxu0 0.0
  %7014 = vmatpush1.msra.mxu0 0.0
  %7015 = vmatprep.subr.mxu0 0.0
  %7016 = vmatpush1.msra.mxu0 0.0
  %7017 = vmatprep.subr.mxu0 0.0
  %7018 = vmatpush1.msra.mxu0 0.0
  %7019 = vmatprep.subr.mxu0 0.0
  %7020 = vmatpush1.msra.mxu0 0.0
  %7021 = vmatprep.subr.mxu0 0.0
  %7022 = vmatpush1.msra.mxu0 0.0
  %7023 = vmatprep.subr.mxu0 0.0
  %7024 = vmatpush1.msra.mxu0 0.0
  %7025 = vmatprep.subr.mxu0 0.0
  %7026 = vmatpush1.msra.mxu0 0.0
  %7027 = vmatprep.subr.mxu0 0.0
  %7028 = vmatpush1.msra.mxu0 0.0
  %7029 = vmatprep.subr.mxu0 0.0
  %7030 = vmatpush1.msra.mxu0 0.0
  %7031 = vmatprep.subr.mxu0 0.0
  %7032 = vmatpush1.msra.mxu0 0.0
  %7033 = vmatprep.subr.mxu0 0.0
  %7034 = vmatpush1.msra.mxu0 0.0
  %7035 = vmatprep.subr.mxu0 0.0
  %7036 = vmatpush1.msra.mxu0 0.0
  %7037 = vmatprep.subr.mxu0 0.0
  %7038 = vmatpush1.msra.mxu0 0.0
  %7039 = vmatprep.mubr.f32.mxu0 0.0
  %7040 = vmatmul.mubr.f32.gmra.mrb[0].mxu0 %v6973
  %v7041 = vpop.f32.mrb[0].mxu0
  %v7042 = vadd.f32 0.0, %v7041
  %v7043 = vpop.f32.mrb[0].mxu0
  %7044 = vdwg.mxu0
  %v7046 = vsel %vm6808, %v6815, 0
  %7048 = vmatprep.subr.mxu0 0.0
  %7049 = vmatpush1.msra.mxu0 %v6924
  %7050 = vmatprep.subr.mxu0 0.0
  %7051 = vmatpush1.msra.mxu0 %v6925
  %7052 = vmatprep.subr.mxu0 0.0
  %7053 = vmatpush1.msra.mxu0 %v6926
  %7054 = vmatprep.subr.mxu0 0.0
  %7055 = vmatpush1.msra.mxu0 %v6927
  %7056 = vmatprep.subr.mxu0 0.0
  %7057 = vmatpush1.msra.mxu0 %v6928
  %7058 = vmatprep.subr.mxu0 0.0
  %7059 = vmatpush1.msra.mxu0 %v6929
  %7060 = vmatprep.subr.mxu0 0.0
  %7061 = vmatpush1.msra.mxu0 %v6930
  %7062 = vmatprep.subr.mxu0 0.0
  %7063 = vmatpush1.msra.mxu0 %v6931
  %7064 = vmatprep.subr.mxu0 0.0
  %7065 = vmatpush1.msra.mxu0 %v6932
  %7066 = vmatprep.subr.mxu0 0.0
  %7067 = vmatpush1.msra.mxu0 %v6933
  %7068 = vmatprep.subr.mxu0 0.0
  %7069 = vmatpush1.msra.mxu0 %v6934
  %7070 = vmatprep.subr.mxu0 0.0
  %7071 = vmatpush1.msra.mxu0 %v6935
  %7072 = vmatprep.subr.mxu0 0.0
  %7073 = vmatpush1.msra.mxu0 %v6936
  %7074 = vmatprep.subr.mxu0 0.0
  %7075 = vmatpush1.msra.mxu0 %v6937
  %7076 = vmatprep.subr.mxu0 0.0
  %7077 = vmatpush1.msra.mxu0 %v6938
  %7078 = vmatprep.subr.mxu0 0.0
  %7079 = vmatpush1.msra.mxu0 %v6939
  %7080 = vmatprep.subr.mxu0 0.0
  %7081 = vmatpush1.msra.mxu0 %v6940
  %7082 = vmatprep.subr.mxu0 0.0
  %7083 = vmatpush1.msra.mxu0 %v6941
  %7084 = vmatprep.subr.mxu0 0.0
  %7085 = vmatpush1.msra.mxu0 %v6942
  %7086 = vmatprep.subr.mxu0 0.0
  %7087 = vmatpush1.msra.mxu0 %v6943
  %7088 = vmatprep.subr.mxu0 0.0
  %7089 = vmatpush1.msra.mxu0 %v6944
  %7090 = vmatprep.subr.mxu0 0.0
  %7091 = vmatpush1.msra.mxu0 %v6945
  %7092 = vmatprep.subr.mxu0 0.0
  %7093 = vmatpush1.msra.mxu0 %v6946
  %7094 = vmatprep.subr.mxu0 0.0
  %7095 = vmatpush1.msra.mxu0 %v6947
  %7096 = vmatprep.subr.mxu0 0.0
  %7097 = vmatpush1.msra.mxu0 %v6948
  %7098 = vmatprep.subr.mxu0 0.0
  %7099 = vmatpush1.msra.mxu0 %v6949
  %7100 = vmatprep.subr.mxu0 0.0
  %7101 = vmatpush1.msra.mxu0 %v6950
  %7102 = vmatprep.subr.mxu0 0.0
  %7103 = vmatpush1.msra.mxu0 %v6951
  %7104 = vmatprep.subr.mxu0 0.0
  %7105 = vmatpush1.msra.mxu0 %v6952
  %7106 = vmatprep.subr.mxu0 0.0
  %7107 = vmatpush1.msra.mxu0 %v6953
  %7108 = vmatprep.subr.mxu0 0.0
  %7109 = vmatpush1.msra.mxu0 %v6954
  %7110 = vmatprep.subr.mxu0 0.0
  %7111 = vmatpush1.msra.mxu0 %v6955
  %7112 = vmatprep.mubr.f32.mxu0 %v6814
  %7113 = vmatmul.mubr.f32.gmra.mrb[0].mxu0 %v6811
  %v7114 = vpop.f32.mrb[0].mxu0
  %v7115 = vadd.f32 %v7042, %v7114
  %v7116 = vpop.f32.mrb[0].mxu0
  %7117 = vdwg.mxu0
  %7118 = vmatprep.subr.mxu0 0.0
  %7119 = vmatpush1.msra.mxu0 %v6956
  %7120 = vmatprep.subr.mxu0 0.0
  %7121 = vmatpush1.msra.mxu0 %v6957
  %7122 = vmatprep.subr.mxu0 0.0
  %7123 = vmatpush1.msra.mxu0 %v6958
  %7124 = vmatprep.subr.mxu0 0.0
  %7125 = vmatpush1.msra.mxu0 %v6959
  %7126 = vmatprep.subr.mxu0 0.0
  %7127 = vmatpush1.msra.mxu0 %v6960
  %7128 = vmatprep.subr.mxu0 0.0
  %7129 = vmatpush1.msra.mxu0 %v6961
  %7130 = vmatprep.subr.mxu0 0.0
  %7131 = vmatpush1.msra.mxu0 %v6962
  %7132 = vmatprep.subr.mxu0 0.0
  %7133 = vmatpush1.msra.mxu0 %v6963
  %7134 = vmatprep.subr.mxu0 0.0
  %7135 = vmatpush1.msra.mxu0 0.0
  %7136 = vmatprep.subr.mxu0 0.0
  %7137 = vmatpush1.msra.mxu0 0.0
  %7138 = vmatprep.subr.mxu0 0.0
  %7139 = vmatpush1.msra.mxu0 0.0
  %7140 = vmatprep.subr.mxu0 0.0
  %7141 = vmatpush1.msra.mxu0 0.0
  %7142 = vmatprep.subr.mxu0 0.0
  %7143 = vmatpush1.msra.mxu0 0.0
  %7144 = vmatprep.subr.mxu0 0.0
  %7145 = vmatpush1.msra.mxu0 0.0
  %7146 = vmatprep.subr.mxu0 0.0
  %7147 = vmatpush1.msra.mxu0 0.0
  %7148 = vmatprep.subr.mxu0 0.0
  %7149 = vmatpush1.msra.mxu0 0.0
  %7150 = vmatprep.subr.mxu0 0.0
  %7151 = vmatpush1.msra.mxu0 0.0
  %7152 = vmatprep.subr.mxu0 0.0
  %7153 = vmatpush1.msra.mxu0 0.0
  %7154 = vmatprep.subr.mxu0 0.0
  %7155 = vmatpush1.msra.mxu0 0.0
  %7156 = vmatprep.subr.mxu0 0.0
  %7157 = vmatpush1.msra.mxu0 0.0
  %7158 = vmatprep.subr.mxu0 0.0
  %7159 = vmatpush1.msra.mxu0 0.0
  %7160 = vmatprep.subr.mxu0 0.0
  %7161 = vmatpush1.msra.mxu0 0.0
  %7162 = vmatprep.subr.mxu0 0.0
  %7163 = vmatpush1.msra.mxu0 0.0
  %7164 = vmatprep.subr.mxu0 0.0
  %7165 = vmatpush1.msra.mxu0 0.0
  %7166 = vmatprep.subr.mxu0 0.0
  %7167 = vmatpush1.msra.mxu0 0.0
  %7168 = vmatprep.subr.mxu0 0.0
  %7169 = vmatpush1.msra.mxu0 0.0
  %7170 = vmatprep.subr.mxu0 0.0
  %7171 = vmatpush1.msra.mxu0 0.0
  %7172 = vmatprep.subr.mxu0 0.0
  %7173 = vmatpush1.msra.mxu0 0.0
  %7174 = vmatprep.subr.mxu0 0.0
  %7175 = vmatpush1.msra.mxu0 0.0
  %7176 = vmatprep.subr.mxu0 0.0
  %7177 = vmatpush1.msra.mxu0 0.0
  %7178 = vmatprep.subr.mxu0 0.0
  %7179 = vmatpush1.msra.mxu0 0.0
  %7180 = vmatprep.subr.mxu0 0.0
  %7181 = vmatpush1.msra.mxu0 0.0
  %7182 = vmatprep.mubr.f32.mxu0 0.0
  %7183 = vmatmul.mubr.f32.gmra.mrb[0].mxu0 %v7046
  %v7184 = vpop.f32.mrb[0].mxu0
  %v7185 = vadd.f32 %v7115, %v7184
  %v7186 = vpop.f32.mrb[0].mxu0
  %7187 = vdwg.mxu0
  %v7188 = vld [vmem:[%s12] sm:$0x1]
  %v7190 = vlaneseq
  %v7191 = vshrl.u32 %v7190, 7
  %v7192 = vsub.s32 0, %v7191
  %v7193 = vrot.slane %v7188, %v7192
  %v7195 = vadd.f32 %v7185, %v7193
  %v7196 = vmax.f32 %v7195, 0.0
  %v7197 = vld [vmem:[%s13] sm:$0xff]
  %v7198 = vld [vmem:[%s13 + $0x8] sm:$0xff]
  %v7199 = vld [vmem:[%s13 + $0x10] sm:$0xff]
  %v7200 = vld [vmem:[%s13 + $0x18] sm:$0xff]
  %v7201 = vld [vmem:[%s13 + $0x20] sm:$0xff]
  %v7202 = vld [vmem:[%s13 + $0x28] sm:$0xff]
  %v7203 = vld [vmem:[%s13 + $0x30] sm:$0xff]
  %v7204 = vld [vmem:[%s13 + $0x38] sm:$0xff]
  %v7205 = vld [vmem:[#allocation2] sm:$0x1]
  %v7207 = vlaneseq
  %v7208 = vshrl.u32 %v7207, 7
  %v7209 = vsub.s32 0, %v7208
  %v7210 = vrot.slane %v7205, %v7209
  %v7213 = vsel %vm6808, %v7196, 0
  %7215 = vmatprep.subr.mxu0 0.0
  %7216 = vmatpush1.msra.mxu0 %v7197
  %7217 = vmatprep.subr.mxu0 0.0
  %7218 = vmatpush1.msra.mxu0 %v7198
  %7219 = vmatprep.subr.mxu0 0.0
  %7220 = vmatpush1.msra.mxu0 %v7199
  %7221 = vmatprep.subr.mxu0 0.0
  %7222 = vmatpush1.msra.mxu0 %v7200
  %7223 = vmatprep.subr.mxu0 0.0
  %7224 = vmatpush1.msra.mxu0 %v7201
  %7225 = vmatprep.subr.mxu0 0.0
  %7226 = vmatpush1.msra.mxu0 %v7202
  %7227 = vmatprep.subr.mxu0 0.0
  %7228 = vmatpush1.msra.mxu0 %v7203
  %7229 = vmatprep.subr.mxu0 0.0
  %7230 = vmatpush1.msra.mxu0 %v7204
  %7231 = vmatprep.subr.mxu0 0.0
  %7232 = vmatpush1.msra.mxu0 0.0
  %7233 = vmatprep.subr.mxu0 0.0
  %7234 = vmatpush1.msra.mxu0 0.0
  %7235 = vmatprep.subr.mxu0 0.0
  %7236 = vmatpush1.msra.mxu0 0.0
  %7237 = vmatprep.subr.mxu0 0.0
  %7238 = vmatpush1.msra.mxu0 0.0
  %7239 = vmatprep.subr.mxu0 0.0
  %7240 = vmatpush1.msra.mxu0 0.0
  %7241 = vmatprep.subr.mxu0 0.0
  %7242 = vmatpush1.msra.mxu0 0.0
  %7243 = vmatprep.subr.mxu0 0.0
  %7244 = vmatpush1.msra.mxu0 0.0
  %7245 = vmatprep.subr.mxu0 0.0
  %7246 = vmatpush1.msra.mxu0 0.0
  %7247 = vmatprep.subr.mxu0 0.0
  %7248 = vmatpush1.msra.mxu0 0.0
  %7249 = vmatprep.subr.mxu0 0.0
  %7250 = vmatpush1.msra.mxu0 0.0
  %7251 = vmatprep.subr.mxu0 0.0
  %7252 = vmatpush1.msra.mxu0 0.0
  %7253 = vmatprep.subr.mxu0 0.0
  %7254 = vmatpush1.msra.mxu0 0.0
  %7255 = vmatprep.subr.mxu0 0.0
  %7256 = vmatpush1.msra.mxu0 0.0
  %7257 = vmatprep.subr.mxu0 0.0
  %7258 = vmatpush1.msra.mxu0 0.0
  %7259 = vmatprep.subr.mxu0 0.0
  %7260 = vmatpush1.msra.mxu0 0.0
  %7261 = vmatprep.subr.mxu0 0.0
  %7262 = vmatpush1.msra.mxu0 0.0
  %7263 = vmatprep.subr.mxu0 0.0
  %7264 = vmatpush1.msra.mxu0 0.0
  %7265 = vmatprep.subr.mxu0 0.0
  %7266 = vmatpush1.msra.mxu0 0.0
  %7267 = vmatprep.subr.mxu0 0.0
  %7268 = vmatpush1.msra.mxu0 0.0
  %7269 = vmatprep.subr.mxu0 0.0
  %7270 = vmatpush1.msra.mxu0 0.0
  %7271 = vmatprep.subr.mxu0 0.0
  %7272 = vmatpush1.msra.mxu0 0.0
  %7273 = vmatprep.subr.mxu0 0.0
  %7274 = vmatpush1.msra.mxu0 0.0
  %7275 = vmatprep.subr.mxu0 0.0
  %7276 = vmatpush1.msra.mxu0 0.0
  %7277 = vmatprep.subr.mxu0 0.0
  %7278 = vmatpush1.msra.mxu0 0.0
  %7279 = vmatprep.mubr.f32.mxu0 0.0
  %7280 = vmatmul.mubr.f32.gmra.mrb[0].mxu0 %v7213
  %v7281 = vpop.f32.mrb[0].mxu0
  %v7282 = vadd.f32 %v7210, %v7281
  %v7283 = vpop.f32.mrb[0].mxu0
  %7284 = vdwg.mxu0
  %vm7285 = vcmask 1024
  %7286 = vst.msk [vmem:[%s15] sm:$0x3] %vm7285, %v7282
  // Predicated region
  $region62: #{modified_simple_cnn_cond.1} parent=0 // pred_check
    _
  $region63: #{modified_simple_cnn_cond.1} parent=0 // pred_check_branch
    %7288 = sbr.rel (0) target = $region65
  $region64: #{modified_simple_cnn_cond.1} parent=0 // pred_region
    _
  $region65: #{modified_simple_cnn_cond.1} parent=0 // pred_fallthru
    _
  // Predicated region
  $region66: #{modified_simple_cnn_cond.1} parent=0 // pred_check
    _
  $region67: #{modified_simple_cnn_cond.1} parent=0 // pred_check_branch
    %7290 = sbr.rel (0) target = $region69
  $region68: #{modified_simple_cnn_cond.1} parent=0 // pred_region
    _
  $region69: #{modified_simple_cnn_cond.1} parent=0 // pred_fallthru
    _

</llo_original>
